<compile_context>
chip_gen: v7x
topology: tpu7x:2x2x1
jax: 0.10.0
libtpu: 0.0.40
codegen_flags: <defaults>
</compile_context>

<pallas_src>
import numpy as np
import jax
import jax.numpy as jnp
from jax import lax
from jax.experimental import pallas as pl
from jax.experimental.pallas import tpu as pltpu

PRELU_ALPHA = 0.25  # nn.PReLU() default single shared slope (deterministic init)

# Set to jnp.bfloat16 on v6e/v7x: bf16 MXU operands with f32 accumulation.
# Default f32 keeps exact reference numerics (and f32 VPU path on v5e).
CONV_MATMUL_DTYPE = jnp.float32


# ---------------------------------------------------------------------------
# Glue (layout / parameter plumbing only; all hot math runs inside the kernel).
# ---------------------------------------------------------------------------
def _up2x_matrix(n):
    """(2n, n) bilinear x2 interpolation matrix == torch align_corners=False."""
    A = np.zeros((2 * n, n), np.float32)
    for o in range(2 * n):
        src = max((o + 0.5) / 2.0 - 0.5, 0.0)
        i0 = min(int(np.floor(src)), n - 1)
        i1 = min(i0 + 1, n - 1)
        lam = src - i0
        A[o, i0] += 1.0 - lam
        A[o, i1] += lam
    return A


def _tap_masks(H, W):
    """(9, 1, H*W) f32 validity masks for the 9 taps of a zero-padded 3x3 conv."""
    yy, xx = np.meshgrid(np.arange(H), np.arange(W), indexing="ij")
    m = np.zeros((9, 1, H * W), np.float32)
    for t in range(9):
        dy, dx = t // 3 - 1, t % 3 - 1
        ok = (xx + dx >= 0) & (xx + dx < W) & (yy + dy >= 0) & (yy + dy < H)
        m[t, 0] = ok.reshape(-1).astype(np.float32)
    return m


def _full_spec(shape):
    nd = len(shape)
    return pl.BlockSpec(tuple(shape), lambda b: (0,) * nd)


def _batch_spec(shape):
    nd = len(shape)
    return pl.BlockSpec((1,) + tuple(shape[1:]), lambda b: (b,) + (0,) * (nd - 1))


# ---------------------------------------------------------------------------
# Fused TFR forward: one pallas_call, grid over batch.
# ---------------------------------------------------------------------------
def tfr_forward(params, x, encoder_outs, decoder_outs):
    """x / encoder_outs[i] / decoder_outs[i] are NCHW float32 (PyTorch layout)."""
    B, C, H, W = x.shape
    Hh, Wh = H // 2, W // 2
    Hq, Wq = H // 4, W // 4
    HW = H * W
    C2 = encoder_outs[1].shape[1]
    C3 = encoder_outs[2].shape[1]
    num_cab = len(params["orb1"]["cabs"])

    # ---- pack conv / CA weights into (3*num_cab, ...) stacks, conv-transposed ----
    w1_l, w2_l, ca1_l, ca2_l, wt_l = [], [], [], [], []
    for name in ("orb1", "orb2", "orb3"):
        p = params[name]
        for cab_p in p["cabs"]:
            w1_l.append(cab_p["w1"].reshape(9 * C, C).T)   # (C_out, 9*C_in)
            w2_l.append(cab_p["w2"].reshape(9 * C, C).T)
            ca1_l.append(cab_p["ca_w1"])                    # (C, cr)
            ca2_l.append(cab_p["ca_w2"].T)                  # (C, cr)
        wt_l.append(p["w_tail"].reshape(9 * C, C).T)
    W1P = jnp.stack(w1_l).astype(CONV_MATMUL_DTYPE)         # (3*ncab, C, 9C)
    W2P = jnp.stack(w2_l).astype(CONV_MATMUL_DTYPE)         # (3*ncab, C, 9C)
    CA1S = jnp.stack(ca1_l)                                  # (3*ncab, C, cr)
    CA2S = jnp.stack(ca2_l)                                  # (3*ncab, C, cr)
    WTP = jnp.stack(wt_l).astype(CONV_MATMUL_DTYPE)          # (3, C, 9C)

    # ---- fold the 1x1 chains (exact: channel 1x1s commute with per-channel bilinear) ----
    WF1 = jnp.concatenate([params["conv_enc1"], params["conv_dec1"]], axis=0).T      # (C, 2C)
    WF2 = jnp.concatenate([params["up_enc1"] @ params["conv_enc2"],
                           params["up_dec1"] @ params["conv_dec2"]], axis=0).T        # (C, 2C2)
    WF3 = jnp.concatenate(
        [params["up_enc2_a"] @ params["up_enc2_b"] @ params["conv_enc3"],
         params["up_dec2_a"] @ params["up_dec2_b"] @ params["conv_dec3"]], axis=0).T  # (C, 2C3)

    # ---- bilinear x2 / x4 spatial interpolation matrices (applied after low-res proj) ----
    # TODO(synk): replace dense Kronecker matrices with separable row/col matmuls at
    # production resolutions (v7x VMEM budget); exact and cheap at demo size.
    m2 = np.kron(_up2x_matrix(Hh), _up2x_matrix(Wh))      # (HW, Hh*Wh)
    m4 = np.kron(_up2x_matrix(Hq), _up2x_matrix(Wq))      # (Hh*Wh, Hq*Wq)
    M2T = jnp.asarray(m2.T)                                # (Hh*Wh, HW)
    M24T = jnp.asarray((m2 @ m4).T)                        # (Hq*Wq, HW)
    MASKS = jnp.asarray(_tap_masks(H, W))                  # (9, 1, HW)

    # ---- channels-first flattened activations (HW sits in the lane dim) ----
    xf = x.reshape(B, C, HW)
    ed0 = jnp.concatenate([encoder_outs[0], decoder_outs[0]], axis=1).reshape(B, 2 * C, HW)
    ed1 = jnp.concatenate([encoder_outs[1], decoder_outs[1]], axis=1).reshape(B, 2 * C2, Hh * Wh)
    ed2 = jnp.concatenate([encoder_outs[2], decoder_outs[2]], axis=1).reshape(B, 2 * C3, Hq * Wq)

    def kernel(x_ref, ed0_ref, ed1_ref, ed2_ref,
               w1_ref, w2_ref, ca1_ref, ca2_ref, wt_ref,
               wf1_ref, wf2_ref, wf3_ref, m2t_ref, m24t_ref, mask_ref,
               o_ref):
        f32 = jnp.float32

        def conv3x3(a, wp):
            # a: (C, HW); wp: (C_out, 9*C_in).  The 9 taps are static lane rolls of
            # the flattened map (+ border masks), stacked along sublanes and fed to
            # one K=9C matmul.  No scratch round trips.
            cols = []
            for t in range(9):
                dy, dx = t // 3 - 1, t % 3 - 1
                s = dy * W + dx
                if s == 0:
                    cols.append(a)
                else:
                    v = jnp.roll(a, -s, axis=1)            # v[:, p] = a[:, p + s]
                    cols.append(v * mask_ref[t])           # zero out-of-image taps
            col = jnp.concatenate(cols, axis=0).astype(CONV_MATMUL_DTYPE)  # (9C, HW)
            return jnp.dot(wp, col, preferred_element_type=f32)            # (C, HW)

        def prelu(z):
            return jnp.where(z >= 0, z, PRELU_ALPHA * z)

        def cab(res, idx):
            h = prelu(conv3x3(res, w1_ref[idx]))
            r = conv3x3(h, w2_ref[idx])
            # Channel attention on VPU/XLU: global mean -> SE -> sigmoid gate.
            y = jnp.mean(r, axis=1, keepdims=True)                                     # (C, 1)
            t1 = jnp.maximum(jnp.sum(ca1_ref[idx] * y, axis=0, keepdims=True), 0.0)    # (1, cr)
            gate = jax.nn.sigmoid(jnp.sum(ca2_ref[idx] * t1, axis=1, keepdims=True))   # (C, 1)
            return r * gate + res

        def orb(a, oi):
            body = lambda j, res: cab(res, oi * num_cab + j)
            res = lax.fori_loop(0, num_cab, body, a)
            return conv3x3(res, wt_ref[oi]) + a

        dot = lambda u, v: jnp.dot(u, v, preferred_element_type=f32)

        xv = x_ref[0]                                      # (C, HW)
        # --- ORB1 + level-1 injection: x += [W_enc1 | W_dec1] @ [enc0; dec0] ---
        xv = orb(xv, 0)
        xv = xv + dot(wf1_ref[...], ed0_ref[0])
        # --- ORB2 + level-2 injection: fused channel proj at half res, then bilinear x2 ---
        xv = orb(xv, 1)
        t = dot(wf2_ref[...], ed1_ref[0])                  # (C, Hh*Wh)
        xv = xv + dot(t, m2t_ref[...])                     # (C, HW)
        # --- ORB3 + level-3 injection: fused channel proj at quarter res, then bilinear x4 ---
        xv = orb(xv, 2)
        t = dot(wf3_ref[...], ed2_ref[0])                  # (C, Hq*Wq)
        xv = xv + dot(t, m24t_ref[...])                    # (C, HW)

        o_ref[0] = xv.astype(o_ref.dtype)

    inputs = [xf, ed0, ed1, ed2, W1P, W2P, CA1S, CA2S, WTP,
              WF1, WF2, WF3, M2T, M24T, MASKS]
    batched = [True, True, True, True] + [False] * 11
    in_specs = [(_batch_spec if b else _full_spec)(a.shape) for a, b in zip(inputs, batched)]

    out = pl.pallas_call(
        kernel,
        out_shape=jax.ShapeDtypeStruct((B, C, HW), jnp.float32),
        grid=(B,),
        in_specs=in_specs,
        out_specs=_batch_spec((B, C, HW)),
        compiler_params=pltpu.CompilerParams(
            dimension_semantics=("parallel",),
            vmem_limit_bytes=64 * 1024 * 1024,
        ),
    )(*inputs)
    return out.reshape(B, C, H, W)


# ---------------------------------------------------------------------------
# Parameter init (deterministic; mirrors the module's weight shapes, bias=False)
# ---------------------------------------------------------------------------
def init_params(key, n_feat, reduction, scale_unetfeats, num_cab):
    keys = iter(jax.random.split(key, 256))

    def w(*shape, scale=0.05):
        return jax.random.normal(next(keys), shape, jnp.float32) * scale

    cr = max(n_feat // reduction, 1)

    def cab():
        # w1/w2: (tap, C_in, C_out); ca_w1: (C, cr); ca_w2: (cr, C)
        return dict(w1=w(9, n_feat, n_feat), w2=w(9, n_feat, n_feat),
                    ca_w1=w(n_feat, cr), ca_w2=w(cr, n_feat))

    def orb():
        return dict(cabs=[cab() for _ in range(num_cab)],
                    w_tail=w(9, n_feat, n_feat))

    s = scale_unetfeats
    return dict(
        orb1=orb(), orb2=orb(), orb3=orb(),
        # 1x1 conv weights in (C_in, C_out) convention
        up_enc1=w(n_feat + s, n_feat), up_dec1=w(n_feat + s, n_feat),
        up_enc2_a=w(n_feat + 2 * s, n_feat + s), up_enc2_b=w(n_feat + s, n_feat),
        up_dec2_a=w(n_feat + 2 * s, n_feat + s), up_dec2_b=w(n_feat + s, n_feat),
        conv_enc1=w(n_feat, n_feat), conv_enc2=w(n_feat, n_feat), conv_enc3=w(n_feat, n_feat),
        conv_dec1=w(n_feat, n_feat), conv_dec2=w(n_feat, n_feat), conv_dec3=w(n_feat, n_feat),
    )


if __name__ == "__main__":
    B, n_feat, H, W = 2, 32, 16, 16
    reduction, scale_unetfeats, num_cab = 4, 16, 2   # production uses num_cab=8

    key = jax.random.PRNGKey(0)
    kp, kx, ke0, ke1, ke2, kd0, kd1, kd2 = jax.random.split(key, 8)
    params = init_params(kp, n_feat, reduction, scale_unetfeats, num_cab)

    # PyTorch-convention NCHW inputs at the three U-Net scales.
    x = jax.random.normal(kx, (B, n_feat, H, W), jnp.float32)
    enc = [
        jax.random.normal(ke0, (B, n_feat, H, W), jnp.float32),
        jax.random.normal(ke1, (B, n_feat + scale_unetfeats, H // 2, W // 2), jnp.float32),
        jax.random.normal(ke2, (B, n_feat + 2 * scale_unetfeats, H // 4, W // 4), jnp.float32),
    ]
    dec = [
        jax.random.normal(kd0, (B, n_feat, H, W), jnp.float32),
        jax.random.normal(kd1, (B, n_feat + scale_unetfeats, H // 2, W // 2), jnp.float32),
        jax.random.normal(kd2, (B, n_feat + 2 * scale_unetfeats, H // 4, W // 4), jnp.float32),
    ]

    out = jax.jit(tfr_forward)(params, x, enc, dec)
    out = jax.block_until_ready(out)
    assert out.shape == (B, n_feat, H, W) and out.dtype == jnp.float32
    assert bool(jnp.all(jnp.isfinite(out)))
    print("KERNEL_OK")
</pallas_src>

<mosaic_0001>
module attributes {stable_mosaic.version = 11 : i64} {
  func.func @kernel(%arg0: i32, %arg1: memref<1x32x256xf32, #tpu.memory_space<vmem>>, %arg2: memref<1x64x256xf32, #tpu.memory_space<vmem>>, %arg3: memref<1x96x64xf32, #tpu.memory_space<vmem>>, %arg4: memref<1x128x16xf32, #tpu.memory_space<vmem>>, %arg5: memref<6x32x288xf32, #tpu.memory_space<vmem>>, %arg6: memref<6x32x288xf32, #tpu.memory_space<vmem>>, %arg7: memref<6x32x8xf32, #tpu.memory_space<vmem>>, %arg8: memref<6x32x8xf32, #tpu.memory_space<vmem>>, %arg9: memref<3x32x288xf32, #tpu.memory_space<vmem>>, %arg10: memref<32x64xf32, #tpu.memory_space<vmem>>, %arg11: memref<32x96xf32, #tpu.memory_space<vmem>>, %arg12: memref<32x128xf32, #tpu.memory_space<vmem>>, %arg13: memref<64x256xf32, #tpu.memory_space<vmem>>, %arg14: memref<16x256xf32, #tpu.memory_space<vmem>>, %arg15: memref<9x1x256xf32, #tpu.memory_space<vmem>>, %arg16: memref<1x32x256xf32, #tpu.memory_space<vmem>>) attributes {dimension_semantics = [#tpu.dimension_semantics<parallel>], iteration_bounds = array<i64: 2>, scalar_prefetch = 0 : i64, scratch_operands = 0 : i64, tpu.core_type = #tpu.core_type<tc>, window_params = [{transform_indices = @transform_0, window_bounds = array<i64: 1, 32, 256>}, {transform_indices = @transform_1, window_bounds = array<i64: 1, 64, 256>}, {transform_indices = @transform_2, window_bounds = array<i64: 1, 96, 64>}, {transform_indices = @transform_3, window_bounds = array<i64: 1, 128, 16>}, {pipeline_mode = #tpu.pipeline_mode<synchronous>, transform_indices = @transform_4, window_bounds = array<i64: 6, 32, 288>}, {pipeline_mode = #tpu.pipeline_mode<synchronous>, transform_indices = @transform_5, window_bounds = array<i64: 6, 32, 288>}, {pipeline_mode = #tpu.pipeline_mode<synchronous>, transform_indices = @transform_6, window_bounds = array<i64: 6, 32, 8>}, {pipeline_mode = #tpu.pipeline_mode<synchronous>, transform_indices = @transform_7, window_bounds = array<i64: 6, 32, 8>}, {pipeline_mode = #tpu.pipeline_mode<synchronous>, transform_indices = @transform_8, window_bounds = array<i64: 3, 32, 288>}, {pipeline_mode = #tpu.pipeline_mode<synchronous>, transform_indices = @transform_9, window_bounds = array<i64: 32, 64>}, {pipeline_mode = #tpu.pipeline_mode<synchronous>, transform_indices = @transform_10, window_bounds = array<i64: 32, 96>}, {pipeline_mode = #tpu.pipeline_mode<synchronous>, transform_indices = @transform_11, window_bounds = array<i64: 32, 128>}, {pipeline_mode = #tpu.pipeline_mode<synchronous>, transform_indices = @transform_12, window_bounds = array<i64: 64, 256>}, {pipeline_mode = #tpu.pipeline_mode<synchronous>, transform_indices = @transform_13, window_bounds = array<i64: 16, 256>}, {pipeline_mode = #tpu.pipeline_mode<synchronous>, transform_indices = @transform_14, window_bounds = array<i64: 9, 1, 256>}, {transform_indices = @transform_15, window_bounds = array<i64: 1, 32, 256>}]} {
    %c0 = arith.constant 0 : index
    %c0_0 = arith.constant 0 : index
    %c0_1 = arith.constant 0 : index
    %0 = vector.load %arg1[%c0, %c0_0, %c0_1] : memref<1x32x256xf32, #tpu.memory_space<vmem>>, vector<1x32x256xf32>
    %1 = vector.shape_cast %0 : vector<1x32x256xf32> to vector<32x256xf32>
    %c0_i32 = arith.constant 0 : i32
    %c2_i32 = arith.constant 2 : i32
    %2 = arith.addi %c0_i32, %c2_i32 : i32
    %c1_i32 = arith.constant 1 : i32
    %3 = scf.for %arg17 = %c0_i32 to %2 step %c1_i32 iter_args(%arg18 = %1) -> (vector<32x256xf32>)  : i32 {
      %c0_i32_114 = arith.constant 0 : i32
      %213 = arith.addi %c0_i32_114, %arg17 : i32
      %214 = arith.index_cast %213 : i32 to index
      %c0_115 = arith.constant 0 : index
      %c0_116 = arith.constant 0 : index
      %215 = vector.load %arg5[%214, %c0_115, %c0_116] : memref<6x32x288xf32, #tpu.memory_space<vmem>>, vector<1x32x288xf32>
      %216 = vector.shape_cast %215 : vector<1x32x288xf32> to vector<32x288xf32>
      %217 = vector.extract_strided_slice %arg18 {offsets = [0, 239], sizes = [32, 17], strides = [1, 1]} : vector<32x256xf32> to vector<32x17xf32>
      %218 = vector.extract_strided_slice %arg18 {offsets = [0, 0], sizes = [32, 239], strides = [1, 1]} : vector<32x256xf32> to vector<32x239xf32>
      %219 = tpu.concatenate %217, %218 in 1 : vector<32x17xf32>, vector<32x239xf32> -> vector<32x256xf32>
      %c0_117 = arith.constant 0 : index
      %c0_118 = arith.constant 0 : index
      %c0_119 = arith.constant 0 : index
      %220 = vector.load %arg15[%c0_117, %c0_118, %c0_119] : memref<9x1x256xf32, #tpu.memory_space<vmem>>, vector<1x1x256xf32>
      %221 = vector.shape_cast %220 : vector<1x1x256xf32> to vector<1x256xf32>
      %222 = vector.broadcast %221 : vector<1x256xf32> to vector<32x256xf32>
      %223 = arith.mulf %219, %222 : vector<32x256xf32>
      %224 = vector.extract_strided_slice %arg18 {offsets = [0, 240], sizes = [32, 16], strides = [1, 1]} : vector<32x256xf32> to vector<32x16xf32>
      %225 = vector.extract_strided_slice %arg18 {offsets = [0, 0], sizes = [32, 240], strides = [1, 1]} : vector<32x256xf32> to vector<32x240xf32>
      %226 = tpu.concatenate %224, %225 in 1 : vector<32x16xf32>, vector<32x240xf32> -> vector<32x256xf32>
      %c1_120 = arith.constant 1 : index
      %c0_121 = arith.constant 0 : index
      %c0_122 = arith.constant 0 : index
      %227 = vector.load %arg15[%c1_120, %c0_121, %c0_122] : memref<9x1x256xf32, #tpu.memory_space<vmem>>, vector<1x1x256xf32>
      %228 = vector.shape_cast %227 : vector<1x1x256xf32> to vector<1x256xf32>
      %229 = vector.broadcast %228 : vector<1x256xf32> to vector<32x256xf32>
      %230 = arith.mulf %226, %229 : vector<32x256xf32>
      %231 = vector.extract_strided_slice %arg18 {offsets = [0, 241], sizes = [32, 15], strides = [1, 1]} : vector<32x256xf32> to vector<32x15xf32>
      %232 = vector.extract_strided_slice %arg18 {offsets = [0, 0], sizes = [32, 241], strides = [1, 1]} : vector<32x256xf32> to vector<32x241xf32>
      %233 = tpu.concatenate %231, %232 in 1 : vector<32x15xf32>, vector<32x241xf32> -> vector<32x256xf32>
      %c2_123 = arith.constant 2 : index
      %c0_124 = arith.constant 0 : index
      %c0_125 = arith.constant 0 : index
      %234 = vector.load %arg15[%c2_123, %c0_124, %c0_125] : memref<9x1x256xf32, #tpu.memory_space<vmem>>, vector<1x1x256xf32>
      %235 = vector.shape_cast %234 : vector<1x1x256xf32> to vector<1x256xf32>
      %236 = vector.broadcast %235 : vector<1x256xf32> to vector<32x256xf32>
      %237 = arith.mulf %233, %236 : vector<32x256xf32>
      %238 = vector.extract_strided_slice %arg18 {offsets = [0, 255], sizes = [32, 1], strides = [1, 1]} : vector<32x256xf32> to vector<32x1xf32>
      %239 = vector.extract_strided_slice %arg18 {offsets = [0, 0], sizes = [32, 255], strides = [1, 1]} : vector<32x256xf32> to vector<32x255xf32>
      %240 = tpu.concatenate %238, %239 in 1 : vector<32x1xf32>, vector<32x255xf32> -> vector<32x256xf32>
      %c3_126 = arith.constant 3 : index
      %c0_127 = arith.constant 0 : index
      %c0_128 = arith.constant 0 : index
      %241 = vector.load %arg15[%c3_126, %c0_127, %c0_128] : memref<9x1x256xf32, #tpu.memory_space<vmem>>, vector<1x1x256xf32>
      %242 = vector.shape_cast %241 : vector<1x1x256xf32> to vector<1x256xf32>
      %243 = vector.broadcast %242 : vector<1x256xf32> to vector<32x256xf32>
      %244 = arith.mulf %240, %243 : vector<32x256xf32>
      %245 = vector.extract_strided_slice %arg18 {offsets = [0, 1], sizes = [32, 255], strides = [1, 1]} : vector<32x256xf32> to vector<32x255xf32>
      %246 = vector.extract_strided_slice %arg18 {offsets = [0, 0], sizes = [32, 1], strides = [1, 1]} : vector<32x256xf32> to vector<32x1xf32>
      %247 = tpu.concatenate %245, %246 in 1 : vector<32x255xf32>, vector<32x1xf32> -> vector<32x256xf32>
      %c5_129 = arith.constant 5 : index
      %c0_130 = arith.constant 0 : index
      %c0_131 = arith.constant 0 : index
      %248 = vector.load %arg15[%c5_129, %c0_130, %c0_131] : memref<9x1x256xf32, #tpu.memory_space<vmem>>, vector<1x1x256xf32>
      %249 = vector.shape_cast %248 : vector<1x1x256xf32> to vector<1x256xf32>
      %250 = vector.broadcast %249 : vector<1x256xf32> to vector<32x256xf32>
      %251 = arith.mulf %247, %250 : vector<32x256xf32>
      %252 = vector.extract_strided_slice %arg18 {offsets = [0, 15], sizes = [32, 241], strides = [1, 1]} : vector<32x256xf32> to vector<32x241xf32>
      %253 = vector.extract_strided_slice %arg18 {offsets = [0, 0], sizes = [32, 15], strides = [1, 1]} : vector<32x256xf32> to vector<32x15xf32>
      %254 = tpu.concatenate %252, %253 in 1 : vector<32x241xf32>, vector<32x15xf32> -> vector<32x256xf32>
      %c6_132 = arith.constant 6 : index
      %c0_133 = arith.constant 0 : index
      %c0_134 = arith.constant 0 : index
      %255 = vector.load %arg15[%c6_132, %c0_133, %c0_134] : memref<9x1x256xf32, #tpu.memory_space<vmem>>, vector<1x1x256xf32>
      %256 = vector.shape_cast %255 : vector<1x1x256xf32> to vector<1x256xf32>
      %257 = vector.broadcast %256 : vector<1x256xf32> to vector<32x256xf32>
      %258 = arith.mulf %254, %257 : vector<32x256xf32>
      %259 = vector.extract_strided_slice %arg18 {offsets = [0, 16], sizes = [32, 240], strides = [1, 1]} : vector<32x256xf32> to vector<32x240xf32>
      %260 = vector.extract_strided_slice %arg18 {offsets = [0, 0], sizes = [32, 16], strides = [1, 1]} : vector<32x256xf32> to vector<32x16xf32>
      %261 = tpu.concatenate %259, %260 in 1 : vector<32x240xf32>, vector<32x16xf32> -> vector<32x256xf32>
      %c7_135 = arith.constant 7 : index
      %c0_136 = arith.constant 0 : index
      %c0_137 = arith.constant 0 : index
      %262 = vector.load %arg15[%c7_135, %c0_136, %c0_137] : memref<9x1x256xf32, #tpu.memory_space<vmem>>, vector<1x1x256xf32>
      %263 = vector.shape_cast %262 : vector<1x1x256xf32> to vector<1x256xf32>
      %264 = vector.broadcast %263 : vector<1x256xf32> to vector<32x256xf32>
      %265 = arith.mulf %261, %264 : vector<32x256xf32>
      %266 = vector.extract_strided_slice %arg18 {offsets = [0, 17], sizes = [32, 239], strides = [1, 1]} : vector<32x256xf32> to vector<32x239xf32>
      %267 = vector.extract_strided_slice %arg18 {offsets = [0, 0], sizes = [32, 17], strides = [1, 1]} : vector<32x256xf32> to vector<32x17xf32>
      %268 = tpu.concatenate %266, %267 in 1 : vector<32x239xf32>, vector<32x17xf32> -> vector<32x256xf32>
      %c8_138 = arith.constant 8 : index
      %c0_139 = arith.constant 0 : index
      %c0_140 = arith.constant 0 : index
      %269 = vector.load %arg15[%c8_138, %c0_139, %c0_140] : memref<9x1x256xf32, #tpu.memory_space<vmem>>, vector<1x1x256xf32>
      %270 = vector.shape_cast %269 : vector<1x1x256xf32> to vector<1x256xf32>
      %271 = vector.broadcast %270 : vector<1x256xf32> to vector<32x256xf32>
      %272 = arith.mulf %268, %271 : vector<32x256xf32>
      %273 = tpu.concatenate %223, %230, %237, %244, %arg18, %251, %258, %265, %272 in 0 : vector<32x256xf32>, vector<32x256xf32>, vector<32x256xf32>, vector<32x256xf32>, vector<32x256xf32>, vector<32x256xf32>, vector<32x256xf32>, vector<32x256xf32>, vector<32x256xf32> -> vector<288x256xf32>
      %cst_141 = arith.constant dense<0.000000e+00> : vector<32x256xf32>
      %274 = tpu.matmul %216, %273, %cst_141 {dimension_numbers = #tpu.dot_dimension_numbers<[1], [0], [0], [1], [0, 0, 1, 1], [], []>} : vector<32x288xf32>, vector<288x256xf32>, vector<32x256xf32> -> vector<32x256xf32>
      %cst_142 = arith.constant 0.000000e+00 : f32
      %275 = vector.broadcast %cst_142 : f32 to vector<32x256xf32>
      %276 = arith.cmpf oge, %274, %275 : vector<32x256xf32>
      %cst_143 = arith.constant 2.500000e-01 : f32
      %277 = vector.broadcast %cst_143 : f32 to vector<32x256xf32>
      %278 = arith.mulf %277, %274 : vector<32x256xf32>
      %279 = arith.select %276, %274, %278 : vector<32x256xi1>, vector<32x256xf32>
      %280 = arith.index_cast %213 : i32 to index
      %c0_144 = arith.constant 0 : index
      %c0_145 = arith.constant 0 : index
      %281 = vector.load %arg6[%280, %c0_144, %c0_145] : memref<6x32x288xf32, #tpu.memory_space<vmem>>, vector<1x32x288xf32>
      %282 = vector.shape_cast %281 : vector<1x32x288xf32> to vector<32x288xf32>
      %283 = vector.extract_strided_slice %279 {offsets = [0, 239], sizes = [32, 17], strides = [1, 1]} : vector<32x256xf32> to vector<32x17xf32>
      %284 = vector.extract_strided_slice %279 {offsets = [0, 0], sizes = [32, 239], strides = [1, 1]} : vector<32x256xf32> to vector<32x239xf32>
      %285 = tpu.concatenate %283, %284 in 1 : vector<32x17xf32>, vector<32x239xf32> -> vector<32x256xf32>
      %c0_146 = arith.constant 0 : index
      %c0_147 = arith.constant 0 : index
      %c0_148 = arith.constant 0 : index
      %286 = vector.load %arg15[%c0_146, %c0_147, %c0_148] : memref<9x1x256xf32, #tpu.memory_space<vmem>>, vector<1x1x256xf32>
      %287 = vector.shape_cast %286 : vector<1x1x256xf32> to vector<1x256xf32>
      %288 = vector.broadcast %287 : vector<1x256xf32> to vector<32x256xf32>
      %289 = arith.mulf %285, %288 : vector<32x256xf32>
      %290 = vector.extract_strided_slice %279 {offsets = [0, 240], sizes = [32, 16], strides = [1, 1]} : vector<32x256xf32> to vector<32x16xf32>
      %291 = vector.extract_strided_slice %279 {offsets = [0, 0], sizes = [32, 240], strides = [1, 1]} : vector<32x256xf32> to vector<32x240xf32>
      %292 = tpu.concatenate %290, %291 in 1 : vector<32x16xf32>, vector<32x240xf32> -> vector<32x256xf32>
      %c1_149 = arith.constant 1 : index
      %c0_150 = arith.constant 0 : index
      %c0_151 = arith.constant 0 : index
      %293 = vector.load %arg15[%c1_149, %c0_150, %c0_151] : memref<9x1x256xf32, #tpu.memory_space<vmem>>, vector<1x1x256xf32>
      %294 = vector.shape_cast %293 : vector<1x1x256xf32> to vector<1x256xf32>
      %295 = vector.broadcast %294 : vector<1x256xf32> to vector<32x256xf32>
      %296 = arith.mulf %292, %295 : vector<32x256xf32>
      %297 = vector.extract_strided_slice %279 {offsets = [0, 241], sizes = [32, 15], strides = [1, 1]} : vector<32x256xf32> to vector<32x15xf32>
      %298 = vector.extract_strided_slice %279 {offsets = [0, 0], sizes = [32, 241], strides = [1, 1]} : vector<32x256xf32> to vector<32x241xf32>
      %299 = tpu.concatenate %297, %298 in 1 : vector<32x15xf32>, vector<32x241xf32> -> vector<32x256xf32>
      %c2_152 = arith.constant 2 : index
      %c0_153 = arith.constant 0 : index
      %c0_154 = arith.constant 0 : index
      %300 = vector.load %arg15[%c2_152, %c0_153, %c0_154] : memref<9x1x256xf32, #tpu.memory_space<vmem>>, vector<1x1x256xf32>
      %301 = vector.shape_cast %300 : vector<1x1x256xf32> to vector<1x256xf32>
      %302 = vector.broadcast %301 : vector<1x256xf32> to vector<32x256xf32>
      %303 = arith.mulf %299, %302 : vector<32x256xf32>
      %304 = vector.extract_strided_slice %279 {offsets = [0, 255], sizes = [32, 1], strides = [1, 1]} : vector<32x256xf32> to vector<32x1xf32>
      %305 = vector.extract_strided_slice %279 {offsets = [0, 0], sizes = [32, 255], strides = [1, 1]} : vector<32x256xf32> to vector<32x255xf32>
      %306 = tpu.concatenate %304, %305 in 1 : vector<32x1xf32>, vector<32x255xf32> -> vector<32x256xf32>
      %c3_155 = arith.constant 3 : index
      %c0_156 = arith.constant 0 : index
      %c0_157 = arith.constant 0 : index
      %307 = vector.load %arg15[%c3_155, %c0_156, %c0_157] : memref<9x1x256xf32, #tpu.memory_space<vmem>>, vector<1x1x256xf32>
      %308 = vector.shape_cast %307 : vector<1x1x256xf32> to vector<1x256xf32>
      %309 = vector.broadcast %308 : vector<1x256xf32> to vector<32x256xf32>
      %310 = arith.mulf %306, %309 : vector<32x256xf32>
      %311 = vector.extract_strided_slice %279 {offsets = [0, 1], sizes = [32, 255], strides = [1, 1]} : vector<32x256xf32> to vector<32x255xf32>
      %312 = vector.extract_strided_slice %279 {offsets = [0, 0], sizes = [32, 1], strides = [1, 1]} : vector<32x256xf32> to vector<32x1xf32>
      %313 = tpu.concatenate %311, %312 in 1 : vector<32x255xf32>, vector<32x1xf32> -> vector<32x256xf32>
      %c5_158 = arith.constant 5 : index
      %c0_159 = arith.constant 0 : index
      %c0_160 = arith.constant 0 : index
      %314 = vector.load %arg15[%c5_158, %c0_159, %c0_160] : memref<9x1x256xf32, #tpu.memory_space<vmem>>, vector<1x1x256xf32>
      %315 = vector.shape_cast %314 : vector<1x1x256xf32> to vector<1x256xf32>
      %316 = vector.broadcast %315 : vector<1x256xf32> to vector<32x256xf32>
      %317 = arith.mulf %313, %316 : vector<32x256xf32>
      %318 = vector.extract_strided_slice %279 {offsets = [0, 15], sizes = [32, 241], strides = [1, 1]} : vector<32x256xf32> to vector<32x241xf32>
      %319 = vector.extract_strided_slice %279 {offsets = [0, 0], sizes = [32, 15], strides = [1, 1]} : vector<32x256xf32> to vector<32x15xf32>
      %320 = tpu.concatenate %318, %319 in 1 : vector<32x241xf32>, vector<32x15xf32> -> vector<32x256xf32>
      %c6_161 = arith.constant 6 : index
      %c0_162 = arith.constant 0 : index
      %c0_163 = arith.constant 0 : index
      %321 = vector.load %arg15[%c6_161, %c0_162, %c0_163] : memref<9x1x256xf32, #tpu.memory_space<vmem>>, vector<1x1x256xf32>
      %322 = vector.shape_cast %321 : vector<1x1x256xf32> to vector<1x256xf32>
      %323 = vector.broadcast %322 : vector<1x256xf32> to vector<32x256xf32>
      %324 = arith.mulf %320, %323 : vector<32x256xf32>
      %325 = vector.extract_strided_slice %279 {offsets = [0, 16], sizes = [32, 240], strides = [1, 1]} : vector<32x256xf32> to vector<32x240xf32>
      %326 = vector.extract_strided_slice %279 {offsets = [0, 0], sizes = [32, 16], strides = [1, 1]} : vector<32x256xf32> to vector<32x16xf32>
      %327 = tpu.concatenate %325, %326 in 1 : vector<32x240xf32>, vector<32x16xf32> -> vector<32x256xf32>
      %c7_164 = arith.constant 7 : index
      %c0_165 = arith.constant 0 : index
      %c0_166 = arith.constant 0 : index
      %328 = vector.load %arg15[%c7_164, %c0_165, %c0_166] : memref<9x1x256xf32, #tpu.memory_space<vmem>>, vector<1x1x256xf32>
      %329 = vector.shape_cast %328 : vector<1x1x256xf32> to vector<1x256xf32>
      %330 = vector.broadcast %329 : vector<1x256xf32> to vector<32x256xf32>
      %331 = arith.mulf %327, %330 : vector<32x256xf32>
      %332 = vector.extract_strided_slice %279 {offsets = [0, 17], sizes = [32, 239], strides = [1, 1]} : vector<32x256xf32> to vector<32x239xf32>
      %333 = vector.extract_strided_slice %279 {offsets = [0, 0], sizes = [32, 17], strides = [1, 1]} : vector<32x256xf32> to vector<32x17xf32>
      %334 = tpu.concatenate %332, %333 in 1 : vector<32x239xf32>, vector<32x17xf32> -> vector<32x256xf32>
      %c8_167 = arith.constant 8 : index
      %c0_168 = arith.constant 0 : index
      %c0_169 = arith.constant 0 : index
      %335 = vector.load %arg15[%c8_167, %c0_168, %c0_169] : memref<9x1x256xf32, #tpu.memory_space<vmem>>, vector<1x1x256xf32>
      %336 = vector.shape_cast %335 : vector<1x1x256xf32> to vector<1x256xf32>
      %337 = vector.broadcast %336 : vector<1x256xf32> to vector<32x256xf32>
      %338 = arith.mulf %334, %337 : vector<32x256xf32>
      %339 = tpu.concatenate %289, %296, %303, %310, %279, %317, %324, %331, %338 in 0 : vector<32x256xf32>, vector<32x256xf32>, vector<32x256xf32>, vector<32x256xf32>, vector<32x256xf32>, vector<32x256xf32>, vector<32x256xf32>, vector<32x256xf32>, vector<32x256xf32> -> vector<288x256xf32>
      %cst_170 = arith.constant dense<0.000000e+00> : vector<32x256xf32>
      %340 = tpu.matmul %282, %339, %cst_170 {dimension_numbers = #tpu.dot_dimension_numbers<[1], [0], [0], [1], [0, 0, 1, 1], [], []>} : vector<32x288xf32>, vector<288x256xf32>, vector<32x256xf32> -> vector<32x256xf32>
      %cst_171 = arith.constant dense<0.000000e+00> : vector<32xf32>
      %341 = vector.multi_reduction <add>, %340, %cst_171 [1] : vector<32x256xf32> to vector<32xf32>
      %342 = vector.shape_cast %341 : vector<32xf32> to vector<32x1xf32>
      %cst_172 = arith.constant 2.560000e+02 : f32
      %343 = vector.broadcast %cst_172 : f32 to vector<32x1xf32>
      %344 = arith.divf %342, %343 : vector<32x1xf32>
      %345 = arith.index_cast %213 : i32 to index
      %c0_173 = arith.constant 0 : index
      %c0_174 = arith.constant 0 : index
      %346 = vector.load %arg7[%345, %c0_173, %c0_174] : memref<6x32x8xf32, #tpu.memory_space<vmem>>, vector<1x32x8xf32>
      %347 = vector.shape_cast %346 : vector<1x32x8xf32> to vector<32x8xf32>
      %348 = vector.broadcast %344 : vector<32x1xf32> to vector<32x8xf32>
      %349 = arith.mulf %347, %348 : vector<32x8xf32>
      %cst_175 = arith.constant dense<0.000000e+00> : vector<8xf32>
      %350 = vector.multi_reduction <add>, %349, %cst_175 [0] : vector<32x8xf32> to vector<8xf32>
      %351 = vector.shape_cast %350 : vector<8xf32> to vector<1x8xf32>
      %cst_176 = arith.constant 0.000000e+00 : f32
      %352 = vector.broadcast %cst_176 : f32 to vector<1x8xf32>
      %353 = arith.maximumf %351, %352 : vector<1x8xf32>
      %354 = arith.index_cast %213 : i32 to index
      %c0_177 = arith.constant 0 : index
      %c0_178 = arith.constant 0 : index
      %355 = vector.load %arg8[%354, %c0_177, %c0_178] : memref<6x32x8xf32, #tpu.memory_space<vmem>>, vector<1x32x8xf32>
      %356 = vector.shape_cast %355 : vector<1x32x8xf32> to vector<32x8xf32>
      %357 = vector.broadcast %353 : vector<1x8xf32> to vector<32x8xf32>
      %358 = arith.mulf %356, %357 : vector<32x8xf32>
      %cst_179 = arith.constant dense<0.000000e+00> : vector<32xf32>
      %359 = vector.multi_reduction <add>, %358, %cst_179 [1] : vector<32x8xf32> to vector<32xf32>
      %360 = vector.shape_cast %359 : vector<32xf32> to vector<32x1xf32>
      %361 = arith.negf %360 : vector<32x1xf32>
      %362 = math.exp %361 : vector<32x1xf32>
      %cst_180 = arith.constant 1.000000e+00 : f32
      %363 = vector.broadcast %cst_180 : f32 to vector<32x1xf32>
      %364 = arith.addf %363, %362 : vector<32x1xf32>
      %365 = arith.divf %363, %364 : vector<32x1xf32>
      %366 = vector.broadcast %365 : vector<32x1xf32> to vector<32x256xf32>
      %367 = arith.mulf %340, %366 : vector<32x256xf32>
      %368 = arith.addf %367, %arg18 : vector<32x256xf32>
      scf.yield %368 : vector<32x256xf32>
    }
    %c2_i32_2 = arith.constant 2 : i32
    %c0_3 = arith.constant 0 : index
    %c0_4 = arith.constant 0 : index
    %c0_5 = arith.constant 0 : index
    %4 = vector.load %arg9[%c0_3, %c0_4, %c0_5] : memref<3x32x288xf32, #tpu.memory_space<vmem>>, vector<1x32x288xf32>
    %5 = vector.shape_cast %4 : vector<1x32x288xf32> to vector<32x288xf32>
    %6 = vector.extract_strided_slice %3 {offsets = [0, 239], sizes = [32, 17], strides = [1, 1]} : vector<32x256xf32> to vector<32x17xf32>
    %7 = vector.extract_strided_slice %3 {offsets = [0, 0], sizes = [32, 239], strides = [1, 1]} : vector<32x256xf32> to vector<32x239xf32>
    %8 = tpu.concatenate %6, %7 in 1 : vector<32x17xf32>, vector<32x239xf32> -> vector<32x256xf32>
    %c0_6 = arith.constant 0 : index
    %c0_7 = arith.constant 0 : index
    %c0_8 = arith.constant 0 : index
    %9 = vector.load %arg15[%c0_6, %c0_7, %c0_8] : memref<9x1x256xf32, #tpu.memory_space<vmem>>, vector<1x1x256xf32>
    %10 = vector.shape_cast %9 : vector<1x1x256xf32> to vector<1x256xf32>
    %11 = vector.broadcast %10 : vector<1x256xf32> to vector<32x256xf32>
    %12 = arith.mulf %8, %11 : vector<32x256xf32>
    %13 = vector.extract_strided_slice %3 {offsets = [0, 240], sizes = [32, 16], strides = [1, 1]} : vector<32x256xf32> to vector<32x16xf32>
    %14 = vector.extract_strided_slice %3 {offsets = [0, 0], sizes = [32, 240], strides = [1, 1]} : vector<32x256xf32> to vector<32x240xf32>
    %15 = tpu.concatenate %13, %14 in 1 : vector<32x16xf32>, vector<32x240xf32> -> vector<32x256xf32>
    %c1 = arith.constant 1 : index
    %c0_9 = arith.constant 0 : index
    %c0_10 = arith.constant 0 : index
    %16 = vector.load %arg15[%c1, %c0_9, %c0_10] : memref<9x1x256xf32, #tpu.memory_space<vmem>>, vector<1x1x256xf32>
    %17 = vector.shape_cast %16 : vector<1x1x256xf32> to vector<1x256xf32>
    %18 = vector.broadcast %17 : vector<1x256xf32> to vector<32x256xf32>
    %19 = arith.mulf %15, %18 : vector<32x256xf32>
    %20 = vector.extract_strided_slice %3 {offsets = [0, 241], sizes = [32, 15], strides = [1, 1]} : vector<32x256xf32> to vector<32x15xf32>
    %21 = vector.extract_strided_slice %3 {offsets = [0, 0], sizes = [32, 241], strides = [1, 1]} : vector<32x256xf32> to vector<32x241xf32>
    %22 = tpu.concatenate %20, %21 in 1 : vector<32x15xf32>, vector<32x241xf32> -> vector<32x256xf32>
    %c2 = arith.constant 2 : index
    %c0_11 = arith.constant 0 : index
    %c0_12 = arith.constant 0 : index
    %23 = vector.load %arg15[%c2, %c0_11, %c0_12] : memref<9x1x256xf32, #tpu.memory_space<vmem>>, vector<1x1x256xf32>
    %24 = vector.shape_cast %23 : vector<1x1x256xf32> to vector<1x256xf32>
    %25 = vector.broadcast %24 : vector<1x256xf32> to vector<32x256xf32>
    %26 = arith.mulf %22, %25 : vector<32x256xf32>
    %27 = vector.extract_strided_slice %3 {offsets = [0, 255], sizes = [32, 1], strides = [1, 1]} : vector<32x256xf32> to vector<32x1xf32>
    %28 = vector.extract_strided_slice %3 {offsets = [0, 0], sizes = [32, 255], strides = [1, 1]} : vector<32x256xf32> to vector<32x255xf32>
    %29 = tpu.concatenate %27, %28 in 1 : vector<32x1xf32>, vector<32x255xf32> -> vector<32x256xf32>
    %c3 = arith.constant 3 : index
    %c0_13 = arith.constant 0 : index
    %c0_14 = arith.constant 0 : index
    %30 = vector.load %arg15[%c3, %c0_13, %c0_14] : memref<9x1x256xf32, #tpu.memory_space<vmem>>, vector<1x1x256xf32>
    %31 = vector.shape_cast %30 : vector<1x1x256xf32> to vector<1x256xf32>
    %32 = vector.broadcast %31 : vector<1x256xf32> to vector<32x256xf32>
    %33 = arith.mulf %29, %32 : vector<32x256xf32>
    %34 = vector.extract_strided_slice %3 {offsets = [0, 1], sizes = [32, 255], strides = [1, 1]} : vector<32x256xf32> to vector<32x255xf32>
    %35 = vector.extract_strided_slice %3 {offsets = [0, 0], sizes = [32, 1], strides = [1, 1]} : vector<32x256xf32> to vector<32x1xf32>
    %36 = tpu.concatenate %34, %35 in 1 : vector<32x255xf32>, vector<32x1xf32> -> vector<32x256xf32>
    %c5 = arith.constant 5 : index
    %c0_15 = arith.constant 0 : index
    %c0_16 = arith.constant 0 : index
    %37 = vector.load %arg15[%c5, %c0_15, %c0_16] : memref<9x1x256xf32, #tpu.memory_space<vmem>>, vector<1x1x256xf32>
    %38 = vector.shape_cast %37 : vector<1x1x256xf32> to vector<1x256xf32>
    %39 = vector.broadcast %38 : vector<1x256xf32> to vector<32x256xf32>
    %40 = arith.mulf %36, %39 : vector<32x256xf32>
    %41 = vector.extract_strided_slice %3 {offsets = [0, 15], sizes = [32, 241], strides = [1, 1]} : vector<32x256xf32> to vector<32x241xf32>
    %42 = vector.extract_strided_slice %3 {offsets = [0, 0], sizes = [32, 15], strides = [1, 1]} : vector<32x256xf32> to vector<32x15xf32>
    %43 = tpu.concatenate %41, %42 in 1 : vector<32x241xf32>, vector<32x15xf32> -> vector<32x256xf32>
    %c6 = arith.constant 6 : index
    %c0_17 = arith.constant 0 : index
    %c0_18 = arith.constant 0 : index
    %44 = vector.load %arg15[%c6, %c0_17, %c0_18] : memref<9x1x256xf32, #tpu.memory_space<vmem>>, vector<1x1x256xf32>
    %45 = vector.shape_cast %44 : vector<1x1x256xf32> to vector<1x256xf32>
    %46 = vector.broadcast %45 : vector<1x256xf32> to vector<32x256xf32>
    %47 = arith.mulf %43, %46 : vector<32x256xf32>
    %48 = vector.extract_strided_slice %3 {offsets = [0, 16], sizes = [32, 240], strides = [1, 1]} : vector<32x256xf32> to vector<32x240xf32>
    %49 = vector.extract_strided_slice %3 {offsets = [0, 0], sizes = [32, 16], strides = [1, 1]} : vector<32x256xf32> to vector<32x16xf32>
    %50 = tpu.concatenate %48, %49 in 1 : vector<32x240xf32>, vector<32x16xf32> -> vector<32x256xf32>
    %c7 = arith.constant 7 : index
    %c0_19 = arith.constant 0 : index
    %c0_20 = arith.constant 0 : index
    %51 = vector.load %arg15[%c7, %c0_19, %c0_20] : memref<9x1x256xf32, #tpu.memory_space<vmem>>, vector<1x1x256xf32>
    %52 = vector.shape_cast %51 : vector<1x1x256xf32> to vector<1x256xf32>
    %53 = vector.broadcast %52 : vector<1x256xf32> to vector<32x256xf32>
    %54 = arith.mulf %50, %53 : vector<32x256xf32>
    %55 = vector.extract_strided_slice %3 {offsets = [0, 17], sizes = [32, 239], strides = [1, 1]} : vector<32x256xf32> to vector<32x239xf32>
    %56 = vector.extract_strided_slice %3 {offsets = [0, 0], sizes = [32, 17], strides = [1, 1]} : vector<32x256xf32> to vector<32x17xf32>
    %57 = tpu.concatenate %55, %56 in 1 : vector<32x239xf32>, vector<32x17xf32> -> vector<32x256xf32>
    %c8 = arith.constant 8 : index
    %c0_21 = arith.constant 0 : index
    %c0_22 = arith.constant 0 : index
    %58 = vector.load %arg15[%c8, %c0_21, %c0_22] : memref<9x1x256xf32, #tpu.memory_space<vmem>>, vector<1x1x256xf32>
    %59 = vector.shape_cast %58 : vector<1x1x256xf32> to vector<1x256xf32>
    %60 = vector.broadcast %59 : vector<1x256xf32> to vector<32x256xf32>
    %61 = arith.mulf %57, %60 : vector<32x256xf32>
    %62 = tpu.concatenate %12, %19, %26, %33, %3, %40, %47, %54, %61 in 0 : vector<32x256xf32>, vector<32x256xf32>, vector<32x256xf32>, vector<32x256xf32>, vector<32x256xf32>, vector<32x256xf32>, vector<32x256xf32>, vector<32x256xf32>, vector<32x256xf32> -> vector<288x256xf32>
    %cst = arith.constant dense<0.000000e+00> : vector<32x256xf32>
    %63 = tpu.matmul %5, %62, %cst {dimension_numbers = #tpu.dot_dimension_numbers<[1], [0], [0], [1], [0, 0, 1, 1], [], []>} : vector<32x288xf32>, vector<288x256xf32>, vector<32x256xf32> -> vector<32x256xf32>
    %64 = arith.addf %63, %1 : vector<32x256xf32>
    %c0_23 = arith.constant 0 : index
    %c0_24 = arith.constant 0 : index
    %65 = vector.load %arg10[%c0_23, %c0_24] : memref<32x64xf32, #tpu.memory_space<vmem>>, vector<32x64xf32>
    %c0_25 = arith.constant 0 : index
    %c0_26 = arith.constant 0 : index
    %c0_27 = arith.constant 0 : index
    %66 = vector.load %arg2[%c0_25, %c0_26, %c0_27] : memref<1x64x256xf32, #tpu.memory_space<vmem>>, vector<1x64x256xf32>
    %67 = vector.shape_cast %66 : vector<1x64x256xf32> to vector<64x256xf32>
    %cst_28 = arith.constant dense<0.000000e+00> : vector<32x256xf32>
    %68 = tpu.matmul %65, %67, %cst_28 {dimension_numbers = #tpu.dot_dimension_numbers<[1], [0], [0], [1], [0, 0, 1, 1], [], []>} : vector<32x64xf32>, vector<64x256xf32>, vector<32x256xf32> -> vector<32x256xf32>
    %69 = arith.addf %64, %68 : vector<32x256xf32>
    %c0_i32_29 = arith.constant 0 : i32
    %c2_i32_30 = arith.constant 2 : i32
    %70 = arith.addi %c0_i32_29, %c2_i32_30 : i32
    %c1_i32_31 = arith.constant 1 : i32
    %71 = scf.for %arg17 = %c0_i32_29 to %70 step %c1_i32_31 iter_args(%arg18 = %69) -> (vector<32x256xf32>)  : i32 {
      %c2_i32_114 = arith.constant 2 : i32
      %213 = arith.addi %c2_i32_114, %arg17 : i32
      %214 = arith.index_cast %213 : i32 to index
      %c0_115 = arith.constant 0 : index
      %c0_116 = arith.constant 0 : index
      %215 = vector.load %arg5[%214, %c0_115, %c0_116] : memref<6x32x288xf32, #tpu.memory_space<vmem>>, vector<1x32x288xf32>
      %216 = vector.shape_cast %215 : vector<1x32x288xf32> to vector<32x288xf32>
      %217 = vector.extract_strided_slice %arg18 {offsets = [0, 239], sizes = [32, 17], strides = [1, 1]} : vector<32x256xf32> to vector<32x17xf32>
      %218 = vector.extract_strided_slice %arg18 {offsets = [0, 0], sizes = [32, 239], strides = [1, 1]} : vector<32x256xf32> to vector<32x239xf32>
      %219 = tpu.concatenate %217, %218 in 1 : vector<32x17xf32>, vector<32x239xf32> -> vector<32x256xf32>
      %c0_117 = arith.constant 0 : index
      %c0_118 = arith.constant 0 : index
      %c0_119 = arith.constant 0 : index
      %220 = vector.load %arg15[%c0_117, %c0_118, %c0_119] : memref<9x1x256xf32, #tpu.memory_space<vmem>>, vector<1x1x256xf32>
      %221 = vector.shape_cast %220 : vector<1x1x256xf32> to vector<1x256xf32>
      %222 = vector.broadcast %221 : vector<1x256xf32> to vector<32x256xf32>
      %223 = arith.mulf %219, %222 : vector<32x256xf32>
      %224 = vector.extract_strided_slice %arg18 {offsets = [0, 240], sizes = [32, 16], strides = [1, 1]} : vector<32x256xf32> to vector<32x16xf32>
      %225 = vector.extract_strided_slice %arg18 {offsets = [0, 0], sizes = [32, 240], strides = [1, 1]} : vector<32x256xf32> to vector<32x240xf32>
      %226 = tpu.concatenate %224, %225 in 1 : vector<32x16xf32>, vector<32x240xf32> -> vector<32x256xf32>
      %c1_120 = arith.constant 1 : index
      %c0_121 = arith.constant 0 : index
      %c0_122 = arith.constant 0 : index
      %227 = vector.load %arg15[%c1_120, %c0_121, %c0_122] : memref<9x1x256xf32, #tpu.memory_space<vmem>>, vector<1x1x256xf32>
      %228 = vector.shape_cast %227 : vector<1x1x256xf32> to vector<1x256xf32>
      %229 = vector.broadcast %228 : vector<1x256xf32> to vector<32x256xf32>
      %230 = arith.mulf %226, %229 : vector<32x256xf32>
      %231 = vector.extract_strided_slice %arg18 {offsets = [0, 241], sizes = [32, 15], strides = [1, 1]} : vector<32x256xf32> to vector<32x15xf32>
      %232 = vector.extract_strided_slice %arg18 {offsets = [0, 0], sizes = [32, 241], strides = [1, 1]} : vector<32x256xf32> to vector<32x241xf32>
      %233 = tpu.concatenate %231, %232 in 1 : vector<32x15xf32>, vector<32x241xf32> -> vector<32x256xf32>
      %c2_123 = arith.constant 2 : index
      %c0_124 = arith.constant 0 : index
      %c0_125 = arith.constant 0 : index
      %234 = vector.load %arg15[%c2_123, %c0_124, %c0_125] : memref<9x1x256xf32, #tpu.memory_space<vmem>>, vector<1x1x256xf32>
      %235 = vector.shape_cast %234 : vector<1x1x256xf32> to vector<1x256xf32>
      %236 = vector.broadcast %235 : vector<1x256xf32> to vector<32x256xf32>
      %237 = arith.mulf %233, %236 : vector<32x256xf32>
      %238 = vector.extract_strided_slice %arg18 {offsets = [0, 255], sizes = [32, 1], strides = [1, 1]} : vector<32x256xf32> to vector<32x1xf32>
      %239 = vector.extract_strided_slice %arg18 {offsets = [0, 0], sizes = [32, 255], strides = [1, 1]} : vector<32x256xf32> to vector<32x255xf32>
      %240 = tpu.concatenate %238, %239 in 1 : vector<32x1xf32>, vector<32x255xf32> -> vector<32x256xf32>
      %c3_126 = arith.constant 3 : index
      %c0_127 = arith.constant 0 : index
      %c0_128 = arith.constant 0 : index
      %241 = vector.load %arg15[%c3_126, %c0_127, %c0_128] : memref<9x1x256xf32, #tpu.memory_space<vmem>>, vector<1x1x256xf32>
      %242 = vector.shape_cast %241 : vector<1x1x256xf32> to vector<1x256xf32>
      %243 = vector.broadcast %242 : vector<1x256xf32> to vector<32x256xf32>
      %244 = arith.mulf %240, %243 : vector<32x256xf32>
      %245 = vector.extract_strided_slice %arg18 {offsets = [0, 1], sizes = [32, 255], strides = [1, 1]} : vector<32x256xf32> to vector<32x255xf32>
      %246 = vector.extract_strided_slice %arg18 {offsets = [0, 0], sizes = [32, 1], strides = [1, 1]} : vector<32x256xf32> to vector<32x1xf32>
      %247 = tpu.concatenate %245, %246 in 1 : vector<32x255xf32>, vector<32x1xf32> -> vector<32x256xf32>
      %c5_129 = arith.constant 5 : index
      %c0_130 = arith.constant 0 : index
      %c0_131 = arith.constant 0 : index
      %248 = vector.load %arg15[%c5_129, %c0_130, %c0_131] : memref<9x1x256xf32, #tpu.memory_space<vmem>>, vector<1x1x256xf32>
      %249 = vector.shape_cast %248 : vector<1x1x256xf32> to vector<1x256xf32>
      %250 = vector.broadcast %249 : vector<1x256xf32> to vector<32x256xf32>
      %251 = arith.mulf %247, %250 : vector<32x256xf32>
      %252 = vector.extract_strided_slice %arg18 {offsets = [0, 15], sizes = [32, 241], strides = [1, 1]} : vector<32x256xf32> to vector<32x241xf32>
      %253 = vector.extract_strided_slice %arg18 {offsets = [0, 0], sizes = [32, 15], strides = [1, 1]} : vector<32x256xf32> to vector<32x15xf32>
      %254 = tpu.concatenate %252, %253 in 1 : vector<32x241xf32>, vector<32x15xf32> -> vector<32x256xf32>
      %c6_132 = arith.constant 6 : index
      %c0_133 = arith.constant 0 : index
      %c0_134 = arith.constant 0 : index
      %255 = vector.load %arg15[%c6_132, %c0_133, %c0_134] : memref<9x1x256xf32, #tpu.memory_space<vmem>>, vector<1x1x256xf32>
      %256 = vector.shape_cast %255 : vector<1x1x256xf32> to vector<1x256xf32>
      %257 = vector.broadcast %256 : vector<1x256xf32> to vector<32x256xf32>
      %258 = arith.mulf %254, %257 : vector<32x256xf32>
      %259 = vector.extract_strided_slice %arg18 {offsets = [0, 16], sizes = [32, 240], strides = [1, 1]} : vector<32x256xf32> to vector<32x240xf32>
      %260 = vector.extract_strided_slice %arg18 {offsets = [0, 0], sizes = [32, 16], strides = [1, 1]} : vector<32x256xf32> to vector<32x16xf32>
      %261 = tpu.concatenate %259, %260 in 1 : vector<32x240xf32>, vector<32x16xf32> -> vector<32x256xf32>
      %c7_135 = arith.constant 7 : index
      %c0_136 = arith.constant 0 : index
      %c0_137 = arith.constant 0 : index
      %262 = vector.load %arg15[%c7_135, %c0_136, %c0_137] : memref<9x1x256xf32, #tpu.memory_space<vmem>>, vector<1x1x256xf32>
      %263 = vector.shape_cast %262 : vector<1x1x256xf32> to vector<1x256xf32>
      %264 = vector.broadcast %263 : vector<1x256xf32> to vector<32x256xf32>
      %265 = arith.mulf %261, %264 : vector<32x256xf32>
      %266 = vector.extract_strided_slice %arg18 {offsets = [0, 17], sizes = [32, 239], strides = [1, 1]} : vector<32x256xf32> to vector<32x239xf32>
      %267 = vector.extract_strided_slice %arg18 {offsets = [0, 0], sizes = [32, 17], strides = [1, 1]} : vector<32x256xf32> to vector<32x17xf32>
      %268 = tpu.concatenate %266, %267 in 1 : vector<32x239xf32>, vector<32x17xf32> -> vector<32x256xf32>
      %c8_138 = arith.constant 8 : index
      %c0_139 = arith.constant 0 : index
      %c0_140 = arith.constant 0 : index
      %269 = vector.load %arg15[%c8_138, %c0_139, %c0_140] : memref<9x1x256xf32, #tpu.memory_space<vmem>>, vector<1x1x256xf32>
      %270 = vector.shape_cast %269 : vector<1x1x256xf32> to vector<1x256xf32>
      %271 = vector.broadcast %270 : vector<1x256xf32> to vector<32x256xf32>
      %272 = arith.mulf %268, %271 : vector<32x256xf32>
      %273 = tpu.concatenate %223, %230, %237, %244, %arg18, %251, %258, %265, %272 in 0 : vector<32x256xf32>, vector<32x256xf32>, vector<32x256xf32>, vector<32x256xf32>, vector<32x256xf32>, vector<32x256xf32>, vector<32x256xf32>, vector<32x256xf32>, vector<32x256xf32> -> vector<288x256xf32>
      %cst_141 = arith.constant dense<0.000000e+00> : vector<32x256xf32>
      %274 = tpu.matmul %216, %273, %cst_141 {dimension_numbers = #tpu.dot_dimension_numbers<[1], [0], [0], [1], [0, 0, 1, 1], [], []>} : vector<32x288xf32>, vector<288x256xf32>, vector<32x256xf32> -> vector<32x256xf32>
      %cst_142 = arith.constant 0.000000e+00 : f32
      %275 = vector.broadcast %cst_142 : f32 to vector<32x256xf32>
      %276 = arith.cmpf oge, %274, %275 : vector<32x256xf32>
      %cst_143 = arith.constant 2.500000e-01 : f32
      %277 = vector.broadcast %cst_143 : f32 to vector<32x256xf32>
      %278 = arith.mulf %277, %274 : vector<32x256xf32>
      %279 = arith.select %276, %274, %278 : vector<32x256xi1>, vector<32x256xf32>
      %280 = arith.index_cast %213 : i32 to index
      %c0_144 = arith.constant 0 : index
      %c0_145 = arith.constant 0 : index
      %281 = vector.load %arg6[%280, %c0_144, %c0_145] : memref<6x32x288xf32, #tpu.memory_space<vmem>>, vector<1x32x288xf32>
      %282 = vector.shape_cast %281 : vector<1x32x288xf32> to vector<32x288xf32>
      %283 = vector.extract_strided_slice %279 {offsets = [0, 239], sizes = [32, 17], strides = [1, 1]} : vector<32x256xf32> to vector<32x17xf32>
      %284 = vector.extract_strided_slice %279 {offsets = [0, 0], sizes = [32, 239], strides = [1, 1]} : vector<32x256xf32> to vector<32x239xf32>
      %285 = tpu.concatenate %283, %284 in 1 : vector<32x17xf32>, vector<32x239xf32> -> vector<32x256xf32>
      %c0_146 = arith.constant 0 : index
      %c0_147 = arith.constant 0 : index
      %c0_148 = arith.constant 0 : index
      %286 = vector.load %arg15[%c0_146, %c0_147, %c0_148] : memref<9x1x256xf32, #tpu.memory_space<vmem>>, vector<1x1x256xf32>
      %287 = vector.shape_cast %286 : vector<1x1x256xf32> to vector<1x256xf32>
      %288 = vector.broadcast %287 : vector<1x256xf32> to vector<32x256xf32>
      %289 = arith.mulf %285, %288 : vector<32x256xf32>
      %290 = vector.extract_strided_slice %279 {offsets = [0, 240], sizes = [32, 16], strides = [1, 1]} : vector<32x256xf32> to vector<32x16xf32>
      %291 = vector.extract_strided_slice %279 {offsets = [0, 0], sizes = [32, 240], strides = [1, 1]} : vector<32x256xf32> to vector<32x240xf32>
      %292 = tpu.concatenate %290, %291 in 1 : vector<32x16xf32>, vector<32x240xf32> -> vector<32x256xf32>
      %c1_149 = arith.constant 1 : index
      %c0_150 = arith.constant 0 : index
      %c0_151 = arith.constant 0 : index
      %293 = vector.load %arg15[%c1_149, %c0_150, %c0_151] : memref<9x1x256xf32, #tpu.memory_space<vmem>>, vector<1x1x256xf32>
      %294 = vector.shape_cast %293 : vector<1x1x256xf32> to vector<1x256xf32>
      %295 = vector.broadcast %294 : vector<1x256xf32> to vector<32x256xf32>
      %296 = arith.mulf %292, %295 : vector<32x256xf32>
      %297 = vector.extract_strided_slice %279 {offsets = [0, 241], sizes = [32, 15], strides = [1, 1]} : vector<32x256xf32> to vector<32x15xf32>
      %298 = vector.extract_strided_slice %279 {offsets = [0, 0], sizes = [32, 241], strides = [1, 1]} : vector<32x256xf32> to vector<32x241xf32>
      %299 = tpu.concatenate %297, %298 in 1 : vector<32x15xf32>, vector<32x241xf32> -> vector<32x256xf32>
      %c2_152 = arith.constant 2 : index
      %c0_153 = arith.constant 0 : index
      %c0_154 = arith.constant 0 : index
      %300 = vector.load %arg15[%c2_152, %c0_153, %c0_154] : memref<9x1x256xf32, #tpu.memory_space<vmem>>, vector<1x1x256xf32>
      %301 = vector.shape_cast %300 : vector<1x1x256xf32> to vector<1x256xf32>
      %302 = vector.broadcast %301 : vector<1x256xf32> to vector<32x256xf32>
      %303 = arith.mulf %299, %302 : vector<32x256xf32>
      %304 = vector.extract_strided_slice %279 {offsets = [0, 255], sizes = [32, 1], strides = [1, 1]} : vector<32x256xf32> to vector<32x1xf32>
      %305 = vector.extract_strided_slice %279 {offsets = [0, 0], sizes = [32, 255], strides = [1, 1]} : vector<32x256xf32> to vector<32x255xf32>
      %306 = tpu.concatenate %304, %305 in 1 : vector<32x1xf32>, vector<32x255xf32> -> vector<32x256xf32>
      %c3_155 = arith.constant 3 : index
      %c0_156 = arith.constant 0 : index
      %c0_157 = arith.constant 0 : index
      %307 = vector.load %arg15[%c3_155, %c0_156, %c0_157] : memref<9x1x256xf32, #tpu.memory_space<vmem>>, vector<1x1x256xf32>
      %308 = vector.shape_cast %307 : vector<1x1x256xf32> to vector<1x256xf32>
      %309 = vector.broadcast %308 : vector<1x256xf32> to vector<32x256xf32>
      %310 = arith.mulf %306, %309 : vector<32x256xf32>
      %311 = vector.extract_strided_slice %279 {offsets = [0, 1], sizes = [32, 255], strides = [1, 1]} : vector<32x256xf32> to vector<32x255xf32>
      %312 = vector.extract_strided_slice %279 {offsets = [0, 0], sizes = [32, 1], strides = [1, 1]} : vector<32x256xf32> to vector<32x1xf32>
      %313 = tpu.concatenate %311, %312 in 1 : vector<32x255xf32>, vector<32x1xf32> -> vector<32x256xf32>
      %c5_158 = arith.constant 5 : index
      %c0_159 = arith.constant 0 : index
      %c0_160 = arith.constant 0 : index
      %314 = vector.load %arg15[%c5_158, %c0_159, %c0_160] : memref<9x1x256xf32, #tpu.memory_space<vmem>>, vector<1x1x256xf32>
      %315 = vector.shape_cast %314 : vector<1x1x256xf32> to vector<1x256xf32>
      %316 = vector.broadcast %315 : vector<1x256xf32> to vector<32x256xf32>
      %317 = arith.mulf %313, %316 : vector<32x256xf32>
      %318 = vector.extract_strided_slice %279 {offsets = [0, 15], sizes = [32, 241], strides = [1, 1]} : vector<32x256xf32> to vector<32x241xf32>
      %319 = vector.extract_strided_slice %279 {offsets = [0, 0], sizes = [32, 15], strides = [1, 1]} : vector<32x256xf32> to vector<32x15xf32>
      %320 = tpu.concatenate %318, %319 in 1 : vector<32x241xf32>, vector<32x15xf32> -> vector<32x256xf32>
      %c6_161 = arith.constant 6 : index
      %c0_162 = arith.constant 0 : index
      %c0_163 = arith.constant 0 : index
      %321 = vector.load %arg15[%c6_161, %c0_162, %c0_163] : memref<9x1x256xf32, #tpu.memory_space<vmem>>, vector<1x1x256xf32>
      %322 = vector.shape_cast %321 : vector<1x1x256xf32> to vector<1x256xf32>
      %323 = vector.broadcast %322 : vector<1x256xf32> to vector<32x256xf32>
      %324 = arith.mulf %320, %323 : vector<32x256xf32>
      %325 = vector.extract_strided_slice %279 {offsets = [0, 16], sizes = [32, 240], strides = [1, 1]} : vector<32x256xf32> to vector<32x240xf32>
      %326 = vector.extract_strided_slice %279 {offsets = [0, 0], sizes = [32, 16], strides = [1, 1]} : vector<32x256xf32> to vector<32x16xf32>
      %327 = tpu.concatenate %325, %326 in 1 : vector<32x240xf32>, vector<32x16xf32> -> vector<32x256xf32>
      %c7_164 = arith.constant 7 : index
      %c0_165 = arith.constant 0 : index
      %c0_166 = arith.constant 0 : index
      %328 = vector.load %arg15[%c7_164, %c0_165, %c0_166] : memref<9x1x256xf32, #tpu.memory_space<vmem>>, vector<1x1x256xf32>
      %329 = vector.shape_cast %328 : vector<1x1x256xf32> to vector<1x256xf32>
      %330 = vector.broadcast %329 : vector<1x256xf32> to vector<32x256xf32>
      %331 = arith.mulf %327, %330 : vector<32x256xf32>
      %332 = vector.extract_strided_slice %279 {offsets = [0, 17], sizes = [32, 239], strides = [1, 1]} : vector<32x256xf32> to vector<32x239xf32>
      %333 = vector.extract_strided_slice %279 {offsets = [0, 0], sizes = [32, 17], strides = [1, 1]} : vector<32x256xf32> to vector<32x17xf32>
      %334 = tpu.concatenate %332, %333 in 1 : vector<32x239xf32>, vector<32x17xf32> -> vector<32x256xf32>
      %c8_167 = arith.constant 8 : index
      %c0_168 = arith.constant 0 : index
      %c0_169 = arith.constant 0 : index
      %335 = vector.load %arg15[%c8_167, %c0_168, %c0_169] : memref<9x1x256xf32, #tpu.memory_space<vmem>>, vector<1x1x256xf32>
      %336 = vector.shape_cast %335 : vector<1x1x256xf32> to vector<1x256xf32>
      %337 = vector.broadcast %336 : vector<1x256xf32> to vector<32x256xf32>
      %338 = arith.mulf %334, %337 : vector<32x256xf32>
      %339 = tpu.concatenate %289, %296, %303, %310, %279, %317, %324, %331, %338 in 0 : vector<32x256xf32>, vector<32x256xf32>, vector<32x256xf32>, vector<32x256xf32>, vector<32x256xf32>, vector<32x256xf32>, vector<32x256xf32>, vector<32x256xf32>, vector<32x256xf32> -> vector<288x256xf32>
      %cst_170 = arith.constant dense<0.000000e+00> : vector<32x256xf32>
      %340 = tpu.matmul %282, %339, %cst_170 {dimension_numbers = #tpu.dot_dimension_numbers<[1], [0], [0], [1], [0, 0, 1, 1], [], []>} : vector<32x288xf32>, vector<288x256xf32>, vector<32x256xf32> -> vector<32x256xf32>
      %cst_171 = arith.constant dense<0.000000e+00> : vector<32xf32>
      %341 = vector.multi_reduction <add>, %340, %cst_171 [1] : vector<32x256xf32> to vector<32xf32>
      %342 = vector.shape_cast %341 : vector<32xf32> to vector<32x1xf32>
      %cst_172 = arith.constant 2.560000e+02 : f32
      %343 = vector.broadcast %cst_172 : f32 to vector<32x1xf32>
      %344 = arith.divf %342, %343 : vector<32x1xf32>
      %345 = arith.index_cast %213 : i32 to index
      %c0_173 = arith.constant 0 : index
      %c0_174 = arith.constant 0 : index
      %346 = vector.load %arg7[%345, %c0_173, %c0_174] : memref<6x32x8xf32, #tpu.memory_space<vmem>>, vector<1x32x8xf32>
      %347 = vector.shape_cast %346 : vector<1x32x8xf32> to vector<32x8xf32>
      %348 = vector.broadcast %344 : vector<32x1xf32> to vector<32x8xf32>
      %349 = arith.mulf %347, %348 : vector<32x8xf32>
      %cst_175 = arith.constant dense<0.000000e+00> : vector<8xf32>
      %350 = vector.multi_reduction <add>, %349, %cst_175 [0] : vector<32x8xf32> to vector<8xf32>
      %351 = vector.shape_cast %350 : vector<8xf32> to vector<1x8xf32>
      %cst_176 = arith.constant 0.000000e+00 : f32
      %352 = vector.broadcast %cst_176 : f32 to vector<1x8xf32>
      %353 = arith.maximumf %351, %352 : vector<1x8xf32>
      %354 = arith.index_cast %213 : i32 to index
      %c0_177 = arith.constant 0 : index
      %c0_178 = arith.constant 0 : index
      %355 = vector.load %arg8[%354, %c0_177, %c0_178] : memref<6x32x8xf32, #tpu.memory_space<vmem>>, vector<1x32x8xf32>
      %356 = vector.shape_cast %355 : vector<1x32x8xf32> to vector<32x8xf32>
      %357 = vector.broadcast %353 : vector<1x8xf32> to vector<32x8xf32>
      %358 = arith.mulf %356, %357 : vector<32x8xf32>
      %cst_179 = arith.constant dense<0.000000e+00> : vector<32xf32>
      %359 = vector.multi_reduction <add>, %358, %cst_179 [1] : vector<32x8xf32> to vector<32xf32>
      %360 = vector.shape_cast %359 : vector<32xf32> to vector<32x1xf32>
      %361 = arith.negf %360 : vector<32x1xf32>
      %362 = math.exp %361 : vector<32x1xf32>
      %cst_180 = arith.constant 1.000000e+00 : f32
      %363 = vector.broadcast %cst_180 : f32 to vector<32x1xf32>
      %364 = arith.addf %363, %362 : vector<32x1xf32>
      %365 = arith.divf %363, %364 : vector<32x1xf32>
      %366 = vector.broadcast %365 : vector<32x1xf32> to vector<32x256xf32>
      %367 = arith.mulf %340, %366 : vector<32x256xf32>
      %368 = arith.addf %367, %arg18 : vector<32x256xf32>
      scf.yield %368 : vector<32x256xf32>
    }
    %c2_i32_32 = arith.constant 2 : i32
    %c1_33 = arith.constant 1 : index
    %c0_34 = arith.constant 0 : index
    %c0_35 = arith.constant 0 : index
    %72 = vector.load %arg9[%c1_33, %c0_34, %c0_35] : memref<3x32x288xf32, #tpu.memory_space<vmem>>, vector<1x32x288xf32>
    %73 = vector.shape_cast %72 : vector<1x32x288xf32> to vector<32x288xf32>
    %74 = vector.extract_strided_slice %71 {offsets = [0, 239], sizes = [32, 17], strides = [1, 1]} : vector<32x256xf32> to vector<32x17xf32>
    %75 = vector.extract_strided_slice %71 {offsets = [0, 0], sizes = [32, 239], strides = [1, 1]} : vector<32x256xf32> to vector<32x239xf32>
    %76 = tpu.concatenate %74, %75 in 1 : vector<32x17xf32>, vector<32x239xf32> -> vector<32x256xf32>
    %c0_36 = arith.constant 0 : index
    %c0_37 = arith.constant 0 : index
    %c0_38 = arith.constant 0 : index
    %77 = vector.load %arg15[%c0_36, %c0_37, %c0_38] : memref<9x1x256xf32, #tpu.memory_space<vmem>>, vector<1x1x256xf32>
    %78 = vector.shape_cast %77 : vector<1x1x256xf32> to vector<1x256xf32>
    %79 = vector.broadcast %78 : vector<1x256xf32> to vector<32x256xf32>
    %80 = arith.mulf %76, %79 : vector<32x256xf32>
    %81 = vector.extract_strided_slice %71 {offsets = [0, 240], sizes = [32, 16], strides = [1, 1]} : vector<32x256xf32> to vector<32x16xf32>
    %82 = vector.extract_strided_slice %71 {offsets = [0, 0], sizes = [32, 240], strides = [1, 1]} : vector<32x256xf32> to vector<32x240xf32>
    %83 = tpu.concatenate %81, %82 in 1 : vector<32x16xf32>, vector<32x240xf32> -> vector<32x256xf32>
    %c1_39 = arith.constant 1 : index
    %c0_40 = arith.constant 0 : index
    %c0_41 = arith.constant 0 : index
    %84 = vector.load %arg15[%c1_39, %c0_40, %c0_41] : memref<9x1x256xf32, #tpu.memory_space<vmem>>, vector<1x1x256xf32>
    %85 = vector.shape_cast %84 : vector<1x1x256xf32> to vector<1x256xf32>
    %86 = vector.broadcast %85 : vector<1x256xf32> to vector<32x256xf32>
    %87 = arith.mulf %83, %86 : vector<32x256xf32>
    %88 = vector.extract_strided_slice %71 {offsets = [0, 241], sizes = [32, 15], strides = [1, 1]} : vector<32x256xf32> to vector<32x15xf32>
    %89 = vector.extract_strided_slice %71 {offsets = [0, 0], sizes = [32, 241], strides = [1, 1]} : vector<32x256xf32> to vector<32x241xf32>
    %90 = tpu.concatenate %88, %89 in 1 : vector<32x15xf32>, vector<32x241xf32> -> vector<32x256xf32>
    %c2_42 = arith.constant 2 : index
    %c0_43 = arith.constant 0 : index
    %c0_44 = arith.constant 0 : index
    %91 = vector.load %arg15[%c2_42, %c0_43, %c0_44] : memref<9x1x256xf32, #tpu.memory_space<vmem>>, vector<1x1x256xf32>
    %92 = vector.shape_cast %91 : vector<1x1x256xf32> to vector<1x256xf32>
    %93 = vector.broadcast %92 : vector<1x256xf32> to vector<32x256xf32>
    %94 = arith.mulf %90, %93 : vector<32x256xf32>
    %95 = vector.extract_strided_slice %71 {offsets = [0, 255], sizes = [32, 1], strides = [1, 1]} : vector<32x256xf32> to vector<32x1xf32>
    %96 = vector.extract_strided_slice %71 {offsets = [0, 0], sizes = [32, 255], strides = [1, 1]} : vector<32x256xf32> to vector<32x255xf32>
    %97 = tpu.concatenate %95, %96 in 1 : vector<32x1xf32>, vector<32x255xf32> -> vector<32x256xf32>
    %c3_45 = arith.constant 3 : index
    %c0_46 = arith.constant 0 : index
    %c0_47 = arith.constant 0 : index
    %98 = vector.load %arg15[%c3_45, %c0_46, %c0_47] : memref<9x1x256xf32, #tpu.memory_space<vmem>>, vector<1x1x256xf32>
    %99 = vector.shape_cast %98 : vector<1x1x256xf32> to vector<1x256xf32>
    %100 = vector.broadcast %99 : vector<1x256xf32> to vector<32x256xf32>
    %101 = arith.mulf %97, %100 : vector<32x256xf32>
    %102 = vector.extract_strided_slice %71 {offsets = [0, 1], sizes = [32, 255], strides = [1, 1]} : vector<32x256xf32> to vector<32x255xf32>
    %103 = vector.extract_strided_slice %71 {offsets = [0, 0], sizes = [32, 1], strides = [1, 1]} : vector<32x256xf32> to vector<32x1xf32>
    %104 = tpu.concatenate %102, %103 in 1 : vector<32x255xf32>, vector<32x1xf32> -> vector<32x256xf32>
    %c5_48 = arith.constant 5 : index
    %c0_49 = arith.constant 0 : index
    %c0_50 = arith.constant 0 : index
    %105 = vector.load %arg15[%c5_48, %c0_49, %c0_50] : memref<9x1x256xf32, #tpu.memory_space<vmem>>, vector<1x1x256xf32>
    %106 = vector.shape_cast %105 : vector<1x1x256xf32> to vector<1x256xf32>
    %107 = vector.broadcast %106 : vector<1x256xf32> to vector<32x256xf32>
    %108 = arith.mulf %104, %107 : vector<32x256xf32>
    %109 = vector.extract_strided_slice %71 {offsets = [0, 15], sizes = [32, 241], strides = [1, 1]} : vector<32x256xf32> to vector<32x241xf32>
    %110 = vector.extract_strided_slice %71 {offsets = [0, 0], sizes = [32, 15], strides = [1, 1]} : vector<32x256xf32> to vector<32x15xf32>
    %111 = tpu.concatenate %109, %110 in 1 : vector<32x241xf32>, vector<32x15xf32> -> vector<32x256xf32>
    %c6_51 = arith.constant 6 : index
    %c0_52 = arith.constant 0 : index
    %c0_53 = arith.constant 0 : index
    %112 = vector.load %arg15[%c6_51, %c0_52, %c0_53] : memref<9x1x256xf32, #tpu.memory_space<vmem>>, vector<1x1x256xf32>
    %113 = vector.shape_cast %112 : vector<1x1x256xf32> to vector<1x256xf32>
    %114 = vector.broadcast %113 : vector<1x256xf32> to vector<32x256xf32>
    %115 = arith.mulf %111, %114 : vector<32x256xf32>
    %116 = vector.extract_strided_slice %71 {offsets = [0, 16], sizes = [32, 240], strides = [1, 1]} : vector<32x256xf32> to vector<32x240xf32>
    %117 = vector.extract_strided_slice %71 {offsets = [0, 0], sizes = [32, 16], strides = [1, 1]} : vector<32x256xf32> to vector<32x16xf32>
    %118 = tpu.concatenate %116, %117 in 1 : vector<32x240xf32>, vector<32x16xf32> -> vector<32x256xf32>
    %c7_54 = arith.constant 7 : index
    %c0_55 = arith.constant 0 : index
    %c0_56 = arith.constant 0 : index
    %119 = vector.load %arg15[%c7_54, %c0_55, %c0_56] : memref<9x1x256xf32, #tpu.memory_space<vmem>>, vector<1x1x256xf32>
    %120 = vector.shape_cast %119 : vector<1x1x256xf32> to vector<1x256xf32>
    %121 = vector.broadcast %120 : vector<1x256xf32> to vector<32x256xf32>
    %122 = arith.mulf %118, %121 : vector<32x256xf32>
    %123 = vector.extract_strided_slice %71 {offsets = [0, 17], sizes = [32, 239], strides = [1, 1]} : vector<32x256xf32> to vector<32x239xf32>
    %124 = vector.extract_strided_slice %71 {offsets = [0, 0], sizes = [32, 17], strides = [1, 1]} : vector<32x256xf32> to vector<32x17xf32>
    %125 = tpu.concatenate %123, %124 in 1 : vector<32x239xf32>, vector<32x17xf32> -> vector<32x256xf32>
    %c8_57 = arith.constant 8 : index
    %c0_58 = arith.constant 0 : index
    %c0_59 = arith.constant 0 : index
    %126 = vector.load %arg15[%c8_57, %c0_58, %c0_59] : memref<9x1x256xf32, #tpu.memory_space<vmem>>, vector<1x1x256xf32>
    %127 = vector.shape_cast %126 : vector<1x1x256xf32> to vector<1x256xf32>
    %128 = vector.broadcast %127 : vector<1x256xf32> to vector<32x256xf32>
    %129 = arith.mulf %125, %128 : vector<32x256xf32>
    %130 = tpu.concatenate %80, %87, %94, %101, %71, %108, %115, %122, %129 in 0 : vector<32x256xf32>, vector<32x256xf32>, vector<32x256xf32>, vector<32x256xf32>, vector<32x256xf32>, vector<32x256xf32>, vector<32x256xf32>, vector<32x256xf32>, vector<32x256xf32> -> vector<288x256xf32>
    %cst_60 = arith.constant dense<0.000000e+00> : vector<32x256xf32>
    %131 = tpu.matmul %73, %130, %cst_60 {dimension_numbers = #tpu.dot_dimension_numbers<[1], [0], [0], [1], [0, 0, 1, 1], [], []>} : vector<32x288xf32>, vector<288x256xf32>, vector<32x256xf32> -> vector<32x256xf32>
    %132 = arith.addf %131, %69 : vector<32x256xf32>
    %c0_61 = arith.constant 0 : index
    %c0_62 = arith.constant 0 : index
    %133 = vector.load %arg11[%c0_61, %c0_62] : memref<32x96xf32, #tpu.memory_space<vmem>>, vector<32x96xf32>
    %c0_63 = arith.constant 0 : index
    %c0_64 = arith.constant 0 : index
    %c0_65 = arith.constant 0 : index
    %134 = vector.load %arg3[%c0_63, %c0_64, %c0_65] : memref<1x96x64xf32, #tpu.memory_space<vmem>>, vector<1x96x64xf32>
    %135 = vector.shape_cast %134 : vector<1x96x64xf32> to vector<96x64xf32>
    %cst_66 = arith.constant dense<0.000000e+00> : vector<32x64xf32>
    %136 = tpu.matmul %133, %135, %cst_66 {dimension_numbers = #tpu.dot_dimension_numbers<[1], [0], [0], [1], [0, 0, 1, 1], [], []>} : vector<32x96xf32>, vector<96x64xf32>, vector<32x64xf32> -> vector<32x64xf32>
    %c0_67 = arith.constant 0 : index
    %c0_68 = arith.constant 0 : index
    %137 = vector.load %arg13[%c0_67, %c0_68] : memref<64x256xf32, #tpu.memory_space<vmem>>, vector<64x256xf32>
    %cst_69 = arith.constant dense<0.000000e+00> : vector<32x256xf32>
    %138 = tpu.matmul %136, %137, %cst_69 {dimension_numbers = #tpu.dot_dimension_numbers<[1], [0], [0], [1], [0, 0, 1, 1], [], []>} : vector<32x64xf32>, vector<64x256xf32>, vector<32x256xf32> -> vector<32x256xf32>
    %139 = arith.addf %132, %138 : vector<32x256xf32>
    %c0_i32_70 = arith.constant 0 : i32
    %c2_i32_71 = arith.constant 2 : i32
    %140 = arith.addi %c0_i32_70, %c2_i32_71 : i32
    %c1_i32_72 = arith.constant 1 : i32
    %141 = scf.for %arg17 = %c0_i32_70 to %140 step %c1_i32_72 iter_args(%arg18 = %139) -> (vector<32x256xf32>)  : i32 {
      %c4_i32 = arith.constant 4 : i32
      %213 = arith.addi %c4_i32, %arg17 : i32
      %214 = arith.index_cast %213 : i32 to index
      %c0_114 = arith.constant 0 : index
      %c0_115 = arith.constant 0 : index
      %215 = vector.load %arg5[%214, %c0_114, %c0_115] : memref<6x32x288xf32, #tpu.memory_space<vmem>>, vector<1x32x288xf32>
      %216 = vector.shape_cast %215 : vector<1x32x288xf32> to vector<32x288xf32>
      %217 = vector.extract_strided_slice %arg18 {offsets = [0, 239], sizes = [32, 17], strides = [1, 1]} : vector<32x256xf32> to vector<32x17xf32>
      %218 = vector.extract_strided_slice %arg18 {offsets = [0, 0], sizes = [32, 239], strides = [1, 1]} : vector<32x256xf32> to vector<32x239xf32>
      %219 = tpu.concatenate %217, %218 in 1 : vector<32x17xf32>, vector<32x239xf32> -> vector<32x256xf32>
      %c0_116 = arith.constant 0 : index
      %c0_117 = arith.constant 0 : index
      %c0_118 = arith.constant 0 : index
      %220 = vector.load %arg15[%c0_116, %c0_117, %c0_118] : memref<9x1x256xf32, #tpu.memory_space<vmem>>, vector<1x1x256xf32>
      %221 = vector.shape_cast %220 : vector<1x1x256xf32> to vector<1x256xf32>
      %222 = vector.broadcast %221 : vector<1x256xf32> to vector<32x256xf32>
      %223 = arith.mulf %219, %222 : vector<32x256xf32>
      %224 = vector.extract_strided_slice %arg18 {offsets = [0, 240], sizes = [32, 16], strides = [1, 1]} : vector<32x256xf32> to vector<32x16xf32>
      %225 = vector.extract_strided_slice %arg18 {offsets = [0, 0], sizes = [32, 240], strides = [1, 1]} : vector<32x256xf32> to vector<32x240xf32>
      %226 = tpu.concatenate %224, %225 in 1 : vector<32x16xf32>, vector<32x240xf32> -> vector<32x256xf32>
      %c1_119 = arith.constant 1 : index
      %c0_120 = arith.constant 0 : index
      %c0_121 = arith.constant 0 : index
      %227 = vector.load %arg15[%c1_119, %c0_120, %c0_121] : memref<9x1x256xf32, #tpu.memory_space<vmem>>, vector<1x1x256xf32>
      %228 = vector.shape_cast %227 : vector<1x1x256xf32> to vector<1x256xf32>
      %229 = vector.broadcast %228 : vector<1x256xf32> to vector<32x256xf32>
      %230 = arith.mulf %226, %229 : vector<32x256xf32>
      %231 = vector.extract_strided_slice %arg18 {offsets = [0, 241], sizes = [32, 15], strides = [1, 1]} : vector<32x256xf32> to vector<32x15xf32>
      %232 = vector.extract_strided_slice %arg18 {offsets = [0, 0], sizes = [32, 241], strides = [1, 1]} : vector<32x256xf32> to vector<32x241xf32>
      %233 = tpu.concatenate %231, %232 in 1 : vector<32x15xf32>, vector<32x241xf32> -> vector<32x256xf32>
      %c2_122 = arith.constant 2 : index
      %c0_123 = arith.constant 0 : index
      %c0_124 = arith.constant 0 : index
      %234 = vector.load %arg15[%c2_122, %c0_123, %c0_124] : memref<9x1x256xf32, #tpu.memory_space<vmem>>, vector<1x1x256xf32>
      %235 = vector.shape_cast %234 : vector<1x1x256xf32> to vector<1x256xf32>
      %236 = vector.broadcast %235 : vector<1x256xf32> to vector<32x256xf32>
      %237 = arith.mulf %233, %236 : vector<32x256xf32>
      %238 = vector.extract_strided_slice %arg18 {offsets = [0, 255], sizes = [32, 1], strides = [1, 1]} : vector<32x256xf32> to vector<32x1xf32>
      %239 = vector.extract_strided_slice %arg18 {offsets = [0, 0], sizes = [32, 255], strides = [1, 1]} : vector<32x256xf32> to vector<32x255xf32>
      %240 = tpu.concatenate %238, %239 in 1 : vector<32x1xf32>, vector<32x255xf32> -> vector<32x256xf32>
      %c3_125 = arith.constant 3 : index
      %c0_126 = arith.constant 0 : index
      %c0_127 = arith.constant 0 : index
      %241 = vector.load %arg15[%c3_125, %c0_126, %c0_127] : memref<9x1x256xf32, #tpu.memory_space<vmem>>, vector<1x1x256xf32>
      %242 = vector.shape_cast %241 : vector<1x1x256xf32> to vector<1x256xf32>
      %243 = vector.broadcast %242 : vector<1x256xf32> to vector<32x256xf32>
      %244 = arith.mulf %240, %243 : vector<32x256xf32>
      %245 = vector.extract_strided_slice %arg18 {offsets = [0, 1], sizes = [32, 255], strides = [1, 1]} : vector<32x256xf32> to vector<32x255xf32>
      %246 = vector.extract_strided_slice %arg18 {offsets = [0, 0], sizes = [32, 1], strides = [1, 1]} : vector<32x256xf32> to vector<32x1xf32>
      %247 = tpu.concatenate %245, %246 in 1 : vector<32x255xf32>, vector<32x1xf32> -> vector<32x256xf32>
      %c5_128 = arith.constant 5 : index
      %c0_129 = arith.constant 0 : index
      %c0_130 = arith.constant 0 : index
      %248 = vector.load %arg15[%c5_128, %c0_129, %c0_130] : memref<9x1x256xf32, #tpu.memory_space<vmem>>, vector<1x1x256xf32>
      %249 = vector.shape_cast %248 : vector<1x1x256xf32> to vector<1x256xf32>
      %250 = vector.broadcast %249 : vector<1x256xf32> to vector<32x256xf32>
      %251 = arith.mulf %247, %250 : vector<32x256xf32>
      %252 = vector.extract_strided_slice %arg18 {offsets = [0, 15], sizes = [32, 241], strides = [1, 1]} : vector<32x256xf32> to vector<32x241xf32>
      %253 = vector.extract_strided_slice %arg18 {offsets = [0, 0], sizes = [32, 15], strides = [1, 1]} : vector<32x256xf32> to vector<32x15xf32>
      %254 = tpu.concatenate %252, %253 in 1 : vector<32x241xf32>, vector<32x15xf32> -> vector<32x256xf32>
      %c6_131 = arith.constant 6 : index
      %c0_132 = arith.constant 0 : index
      %c0_133 = arith.constant 0 : index
      %255 = vector.load %arg15[%c6_131, %c0_132, %c0_133] : memref<9x1x256xf32, #tpu.memory_space<vmem>>, vector<1x1x256xf32>
      %256 = vector.shape_cast %255 : vector<1x1x256xf32> to vector<1x256xf32>
      %257 = vector.broadcast %256 : vector<1x256xf32> to vector<32x256xf32>
      %258 = arith.mulf %254, %257 : vector<32x256xf32>
      %259 = vector.extract_strided_slice %arg18 {offsets = [0, 16], sizes = [32, 240], strides = [1, 1]} : vector<32x256xf32> to vector<32x240xf32>
      %260 = vector.extract_strided_slice %arg18 {offsets = [0, 0], sizes = [32, 16], strides = [1, 1]} : vector<32x256xf32> to vector<32x16xf32>
      %261 = tpu.concatenate %259, %260 in 1 : vector<32x240xf32>, vector<32x16xf32> -> vector<32x256xf32>
      %c7_134 = arith.constant 7 : index
      %c0_135 = arith.constant 0 : index
      %c0_136 = arith.constant 0 : index
      %262 = vector.load %arg15[%c7_134, %c0_135, %c0_136] : memref<9x1x256xf32, #tpu.memory_space<vmem>>, vector<1x1x256xf32>
      %263 = vector.shape_cast %262 : vector<1x1x256xf32> to vector<1x256xf32>
      %264 = vector.broadcast %263 : vector<1x256xf32> to vector<32x256xf32>
      %265 = arith.mulf %261, %264 : vector<32x256xf32>
      %266 = vector.extract_strided_slice %arg18 {offsets = [0, 17], sizes = [32, 239], strides = [1, 1]} : vector<32x256xf32> to vector<32x239xf32>
      %267 = vector.extract_strided_slice %arg18 {offsets = [0, 0], sizes = [32, 17], strides = [1, 1]} : vector<32x256xf32> to vector<32x17xf32>
      %268 = tpu.concatenate %266, %267 in 1 : vector<32x239xf32>, vector<32x17xf32> -> vector<32x256xf32>
      %c8_137 = arith.constant 8 : index
      %c0_138 = arith.constant 0 : index
      %c0_139 = arith.constant 0 : index
      %269 = vector.load %arg15[%c8_137, %c0_138, %c0_139] : memref<9x1x256xf32, #tpu.memory_space<vmem>>, vector<1x1x256xf32>
      %270 = vector.shape_cast %269 : vector<1x1x256xf32> to vector<1x256xf32>
      %271 = vector.broadcast %270 : vector<1x256xf32> to vector<32x256xf32>
      %272 = arith.mulf %268, %271 : vector<32x256xf32>
      %273 = tpu.concatenate %223, %230, %237, %244, %arg18, %251, %258, %265, %272 in 0 : vector<32x256xf32>, vector<32x256xf32>, vector<32x256xf32>, vector<32x256xf32>, vector<32x256xf32>, vector<32x256xf32>, vector<32x256xf32>, vector<32x256xf32>, vector<32x256xf32> -> vector<288x256xf32>
      %cst_140 = arith.constant dense<0.000000e+00> : vector<32x256xf32>
      %274 = tpu.matmul %216, %273, %cst_140 {dimension_numbers = #tpu.dot_dimension_numbers<[1], [0], [0], [1], [0, 0, 1, 1], [], []>} : vector<32x288xf32>, vector<288x256xf32>, vector<32x256xf32> -> vector<32x256xf32>
      %cst_141 = arith.constant 0.000000e+00 : f32
      %275 = vector.broadcast %cst_141 : f32 to vector<32x256xf32>
      %276 = arith.cmpf oge, %274, %275 : vector<32x256xf32>
      %cst_142 = arith.constant 2.500000e-01 : f32
      %277 = vector.broadcast %cst_142 : f32 to vector<32x256xf32>
      %278 = arith.mulf %277, %274 : vector<32x256xf32>
      %279 = arith.select %276, %274, %278 : vector<32x256xi1>, vector<32x256xf32>
      %280 = arith.index_cast %213 : i32 to index
      %c0_143 = arith.constant 0 : index
      %c0_144 = arith.constant 0 : index
      %281 = vector.load %arg6[%280, %c0_143, %c0_144] : memref<6x32x288xf32, #tpu.memory_space<vmem>>, vector<1x32x288xf32>
      %282 = vector.shape_cast %281 : vector<1x32x288xf32> to vector<32x288xf32>
      %283 = vector.extract_strided_slice %279 {offsets = [0, 239], sizes = [32, 17], strides = [1, 1]} : vector<32x256xf32> to vector<32x17xf32>
      %284 = vector.extract_strided_slice %279 {offsets = [0, 0], sizes = [32, 239], strides = [1, 1]} : vector<32x256xf32> to vector<32x239xf32>
      %285 = tpu.concatenate %283, %284 in 1 : vector<32x17xf32>, vector<32x239xf32> -> vector<32x256xf32>
      %c0_145 = arith.constant 0 : index
      %c0_146 = arith.constant 0 : index
      %c0_147 = arith.constant 0 : index
      %286 = vector.load %arg15[%c0_145, %c0_146, %c0_147] : memref<9x1x256xf32, #tpu.memory_space<vmem>>, vector<1x1x256xf32>
      %287 = vector.shape_cast %286 : vector<1x1x256xf32> to vector<1x256xf32>
      %288 = vector.broadcast %287 : vector<1x256xf32> to vector<32x256xf32>
      %289 = arith.mulf %285, %288 : vector<32x256xf32>
      %290 = vector.extract_strided_slice %279 {offsets = [0, 240], sizes = [32, 16], strides = [1, 1]} : vector<32x256xf32> to vector<32x16xf32>
      %291 = vector.extract_strided_slice %279 {offsets = [0, 0], sizes = [32, 240], strides = [1, 1]} : vector<32x256xf32> to vector<32x240xf32>
      %292 = tpu.concatenate %290, %291 in 1 : vector<32x16xf32>, vector<32x240xf32> -> vector<32x256xf32>
      %c1_148 = arith.constant 1 : index
      %c0_149 = arith.constant 0 : index
      %c0_150 = arith.constant 0 : index
      %293 = vector.load %arg15[%c1_148, %c0_149, %c0_150] : memref<9x1x256xf32, #tpu.memory_space<vmem>>, vector<1x1x256xf32>
      %294 = vector.shape_cast %293 : vector<1x1x256xf32> to vector<1x256xf32>
      %295 = vector.broadcast %294 : vector<1x256xf32> to vector<32x256xf32>
      %296 = arith.mulf %292, %295 : vector<32x256xf32>
      %297 = vector.extract_strided_slice %279 {offsets = [0, 241], sizes = [32, 15], strides = [1, 1]} : vector<32x256xf32> to vector<32x15xf32>
      %298 = vector.extract_strided_slice %279 {offsets = [0, 0], sizes = [32, 241], strides = [1, 1]} : vector<32x256xf32> to vector<32x241xf32>
      %299 = tpu.concatenate %297, %298 in 1 : vector<32x15xf32>, vector<32x241xf32> -> vector<32x256xf32>
      %c2_151 = arith.constant 2 : index
      %c0_152 = arith.constant 0 : index
      %c0_153 = arith.constant 0 : index
      %300 = vector.load %arg15[%c2_151, %c0_152, %c0_153] : memref<9x1x256xf32, #tpu.memory_space<vmem>>, vector<1x1x256xf32>
      %301 = vector.shape_cast %300 : vector<1x1x256xf32> to vector<1x256xf32>
      %302 = vector.broadcast %301 : vector<1x256xf32> to vector<32x256xf32>
      %303 = arith.mulf %299, %302 : vector<32x256xf32>
      %304 = vector.extract_strided_slice %279 {offsets = [0, 255], sizes = [32, 1], strides = [1, 1]} : vector<32x256xf32> to vector<32x1xf32>
      %305 = vector.extract_strided_slice %279 {offsets = [0, 0], sizes = [32, 255], strides = [1, 1]} : vector<32x256xf32> to vector<32x255xf32>
      %306 = tpu.concatenate %304, %305 in 1 : vector<32x1xf32>, vector<32x255xf32> -> vector<32x256xf32>
      %c3_154 = arith.constant 3 : index
      %c0_155 = arith.constant 0 : index
      %c0_156 = arith.constant 0 : index
      %307 = vector.load %arg15[%c3_154, %c0_155, %c0_156] : memref<9x1x256xf32, #tpu.memory_space<vmem>>, vector<1x1x256xf32>
      %308 = vector.shape_cast %307 : vector<1x1x256xf32> to vector<1x256xf32>
      %309 = vector.broadcast %308 : vector<1x256xf32> to vector<32x256xf32>
      %310 = arith.mulf %306, %309 : vector<32x256xf32>
      %311 = vector.extract_strided_slice %279 {offsets = [0, 1], sizes = [32, 255], strides = [1, 1]} : vector<32x256xf32> to vector<32x255xf32>
      %312 = vector.extract_strided_slice %279 {offsets = [0, 0], sizes = [32, 1], strides = [1, 1]} : vector<32x256xf32> to vector<32x1xf32>
      %313 = tpu.concatenate %311, %312 in 1 : vector<32x255xf32>, vector<32x1xf32> -> vector<32x256xf32>
      %c5_157 = arith.constant 5 : index
      %c0_158 = arith.constant 0 : index
      %c0_159 = arith.constant 0 : index
      %314 = vector.load %arg15[%c5_157, %c0_158, %c0_159] : memref<9x1x256xf32, #tpu.memory_space<vmem>>, vector<1x1x256xf32>
      %315 = vector.shape_cast %314 : vector<1x1x256xf32> to vector<1x256xf32>
      %316 = vector.broadcast %315 : vector<1x256xf32> to vector<32x256xf32>
      %317 = arith.mulf %313, %316 : vector<32x256xf32>
      %318 = vector.extract_strided_slice %279 {offsets = [0, 15], sizes = [32, 241], strides = [1, 1]} : vector<32x256xf32> to vector<32x241xf32>
      %319 = vector.extract_strided_slice %279 {offsets = [0, 0], sizes = [32, 15], strides = [1, 1]} : vector<32x256xf32> to vector<32x15xf32>
      %320 = tpu.concatenate %318, %319 in 1 : vector<32x241xf32>, vector<32x15xf32> -> vector<32x256xf32>
      %c6_160 = arith.constant 6 : index
      %c0_161 = arith.constant 0 : index
      %c0_162 = arith.constant 0 : index
      %321 = vector.load %arg15[%c6_160, %c0_161, %c0_162] : memref<9x1x256xf32, #tpu.memory_space<vmem>>, vector<1x1x256xf32>
      %322 = vector.shape_cast %321 : vector<1x1x256xf32> to vector<1x256xf32>
      %323 = vector.broadcast %322 : vector<1x256xf32> to vector<32x256xf32>
      %324 = arith.mulf %320, %323 : vector<32x256xf32>
      %325 = vector.extract_strided_slice %279 {offsets = [0, 16], sizes = [32, 240], strides = [1, 1]} : vector<32x256xf32> to vector<32x240xf32>
      %326 = vector.extract_strided_slice %279 {offsets = [0, 0], sizes = [32, 16], strides = [1, 1]} : vector<32x256xf32> to vector<32x16xf32>
      %327 = tpu.concatenate %325, %326 in 1 : vector<32x240xf32>, vector<32x16xf32> -> vector<32x256xf32>
      %c7_163 = arith.constant 7 : index
      %c0_164 = arith.constant 0 : index
      %c0_165 = arith.constant 0 : index
      %328 = vector.load %arg15[%c7_163, %c0_164, %c0_165] : memref<9x1x256xf32, #tpu.memory_space<vmem>>, vector<1x1x256xf32>
      %329 = vector.shape_cast %328 : vector<1x1x256xf32> to vector<1x256xf32>
      %330 = vector.broadcast %329 : vector<1x256xf32> to vector<32x256xf32>
      %331 = arith.mulf %327, %330 : vector<32x256xf32>
      %332 = vector.extract_strided_slice %279 {offsets = [0, 17], sizes = [32, 239], strides = [1, 1]} : vector<32x256xf32> to vector<32x239xf32>
      %333 = vector.extract_strided_slice %279 {offsets = [0, 0], sizes = [32, 17], strides = [1, 1]} : vector<32x256xf32> to vector<32x17xf32>
      %334 = tpu.concatenate %332, %333 in 1 : vector<32x239xf32>, vector<32x17xf32> -> vector<32x256xf32>
      %c8_166 = arith.constant 8 : index
      %c0_167 = arith.constant 0 : index
      %c0_168 = arith.constant 0 : index
      %335 = vector.load %arg15[%c8_166, %c0_167, %c0_168] : memref<9x1x256xf32, #tpu.memory_space<vmem>>, vector<1x1x256xf32>
      %336 = vector.shape_cast %335 : vector<1x1x256xf32> to vector<1x256xf32>
      %337 = vector.broadcast %336 : vector<1x256xf32> to vector<32x256xf32>
      %338 = arith.mulf %334, %337 : vector<32x256xf32>
      %339 = tpu.concatenate %289, %296, %303, %310, %279, %317, %324, %331, %338 in 0 : vector<32x256xf32>, vector<32x256xf32>, vector<32x256xf32>, vector<32x256xf32>, vector<32x256xf32>, vector<32x256xf32>, vector<32x256xf32>, vector<32x256xf32>, vector<32x256xf32> -> vector<288x256xf32>
      %cst_169 = arith.constant dense<0.000000e+00> : vector<32x256xf32>
      %340 = tpu.matmul %282, %339, %cst_169 {dimension_numbers = #tpu.dot_dimension_numbers<[1], [0], [0], [1], [0, 0, 1, 1], [], []>} : vector<32x288xf32>, vector<288x256xf32>, vector<32x256xf32> -> vector<32x256xf32>
      %cst_170 = arith.constant dense<0.000000e+00> : vector<32xf32>
      %341 = vector.multi_reduction <add>, %340, %cst_170 [1] : vector<32x256xf32> to vector<32xf32>
      %342 = vector.shape_cast %341 : vector<32xf32> to vector<32x1xf32>
      %cst_171 = arith.constant 2.560000e+02 : f32
      %343 = vector.broadcast %cst_171 : f32 to vector<32x1xf32>
      %344 = arith.divf %342, %343 : vector<32x1xf32>
      %345 = arith.index_cast %213 : i32 to index
      %c0_172 = arith.constant 0 : index
      %c0_173 = arith.constant 0 : index
      %346 = vector.load %arg7[%345, %c0_172, %c0_173] : memref<6x32x8xf32, #tpu.memory_space<vmem>>, vector<1x32x8xf32>
      %347 = vector.shape_cast %346 : vector<1x32x8xf32> to vector<32x8xf32>
      %348 = vector.broadcast %344 : vector<32x1xf32> to vector<32x8xf32>
      %349 = arith.mulf %347, %348 : vector<32x8xf32>
      %cst_174 = arith.constant dense<0.000000e+00> : vector<8xf32>
      %350 = vector.multi_reduction <add>, %349, %cst_174 [0] : vector<32x8xf32> to vector<8xf32>
      %351 = vector.shape_cast %350 : vector<8xf32> to vector<1x8xf32>
      %cst_175 = arith.constant 0.000000e+00 : f32
      %352 = vector.broadcast %cst_175 : f32 to vector<1x8xf32>
      %353 = arith.maximumf %351, %352 : vector<1x8xf32>
      %354 = arith.index_cast %213 : i32 to index
      %c0_176 = arith.constant 0 : index
      %c0_177 = arith.constant 0 : index
      %355 = vector.load %arg8[%354, %c0_176, %c0_177] : memref<6x32x8xf32, #tpu.memory_space<vmem>>, vector<1x32x8xf32>
      %356 = vector.shape_cast %355 : vector<1x32x8xf32> to vector<32x8xf32>
      %357 = vector.broadcast %353 : vector<1x8xf32> to vector<32x8xf32>
      %358 = arith.mulf %356, %357 : vector<32x8xf32>
      %cst_178 = arith.constant dense<0.000000e+00> : vector<32xf32>
      %359 = vector.multi_reduction <add>, %358, %cst_178 [1] : vector<32x8xf32> to vector<32xf32>
      %360 = vector.shape_cast %359 : vector<32xf32> to vector<32x1xf32>
      %361 = arith.negf %360 : vector<32x1xf32>
      %362 = math.exp %361 : vector<32x1xf32>
      %cst_179 = arith.constant 1.000000e+00 : f32
      %363 = vector.broadcast %cst_179 : f32 to vector<32x1xf32>
      %364 = arith.addf %363, %362 : vector<32x1xf32>
      %365 = arith.divf %363, %364 : vector<32x1xf32>
      %366 = vector.broadcast %365 : vector<32x1xf32> to vector<32x256xf32>
      %367 = arith.mulf %340, %366 : vector<32x256xf32>
      %368 = arith.addf %367, %arg18 : vector<32x256xf32>
      scf.yield %368 : vector<32x256xf32>
    }
    %c2_i32_73 = arith.constant 2 : i32
    %c2_74 = arith.constant 2 : index
    %c0_75 = arith.constant 0 : index
    %c0_76 = arith.constant 0 : index
    %142 = vector.load %arg9[%c2_74, %c0_75, %c0_76] : memref<3x32x288xf32, #tpu.memory_space<vmem>>, vector<1x32x288xf32>
    %143 = vector.shape_cast %142 : vector<1x32x288xf32> to vector<32x288xf32>
    %144 = vector.extract_strided_slice %141 {offsets = [0, 239], sizes = [32, 17], strides = [1, 1]} : vector<32x256xf32> to vector<32x17xf32>
    %145 = vector.extract_strided_slice %141 {offsets = [0, 0], sizes = [32, 239], strides = [1, 1]} : vector<32x256xf32> to vector<32x239xf32>
    %146 = tpu.concatenate %144, %145 in 1 : vector<32x17xf32>, vector<32x239xf32> -> vector<32x256xf32>
    %c0_77 = arith.constant 0 : index
    %c0_78 = arith.constant 0 : index
    %c0_79 = arith.constant 0 : index
    %147 = vector.load %arg15[%c0_77, %c0_78, %c0_79] : memref<9x1x256xf32, #tpu.memory_space<vmem>>, vector<1x1x256xf32>
    %148 = vector.shape_cast %147 : vector<1x1x256xf32> to vector<1x256xf32>
    %149 = vector.broadcast %148 : vector<1x256xf32> to vector<32x256xf32>
    %150 = arith.mulf %146, %149 : vector<32x256xf32>
    %151 = vector.extract_strided_slice %141 {offsets = [0, 240], sizes = [32, 16], strides = [1, 1]} : vector<32x256xf32> to vector<32x16xf32>
    %152 = vector.extract_strided_slice %141 {offsets = [0, 0], sizes = [32, 240], strides = [1, 1]} : vector<32x256xf32> to vector<32x240xf32>
    %153 = tpu.concatenate %151, %152 in 1 : vector<32x16xf32>, vector<32x240xf32> -> vector<32x256xf32>
    %c1_80 = arith.constant 1 : index
    %c0_81 = arith.constant 0 : index
    %c0_82 = arith.constant 0 : index
    %154 = vector.load %arg15[%c1_80, %c0_81, %c0_82] : memref<9x1x256xf32, #tpu.memory_space<vmem>>, vector<1x1x256xf32>
    %155 = vector.shape_cast %154 : vector<1x1x256xf32> to vector<1x256xf32>
    %156 = vector.broadcast %155 : vector<1x256xf32> to vector<32x256xf32>
    %157 = arith.mulf %153, %156 : vector<32x256xf32>
    %158 = vector.extract_strided_slice %141 {offsets = [0, 241], sizes = [32, 15], strides = [1, 1]} : vector<32x256xf32> to vector<32x15xf32>
    %159 = vector.extract_strided_slice %141 {offsets = [0, 0], sizes = [32, 241], strides = [1, 1]} : vector<32x256xf32> to vector<32x241xf32>
    %160 = tpu.concatenate %158, %159 in 1 : vector<32x15xf32>, vector<32x241xf32> -> vector<32x256xf32>
    %c2_83 = arith.constant 2 : index
    %c0_84 = arith.constant 0 : index
    %c0_85 = arith.constant 0 : index
    %161 = vector.load %arg15[%c2_83, %c0_84, %c0_85] : memref<9x1x256xf32, #tpu.memory_space<vmem>>, vector<1x1x256xf32>
    %162 = vector.shape_cast %161 : vector<1x1x256xf32> to vector<1x256xf32>
    %163 = vector.broadcast %162 : vector<1x256xf32> to vector<32x256xf32>
    %164 = arith.mulf %160, %163 : vector<32x256xf32>
    %165 = vector.extract_strided_slice %141 {offsets = [0, 255], sizes = [32, 1], strides = [1, 1]} : vector<32x256xf32> to vector<32x1xf32>
    %166 = vector.extract_strided_slice %141 {offsets = [0, 0], sizes = [32, 255], strides = [1, 1]} : vector<32x256xf32> to vector<32x255xf32>
    %167 = tpu.concatenate %165, %166 in 1 : vector<32x1xf32>, vector<32x255xf32> -> vector<32x256xf32>
    %c3_86 = arith.constant 3 : index
    %c0_87 = arith.constant 0 : index
    %c0_88 = arith.constant 0 : index
    %168 = vector.load %arg15[%c3_86, %c0_87, %c0_88] : memref<9x1x256xf32, #tpu.memory_space<vmem>>, vector<1x1x256xf32>
    %169 = vector.shape_cast %168 : vector<1x1x256xf32> to vector<1x256xf32>
    %170 = vector.broadcast %169 : vector<1x256xf32> to vector<32x256xf32>
    %171 = arith.mulf %167, %170 : vector<32x256xf32>
    %172 = vector.extract_strided_slice %141 {offsets = [0, 1], sizes = [32, 255], strides = [1, 1]} : vector<32x256xf32> to vector<32x255xf32>
    %173 = vector.extract_strided_slice %141 {offsets = [0, 0], sizes = [32, 1], strides = [1, 1]} : vector<32x256xf32> to vector<32x1xf32>
    %174 = tpu.concatenate %172, %173 in 1 : vector<32x255xf32>, vector<32x1xf32> -> vector<32x256xf32>
    %c5_89 = arith.constant 5 : index
    %c0_90 = arith.constant 0 : index
    %c0_91 = arith.constant 0 : index
    %175 = vector.load %arg15[%c5_89, %c0_90, %c0_91] : memref<9x1x256xf32, #tpu.memory_space<vmem>>, vector<1x1x256xf32>
    %176 = vector.shape_cast %175 : vector<1x1x256xf32> to vector<1x256xf32>
    %177 = vector.broadcast %176 : vector<1x256xf32> to vector<32x256xf32>
    %178 = arith.mulf %174, %177 : vector<32x256xf32>
    %179 = vector.extract_strided_slice %141 {offsets = [0, 15], sizes = [32, 241], strides = [1, 1]} : vector<32x256xf32> to vector<32x241xf32>
    %180 = vector.extract_strided_slice %141 {offsets = [0, 0], sizes = [32, 15], strides = [1, 1]} : vector<32x256xf32> to vector<32x15xf32>
    %181 = tpu.concatenate %179, %180 in 1 : vector<32x241xf32>, vector<32x15xf32> -> vector<32x256xf32>
    %c6_92 = arith.constant 6 : index
    %c0_93 = arith.constant 0 : index
    %c0_94 = arith.constant 0 : index
    %182 = vector.load %arg15[%c6_92, %c0_93, %c0_94] : memref<9x1x256xf32, #tpu.memory_space<vmem>>, vector<1x1x256xf32>
    %183 = vector.shape_cast %182 : vector<1x1x256xf32> to vector<1x256xf32>
    %184 = vector.broadcast %183 : vector<1x256xf32> to vector<32x256xf32>
    %185 = arith.mulf %181, %184 : vector<32x256xf32>
    %186 = vector.extract_strided_slice %141 {offsets = [0, 16], sizes = [32, 240], strides = [1, 1]} : vector<32x256xf32> to vector<32x240xf32>
    %187 = vector.extract_strided_slice %141 {offsets = [0, 0], sizes = [32, 16], strides = [1, 1]} : vector<32x256xf32> to vector<32x16xf32>
    %188 = tpu.concatenate %186, %187 in 1 : vector<32x240xf32>, vector<32x16xf32> -> vector<32x256xf32>
    %c7_95 = arith.constant 7 : index
    %c0_96 = arith.constant 0 : index
    %c0_97 = arith.constant 0 : index
    %189 = vector.load %arg15[%c7_95, %c0_96, %c0_97] : memref<9x1x256xf32, #tpu.memory_space<vmem>>, vector<1x1x256xf32>
    %190 = vector.shape_cast %189 : vector<1x1x256xf32> to vector<1x256xf32>
    %191 = vector.broadcast %190 : vector<1x256xf32> to vector<32x256xf32>
    %192 = arith.mulf %188, %191 : vector<32x256xf32>
    %193 = vector.extract_strided_slice %141 {offsets = [0, 17], sizes = [32, 239], strides = [1, 1]} : vector<32x256xf32> to vector<32x239xf32>
    %194 = vector.extract_strided_slice %141 {offsets = [0, 0], sizes = [32, 17], strides = [1, 1]} : vector<32x256xf32> to vector<32x17xf32>
    %195 = tpu.concatenate %193, %194 in 1 : vector<32x239xf32>, vector<32x17xf32> -> vector<32x256xf32>
    %c8_98 = arith.constant 8 : index
    %c0_99 = arith.constant 0 : index
    %c0_100 = arith.constant 0 : index
    %196 = vector.load %arg15[%c8_98, %c0_99, %c0_100] : memref<9x1x256xf32, #tpu.memory_space<vmem>>, vector<1x1x256xf32>
    %197 = vector.shape_cast %196 : vector<1x1x256xf32> to vector<1x256xf32>
    %198 = vector.broadcast %197 : vector<1x256xf32> to vector<32x256xf32>
    %199 = arith.mulf %195, %198 : vector<32x256xf32>
    %200 = tpu.concatenate %150, %157, %164, %171, %141, %178, %185, %192, %199 in 0 : vector<32x256xf32>, vector<32x256xf32>, vector<32x256xf32>, vector<32x256xf32>, vector<32x256xf32>, vector<32x256xf32>, vector<32x256xf32>, vector<32x256xf32>, vector<32x256xf32> -> vector<288x256xf32>
    %cst_101 = arith.constant dense<0.000000e+00> : vector<32x256xf32>
    %201 = tpu.matmul %143, %200, %cst_101 {dimension_numbers = #tpu.dot_dimension_numbers<[1], [0], [0], [1], [0, 0, 1, 1], [], []>} : vector<32x288xf32>, vector<288x256xf32>, vector<32x256xf32> -> vector<32x256xf32>
    %202 = arith.addf %201, %139 : vector<32x256xf32>
    %c0_102 = arith.constant 0 : index
    %c0_103 = arith.constant 0 : index
    %203 = vector.load %arg12[%c0_102, %c0_103] : memref<32x128xf32, #tpu.memory_space<vmem>>, vector<32x128xf32>
    %c0_104 = arith.constant 0 : index
    %c0_105 = arith.constant 0 : index
    %c0_106 = arith.constant 0 : index
    %204 = vector.load %arg4[%c0_104, %c0_105, %c0_106] : memref<1x128x16xf32, #tpu.memory_space<vmem>>, vector<1x128x16xf32>
    %205 = vector.shape_cast %204 : vector<1x128x16xf32> to vector<128x16xf32>
    %cst_107 = arith.constant dense<0.000000e+00> : vector<32x16xf32>
    %206 = tpu.matmul %203, %205, %cst_107 {dimension_numbers = #tpu.dot_dimension_numbers<[1], [0], [0], [1], [0, 0, 1, 1], [], []>} : vector<32x128xf32>, vector<128x16xf32>, vector<32x16xf32> -> vector<32x16xf32>
    %c0_108 = arith.constant 0 : index
    %c0_109 = arith.constant 0 : index
    %207 = vector.load %arg14[%c0_108, %c0_109] : memref<16x256xf32, #tpu.memory_space<vmem>>, vector<16x256xf32>
    %cst_110 = arith.constant dense<0.000000e+00> : vector<32x256xf32>
    %208 = tpu.matmul %206, %207, %cst_110 {dimension_numbers = #tpu.dot_dimension_numbers<[1], [0], [0], [1], [0, 0, 1, 1], [], []>} : vector<32x16xf32>, vector<16x256xf32>, vector<32x256xf32> -> vector<32x256xf32>
    %209 = arith.addf %202, %208 : vector<32x256xf32>
    %c0_111 = arith.constant 0 : index
    %c0_112 = arith.constant 0 : index
    %c0_113 = arith.constant 0 : index
    %210 = vector.load %arg16[%c0_111, %c0_112, %c0_113] : memref<1x32x256xf32, #tpu.memory_space<vmem>>, vector<1x32x256xf32>
    %211 = vector.shape_cast %210 : vector<1x32x256xf32> to vector<32x256xf32>
    %212 = vector.shape_cast %209 : vector<32x256xf32> to vector<1x32x256xf32>
    tpu.vector_store %arg16[%c0_111, %c0_112, %c0_113], %212 {strides = array<i32>} : memref<1x32x256xf32, #tpu.memory_space<vmem>>, vector<1x32x256xf32>,
    return
  }
  func.func @transform_0(%arg0: i32) -> (i32, i32, i32) {
    %c0_i32 = arith.constant 0 : i32
    %c0_i32_0 = arith.constant 0 : i32
    %c0_i32_1 = arith.constant 0 : i32
    return %arg0, %c0_i32, %c0_i32_0 : i32, i32, i32
  }
  func.func @transform_1(%arg0: i32) -> (i32, i32, i32) {
    %c0_i32 = arith.constant 0 : i32
    %c0_i32_0 = arith.constant 0 : i32
    %c0_i32_1 = arith.constant 0 : i32
    return %arg0, %c0_i32, %c0_i32_0 : i32, i32, i32
  }
  func.func @transform_2(%arg0: i32) -> (i32, i32, i32) {
    %c0_i32 = arith.constant 0 : i32
    %c0_i32_0 = arith.constant 0 : i32
    %c0_i32_1 = arith.constant 0 : i32
    return %arg0, %c0_i32, %c0_i32_0 : i32, i32, i32
  }
  func.func @transform_3(%arg0: i32) -> (i32, i32, i32) {
    %c0_i32 = arith.constant 0 : i32
    %c0_i32_0 = arith.constant 0 : i32
    %c0_i32_1 = arith.constant 0 : i32
    return %arg0, %c0_i32, %c0_i32_0 : i32, i32, i32
  }
  func.func @transform_4(%arg0: i32) -> (i32, i32, i32) {
    %c0_i32 = arith.constant 0 : i32
    %c0_i32_0 = arith.constant 0 : i32
    %c0_i32_1 = arith.constant 0 : i32
    %c0_i32_2 = arith.constant 0 : i32
    return %c0_i32, %c0_i32_0, %c0_i32_1 : i32, i32, i32
  }
  func.func @transform_5(%arg0: i32) -> (i32, i32, i32) {
    %c0_i32 = arith.constant 0 : i32
    %c0_i32_0 = arith.constant 0 : i32
    %c0_i32_1 = arith.constant 0 : i32
    %c0_i32_2 = arith.constant 0 : i32
    return %c0_i32, %c0_i32_0, %c0_i32_1 : i32, i32, i32
  }
  func.func @transform_6(%arg0: i32) -> (i32, i32, i32) {
    %c0_i32 = arith.constant 0 : i32
    %c0_i32_0 = arith.constant 0 : i32
    %c0_i32_1 = arith.constant 0 : i32
    %c0_i32_2 = arith.constant 0 : i32
    return %c0_i32, %c0_i32_0, %c0_i32_1 : i32, i32, i32
  }
  func.func @transform_7(%arg0: i32) -> (i32, i32, i32) {
    %c0_i32 = arith.constant 0 : i32
    %c0_i32_0 = arith.constant 0 : i32
    %c0_i32_1 = arith.constant 0 : i32
    %c0_i32_2 = arith.constant 0 : i32
    return %c0_i32, %c0_i32_0, %c0_i32_1 : i32, i32, i32
  }
  func.func @transform_8(%arg0: i32) -> (i32, i32, i32) {
    %c0_i32 = arith.constant 0 : i32
    %c0_i32_0 = arith.constant 0 : i32
    %c0_i32_1 = arith.constant 0 : i32
    %c0_i32_2 = arith.constant 0 : i32
    return %c0_i32, %c0_i32_0, %c0_i32_1 : i32, i32, i32
  }
  func.func @transform_9(%arg0: i32) -> (i32, i32) {
    %c0_i32 = arith.constant 0 : i32
    %c0_i32_0 = arith.constant 0 : i32
    %c0_i32_1 = arith.constant 0 : i32
    return %c0_i32, %c0_i32_0 : i32, i32
  }
  func.func @transform_10(%arg0: i32) -> (i32, i32) {
    %c0_i32 = arith.constant 0 : i32
    %c0_i32_0 = arith.constant 0 : i32
    %c0_i32_1 = arith.constant 0 : i32
    return %c0_i32, %c0_i32_0 : i32, i32
  }
  func.func @transform_11(%arg0: i32) -> (i32, i32) {
    %c0_i32 = arith.constant 0 : i32
    %c0_i32_0 = arith.constant 0 : i32
    %c0_i32_1 = arith.constant 0 : i32
    return %c0_i32, %c0_i32_0 : i32, i32
  }
  func.func @transform_12(%arg0: i32) -> (i32, i32) {
    %c0_i32 = arith.constant 0 : i32
    %c0_i32_0 = arith.constant 0 : i32
    %c0_i32_1 = arith.constant 0 : i32
    return %c0_i32, %c0_i32_0 : i32, i32
  }
  func.func @transform_13(%arg0: i32) -> (i32, i32) {
    %c0_i32 = arith.constant 0 : i32
    %c0_i32_0 = arith.constant 0 : i32
    %c0_i32_1 = arith.constant 0 : i32
    return %c0_i32, %c0_i32_0 : i32, i32
  }
  func.func @transform_14(%arg0: i32) -> (i32, i32, i32) {
    %c0_i32 = arith.constant 0 : i32
    %c0_i32_0 = arith.constant 0 : i32
    %c0_i32_1 = arith.constant 0 : i32
    %c0_i32_2 = arith.constant 0 : i32
    return %c0_i32, %c0_i32_0, %c0_i32_1 : i32, i32, i32
  }
  func.func @transform_15(%arg0: i32) -> (i32, i32, i32) {
    %c0_i32 = arith.constant 0 : i32
    %c0_i32_0 = arith.constant 0 : i32
    %c0_i32_1 = arith.constant 0 : i32
    return %arg0, %c0_i32, %c0_i32_0 : i32, i32, i32
  }
}

</mosaic_0001>

<llo_original>
// kernel: tfr_forward.1
$region0: #{tfr_forward.1}
  #allocation0 [shape = 'u32[]', space=smem, size = 0x4, offset = 0x4, fixed_abs, tag = 'smem constant byte address 0x4 - core index']
  #allocation1 [shape = 'u32[144,128]{1,0:T(1,128)}', space=vmem, size = 0x12000, scoped, tag = 'internal scratch']
  %s0 = inlined_call_operand.hbm [shape: f32[2,32,256], index: 0, kind: input, shape index: {}]
  %s1 = inlined_call_operand.hbm [shape: f32[2,64,256], index: 1, kind: input, shape index: {}]
  %s2 = inlined_call_operand.hbm [shape: f32[2,96,64], index: 2, kind: input, shape index: {}]
  %s3 = inlined_call_operand.hbm [shape: f32[2,128,16], index: 3, kind: input, shape index: {}]
  %s4 = inlined_call_operand.hbm [shape: f32[6,32,288], index: 4, kind: input, shape index: {}]
  %s5 = inlined_call_operand.hbm [shape: f32[6,32,288], index: 5, kind: input, shape index: {}]
  %s6 = inlined_call_operand.hbm [shape: f32[6,32,8], index: 6, kind: input, shape index: {}]
  %s7 = inlined_call_operand.hbm [shape: f32[6,32,8], index: 7, kind: input, shape index: {}]
  %s8 = inlined_call_operand.hbm [shape: f32[3,32,288], index: 8, kind: input, shape index: {}]
  %s9 = inlined_call_operand.hbm [shape: f32[32,64], index: 9, kind: input, shape index: {}]
  %s10 = inlined_call_operand.hbm [shape: f32[32,96], index: 10, kind: input, shape index: {}]
  %s11 = inlined_call_operand.hbm [shape: f32[32,128], index: 11, kind: input, shape index: {}]
  %s12 = inlined_call_operand.hbm [shape: f32[64,256], index: 12, kind: input, shape index: {}]
  %s13 = inlined_call_operand.hbm [shape: f32[16,256], index: 13, kind: input, shape index: {}]
  %s14 = inlined_call_operand.hbm [shape: f32[9,1,256], index: 14, kind: input, shape index: {}]
  %s15 = inlined_call_operand.hbm [shape: f32[2,32,256], index: 15, kind: output, shape index: {}]
  %s16 = sld [smem:[#allocation0]]
  $region174: #{tfr_forward.1} parent=0
    _
  %s18 = ssub.s32 1, %s16
  %s19 = scalar_select 0, %s18, %s16
  $region1: #{tfr_forward.1} parent=0
    #allocation2 [shape = 'u8[65536]{0}', space=vmem, size = 0x10000, scoped, tag = 'input window, operand 0']
    #allocation3 [shape = 's32[2]{0}', space=sflag, size = 0x8, scoped, tag = 'scoped memory for tfr_forward.1']
    #allocation4 [shape = 's32[2]{0}', space=sflag, size = 0x8, scoped, tag = 'scoped memory for tfr_forward.1']
    #allocation5 [shape = 'u8[131072]{0}', space=vmem, size = 0x20000, scoped, tag = 'input window, operand 1']
    #allocation6 [shape = 's32[2]{0}', space=sflag, size = 0x8, scoped, tag = 'scoped memory for tfr_forward.1']
    #allocation7 [shape = 'u8[98304]{0}', space=vmem, size = 0x18000, scoped, tag = 'input window, operand 2']
    #allocation8 [shape = 'u8[131072]{0}', space=vmem, size = 0x20000, scoped, tag = 'input window, operand 3']
    #allocation9 [shape = 's32[2]{0}', space=sflag, size = 0x8, scoped, tag = 'scoped memory for tfr_forward.1']
    #allocation10 [shape = 'u8[294912]{0}', space=vmem, size = 0x48000, scoped, tag = 'input window, operand 4, single buffered']
    #allocation11 [shape = 'u8[294912]{0}', space=vmem, size = 0x48000, scoped, tag = 'input window, operand 5, single buffered']
    #allocation12 [shape = 's32[1]{0}', space=sflag, size = 0x4, scoped, tag = 'scoped memory for tfr_forward.1']
    #allocation13 [shape = 'u8[98304]{0}', space=vmem, size = 0x18000, scoped, tag = 'input window, operand 6, single buffered']
    #allocation14 [shape = 'u8[98304]{0}', space=vmem, size = 0x18000, scoped, tag = 'input window, operand 7, single buffered']
    #allocation15 [shape = 's32[1]{0}', space=sflag, size = 0x4, scoped, tag = 'scoped memory for tfr_forward.1']
    #allocation16 [shape = 'u8[147456]{0}', space=vmem, size = 0x24000, scoped, tag = 'input window, operand 8, single buffered']
    #allocation17 [shape = 'u8[16384]{0}', space=vmem, size = 0x4000, scoped, tag = 'input window, operand 9, single buffered']
    #allocation18 [shape = 's32[1]{0}', space=sflag, size = 0x4, scoped, tag = 'scoped memory for tfr_forward.1']
    #allocation19 [shape = 'u8[16384]{0}', space=vmem, size = 0x4000, scoped, tag = 'input window, operand 10, single buffered']
    #allocation20 [shape = 'u8[16384]{0}', space=vmem, size = 0x4000, scoped, tag = 'input window, operand 11, single buffered']
    #allocation21 [shape = 's32[1]{0}', space=sflag, size = 0x4, scoped, tag = 'scoped memory for tfr_forward.1']
    #allocation22 [shape = 'u8[65536]{0}', space=vmem, size = 0x10000, scoped, tag = 'input window, operand 12, single buffered']
    #allocation23 [shape = 'u8[16384]{0}', space=vmem, size = 0x4000, scoped, tag = 'input window, operand 13, single buffered']
    #allocation24 [shape = 's32[1]{0}', space=sflag, size = 0x4, scoped, tag = 'scoped memory for tfr_forward.1']
    #allocation25 [shape = 'u8[9216]{0}', space=vmem, size = 0x2400, scoped, tag = 'input window, operand 14, single buffered']
    #allocation26 [shape = 'u8[65536]{0}', space=vmem, size = 0x10000, scoped, tag = 'output window, operand 0']
    %20 = vsyncpa [#allocation3], 0
    %s21 = scalar_lea.sflag [#allocation3], 1
    %22 = vsyncpa %s21, 0
    %23 = vsyncpa [#allocation6], 0
    %s24 = scalar_lea.sflag [#allocation6], 1
    %25 = vsyncpa %s24, 0
    %26 = vsyncpa [#allocation9], 0
    %s27 = scalar_lea.sflag [#allocation9], 1
    %28 = vsyncpa %s27, 0
    %29 = vsyncpa [#allocation12], 0
    %30 = vsyncpa [#allocation15], 0
    %31 = vsyncpa [#allocation18], 0
    %32 = vsyncpa [#allocation21], 0
    %33 = vsyncpa [#allocation24], 0
    %34 = vsyncpa [#allocation4], 0
    %s35 = scalar_lea.sflag [#allocation4], 1
    %36 = vsyncpa %s35, 0
    loop: start=0, step=1, limit=4
    $region2: #{tfr_forward.1} parent=1 // loop_pre_header
      _
    $region3: #{tfr_forward.1} parent=1 // loop_header
      %s38 = sphi 0, %s42
      %p39 = scmp.ge.s32.totalorder %s38, 4
      %s48 = sphi 0, %s50
      %s51 = sphi 0, %s48
      %s52 = sphi 0, %s51
      %s68 = sphi 0, %s52
      %s74 = sphi 0, %s76
      %s77 = sphi 0, %s74
      %s78 = sphi 0, %s77
      %s94 = sphi 0, %s78
      %s100 = sphi 0, %s102
      %s103 = sphi 0, %s100
      %s104 = sphi 0, %s103
      %s120 = sphi 0, %s104
      %s126 = sphi 0, %s128
      %s129 = sphi 0, %s126
      %s130 = sphi 0, %s129
      %s146 = sphi 0, %s130
      %s150 = sphi 0, %s150
      %s152 = sphi 0, %s150
      %s153 = sphi 0, %s152
      %s167 = sphi 0, %s153
      %s171 = sphi 0, %s171
      %s173 = sphi 0, %s171
      %s174 = sphi 0, %s173
      %s188 = sphi 0, %s174
      %s192 = sphi 0, %s192
      %s194 = sphi 0, %s192
      %s195 = sphi 0, %s194
      %s209 = sphi 0, %s195
      %s213 = sphi 0, %s213
      %s215 = sphi 0, %s213
      %s216 = sphi 0, %s215
      %s230 = sphi 0, %s216
      %s234 = sphi 0, %s234
      %s236 = sphi 0, %s234
      %s237 = sphi 0, %s236
      %s251 = sphi 0, %s237
      %s255 = sphi 0, %s255
      %s257 = sphi 0, %s255
      %s258 = sphi 0, %s257
      %s272 = sphi 0, %s258
      %s276 = sphi 0, %s276
      %s278 = sphi 0, %s276
      %s279 = sphi 0, %s278
      %s293 = sphi 0, %s279
      %s297 = sphi 0, %s297
      %s299 = sphi 0, %s297
      %s300 = sphi 0, %s299
      %s314 = sphi 0, %s300
      %s318 = sphi 0, %s318
      %s320 = sphi 0, %s318
      %s321 = sphi 0, %s320
      %s335 = sphi 0, %s321
      %s339 = sphi 0, %s339
      %s341 = sphi 0, %s339
      %s342 = sphi 0, %s341
      %s356 = sphi 0, %s342
      %s360 = sphi 0, %s360
      %s362 = sphi 0, %s360
      %s363 = sphi 0, %s362
      %s377 = sphi 0, %s363
      %s383 = sphi 0, %s385
      %s386 = sphi 0, %s383
      %s387 = sphi 0, %s386
      %s403 = sphi 0, %s387
    $region4: #{tfr_forward.1} parent=1 // loop_header_branch
      %41 = sbr.rel (%p39) target = $region8
    $region5: #{tfr_forward.1} parent=1 // loop_body
      %s43 = ssub.s32 %s38, 1
      %s44 = ssub.s32 %s38, 2
      %s45 = sadd.s32 %s38, 1
      %s46 = ssub.s32 %s38, %s45
      %p47 = scmp.eq.s32.totalorder %s46, 0
      %s49 = sadd.s32 %s48, 1
      %s50 = scalar_select %p47, %s48, %s49
      %p53 = pneg %p47
      %p54 = scmp.eq.s32.totalorder %s38, 1
      %p55 = por %p53, %p54
      %p56 = scmp.ne.s32.totalorder %s48, %s51
      %p57 = scmp.eq.s32.totalorder %s38, 0
      %p58 = por %p56, %p57
      %p59 = scmp.ne.s32.totalorder %s48, %s51
      %p60 = scmp.eq.s32.totalorder %s43, 1
      %p61 = por %p59, %p60
      %p62 = scmp.ne.s32.totalorder %s51, %s52
      %p63 = scmp.eq.s32.totalorder %s43, 0
      %p64 = por %p62, %p63
      %p65 = scmp.ne.s32.totalorder %s51, %s52
      %p66 = scmp.eq.s32.totalorder %s44, 1
      %p67 = por %p65, %p66
      %p69 = scmp.ne.s32.totalorder %s52, %s68
      %p70 = scmp.eq.s32.totalorder %s44, 0
      %p71 = por %p69, %p70
      %s72 = ssub.s32 %s38, %s45
      %p73 = scmp.eq.s32.totalorder %s72, 0
      %s75 = sadd.s32 %s74, 1
      %s76 = scalar_select %p73, %s74, %s75
      %p79 = pneg %p73
      %p80 = scmp.eq.s32.totalorder %s38, 1
      %p81 = por %p79, %p80
      %p82 = scmp.ne.s32.totalorder %s74, %s77
      %p83 = scmp.eq.s32.totalorder %s38, 0
      %p84 = por %p82, %p83
      %p85 = scmp.ne.s32.totalorder %s74, %s77
      %p86 = scmp.eq.s32.totalorder %s43, 1
      %p87 = por %p85, %p86
      %p88 = scmp.ne.s32.totalorder %s77, %s78
      %p89 = scmp.eq.s32.totalorder %s43, 0
      %p90 = por %p88, %p89
      %p91 = scmp.ne.s32.totalorder %s77, %s78
      %p92 = scmp.eq.s32.totalorder %s44, 1
      %p93 = por %p91, %p92
      %p95 = scmp.ne.s32.totalorder %s78, %s94
      %p96 = scmp.eq.s32.totalorder %s44, 0
      %p97 = por %p95, %p96
      %s98 = ssub.s32 %s38, %s45
      %p99 = scmp.eq.s32.totalorder %s98, 0
      %s101 = sadd.s32 %s100, 1
      %s102 = scalar_select %p99, %s100, %s101
      %p105 = pneg %p99
      %p106 = scmp.eq.s32.totalorder %s38, 1
      %p107 = por %p105, %p106
      %p108 = scmp.ne.s32.totalorder %s100, %s103
      %p109 = scmp.eq.s32.totalorder %s38, 0
      %p110 = por %p108, %p109
      %p111 = scmp.ne.s32.totalorder %s100, %s103
      %p112 = scmp.eq.s32.totalorder %s43, 1
      %p113 = por %p111, %p112
      %p114 = scmp.ne.s32.totalorder %s103, %s104
      %p115 = scmp.eq.s32.totalorder %s43, 0
      %p116 = por %p114, %p115
      %p117 = scmp.ne.s32.totalorder %s103, %s104
      %p118 = scmp.eq.s32.totalorder %s44, 1
      %p119 = por %p117, %p118
      %p121 = scmp.ne.s32.totalorder %s104, %s120
      %p122 = scmp.eq.s32.totalorder %s44, 0
      %p123 = por %p121, %p122
      %s124 = ssub.s32 %s38, %s45
      %p125 = scmp.eq.s32.totalorder %s124, 0
      %s127 = sadd.s32 %s126, 1
      %s128 = scalar_select %p125, %s126, %s127
      %p131 = pneg %p125
      %p132 = scmp.eq.s32.totalorder %s38, 1
      %p133 = por %p131, %p132
      %p134 = scmp.ne.s32.totalorder %s126, %s129
      %p135 = scmp.eq.s32.totalorder %s38, 0
      %p136 = por %p134, %p135
      %p137 = scmp.ne.s32.totalorder %s126, %s129
      %p138 = scmp.eq.s32.totalorder %s43, 1
      %p139 = por %p137, %p138
      %p140 = scmp.ne.s32.totalorder %s129, %s130
      %p141 = scmp.eq.s32.totalorder %s43, 0
      %p142 = por %p140, %p141
      %p143 = scmp.ne.s32.totalorder %s129, %s130
      %p144 = scmp.eq.s32.totalorder %s44, 1
      %p145 = por %p143, %p144
      %p147 = scmp.ne.s32.totalorder %s130, %s146
      %p148 = scmp.eq.s32.totalorder %s44, 0
      %p149 = por %p147, %p148
      %s151 = sadd.s32 %s150, 1
      %p154 = scmp.eq.s32.totalorder %s38, 1
      %p155 = scmp.ne.s32.totalorder %s150, %s152
      %p156 = scmp.eq.s32.totalorder %s38, 0
      %p157 = por %p155, %p156
      %p158 = scmp.ne.s32.totalorder %s150, %s152
      %p159 = scmp.eq.s32.totalorder %s43, 1
      %p160 = por %p158, %p159
      %p161 = scmp.ne.s32.totalorder %s152, %s153
      %p162 = scmp.eq.s32.totalorder %s43, 0
      %p163 = por %p161, %p162
      %p164 = scmp.ne.s32.totalorder %s152, %s153
      %p165 = scmp.eq.s32.totalorder %s44, 1
      %p166 = por %p164, %p165
      %p168 = scmp.ne.s32.totalorder %s153, %s167
      %p169 = scmp.eq.s32.totalorder %s44, 0
      %p170 = por %p168, %p169
      %s172 = sadd.s32 %s171, 1
      %p175 = scmp.eq.s32.totalorder %s38, 1
      %p176 = scmp.ne.s32.totalorder %s171, %s173
      %p177 = scmp.eq.s32.totalorder %s38, 0
      %p178 = por %p176, %p177
      %p179 = scmp.ne.s32.totalorder %s171, %s173
      %p180 = scmp.eq.s32.totalorder %s43, 1
      %p181 = por %p179, %p180
      %p182 = scmp.ne.s32.totalorder %s173, %s174
      %p183 = scmp.eq.s32.totalorder %s43, 0
      %p184 = por %p182, %p183
      %p185 = scmp.ne.s32.totalorder %s173, %s174
      %p186 = scmp.eq.s32.totalorder %s44, 1
      %p187 = por %p185, %p186
      %p189 = scmp.ne.s32.totalorder %s174, %s188
      %p190 = scmp.eq.s32.totalorder %s44, 0
      %p191 = por %p189, %p190
      %s193 = sadd.s32 %s192, 1
      %p196 = scmp.eq.s32.totalorder %s38, 1
      %p197 = scmp.ne.s32.totalorder %s192, %s194
      %p198 = scmp.eq.s32.totalorder %s38, 0
      %p199 = por %p197, %p198
      %p200 = scmp.ne.s32.totalorder %s192, %s194
      %p201 = scmp.eq.s32.totalorder %s43, 1
      %p202 = por %p200, %p201
      %p203 = scmp.ne.s32.totalorder %s194, %s195
      %p204 = scmp.eq.s32.totalorder %s43, 0
      %p205 = por %p203, %p204
      %p206 = scmp.ne.s32.totalorder %s194, %s195
      %p207 = scmp.eq.s32.totalorder %s44, 1
      %p208 = por %p206, %p207
      %p210 = scmp.ne.s32.totalorder %s195, %s209
      %p211 = scmp.eq.s32.totalorder %s44, 0
      %p212 = por %p210, %p211
      %s214 = sadd.s32 %s213, 1
      %p217 = scmp.eq.s32.totalorder %s38, 1
      %p218 = scmp.ne.s32.totalorder %s213, %s215
      %p219 = scmp.eq.s32.totalorder %s38, 0
      %p220 = por %p218, %p219
      %p221 = scmp.ne.s32.totalorder %s213, %s215
      %p222 = scmp.eq.s32.totalorder %s43, 1
      %p223 = por %p221, %p222
      %p224 = scmp.ne.s32.totalorder %s215, %s216
      %p225 = scmp.eq.s32.totalorder %s43, 0
      %p226 = por %p224, %p225
      %p227 = scmp.ne.s32.totalorder %s215, %s216
      %p228 = scmp.eq.s32.totalorder %s44, 1
      %p229 = por %p227, %p228
      %p231 = scmp.ne.s32.totalorder %s216, %s230
      %p232 = scmp.eq.s32.totalorder %s44, 0
      %p233 = por %p231, %p232
      %s235 = sadd.s32 %s234, 1
      %p238 = scmp.eq.s32.totalorder %s38, 1
      %p239 = scmp.ne.s32.totalorder %s234, %s236
      %p240 = scmp.eq.s32.totalorder %s38, 0
      %p241 = por %p239, %p240
      %p242 = scmp.ne.s32.totalorder %s234, %s236
      %p243 = scmp.eq.s32.totalorder %s43, 1
      %p244 = por %p242, %p243
      %p245 = scmp.ne.s32.totalorder %s236, %s237
      %p246 = scmp.eq.s32.totalorder %s43, 0
      %p247 = por %p245, %p246
      %p248 = scmp.ne.s32.totalorder %s236, %s237
      %p249 = scmp.eq.s32.totalorder %s44, 1
      %p250 = por %p248, %p249
      %p252 = scmp.ne.s32.totalorder %s237, %s251
      %p253 = scmp.eq.s32.totalorder %s44, 0
      %p254 = por %p252, %p253
      %s256 = sadd.s32 %s255, 1
      %p259 = scmp.eq.s32.totalorder %s38, 1
      %p260 = scmp.ne.s32.totalorder %s255, %s257
      %p261 = scmp.eq.s32.totalorder %s38, 0
      %p262 = por %p260, %p261
      %p263 = scmp.ne.s32.totalorder %s255, %s257
      %p264 = scmp.eq.s32.totalorder %s43, 1
      %p265 = por %p263, %p264
      %p266 = scmp.ne.s32.totalorder %s257, %s258
      %p267 = scmp.eq.s32.totalorder %s43, 0
      %p268 = por %p266, %p267
      %p269 = scmp.ne.s32.totalorder %s257, %s258
      %p270 = scmp.eq.s32.totalorder %s44, 1
      %p271 = por %p269, %p270
      %p273 = scmp.ne.s32.totalorder %s258, %s272
      %p274 = scmp.eq.s32.totalorder %s44, 0
      %p275 = por %p273, %p274
      %s277 = sadd.s32 %s276, 1
      %p280 = scmp.eq.s32.totalorder %s38, 1
      %p281 = scmp.ne.s32.totalorder %s276, %s278
      %p282 = scmp.eq.s32.totalorder %s38, 0
      %p283 = por %p281, %p282
      %p284 = scmp.ne.s32.totalorder %s276, %s278
      %p285 = scmp.eq.s32.totalorder %s43, 1
      %p286 = por %p284, %p285
      %p287 = scmp.ne.s32.totalorder %s278, %s279
      %p288 = scmp.eq.s32.totalorder %s43, 0
      %p289 = por %p287, %p288
      %p290 = scmp.ne.s32.totalorder %s278, %s279
      %p291 = scmp.eq.s32.totalorder %s44, 1
      %p292 = por %p290, %p291
      %p294 = scmp.ne.s32.totalorder %s279, %s293
      %p295 = scmp.eq.s32.totalorder %s44, 0
      %p296 = por %p294, %p295
      %s298 = sadd.s32 %s297, 1
      %p301 = scmp.eq.s32.totalorder %s38, 1
      %p302 = scmp.ne.s32.totalorder %s297, %s299
      %p303 = scmp.eq.s32.totalorder %s38, 0
      %p304 = por %p302, %p303
      %p305 = scmp.ne.s32.totalorder %s297, %s299
      %p306 = scmp.eq.s32.totalorder %s43, 1
      %p307 = por %p305, %p306
      %p308 = scmp.ne.s32.totalorder %s299, %s300
      %p309 = scmp.eq.s32.totalorder %s43, 0
      %p310 = por %p308, %p309
      %p311 = scmp.ne.s32.totalorder %s299, %s300
      %p312 = scmp.eq.s32.totalorder %s44, 1
      %p313 = por %p311, %p312
      %p315 = scmp.ne.s32.totalorder %s300, %s314
      %p316 = scmp.eq.s32.totalorder %s44, 0
      %p317 = por %p315, %p316
      %s319 = sadd.s32 %s318, 1
      %p322 = scmp.eq.s32.totalorder %s38, 1
      %p323 = scmp.ne.s32.totalorder %s318, %s320
      %p324 = scmp.eq.s32.totalorder %s38, 0
      %p325 = por %p323, %p324
      %p326 = scmp.ne.s32.totalorder %s318, %s320
      %p327 = scmp.eq.s32.totalorder %s43, 1
      %p328 = por %p326, %p327
      %p329 = scmp.ne.s32.totalorder %s320, %s321
      %p330 = scmp.eq.s32.totalorder %s43, 0
      %p331 = por %p329, %p330
      %p332 = scmp.ne.s32.totalorder %s320, %s321
      %p333 = scmp.eq.s32.totalorder %s44, 1
      %p334 = por %p332, %p333
      %p336 = scmp.ne.s32.totalorder %s321, %s335
      %p337 = scmp.eq.s32.totalorder %s44, 0
      %p338 = por %p336, %p337
      %s340 = sadd.s32 %s339, 1
      %p343 = scmp.eq.s32.totalorder %s38, 1
      %p344 = scmp.ne.s32.totalorder %s339, %s341
      %p345 = scmp.eq.s32.totalorder %s38, 0
      %p346 = por %p344, %p345
      %p347 = scmp.ne.s32.totalorder %s339, %s341
      %p348 = scmp.eq.s32.totalorder %s43, 1
      %p349 = por %p347, %p348
      %p350 = scmp.ne.s32.totalorder %s341, %s342
      %p351 = scmp.eq.s32.totalorder %s43, 0
      %p352 = por %p350, %p351
      %p353 = scmp.ne.s32.totalorder %s341, %s342
      %p354 = scmp.eq.s32.totalorder %s44, 1
      %p355 = por %p353, %p354
      %p357 = scmp.ne.s32.totalorder %s342, %s356
      %p358 = scmp.eq.s32.totalorder %s44, 0
      %p359 = por %p357, %p358
      %s361 = sadd.s32 %s360, 1
      %p364 = scmp.eq.s32.totalorder %s38, 1
      %p365 = scmp.ne.s32.totalorder %s360, %s362
      %p366 = scmp.eq.s32.totalorder %s38, 0
      %p367 = por %p365, %p366
      %p368 = scmp.ne.s32.totalorder %s360, %s362
      %p369 = scmp.eq.s32.totalorder %s43, 1
      %p370 = por %p368, %p369
      %p371 = scmp.ne.s32.totalorder %s362, %s363
      %p372 = scmp.eq.s32.totalorder %s43, 0
      %p373 = por %p371, %p372
      %p374 = scmp.ne.s32.totalorder %s362, %s363
      %p375 = scmp.eq.s32.totalorder %s44, 1
      %p376 = por %p374, %p375
      %p378 = scmp.ne.s32.totalorder %s363, %s377
      %p379 = scmp.eq.s32.totalorder %s44, 0
      %p380 = por %p378, %p379
      %s381 = ssub.s32 %s38, %s45
      %p382 = scmp.eq.s32.totalorder %s381, 0
      %s384 = sadd.s32 %s383, 1
      %s385 = scalar_select %p382, %s383, %s384
      %p388 = pneg %p382
      %p389 = scmp.eq.s32.totalorder %s38, 1
      %p390 = por %p388, %p389
      %p391 = scmp.ne.s32.totalorder %s383, %s386
      %p392 = scmp.eq.s32.totalorder %s38, 0
      %p393 = por %p391, %p392
      %p394 = scmp.ne.s32.totalorder %s383, %s386
      %p395 = scmp.eq.s32.totalorder %s43, 1
      %p396 = por %p394, %p395
      %p397 = scmp.ne.s32.totalorder %s386, %s387
      %p398 = scmp.eq.s32.totalorder %s43, 0
      %p399 = por %p397, %p398
      %p400 = scmp.ne.s32.totalorder %s386, %s387
      %p401 = scmp.eq.s32.totalorder %s44, 1
      %p402 = por %p400, %p401
      %p404 = scmp.ne.s32.totalorder %s387, %s403
      %p405 = scmp.eq.s32.totalorder %s44, 0
      %p406 = por %p404, %p405
      %p407 = scmp.le.s32.totalorder 1, %s38
      %p408 = scmp.lt.s32.totalorder %s38, 3
      %p409 = pnand %p407, %p408
      %p410 = pneg %p409
      // Predicated region
      $region9: #{tfr_forward.1} parent=5 // pred_check
        _
      $region10: #{tfr_forward.1} parent=5 // pred_check_branch
        %412 = sbr.rel (%p409) target = $region12
      $region11: #{tfr_forward.1} parent=5 // pred_region
        %s413 = ssub.s32 %s38, 1
        // Predicated region
        $region13: #{tfr_forward.1} parent=11 // pred_check
          %p414 = pneg %p163
        $region14: #{tfr_forward.1} parent=11 // pred_check_branch
          %416 = sbr.rel (%p414) target = $region16
        $region15: #{tfr_forward.1} parent=11 // pred_region
          %s418 = ssub.s32 9216, 9216
          %419 = vsyncadd [#allocation9], %s418
          %s420 = sshll.u32 [#allocation10], 4
          %s421 = int_to_ptr.vmem [resolvable:$true] %s420
          %426 = dma.hbm_to_vmem [thread:$0]  %s4, 9216, %s421, [#allocation9], 384, 384, 24
        $region16: #{tfr_forward.1} parent=11 // pred_fallthru
          _
        // Predicated region
        $region17: #{tfr_forward.1} parent=11 // pred_check
          %p427 = pneg %p184
        $region18: #{tfr_forward.1} parent=11 // pred_check_branch
          %429 = sbr.rel (%p427) target = $region20
        $region19: #{tfr_forward.1} parent=11 // pred_region
          %s431 = ssub.s32 9216, 9216
          %432 = vsyncadd [#allocation12], %s431
          %s433 = sshll.u32 [#allocation11], 4
          %s434 = int_to_ptr.vmem [resolvable:$true] %s433
          %439 = dma.hbm_to_vmem [thread:$0]  %s5, 9216, %s434, [#allocation12], 384, 384, 24
        $region20: #{tfr_forward.1} parent=11 // pred_fallthru
          _
        // Predicated region
        $region21: #{tfr_forward.1} parent=11 // pred_check
          %p440 = pneg %p205
        $region22: #{tfr_forward.1} parent=11 // pred_check_branch
          %442 = sbr.rel (%p440) target = $region24
        $region23: #{tfr_forward.1} parent=11 // pred_region
          %s444 = ssub.s32 3072, 3072
          %445 = vsyncadd [#allocation12], %s444
          %s446 = sshll.u32 [#allocation13], 4
          %s447 = int_to_ptr.vmem [resolvable:$true] %s446
          %452 = dma.hbm_to_vmem [thread:$0]  %s6, 3072, %s447, [#allocation12], 128, 128, 8
        $region24: #{tfr_forward.1} parent=11 // pred_fallthru
          _
        // Predicated region
        $region25: #{tfr_forward.1} parent=11 // pred_check
          %p453 = pneg %p226
        $region26: #{tfr_forward.1} parent=11 // pred_check_branch
          %455 = sbr.rel (%p453) target = $region28
        $region27: #{tfr_forward.1} parent=11 // pred_region
          %s457 = ssub.s32 3072, 3072
          %458 = vsyncadd [#allocation15], %s457
          %s459 = sshll.u32 [#allocation14], 4
          %s460 = int_to_ptr.vmem [resolvable:$true] %s459
          %465 = dma.hbm_to_vmem [thread:$0]  %s7, 3072, %s460, [#allocation15], 128, 128, 8
        $region28: #{tfr_forward.1} parent=11 // pred_fallthru
          _
        // Predicated region
        $region29: #{tfr_forward.1} parent=11 // pred_check
          %p466 = pneg %p247
        $region30: #{tfr_forward.1} parent=11 // pred_check_branch
          %468 = sbr.rel (%p466) target = $region32
        $region31: #{tfr_forward.1} parent=11 // pred_region
          %s470 = ssub.s32 4608, 4608
          %471 = vsyncadd [#allocation15], %s470
          %s472 = sshll.u32 [#allocation16], 4
          %s473 = int_to_ptr.vmem [resolvable:$true] %s472
          %478 = dma.hbm_to_vmem [thread:$0]  %s8, 4608, %s473, [#allocation15], 384, 384, 24
        $region32: #{tfr_forward.1} parent=11 // pred_fallthru
          _
        // Predicated region
        $region33: #{tfr_forward.1} parent=11 // pred_check
          %p479 = pneg %p268
        $region34: #{tfr_forward.1} parent=11 // pred_check_branch
          %481 = sbr.rel (%p479) target = $region36
        $region35: #{tfr_forward.1} parent=11 // pred_region
          %s483 = ssub.s32 512, 512
          %484 = vsyncadd [#allocation18], %s483
          %s485 = sshll.u32 [#allocation17], 4
          %s486 = int_to_ptr.vmem [resolvable:$true] %s485
          %491 = dma.hbm_to_vmem [thread:$0]  %s9, 512, %s486, [#allocation18], 128, 128, 8
        $region36: #{tfr_forward.1} parent=11 // pred_fallthru
          _
        // Predicated region
        $region37: #{tfr_forward.1} parent=11 // pred_check
          %p492 = pneg %p289
        $region38: #{tfr_forward.1} parent=11 // pred_check_branch
          %494 = sbr.rel (%p492) target = $region40
        $region39: #{tfr_forward.1} parent=11 // pred_region
          %s496 = ssub.s32 512, 512
          %497 = vsyncadd [#allocation18], %s496
          %s498 = sshll.u32 [#allocation19], 4
          %s499 = int_to_ptr.vmem [resolvable:$true] %s498
          %504 = dma.hbm_to_vmem [thread:$0]  %s10, 512, %s499, [#allocation18], 128, 128, 8
        $region40: #{tfr_forward.1} parent=11 // pred_fallthru
          _
        // Predicated region
        $region41: #{tfr_forward.1} parent=11 // pred_check
          %p505 = pneg %p310
        $region42: #{tfr_forward.1} parent=11 // pred_check_branch
          %507 = sbr.rel (%p505) target = $region44
        $region43: #{tfr_forward.1} parent=11 // pred_region
          %s509 = ssub.s32 512, 512
          %510 = vsyncadd [#allocation21], %s509
          %s511 = sshll.u32 [#allocation20], 4
          %s512 = int_to_ptr.vmem [resolvable:$true] %s511
          %517 = dma.hbm_to_vmem [thread:$0]  %s11, 512, %s512, [#allocation21], 128, 128, 8
        $region44: #{tfr_forward.1} parent=11 // pred_fallthru
          _
        // Predicated region
        $region45: #{tfr_forward.1} parent=11 // pred_check
          %p518 = pneg %p331
        $region46: #{tfr_forward.1} parent=11 // pred_check_branch
          %520 = sbr.rel (%p518) target = $region48
        $region47: #{tfr_forward.1} parent=11 // pred_region
          %s522 = ssub.s32 2048, 2048
          %523 = vsyncadd [#allocation21], %s522
          %s524 = sshll.u32 [#allocation22], 4
          %s525 = int_to_ptr.vmem [resolvable:$true] %s524
          %530 = dma.hbm_to_vmem [thread:$0]  %s12, 2048, %s525, [#allocation21], 256, 256, 16
        $region48: #{tfr_forward.1} parent=11 // pred_fallthru
          _
        // Predicated region
        $region49: #{tfr_forward.1} parent=11 // pred_check
          %p531 = pneg %p352
        $region50: #{tfr_forward.1} parent=11 // pred_check_branch
          %533 = sbr.rel (%p531) target = $region52
        $region51: #{tfr_forward.1} parent=11 // pred_region
          %s535 = ssub.s32 512, 512
          %536 = vsyncadd [#allocation24], %s535
          %s537 = sshll.u32 [#allocation23], 4
          %s538 = int_to_ptr.vmem [resolvable:$true] %s537
          %543 = dma.hbm_to_vmem [thread:$0]  %s13, 512, %s538, [#allocation24], 256, 256, 16
        $region52: #{tfr_forward.1} parent=11 // pred_fallthru
          _
        // Predicated region
        $region53: #{tfr_forward.1} parent=11 // pred_check
          %p544 = pneg %p373
        $region54: #{tfr_forward.1} parent=11 // pred_check_branch
          %546 = sbr.rel (%p544) target = $region56
        $region55: #{tfr_forward.1} parent=11 // pred_region
          %s548 = ssub.s32 288, 288
          %549 = vsyncadd [#allocation24], %s548
          %s550 = sshll.u32 [#allocation25], 4
          %s551 = int_to_ptr.vmem [resolvable:$true] %s550
          %556 = dma.hbm_to_vmem [thread:$0]  %s14, 288, %s551, [#allocation24], 32, 32, 2
        $region56: #{tfr_forward.1} parent=11 // pred_fallthru
          _
      $region12: #{tfr_forward.1} parent=5 // pred_fallthru
        _
      %p557 = scmp.lt.s32.totalorder %s38, 2
      // Predicated region
      $region57: #{tfr_forward.1} parent=5 // pred_check
        %p558 = pneg %p557
      $region58: #{tfr_forward.1} parent=5 // pred_check_branch
        %560 = sbr.rel (%p558) target = $region60
      $region59: #{tfr_forward.1} parent=5 // pred_region
        // Predicated region
        $region61: #{tfr_forward.1} parent=59 // pred_check
          %p561 = pneg %p58
        $region62: #{tfr_forward.1} parent=59 // pred_check_branch
          %563 = sbr.rel (%p561) target = $region64
        $region63: #{tfr_forward.1} parent=59 // pred_region
          %s564 = sand.u32 %s48, 1
          %s565 = scalar_lea.sflag [#allocation3], %s564
          %s566 = sand.u32 %s48, 1
          %s567 = smul.addr %s566, 64
          %s568 = scalar_lea.vmem [#allocation2], %s567
          %s570 = ssub.s32 1024, 1024
          %571 = vsyncadd %s565, %s570
          %s572 = smul.addr %s38, 8
          %s573 = smul.addr %s572, 128
          %s574 = scalar_lea.hbm %s0, %s573
          %s575 = sshll.u32 %s568, 4
          %s576 = int_to_ptr.vmem [resolvable:$true] %s575
          %581 = dma.hbm_to_vmem [thread:$0]  %s574, 1024, %s576, %s565, 256, 256, 16
        $region64: #{tfr_forward.1} parent=59 // pred_fallthru
          _
        // Predicated region
        $region65: #{tfr_forward.1} parent=59 // pred_check
          %p582 = pneg %p84
        $region66: #{tfr_forward.1} parent=59 // pred_check_branch
          %584 = sbr.rel (%p582) target = $region68
        $region67: #{tfr_forward.1} parent=59 // pred_region
          %s585 = sand.u32 %s38, 1
          %s586 = scalar_lea.sflag [#allocation6], %s585
          %s587 = sand.u32 %s74, 1
          %s588 = smul.addr %s587, 128
          %s589 = scalar_lea.vmem [#allocation5], %s588
          %s591 = ssub.s32 2048, 2048
          %592 = vsyncadd %s586, %s591
          %s593 = smul.addr %s38, 16
          %s594 = smul.addr %s593, 128
          %s595 = scalar_lea.hbm %s1, %s594
          %s596 = sshll.u32 %s589, 4
          %s597 = int_to_ptr.vmem [resolvable:$true] %s596
          %602 = dma.hbm_to_vmem [thread:$0]  %s595, 2048, %s597, %s586, 256, 256, 16
        $region68: #{tfr_forward.1} parent=59 // pred_fallthru
          _
        // Predicated region
        $region69: #{tfr_forward.1} parent=59 // pred_check
          %p603 = pneg %p110
        $region70: #{tfr_forward.1} parent=59 // pred_check_branch
          %605 = sbr.rel (%p603) target = $region72
        $region71: #{tfr_forward.1} parent=59 // pred_region
          %s606 = sand.u32 %s38, 1
          %s607 = scalar_lea.sflag [#allocation6], %s606
          %s608 = sand.u32 %s100, 1
          %s609 = smul.addr %s608, 96
          %s610 = scalar_lea.vmem [#allocation7], %s609
          %s612 = ssub.s32 1536, 1536
          %613 = vsyncadd %s607, %s612
          %s614 = smul.addr %s38, 12
          %s615 = smul.addr %s614, 128
          %s616 = scalar_lea.hbm %s2, %s615
          %s617 = sshll.u32 %s610, 4
          %s618 = int_to_ptr.vmem [resolvable:$true] %s617
          %623 = dma.hbm_to_vmem [thread:$0]  %s616, 1536, %s618, %s607, 128, 128, 8
        $region72: #{tfr_forward.1} parent=59 // pred_fallthru
          _
        // Predicated region
        $region73: #{tfr_forward.1} parent=59 // pred_check
          %p624 = pneg %p136
        $region74: #{tfr_forward.1} parent=59 // pred_check_branch
          %626 = sbr.rel (%p624) target = $region76
        $region75: #{tfr_forward.1} parent=59 // pred_region
          %s627 = sand.u32 %s38, 1
          %s628 = scalar_lea.sflag [#allocation9], %s627
          %s629 = sand.u32 %s126, 1
          %s630 = smul.addr %s629, 128
          %s631 = scalar_lea.vmem [#allocation8], %s630
          %s633 = ssub.s32 2048, 2048
          %634 = vsyncadd %s628, %s633
          %s635 = smul.addr %s38, 16
          %s636 = smul.addr %s635, 128
          %s637 = scalar_lea.hbm %s3, %s636
          %s638 = sshll.u32 %s631, 4
          %s639 = int_to_ptr.vmem [resolvable:$true] %s638
          %644 = dma.hbm_to_vmem [thread:$0]  %s637, 2048, %s639, %s628, 128, 128, 8
        $region76: #{tfr_forward.1} parent=59 // pred_fallthru
          _
      $region60: #{tfr_forward.1} parent=5 // pred_fallthru
        _
      %p645 = scmp.le.s32.totalorder 1, %s38
      %p646 = scmp.lt.s32.totalorder %s38, 3
      %p647 = pnand %p645, %p646
      %p648 = pneg %p647
      // Predicated region
      $region77: #{tfr_forward.1} parent=5 // pred_check
        _
      $region78: #{tfr_forward.1} parent=5 // pred_check_branch
        %650 = sbr.rel (%p647) target = $region80
      $region79: #{tfr_forward.1} parent=5 // pred_region
        %s651 = ssub.s32 %s38, 1
        %s652 = sand.u32 %s51, 1
        %s653 = scalar_lea.sflag [#allocation3], %s652
        %s654 = sand.u32 %s51, 1
        %s655 = smul.addr %s654, 64
        %s656 = scalar_lea.vmem [#allocation2], %s655
        // Predicated region
        $region81: #{tfr_forward.1} parent=79 // pred_check
          %p657 = pneg %p64
        $region82: #{tfr_forward.1} parent=79 // pred_check_branch
          %659 = sbr.rel (%p657) target = $region84
        $region83: #{tfr_forward.1} parent=79 // pred_region
          %660 = dma.done %s653, 1024
        $region84: #{tfr_forward.1} parent=79 // pred_fallthru
          _
        %s661 = sand.u32 %s43, 1
        %s662 = scalar_lea.sflag [#allocation6], %s661
        %s663 = sand.u32 %s77, 1
        %s664 = smul.addr %s663, 128
        %s665 = scalar_lea.vmem [#allocation5], %s664
        // Predicated region
        $region85: #{tfr_forward.1} parent=79 // pred_check
          %p666 = pneg %p90
        $region86: #{tfr_forward.1} parent=79 // pred_check_branch
          %668 = sbr.rel (%p666) target = $region88
        $region87: #{tfr_forward.1} parent=79 // pred_region
          %669 = dma.done %s662, 2048
        $region88: #{tfr_forward.1} parent=79 // pred_fallthru
          _
        %s670 = sand.u32 %s43, 1
        %s671 = scalar_lea.sflag [#allocation6], %s670
        %s672 = sand.u32 %s103, 1
        %s673 = smul.addr %s672, 96
        %s674 = scalar_lea.vmem [#allocation7], %s673
        // Predicated region
        $region89: #{tfr_forward.1} parent=79 // pred_check
          %p675 = pneg %p116
        $region90: #{tfr_forward.1} parent=79 // pred_check_branch
          %677 = sbr.rel (%p675) target = $region92
        $region91: #{tfr_forward.1} parent=79 // pred_region
          %678 = dma.done %s671, 1536
        $region92: #{tfr_forward.1} parent=79 // pred_fallthru
          _
        %s679 = sand.u32 %s43, 1
        %s680 = scalar_lea.sflag [#allocation9], %s679
        %s681 = sand.u32 %s129, 1
        %s682 = smul.addr %s681, 128
        %s683 = scalar_lea.vmem [#allocation8], %s682
        // Predicated region
        $region93: #{tfr_forward.1} parent=79 // pred_check
          %p684 = pneg %p142
        $region94: #{tfr_forward.1} parent=79 // pred_check_branch
          %686 = sbr.rel (%p684) target = $region96
        $region95: #{tfr_forward.1} parent=79 // pred_region
          %687 = dma.done %s680, 2048
        $region96: #{tfr_forward.1} parent=79 // pred_fallthru
          _
        // Predicated region
        $region97: #{tfr_forward.1} parent=79 // pred_check
          %p688 = pneg %p163
        $region98: #{tfr_forward.1} parent=79 // pred_check_branch
          %690 = sbr.rel (%p688) target = $region100
        $region99: #{tfr_forward.1} parent=79 // pred_region
          %691 = dma.done [#allocation9], 9216
        $region100: #{tfr_forward.1} parent=79 // pred_fallthru
          _
        // Predicated region
        $region101: #{tfr_forward.1} parent=79 // pred_check
          %p692 = pneg %p184
        $region102: #{tfr_forward.1} parent=79 // pred_check_branch
          %694 = sbr.rel (%p692) target = $region104
        $region103: #{tfr_forward.1} parent=79 // pred_region
          %695 = dma.done [#allocation12], 9216
        $region104: #{tfr_forward.1} parent=79 // pred_fallthru
          _
        // Predicated region
        $region105: #{tfr_forward.1} parent=79 // pred_check
          %p696 = pneg %p205
        $region106: #{tfr_forward.1} parent=79 // pred_check_branch
          %698 = sbr.rel (%p696) target = $region108
        $region107: #{tfr_forward.1} parent=79 // pred_region
          %699 = dma.done [#allocation12], 3072
        $region108: #{tfr_forward.1} parent=79 // pred_fallthru
          _
        // Predicated region
        $region109: #{tfr_forward.1} parent=79 // pred_check
          %p700 = pneg %p226
        $region110: #{tfr_forward.1} parent=79 // pred_check_branch
          %702 = sbr.rel (%p700) target = $region112
        $region111: #{tfr_forward.1} parent=79 // pred_region
          %703 = dma.done [#allocation15], 3072
        $region112: #{tfr_forward.1} parent=79 // pred_fallthru
          _
        // Predicated region
        $region113: #{tfr_forward.1} parent=79 // pred_check
          %p704 = pneg %p247
        $region114: #{tfr_forward.1} parent=79 // pred_check_branch
          %706 = sbr.rel (%p704) target = $region116
        $region115: #{tfr_forward.1} parent=79 // pred_region
          %707 = dma.done [#allocation15], 4608
        $region116: #{tfr_forward.1} parent=79 // pred_fallthru
          _
        // Predicated region
        $region117: #{tfr_forward.1} parent=79 // pred_check
          %p708 = pneg %p268
        $region118: #{tfr_forward.1} parent=79 // pred_check_branch
          %710 = sbr.rel (%p708) target = $region120
        $region119: #{tfr_forward.1} parent=79 // pred_region
          %711 = dma.done [#allocation18], 512
        $region120: #{tfr_forward.1} parent=79 // pred_fallthru
          _
        // Predicated region
        $region121: #{tfr_forward.1} parent=79 // pred_check
          %p712 = pneg %p289
        $region122: #{tfr_forward.1} parent=79 // pred_check_branch
          %714 = sbr.rel (%p712) target = $region124
        $region123: #{tfr_forward.1} parent=79 // pred_region
          %715 = dma.done [#allocation18], 512
        $region124: #{tfr_forward.1} parent=79 // pred_fallthru
          _
        // Predicated region
        $region125: #{tfr_forward.1} parent=79 // pred_check
          %p716 = pneg %p310
        $region126: #{tfr_forward.1} parent=79 // pred_check_branch
          %718 = sbr.rel (%p716) target = $region128
        $region127: #{tfr_forward.1} parent=79 // pred_region
          %719 = dma.done [#allocation21], 512
        $region128: #{tfr_forward.1} parent=79 // pred_fallthru
          _
        // Predicated region
        $region129: #{tfr_forward.1} parent=79 // pred_check
          %p720 = pneg %p331
        $region130: #{tfr_forward.1} parent=79 // pred_check_branch
          %722 = sbr.rel (%p720) target = $region132
        $region131: #{tfr_forward.1} parent=79 // pred_region
          %723 = dma.done [#allocation21], 2048
        $region132: #{tfr_forward.1} parent=79 // pred_fallthru
          _
        // Predicated region
        $region133: #{tfr_forward.1} parent=79 // pred_check
          %p724 = pneg %p352
        $region134: #{tfr_forward.1} parent=79 // pred_check_branch
          %726 = sbr.rel (%p724) target = $region136
        $region135: #{tfr_forward.1} parent=79 // pred_region
          %727 = dma.done [#allocation24], 512
        $region136: #{tfr_forward.1} parent=79 // pred_fallthru
          _
        // Predicated region
        $region137: #{tfr_forward.1} parent=79 // pred_check
          %p728 = pneg %p373
        $region138: #{tfr_forward.1} parent=79 // pred_check_branch
          %730 = sbr.rel (%p728) target = $region140
        $region139: #{tfr_forward.1} parent=79 // pred_region
          %731 = dma.done [#allocation24], 288
        $region140: #{tfr_forward.1} parent=79 // pred_fallthru
          _
        %s732 = sand.u32 %s51, 1
        %s733 = scalar_lea.sflag [#allocation3], %s732
        %s734 = sand.u32 %s51, 1
        %s735 = smul.addr %s734, 64
        %s736 = scalar_lea.vmem [#allocation2], %s735
        %p737 = pneg %p64
        %p738 = pneg %p61
        %s739 = sand.u32 %s43, 1
        %s740 = scalar_lea.sflag [#allocation6], %s739
        %s741 = sand.u32 %s77, 1
        %s742 = smul.addr %s741, 128
        %s743 = scalar_lea.vmem [#allocation5], %s742
        %p744 = pneg %p90
        %p745 = pneg %p87
        %s746 = sand.u32 %s43, 1
        %s747 = scalar_lea.sflag [#allocation6], %s746
        %s748 = sand.u32 %s103, 1
        %s749 = smul.addr %s748, 96
        %s750 = scalar_lea.vmem [#allocation7], %s749
        %p751 = pneg %p116
        %p752 = pneg %p113
        %s753 = sand.u32 %s43, 1
        %s754 = scalar_lea.sflag [#allocation9], %s753
        %s755 = sand.u32 %s129, 1
        %s756 = smul.addr %s755, 128
        %s757 = scalar_lea.vmem [#allocation8], %s756
        %p758 = pneg %p142
        %p759 = pneg %p139
        %p760 = pneg %p163
        %p761 = pneg %p160
        %p762 = pneg %p184
        %p763 = pneg %p181
        %p764 = pneg %p205
        %p765 = pneg %p202
        %p766 = pneg %p226
        %p767 = pneg %p223
        %p768 = pneg %p247
        %p769 = pneg %p244
        %p770 = pneg %p268
        %p771 = pneg %p265
        %p772 = pneg %p289
        %p773 = pneg %p286
        %p774 = pneg %p310
        %p775 = pneg %p307
        %p776 = pneg %p331
        %p777 = pneg %p328
        %p778 = pneg %p352
        %p779 = pneg %p349
        %p780 = pneg %p373
        %p781 = pneg %p370
        %p782 = pneg %p399
        %p783 = pneg %p396
        %s784 = sand.u32 %s386, 1
        %s785 = scalar_lea.sflag [#allocation4], %s784
        %s786 = sand.u32 %s386, 1
        %s787 = smul.addr %s786, 64
        %s788 = scalar_lea.vmem [#allocation26], %s787
        %v789 = vld [vmem:[%s656] sm:$0xff]
        %v790 = vld [vmem:[%s656 + $0x8] sm:$0xff]
        %v791 = vld [vmem:[%s656 + $0x10] sm:$0xff]
        %v792 = vld [vmem:[%s656 + $0x18] sm:$0xff]
        %v793 = vld [vmem:[%s656 + $0x20] sm:$0xff]
        %v794 = vld [vmem:[%s656 + $0x28] sm:$0xff]
        %v795 = vld [vmem:[%s656 + $0x30] sm:$0xff]
        %v796 = vld [vmem:[%s656 + $0x38] sm:$0xff]
        loop: start=0, step=1, limit=2
        $region141: #{tfr_forward.1} parent=79 // loop_pre_header
          _
        $region142: #{tfr_forward.1} parent=79 // loop_header
          %s798 = sphi 0, %s802
          %p799 = scmp.ge.s32.totalorder %s798, 2
          %v803 = vphi %v789, %v2171
          %v804 = vphi %v790, %v2172
          %v805 = vphi %v791, %v2173
          %v806 = vphi %v792, %v2174
          %v807 = vphi %v793, %v2175
          %v808 = vphi %v794, %v2176
          %v809 = vphi %v795, %v2177
          %v810 = vphi %v796, %v2178
        $region143: #{tfr_forward.1} parent=79 // loop_header_branch
          %801 = sbr.rel (%p799) target = $region147
        $region144: #{tfr_forward.1} parent=79 // loop_body
          %s811 = smul.u32 %s798, 12
          %s812 = smul.addr %s811, 8
          %s813 = scalar_lea.vmem [#allocation10], %s812
          %v814 = vld [vmem:[%s813] sm:$0xff]
          %v815 = vld [vmem:[%s813 + $0x8] sm:$0xff]
          %v816 = vld [vmem:[%s813 + $0x10] sm:$0xff]
          %v817 = vld [vmem:[%s813 + $0x18] sm:$0xff]
          %v818 = vld [vmem:[%s813 + $0x20] sm:$0xff]
          %v819 = vld [vmem:[%s813 + $0x28] sm:$0xff]
          %v820 = vld [vmem:[%s813 + $0x30] sm:$0xff]
          %v821 = vld [vmem:[%s813 + $0x38] sm:$0xff]
          %v822 = vld [vmem:[%s813 + $0x40] sm:$0xff]
          %v823 = vld [vmem:[%s813 + $0x48] sm:$0xff]
          %v824 = vld [vmem:[%s813 + $0x50] sm:$0xff]
          %v825 = vld [vmem:[%s813 + $0x58] sm:$0xff]
          %830 = vrot.lane.b32.xlu0 %v804, 17
          %v831 = vpop.permute.xlu0 %830
          %832 = vrot.lane.b32.xlu0 %v806, 17
          %v833 = vpop.permute.xlu0 %832
          %834 = vrot.lane.b32.xlu0 %v808, 17
          %v835 = vpop.permute.xlu0 %834
          %836 = vrot.lane.b32.xlu0 %v810, 17
          %v837 = vpop.permute.xlu0 %836
          %846 = vrot.lane.b32.xlu0 %v803, 17
          %v847 = vpop.permute.xlu0 %846
          %848 = vrot.lane.b32.xlu0 %v805, 17
          %v849 = vpop.permute.xlu0 %848
          %850 = vrot.lane.b32.xlu0 %v807, 17
          %v851 = vpop.permute.xlu0 %850
          %852 = vrot.lane.b32.xlu0 %v809, 17
          %v853 = vpop.permute.xlu0 %852
          %vm854 = vcmask 138240
          %v855 = vsel %vm854, %v847, %v831
          %v856 = vsel %vm854, %v849, %v833
          %v857 = vsel %vm854, %v851, %v835
          %v858 = vsel %vm854, %v853, %v837
          %v867 = vsel %vm854, %v831, %v847
          %v868 = vsel %vm854, %v833, %v849
          %v869 = vsel %vm854, %v835, %v851
          %v870 = vsel %vm854, %v837, %v853
          %v871 = vld [vmem:[#allocation25] sm:$0x3]
          %v873 = vlaneseq
          %v874 = vshrl.u32 %v873, 7
          %v875 = vsub.s32 0, %v874
          %v876 = vrot.slane %v871, %v875
          %v877 = vlaneseq
          %v878 = vshrl.u32 %v877, 7
          %v879 = vsub.s32 1, %v878
          %v880 = vrot.slane %v871, %v879
          %v883 = vmul.f32 %v867, %v876
          %v884 = vmul.f32 %v855, %v880
          %v885 = vmul.f32 %v868, %v876
          %v886 = vmul.f32 %v856, %v880
          %v887 = vmul.f32 %v869, %v876
          %v888 = vmul.f32 %v857, %v880
          %v889 = vmul.f32 %v870, %v876
          %v890 = vmul.f32 %v858, %v880
          %891 = vrot.lane.b32.xlu0 %v804, 16
          %v892 = vpop.permute.xlu0 %891
          %893 = vrot.lane.b32.xlu0 %v806, 16
          %v894 = vpop.permute.xlu0 %893
          %895 = vrot.lane.b32.xlu0 %v808, 16
          %v896 = vpop.permute.xlu0 %895
          %897 = vrot.lane.b32.xlu0 %v810, 16
          %v898 = vpop.permute.xlu0 %897
          %903 = vrot.lane.b32.xlu0 %v803, 16
          %v904 = vpop.permute.xlu0 %903
          %905 = vrot.lane.b32.xlu0 %v805, 16
          %v906 = vpop.permute.xlu0 %905
          %907 = vrot.lane.b32.xlu0 %v807, 16
          %v908 = vpop.permute.xlu0 %907
          %909 = vrot.lane.b32.xlu0 %v809, 16
          %v910 = vpop.permute.xlu0 %909
          %vm911 = vcmask 130048
          %v912 = vsel %vm911, %v904, %v892
          %v913 = vsel %vm911, %v906, %v894
          %v914 = vsel %vm911, %v908, %v896
          %v915 = vsel %vm911, %v910, %v898
          %v924 = vsel %vm911, %v892, %v904
          %v925 = vsel %vm911, %v894, %v906
          %v926 = vsel %vm911, %v896, %v908
          %v927 = vsel %vm911, %v898, %v910
          %s928 = scalar_lea.vmem [#allocation25], 2
          %v929 = vld [vmem:[%s928] sm:$0x3]
          %v931 = vlaneseq
          %v932 = vshrl.u32 %v931, 7
          %v933 = vsub.s32 0, %v932
          %v934 = vrot.slane %v929, %v933
          %v935 = vlaneseq
          %v936 = vshrl.u32 %v935, 7
          %v937 = vsub.s32 1, %v936
          %v938 = vrot.slane %v929, %v937
          %v941 = vmul.f32 %v924, %v934
          %v942 = vmul.f32 %v912, %v938
          %v943 = vmul.f32 %v925, %v934
          %v944 = vmul.f32 %v913, %v938
          %v945 = vmul.f32 %v926, %v934
          %v946 = vmul.f32 %v914, %v938
          %v947 = vmul.f32 %v927, %v934
          %v948 = vmul.f32 %v915, %v938
          %949 = vrot.lane.b32.xlu0 %v804, 15
          %v950 = vpop.permute.xlu0 %949
          %951 = vrot.lane.b32.xlu0 %v806, 15
          %v952 = vpop.permute.xlu0 %951
          %953 = vrot.lane.b32.xlu0 %v808, 15
          %v954 = vpop.permute.xlu0 %953
          %955 = vrot.lane.b32.xlu0 %v810, 15
          %v956 = vpop.permute.xlu0 %955
          %961 = vrot.lane.b32.xlu0 %v803, 15
          %v962 = vpop.permute.xlu0 %961
          %963 = vrot.lane.b32.xlu0 %v805, 15
          %v964 = vpop.permute.xlu0 %963
          %965 = vrot.lane.b32.xlu0 %v807, 15
          %v966 = vpop.permute.xlu0 %965
          %967 = vrot.lane.b32.xlu0 %v809, 15
          %v968 = vpop.permute.xlu0 %967
          %vm969 = vcmask 121856
          %v970 = vsel %vm969, %v962, %v950
          %v971 = vsel %vm969, %v964, %v952
          %v972 = vsel %vm969, %v966, %v954
          %v973 = vsel %vm969, %v968, %v956
          %v982 = vsel %vm969, %v950, %v962
          %v983 = vsel %vm969, %v952, %v964
          %v984 = vsel %vm969, %v954, %v966
          %v985 = vsel %vm969, %v956, %v968
          %s986 = scalar_lea.vmem [#allocation25], 4
          %v987 = vld [vmem:[%s986] sm:$0x3]
          %v989 = vlaneseq
          %v990 = vshrl.u32 %v989, 7
          %v991 = vsub.s32 0, %v990
          %v992 = vrot.slane %v987, %v991
          %v993 = vlaneseq
          %v994 = vshrl.u32 %v993, 7
          %v995 = vsub.s32 1, %v994
          %v996 = vrot.slane %v987, %v995
          %v999 = vmul.f32 %v982, %v992
          %v1000 = vmul.f32 %v970, %v996
          %v1001 = vmul.f32 %v983, %v992
          %v1002 = vmul.f32 %v971, %v996
          %v1003 = vmul.f32 %v984, %v992
          %v1004 = vmul.f32 %v972, %v996
          %v1005 = vmul.f32 %v985, %v992
          %v1006 = vmul.f32 %v973, %v996
          %1007 = vrot.lane.b32.xlu0 %v804, 1
          %v1008 = vpop.permute.xlu0 %1007
          %1009 = vrot.lane.b32.xlu0 %v806, 1
          %v1010 = vpop.permute.xlu0 %1009
          %1011 = vrot.lane.b32.xlu0 %v808, 1
          %v1012 = vpop.permute.xlu0 %1011
          %1013 = vrot.lane.b32.xlu0 %v810, 1
          %v1014 = vpop.permute.xlu0 %1013
          %1019 = vrot.lane.b32.xlu0 %v803, 1
          %v1020 = vpop.permute.xlu0 %1019
          %1021 = vrot.lane.b32.xlu0 %v805, 1
          %v1022 = vpop.permute.xlu0 %1021
          %1023 = vrot.lane.b32.xlu0 %v807, 1
          %v1024 = vpop.permute.xlu0 %1023
          %1025 = vrot.lane.b32.xlu0 %v809, 1
          %v1026 = vpop.permute.xlu0 %1025
          %vm1027 = vcmask 7168
          %v1028 = vsel %vm1027, %v1020, %v1008
          %v1029 = vsel %vm1027, %v1022, %v1010
          %v1030 = vsel %vm1027, %v1024, %v1012
          %v1031 = vsel %vm1027, %v1026, %v1014
          %v1040 = vsel %vm1027, %v1008, %v1020
          %v1041 = vsel %vm1027, %v1010, %v1022
          %v1042 = vsel %vm1027, %v1012, %v1024
          %v1043 = vsel %vm1027, %v1014, %v1026
          %s1044 = scalar_lea.vmem [#allocation25], 6
          %v1045 = vld [vmem:[%s1044] sm:$0x3]
          %v1047 = vlaneseq
          %v1048 = vshrl.u32 %v1047, 7
          %v1049 = vsub.s32 0, %v1048
          %v1050 = vrot.slane %v1045, %v1049
          %v1051 = vlaneseq
          %v1052 = vshrl.u32 %v1051, 7
          %v1053 = vsub.s32 1, %v1052
          %v1054 = vrot.slane %v1045, %v1053
          %v1057 = vmul.f32 %v1040, %v1050
          %v1058 = vmul.f32 %v1028, %v1054
          %v1059 = vmul.f32 %v1041, %v1050
          %v1060 = vmul.f32 %v1029, %v1054
          %v1061 = vmul.f32 %v1042, %v1050
          %v1062 = vmul.f32 %v1030, %v1054
          %v1063 = vmul.f32 %v1043, %v1050
          %v1064 = vmul.f32 %v1031, %v1054
          %1065 = vrot.lane.b32.xlu0 %v803, 127
          %v1066 = vpop.permute.xlu0 %1065
          %1067 = vrot.lane.b32.xlu0 %v804, 127
          %v1068 = vpop.permute.xlu0 %1067
          %1069 = vrot.lane.b32.xlu0 %v805, 127
          %v1070 = vpop.permute.xlu0 %1069
          %1071 = vrot.lane.b32.xlu0 %v806, 127
          %v1072 = vpop.permute.xlu0 %1071
          %1073 = vrot.lane.b32.xlu0 %v807, 127
          %v1074 = vpop.permute.xlu0 %1073
          %1075 = vrot.lane.b32.xlu0 %v808, 127
          %v1076 = vpop.permute.xlu0 %1075
          %1077 = vrot.lane.b32.xlu0 %v809, 127
          %v1078 = vpop.permute.xlu0 %1077
          %1079 = vrot.lane.b32.xlu0 %v810, 127
          %v1080 = vpop.permute.xlu0 %1079
          %vm1081 = vcmask 1039360
          %v1082 = vsel %vm1081, %v1066, %v1068
          %v1083 = vsel %vm1081, %v1070, %v1072
          %v1084 = vsel %vm1081, %v1074, %v1076
          %v1085 = vsel %vm1081, %v1078, %v1080
          %v1098 = vsel %vm1081, %v1068, %v1066
          %v1099 = vsel %vm1081, %v1072, %v1070
          %v1100 = vsel %vm1081, %v1076, %v1074
          %v1101 = vsel %vm1081, %v1080, %v1078
          %s1102 = scalar_lea.vmem [#allocation25], 10
          %v1103 = vld [vmem:[%s1102] sm:$0x3]
          %v1105 = vlaneseq
          %v1106 = vshrl.u32 %v1105, 7
          %v1107 = vsub.s32 0, %v1106
          %v1108 = vrot.slane %v1103, %v1107
          %v1109 = vlaneseq
          %v1110 = vshrl.u32 %v1109, 7
          %v1111 = vsub.s32 1, %v1110
          %v1112 = vrot.slane %v1103, %v1111
          %v1115 = vmul.f32 %v1082, %v1108
          %v1116 = vmul.f32 %v1098, %v1112
          %v1117 = vmul.f32 %v1083, %v1108
          %v1118 = vmul.f32 %v1099, %v1112
          %v1119 = vmul.f32 %v1084, %v1108
          %v1120 = vmul.f32 %v1100, %v1112
          %v1121 = vmul.f32 %v1085, %v1108
          %v1122 = vmul.f32 %v1101, %v1112
          %1123 = vrot.lane.b32.xlu0 %v803, 113
          %v1124 = vpop.permute.xlu0 %1123
          %1125 = vrot.lane.b32.xlu0 %v804, 113
          %v1126 = vpop.permute.xlu0 %1125
          %1127 = vrot.lane.b32.xlu0 %v805, 113
          %v1128 = vpop.permute.xlu0 %1127
          %1129 = vrot.lane.b32.xlu0 %v806, 113
          %v1130 = vpop.permute.xlu0 %1129
          %1131 = vrot.lane.b32.xlu0 %v807, 113
          %v1132 = vpop.permute.xlu0 %1131
          %1133 = vrot.lane.b32.xlu0 %v808, 113
          %v1134 = vpop.permute.xlu0 %1133
          %1135 = vrot.lane.b32.xlu0 %v809, 113
          %v1136 = vpop.permute.xlu0 %1135
          %1137 = vrot.lane.b32.xlu0 %v810, 113
          %v1138 = vpop.permute.xlu0 %1137
          %vm1139 = vcmask 924672
          %v1140 = vsel %vm1139, %v1124, %v1126
          %v1141 = vsel %vm1139, %v1128, %v1130
          %v1142 = vsel %vm1139, %v1132, %v1134
          %v1143 = vsel %vm1139, %v1136, %v1138
          %v1156 = vsel %vm1139, %v1126, %v1124
          %v1157 = vsel %vm1139, %v1130, %v1128
          %v1158 = vsel %vm1139, %v1134, %v1132
          %v1159 = vsel %vm1139, %v1138, %v1136
          %s1160 = scalar_lea.vmem [#allocation25], 12
          %v1161 = vld [vmem:[%s1160] sm:$0x3]
          %v1163 = vlaneseq
          %v1164 = vshrl.u32 %v1163, 7
          %v1165 = vsub.s32 0, %v1164
          %v1166 = vrot.slane %v1161, %v1165
          %v1167 = vlaneseq
          %v1168 = vshrl.u32 %v1167, 7
          %v1169 = vsub.s32 1, %v1168
          %v1170 = vrot.slane %v1161, %v1169
          %v1173 = vmul.f32 %v1140, %v1166
          %v1174 = vmul.f32 %v1156, %v1170
          %v1175 = vmul.f32 %v1141, %v1166
          %v1176 = vmul.f32 %v1157, %v1170
          %v1177 = vmul.f32 %v1142, %v1166
          %v1178 = vmul.f32 %v1158, %v1170
          %v1179 = vmul.f32 %v1143, %v1166
          %v1180 = vmul.f32 %v1159, %v1170
          %1181 = vrot.lane.b32.xlu0 %v803, 112
          %v1182 = vpop.permute.xlu0 %1181
          %1183 = vrot.lane.b32.xlu0 %v804, 112
          %v1184 = vpop.permute.xlu0 %1183
          %1185 = vrot.lane.b32.xlu0 %v805, 112
          %v1186 = vpop.permute.xlu0 %1185
          %1187 = vrot.lane.b32.xlu0 %v806, 112
          %v1188 = vpop.permute.xlu0 %1187
          %1189 = vrot.lane.b32.xlu0 %v807, 112
          %v1190 = vpop.permute.xlu0 %1189
          %1191 = vrot.lane.b32.xlu0 %v808, 112
          %v1192 = vpop.permute.xlu0 %1191
          %1193 = vrot.lane.b32.xlu0 %v809, 112
          %v1194 = vpop.permute.xlu0 %1193
          %1195 = vrot.lane.b32.xlu0 %v810, 112
          %v1196 = vpop.permute.xlu0 %1195
          %vm1197 = vcmask 916480
          %v1198 = vsel %vm1197, %v1182, %v1184
          %v1199 = vsel %vm1197, %v1186, %v1188
          %v1200 = vsel %vm1197, %v1190, %v1192
          %v1201 = vsel %vm1197, %v1194, %v1196
          %v1214 = vsel %vm1197, %v1184, %v1182
          %v1215 = vsel %vm1197, %v1188, %v1186
          %v1216 = vsel %vm1197, %v1192, %v1190
          %v1217 = vsel %vm1197, %v1196, %v1194
          %s1218 = scalar_lea.vmem [#allocation25], 14
          %v1219 = vld [vmem:[%s1218] sm:$0x3]
          %v1221 = vlaneseq
          %v1222 = vshrl.u32 %v1221, 7
          %v1223 = vsub.s32 0, %v1222
          %v1224 = vrot.slane %v1219, %v1223
          %v1225 = vlaneseq
          %v1226 = vshrl.u32 %v1225, 7
          %v1227 = vsub.s32 1, %v1226
          %v1228 = vrot.slane %v1219, %v1227
          %v1231 = vmul.f32 %v1198, %v1224
          %v1232 = vmul.f32 %v1214, %v1228
          %v1233 = vmul.f32 %v1199, %v1224
          %v1234 = vmul.f32 %v1215, %v1228
          %v1235 = vmul.f32 %v1200, %v1224
          %v1236 = vmul.f32 %v1216, %v1228
          %v1237 = vmul.f32 %v1201, %v1224
          %v1238 = vmul.f32 %v1217, %v1228
          %1239 = vrot.lane.b32.xlu0 %v803, 111
          %v1240 = vpop.permute.xlu0 %1239
          %1241 = vrot.lane.b32.xlu0 %v804, 111
          %v1242 = vpop.permute.xlu0 %1241
          %1243 = vrot.lane.b32.xlu0 %v805, 111
          %v1244 = vpop.permute.xlu0 %1243
          %1245 = vrot.lane.b32.xlu0 %v806, 111
          %v1246 = vpop.permute.xlu0 %1245
          %1247 = vrot.lane.b32.xlu0 %v807, 111
          %v1248 = vpop.permute.xlu0 %1247
          %1249 = vrot.lane.b32.xlu0 %v808, 111
          %v1250 = vpop.permute.xlu0 %1249
          %1251 = vrot.lane.b32.xlu0 %v809, 111
          %v1252 = vpop.permute.xlu0 %1251
          %1253 = vrot.lane.b32.xlu0 %v810, 111
          %v1254 = vpop.permute.xlu0 %1253
          %vm1255 = vcmask 908288
          %v1256 = vsel %vm1255, %v1240, %v1242
          %v1257 = vsel %vm1255, %v1244, %v1246
          %v1258 = vsel %vm1255, %v1248, %v1250
          %v1259 = vsel %vm1255, %v1252, %v1254
          %v1272 = vsel %vm1255, %v1242, %v1240
          %v1273 = vsel %vm1255, %v1246, %v1244
          %v1274 = vsel %vm1255, %v1250, %v1248
          %v1275 = vsel %vm1255, %v1254, %v1252
          %s1276 = scalar_lea.vmem [#allocation25], 16
          %v1277 = vld [vmem:[%s1276] sm:$0x3]
          %v1279 = vlaneseq
          %v1280 = vshrl.u32 %v1279, 7
          %v1281 = vsub.s32 0, %v1280
          %v1282 = vrot.slane %v1277, %v1281
          %v1283 = vlaneseq
          %v1284 = vshrl.u32 %v1283, 7
          %v1285 = vsub.s32 1, %v1284
          %v1286 = vrot.slane %v1277, %v1285
          %v1289 = vmul.f32 %v1256, %v1282
          %v1290 = vmul.f32 %v1272, %v1286
          %v1291 = vmul.f32 %v1257, %v1282
          %v1292 = vmul.f32 %v1273, %v1286
          %v1293 = vmul.f32 %v1258, %v1282
          %v1294 = vmul.f32 %v1274, %v1286
          %v1295 = vmul.f32 %v1259, %v1282
          %v1296 = vmul.f32 %v1275, %v1286
          %vm1297 = vcmask 261120
          %v1299 = vsel %vm1297, %v816, 0
          %v1302 = vsel %vm1297, %v819, 0
          %v1305 = vsel %vm1297, %v822, 0
          %v1308 = vsel %vm1297, %v825, 0
          %1310 = vmatprep.subr.mxu0 %v884
          %1311 = vmatpush1.msra.mxu0 %v883
          %1312 = vmatprep.subr.mxu0 %v886
          %1313 = vmatpush1.msra.mxu0 %v885
          %1314 = vmatprep.subr.mxu0 %v888
          %1315 = vmatpush1.msra.mxu0 %v887
          %1316 = vmatprep.subr.mxu0 %v890
          %1317 = vmatpush1.msra.mxu0 %v889
          %1318 = vmatprep.subr.mxu0 %v942
          %1319 = vmatpush1.msra.mxu0 %v941
          %1320 = vmatprep.subr.mxu0 %v944
          %1321 = vmatpush1.msra.mxu0 %v943
          %1322 = vmatprep.subr.mxu0 %v946
          %1323 = vmatpush1.msra.mxu0 %v945
          %1324 = vmatprep.subr.mxu0 %v948
          %1325 = vmatpush1.msra.mxu0 %v947
          %1326 = vmatprep.subr.mxu0 %v1000
          %1327 = vmatpush1.msra.mxu0 %v999
          %1328 = vmatprep.subr.mxu0 %v1002
          %1329 = vmatpush1.msra.mxu0 %v1001
          %1330 = vmatprep.subr.mxu0 %v1004
          %1331 = vmatpush1.msra.mxu0 %v1003
          %1332 = vmatprep.subr.mxu0 %v1006
          %1333 = vmatpush1.msra.mxu0 %v1005
          %1334 = vmatprep.subr.mxu0 %v1058
          %1335 = vmatpush1.msra.mxu0 %v1057
          %1336 = vmatprep.subr.mxu0 %v1060
          %1337 = vmatpush1.msra.mxu0 %v1059
          %1338 = vmatprep.subr.mxu0 %v1062
          %1339 = vmatpush1.msra.mxu0 %v1061
          %1340 = vmatprep.subr.mxu0 %v1064
          %1341 = vmatpush1.msra.mxu0 %v1063
          %1342 = vmatprep.subr.mxu0 %v804
          %1343 = vmatpush1.msra.mxu0 %v803
          %1344 = vmatprep.subr.mxu0 %v806
          %1345 = vmatpush1.msra.mxu0 %v805
          %1346 = vmatprep.subr.mxu0 %v808
          %1347 = vmatpush1.msra.mxu0 %v807
          %1348 = vmatprep.subr.mxu0 %v810
          %1349 = vmatpush1.msra.mxu0 %v809
          %1350 = vmatprep.subr.mxu0 %v1116
          %1351 = vmatpush1.msra.mxu0 %v1115
          %1352 = vmatprep.subr.mxu0 %v1118
          %1353 = vmatpush1.msra.mxu0 %v1117
          %1354 = vmatprep.subr.mxu0 %v1120
          %1355 = vmatpush1.msra.mxu0 %v1119
          %1356 = vmatprep.subr.mxu0 %v1122
          %1357 = vmatpush1.msra.mxu0 %v1121
          %1358 = vmatprep.subr.mxu0 %v1174
          %1359 = vmatpush1.msra.mxu0 %v1173
          %1360 = vmatprep.subr.mxu0 %v1176
          %1361 = vmatpush1.msra.mxu0 %v1175
          %1362 = vmatprep.subr.mxu0 %v1178
          %1363 = vmatpush1.msra.mxu0 %v1177
          %1364 = vmatprep.subr.mxu0 %v1180
          %1365 = vmatpush1.msra.mxu0 %v1179
          %1366 = vmatprep.subr.mxu0 %v1232
          %1367 = vmatpush1.msra.mxu0 %v1231
          %1368 = vmatprep.subr.mxu0 %v1234
          %1369 = vmatpush1.msra.mxu0 %v1233
          %1370 = vmatprep.subr.mxu0 %v1236
          %1371 = vmatpush1.msra.mxu0 %v1235
          %1372 = vmatprep.subr.mxu0 %v1238
          %1373 = vmatpush1.msra.mxu0 %v1237
          %1374 = vmatprep.mubr.f32.mxu0 %v815
          %1375 = vmatmul.mubr.f32.gmra.mrb[0].mxu0 %v814
          %v1376 = vpop.f32.mrb[0].mxu0
          %v1377 = vadd.f32 0.0, %v1376
          %v1378 = vpop.f32.mrb[0].mxu0
          %v1379 = vadd.f32 0.0, %v1378
          %1380 = vmatprep.mubr.f32.mxu0 %v818
          %1381 = vmatmul.mubr.f32.gmra.mrb[0].mxu0 %v817
          %v1382 = vpop.f32.mrb[0].mxu0
          %v1383 = vadd.f32 0.0, %v1382
          %v1384 = vpop.f32.mrb[0].mxu0
          %v1385 = vadd.f32 0.0, %v1384
          %1386 = vmatprep.mubr.f32.mxu0 %v821
          %1387 = vmatmul.mubr.f32.gmra.mrb[0].mxu0 %v820
          %v1388 = vpop.f32.mrb[0].mxu0
          %v1389 = vadd.f32 0.0, %v1388
          %v1390 = vpop.f32.mrb[0].mxu0
          %v1391 = vadd.f32 0.0, %v1390
          %1392 = vmatprep.mubr.f32.mxu0 %v824
          %1393 = vmatmul.mubr.f32.gmra.mrb[0].mxu0 %v823
          %v1394 = vpop.f32.mrb[0].mxu0
          %v1395 = vadd.f32 0.0, %v1394
          %v1396 = vpop.f32.mrb[0].mxu0
          %v1397 = vadd.f32 0.0, %v1396
          %1398 = vdwg.mxu0
          %1399 = vmatprep.subr.mxu0 %v1290
          %1400 = vmatpush1.msra.mxu0 %v1289
          %1401 = vmatprep.subr.mxu0 %v1292
          %1402 = vmatpush1.msra.mxu0 %v1291
          %1403 = vmatprep.subr.mxu0 %v1294
          %1404 = vmatpush1.msra.mxu0 %v1293
          %1405 = vmatprep.subr.mxu0 %v1296
          %1406 = vmatpush1.msra.mxu0 %v1295
          %1407 = vmatprep.subr.mxu0 0.0
          %1408 = vmatpush1.msra.mxu0 0.0
          %1409 = vmatprep.subr.mxu0 0.0
          %1410 = vmatpush1.msra.mxu0 0.0
          %1411 = vmatprep.subr.mxu0 0.0
          %1412 = vmatpush1.msra.mxu0 0.0
          %1413 = vmatprep.subr.mxu0 0.0
          %1414 = vmatpush1.msra.mxu0 0.0
          %1415 = vmatprep.subr.mxu0 0.0
          %1416 = vmatpush1.msra.mxu0 0.0
          %1417 = vmatprep.subr.mxu0 0.0
          %1418 = vmatpush1.msra.mxu0 0.0
          %1419 = vmatprep.subr.mxu0 0.0
          %1420 = vmatpush1.msra.mxu0 0.0
          %1421 = vmatprep.subr.mxu0 0.0
          %1422 = vmatpush1.msra.mxu0 0.0
          %1423 = vmatprep.subr.mxu0 0.0
          %1424 = vmatpush1.msra.mxu0 0.0
          %1425 = vmatprep.subr.mxu0 0.0
          %1426 = vmatpush1.msra.mxu0 0.0
          %1427 = vmatprep.subr.mxu0 0.0
          %1428 = vmatpush1.msra.mxu0 0.0
          %1429 = vmatprep.subr.mxu0 0.0
          %1430 = vmatpush1.msra.mxu0 0.0
          %1431 = vmatprep.subr.mxu0 0.0
          %1432 = vmatpush1.msra.mxu0 0.0
          %1433 = vmatprep.subr.mxu0 0.0
          %1434 = vmatpush1.msra.mxu0 0.0
          %1435 = vmatprep.subr.mxu0 0.0
          %1436 = vmatpush1.msra.mxu0 0.0
          %1437 = vmatprep.subr.mxu0 0.0
          %1438 = vmatpush1.msra.mxu0 0.0
          %1439 = vmatprep.subr.mxu0 0.0
          %1440 = vmatpush1.msra.mxu0 0.0
          %1441 = vmatprep.subr.mxu0 0.0
          %1442 = vmatpush1.msra.mxu0 0.0
          %1443 = vmatprep.subr.mxu0 0.0
          %1444 = vmatpush1.msra.mxu0 0.0
          %1445 = vmatprep.subr.mxu0 0.0
          %1446 = vmatpush1.msra.mxu0 0.0
          %1447 = vmatprep.subr.mxu0 0.0
          %1448 = vmatpush1.msra.mxu0 0.0
          %1449 = vmatprep.subr.mxu0 0.0
          %1450 = vmatpush1.msra.mxu0 0.0
          %1451 = vmatprep.subr.mxu0 0.0
          %1452 = vmatpush1.msra.mxu0 0.0
          %1453 = vmatprep.subr.mxu0 0.0
          %1454 = vmatpush1.msra.mxu0 0.0
          %1455 = vmatprep.subr.mxu0 0.0
          %1456 = vmatpush1.msra.mxu0 0.0
          %1457 = vmatprep.subr.mxu0 0.0
          %1458 = vmatpush1.msra.mxu0 0.0
          %1459 = vmatprep.subr.mxu0 0.0
          %1460 = vmatpush1.msra.mxu0 0.0
          %1461 = vmatprep.subr.mxu0 0.0
          %1462 = vmatpush1.msra.mxu0 0.0
          %1463 = vmatprep.mubr.f32.mxu0 0.0
          %1464 = vmatmul.mubr.f32.gmra.mrb[0].mxu0 %v1299
          %v1465 = vpop.f32.mrb[0].mxu0
          %v1466 = vadd.f32 %v1377, %v1465
          %v1467 = vpop.f32.mrb[0].mxu0
          %v1468 = vadd.f32 %v1379, %v1467
          %1469 = vmatprep.mubr.f32.mxu0 0.0
          %1470 = vmatmul.mubr.f32.gmra.mrb[0].mxu0 %v1302
          %v1471 = vpop.f32.mrb[0].mxu0
          %v1472 = vadd.f32 %v1383, %v1471
          %v1473 = vpop.f32.mrb[0].mxu0
          %v1474 = vadd.f32 %v1385, %v1473
          %1475 = vmatprep.mubr.f32.mxu0 0.0
          %1476 = vmatmul.mubr.f32.gmra.mrb[0].mxu0 %v1305
          %v1477 = vpop.f32.mrb[0].mxu0
          %v1478 = vadd.f32 %v1389, %v1477
          %v1479 = vpop.f32.mrb[0].mxu0
          %v1480 = vadd.f32 %v1391, %v1479
          %1481 = vmatprep.mubr.f32.mxu0 0.0
          %1482 = vmatmul.mubr.f32.gmra.mrb[0].mxu0 %v1308
          %v1483 = vpop.f32.mrb[0].mxu0
          %v1484 = vadd.f32 %v1395, %v1483
          %v1485 = vpop.f32.mrb[0].mxu0
          %v1486 = vadd.f32 %v1397, %v1485
          %1487 = vdwg.mxu0
          %vm1488 = vcmp.ge.f32.partialorder %v1466, 0.0
          %vm1489 = vcmp.ge.f32.partialorder %v1468, 0.0
          %vm1490 = vcmp.ge.f32.partialorder %v1472, 0.0
          %vm1491 = vcmp.ge.f32.partialorder %v1474, 0.0
          %vm1492 = vcmp.ge.f32.partialorder %v1478, 0.0
          %vm1493 = vcmp.ge.f32.partialorder %v1480, 0.0
          %vm1494 = vcmp.ge.f32.partialorder %v1484, 0.0
          %vm1495 = vcmp.ge.f32.partialorder %v1486, 0.0
          %v1496 = vmul.f32 %v1466, 0.25
          %v1497 = vmul.f32 %v1468, 0.25
          %v1498 = vmul.f32 %v1472, 0.25
          %v1499 = vmul.f32 %v1474, 0.25
          %v1500 = vmul.f32 %v1478, 0.25
          %v1501 = vmul.f32 %v1480, 0.25
          %v1502 = vmul.f32 %v1484, 0.25
          %v1503 = vmul.f32 %v1486, 0.25
          %v1504 = vsel %vm1488, %v1466, %v1496
          %v1505 = vsel %vm1489, %v1468, %v1497
          %v1506 = vsel %vm1490, %v1472, %v1498
          %v1507 = vsel %vm1491, %v1474, %v1499
          %v1508 = vsel %vm1492, %v1478, %v1500
          %v1509 = vsel %vm1493, %v1480, %v1501
          %v1510 = vsel %vm1494, %v1484, %v1502
          %v1511 = vsel %vm1495, %v1486, %v1503
          %s1512 = smul.addr %s811, 8
          %s1513 = scalar_lea.vmem [#allocation11], %s1512
          %v1514 = vld [vmem:[%s1513] sm:$0xff]
          %v1515 = vld [vmem:[%s1513 + $0x8] sm:$0xff]
          %v1516 = vld [vmem:[%s1513 + $0x10] sm:$0xff]
          %v1517 = vld [vmem:[%s1513 + $0x18] sm:$0xff]
          %v1518 = vld [vmem:[%s1513 + $0x20] sm:$0xff]
          %v1519 = vld [vmem:[%s1513 + $0x28] sm:$0xff]
          %v1520 = vld [vmem:[%s1513 + $0x30] sm:$0xff]
          %v1521 = vld [vmem:[%s1513 + $0x38] sm:$0xff]
          %v1522 = vld [vmem:[%s1513 + $0x40] sm:$0xff]
          %v1523 = vld [vmem:[%s1513 + $0x48] sm:$0xff]
          %v1524 = vld [vmem:[%s1513 + $0x50] sm:$0xff]
          %v1525 = vld [vmem:[%s1513 + $0x58] sm:$0xff]
          %1530 = vrot.lane.b32.xlu0 %v1505, 17
          %v1531 = vpop.permute.xlu0 %1530
          %1532 = vrot.lane.b32.xlu0 %v1507, 17
          %v1533 = vpop.permute.xlu0 %1532
          %1534 = vrot.lane.b32.xlu0 %v1509, 17
          %v1535 = vpop.permute.xlu0 %1534
          %1536 = vrot.lane.b32.xlu0 %v1511, 17
          %v1537 = vpop.permute.xlu0 %1536
          %1546 = vrot.lane.b32.xlu0 %v1504, 17
          %v1547 = vpop.permute.xlu0 %1546
          %1548 = vrot.lane.b32.xlu0 %v1506, 17
          %v1549 = vpop.permute.xlu0 %1548
          %1550 = vrot.lane.b32.xlu0 %v1508, 17
          %v1551 = vpop.permute.xlu0 %1550
          %1552 = vrot.lane.b32.xlu0 %v1510, 17
          %v1553 = vpop.permute.xlu0 %1552
          %v1554 = vsel %vm854, %v1547, %v1531
          %v1555 = vsel %vm854, %v1549, %v1533
          %v1556 = vsel %vm854, %v1551, %v1535
          %v1557 = vsel %vm854, %v1553, %v1537
          %v1566 = vsel %vm854, %v1531, %v1547
          %v1567 = vsel %vm854, %v1533, %v1549
          %v1568 = vsel %vm854, %v1535, %v1551
          %v1569 = vsel %vm854, %v1537, %v1553
          %v1570 = vmul.f32 %v1566, %v876
          %v1571 = vmul.f32 %v1554, %v880
          %v1572 = vmul.f32 %v1567, %v876
          %v1573 = vmul.f32 %v1555, %v880
          %v1574 = vmul.f32 %v1568, %v876
          %v1575 = vmul.f32 %v1556, %v880
          %v1576 = vmul.f32 %v1569, %v876
          %v1577 = vmul.f32 %v1557, %v880
          %1578 = vrot.lane.b32.xlu0 %v1505, 16
          %v1579 = vpop.permute.xlu0 %1578
          %1580 = vrot.lane.b32.xlu0 %v1507, 16
          %v1581 = vpop.permute.xlu0 %1580
          %1582 = vrot.lane.b32.xlu0 %v1509, 16
          %v1583 = vpop.permute.xlu0 %1582
          %1584 = vrot.lane.b32.xlu0 %v1511, 16
          %v1585 = vpop.permute.xlu0 %1584
          %1590 = vrot.lane.b32.xlu0 %v1504, 16
          %v1591 = vpop.permute.xlu0 %1590
          %1592 = vrot.lane.b32.xlu0 %v1506, 16
          %v1593 = vpop.permute.xlu0 %1592
          %1594 = vrot.lane.b32.xlu0 %v1508, 16
          %v1595 = vpop.permute.xlu0 %1594
          %1596 = vrot.lane.b32.xlu0 %v1510, 16
          %v1597 = vpop.permute.xlu0 %1596
          %v1598 = vsel %vm911, %v1591, %v1579
          %v1599 = vsel %vm911, %v1593, %v1581
          %v1600 = vsel %vm911, %v1595, %v1583
          %v1601 = vsel %vm911, %v1597, %v1585
          %v1610 = vsel %vm911, %v1579, %v1591
          %v1611 = vsel %vm911, %v1581, %v1593
          %v1612 = vsel %vm911, %v1583, %v1595
          %v1613 = vsel %vm911, %v1585, %v1597
          %v1614 = vmul.f32 %v1610, %v934
          %v1615 = vmul.f32 %v1598, %v938
          %v1616 = vmul.f32 %v1611, %v934
          %v1617 = vmul.f32 %v1599, %v938
          %v1618 = vmul.f32 %v1612, %v934
          %v1619 = vmul.f32 %v1600, %v938
          %v1620 = vmul.f32 %v1613, %v934
          %v1621 = vmul.f32 %v1601, %v938
          %1622 = vrot.lane.b32.xlu0 %v1505, 15
          %v1623 = vpop.permute.xlu0 %1622
          %1624 = vrot.lane.b32.xlu0 %v1507, 15
          %v1625 = vpop.permute.xlu0 %1624
          %1626 = vrot.lane.b32.xlu0 %v1509, 15
          %v1627 = vpop.permute.xlu0 %1626
          %1628 = vrot.lane.b32.xlu0 %v1511, 15
          %v1629 = vpop.permute.xlu0 %1628
          %1634 = vrot.lane.b32.xlu0 %v1504, 15
          %v1635 = vpop.permute.xlu0 %1634
          %1636 = vrot.lane.b32.xlu0 %v1506, 15
          %v1637 = vpop.permute.xlu0 %1636
          %1638 = vrot.lane.b32.xlu0 %v1508, 15
          %v1639 = vpop.permute.xlu0 %1638
          %1640 = vrot.lane.b32.xlu0 %v1510, 15
          %v1641 = vpop.permute.xlu0 %1640
          %v1642 = vsel %vm969, %v1635, %v1623
          %v1643 = vsel %vm969, %v1637, %v1625
          %v1644 = vsel %vm969, %v1639, %v1627
          %v1645 = vsel %vm969, %v1641, %v1629
          %v1654 = vsel %vm969, %v1623, %v1635
          %v1655 = vsel %vm969, %v1625, %v1637
          %v1656 = vsel %vm969, %v1627, %v1639
          %v1657 = vsel %vm969, %v1629, %v1641
          %v1658 = vmul.f32 %v1654, %v992
          %v1659 = vmul.f32 %v1642, %v996
          %v1660 = vmul.f32 %v1655, %v992
          %v1661 = vmul.f32 %v1643, %v996
          %v1662 = vmul.f32 %v1656, %v992
          %v1663 = vmul.f32 %v1644, %v996
          %v1664 = vmul.f32 %v1657, %v992
          %v1665 = vmul.f32 %v1645, %v996
          %1666 = vrot.lane.b32.xlu0 %v1505, 1
          %v1667 = vpop.permute.xlu0 %1666
          %1668 = vrot.lane.b32.xlu0 %v1507, 1
          %v1669 = vpop.permute.xlu0 %1668
          %1670 = vrot.lane.b32.xlu0 %v1509, 1
          %v1671 = vpop.permute.xlu0 %1670
          %1672 = vrot.lane.b32.xlu0 %v1511, 1
          %v1673 = vpop.permute.xlu0 %1672
          %1678 = vrot.lane.b32.xlu0 %v1504, 1
          %v1679 = vpop.permute.xlu0 %1678
          %1680 = vrot.lane.b32.xlu0 %v1506, 1
          %v1681 = vpop.permute.xlu0 %1680
          %1682 = vrot.lane.b32.xlu0 %v1508, 1
          %v1683 = vpop.permute.xlu0 %1682
          %1684 = vrot.lane.b32.xlu0 %v1510, 1
          %v1685 = vpop.permute.xlu0 %1684
          %v1686 = vsel %vm1027, %v1679, %v1667
          %v1687 = vsel %vm1027, %v1681, %v1669
          %v1688 = vsel %vm1027, %v1683, %v1671
          %v1689 = vsel %vm1027, %v1685, %v1673
          %v1698 = vsel %vm1027, %v1667, %v1679
          %v1699 = vsel %vm1027, %v1669, %v1681
          %v1700 = vsel %vm1027, %v1671, %v1683
          %v1701 = vsel %vm1027, %v1673, %v1685
          %v1702 = vmul.f32 %v1698, %v1050
          %v1703 = vmul.f32 %v1686, %v1054
          %v1704 = vmul.f32 %v1699, %v1050
          %v1705 = vmul.f32 %v1687, %v1054
          %v1706 = vmul.f32 %v1700, %v1050
          %v1707 = vmul.f32 %v1688, %v1054
          %v1708 = vmul.f32 %v1701, %v1050
          %v1709 = vmul.f32 %v1689, %v1054
          %1710 = vrot.lane.b32.xlu0 %v1504, 127
          %v1711 = vpop.permute.xlu0 %1710
          %1712 = vrot.lane.b32.xlu0 %v1505, 127
          %v1713 = vpop.permute.xlu0 %1712
          %1714 = vrot.lane.b32.xlu0 %v1506, 127
          %v1715 = vpop.permute.xlu0 %1714
          %1716 = vrot.lane.b32.xlu0 %v1507, 127
          %v1717 = vpop.permute.xlu0 %1716
          %1718 = vrot.lane.b32.xlu0 %v1508, 127
          %v1719 = vpop.permute.xlu0 %1718
          %1720 = vrot.lane.b32.xlu0 %v1509, 127
          %v1721 = vpop.permute.xlu0 %1720
          %1722 = vrot.lane.b32.xlu0 %v1510, 127
          %v1723 = vpop.permute.xlu0 %1722
          %1724 = vrot.lane.b32.xlu0 %v1511, 127
          %v1725 = vpop.permute.xlu0 %1724
          %v1726 = vsel %vm1081, %v1711, %v1713
          %v1727 = vsel %vm1081, %v1715, %v1717
          %v1728 = vsel %vm1081, %v1719, %v1721
          %v1729 = vsel %vm1081, %v1723, %v1725
          %v1742 = vsel %vm1081, %v1713, %v1711
          %v1743 = vsel %vm1081, %v1717, %v1715
          %v1744 = vsel %vm1081, %v1721, %v1719
          %v1745 = vsel %vm1081, %v1725, %v1723
          %v1746 = vmul.f32 %v1726, %v1108
          %v1747 = vmul.f32 %v1742, %v1112
          %v1748 = vmul.f32 %v1727, %v1108
          %v1749 = vmul.f32 %v1743, %v1112
          %v1750 = vmul.f32 %v1728, %v1108
          %v1751 = vmul.f32 %v1744, %v1112
          %v1752 = vmul.f32 %v1729, %v1108
          %v1753 = vmul.f32 %v1745, %v1112
          %1754 = vrot.lane.b32.xlu0 %v1504, 113
          %v1755 = vpop.permute.xlu0 %1754
          %1756 = vrot.lane.b32.xlu0 %v1505, 113
          %v1757 = vpop.permute.xlu0 %1756
          %1758 = vrot.lane.b32.xlu0 %v1506, 113
          %v1759 = vpop.permute.xlu0 %1758
          %1760 = vrot.lane.b32.xlu0 %v1507, 113
          %v1761 = vpop.permute.xlu0 %1760
          %1762 = vrot.lane.b32.xlu0 %v1508, 113
          %v1763 = vpop.permute.xlu0 %1762
          %1764 = vrot.lane.b32.xlu0 %v1509, 113
          %v1765 = vpop.permute.xlu0 %1764
          %1766 = vrot.lane.b32.xlu0 %v1510, 113
          %v1767 = vpop.permute.xlu0 %1766
          %1768 = vrot.lane.b32.xlu0 %v1511, 113
          %v1769 = vpop.permute.xlu0 %1768
          %v1770 = vsel %vm1139, %v1755, %v1757
          %v1771 = vsel %vm1139, %v1759, %v1761
          %v1772 = vsel %vm1139, %v1763, %v1765
          %v1773 = vsel %vm1139, %v1767, %v1769
          %v1786 = vsel %vm1139, %v1757, %v1755
          %v1787 = vsel %vm1139, %v1761, %v1759
          %v1788 = vsel %vm1139, %v1765, %v1763
          %v1789 = vsel %vm1139, %v1769, %v1767
          %v1790 = vmul.f32 %v1770, %v1166
          %v1791 = vmul.f32 %v1786, %v1170
          %v1792 = vmul.f32 %v1771, %v1166
          %v1793 = vmul.f32 %v1787, %v1170
          %v1794 = vmul.f32 %v1772, %v1166
          %v1795 = vmul.f32 %v1788, %v1170
          %v1796 = vmul.f32 %v1773, %v1166
          %v1797 = vmul.f32 %v1789, %v1170
          %1798 = vrot.lane.b32.xlu0 %v1504, 112
          %v1799 = vpop.permute.xlu0 %1798
          %1800 = vrot.lane.b32.xlu0 %v1505, 112
          %v1801 = vpop.permute.xlu0 %1800
          %1802 = vrot.lane.b32.xlu0 %v1506, 112
          %v1803 = vpop.permute.xlu0 %1802
          %1804 = vrot.lane.b32.xlu0 %v1507, 112
          %v1805 = vpop.permute.xlu0 %1804
          %1806 = vrot.lane.b32.xlu0 %v1508, 112
          %v1807 = vpop.permute.xlu0 %1806
          %1808 = vrot.lane.b32.xlu0 %v1509, 112
          %v1809 = vpop.permute.xlu0 %1808
          %1810 = vrot.lane.b32.xlu0 %v1510, 112
          %v1811 = vpop.permute.xlu0 %1810
          %1812 = vrot.lane.b32.xlu0 %v1511, 112
          %v1813 = vpop.permute.xlu0 %1812
          %v1814 = vsel %vm1197, %v1799, %v1801
          %v1815 = vsel %vm1197, %v1803, %v1805
          %v1816 = vsel %vm1197, %v1807, %v1809
          %v1817 = vsel %vm1197, %v1811, %v1813
          %v1830 = vsel %vm1197, %v1801, %v1799
          %v1831 = vsel %vm1197, %v1805, %v1803
          %v1832 = vsel %vm1197, %v1809, %v1807
          %v1833 = vsel %vm1197, %v1813, %v1811
          %v1834 = vmul.f32 %v1814, %v1224
          %v1835 = vmul.f32 %v1830, %v1228
          %v1836 = vmul.f32 %v1815, %v1224
          %v1837 = vmul.f32 %v1831, %v1228
          %v1838 = vmul.f32 %v1816, %v1224
          %v1839 = vmul.f32 %v1832, %v1228
          %v1840 = vmul.f32 %v1817, %v1224
          %v1841 = vmul.f32 %v1833, %v1228
          %1842 = vrot.lane.b32.xlu0 %v1504, 111
          %v1843 = vpop.permute.xlu0 %1842
          %1844 = vrot.lane.b32.xlu0 %v1505, 111
          %v1845 = vpop.permute.xlu0 %1844
          %1846 = vrot.lane.b32.xlu0 %v1506, 111
          %v1847 = vpop.permute.xlu0 %1846
          %1848 = vrot.lane.b32.xlu0 %v1507, 111
          %v1849 = vpop.permute.xlu0 %1848
          %1850 = vrot.lane.b32.xlu0 %v1508, 111
          %v1851 = vpop.permute.xlu0 %1850
          %1852 = vrot.lane.b32.xlu0 %v1509, 111
          %v1853 = vpop.permute.xlu0 %1852
          %1854 = vrot.lane.b32.xlu0 %v1510, 111
          %v1855 = vpop.permute.xlu0 %1854
          %1856 = vrot.lane.b32.xlu0 %v1511, 111
          %v1857 = vpop.permute.xlu0 %1856
          %v1858 = vsel %vm1255, %v1843, %v1845
          %v1859 = vsel %vm1255, %v1847, %v1849
          %v1860 = vsel %vm1255, %v1851, %v1853
          %v1861 = vsel %vm1255, %v1855, %v1857
          %v1874 = vsel %vm1255, %v1845, %v1843
          %v1875 = vsel %vm1255, %v1849, %v1847
          %v1876 = vsel %vm1255, %v1853, %v1851
          %v1877 = vsel %vm1255, %v1857, %v1855
          %v1878 = vmul.f32 %v1858, %v1282
          %v1879 = vmul.f32 %v1874, %v1286
          %v1880 = vmul.f32 %v1859, %v1282
          %v1881 = vmul.f32 %v1875, %v1286
          %v1882 = vmul.f32 %v1860, %v1282
          %v1883 = vmul.f32 %v1876, %v1286
          %v1884 = vmul.f32 %v1861, %v1282
          %v1885 = vmul.f32 %v1877, %v1286
          %v1887 = vsel %vm1297, %v1516, 0
          %v1890 = vsel %vm1297, %v1519, 0
          %v1893 = vsel %vm1297, %v1522, 0
          %v1896 = vsel %vm1297, %v1525, 0
          %1898 = vmatprep.subr.mxu0 %v1571
          %1899 = vmatpush1.msra.mxu0 %v1570
          %1900 = vmatprep.subr.mxu0 %v1573
          %1901 = vmatpush1.msra.mxu0 %v1572
          %1902 = vmatprep.subr.mxu0 %v1575
          %1903 = vmatpush1.msra.mxu0 %v1574
          %1904 = vmatprep.subr.mxu0 %v1577
          %1905 = vmatpush1.msra.mxu0 %v1576
          %1906 = vmatprep.subr.mxu0 %v1615
          %1907 = vmatpush1.msra.mxu0 %v1614
          %1908 = vmatprep.subr.mxu0 %v1617
          %1909 = vmatpush1.msra.mxu0 %v1616
          %1910 = vmatprep.subr.mxu0 %v1619
          %1911 = vmatpush1.msra.mxu0 %v1618
          %1912 = vmatprep.subr.mxu0 %v1621
          %1913 = vmatpush1.msra.mxu0 %v1620
          %1914 = vmatprep.subr.mxu0 %v1659
          %1915 = vmatpush1.msra.mxu0 %v1658
          %1916 = vmatprep.subr.mxu0 %v1661
          %1917 = vmatpush1.msra.mxu0 %v1660
          %1918 = vmatprep.subr.mxu0 %v1663
          %1919 = vmatpush1.msra.mxu0 %v1662
          %1920 = vmatprep.subr.mxu0 %v1665
          %1921 = vmatpush1.msra.mxu0 %v1664
          %1922 = vmatprep.subr.mxu0 %v1703
          %1923 = vmatpush1.msra.mxu0 %v1702
          %1924 = vmatprep.subr.mxu0 %v1705
          %1925 = vmatpush1.msra.mxu0 %v1704
          %1926 = vmatprep.subr.mxu0 %v1707
          %1927 = vmatpush1.msra.mxu0 %v1706
          %1928 = vmatprep.subr.mxu0 %v1709
          %1929 = vmatpush1.msra.mxu0 %v1708
          %1930 = vmatprep.subr.mxu0 %v1505
          %1931 = vmatpush1.msra.mxu0 %v1504
          %1932 = vmatprep.subr.mxu0 %v1507
          %1933 = vmatpush1.msra.mxu0 %v1506
          %1934 = vmatprep.subr.mxu0 %v1509
          %1935 = vmatpush1.msra.mxu0 %v1508
          %1936 = vmatprep.subr.mxu0 %v1511
          %1937 = vmatpush1.msra.mxu0 %v1510
          %1938 = vmatprep.subr.mxu0 %v1747
          %1939 = vmatpush1.msra.mxu0 %v1746
          %1940 = vmatprep.subr.mxu0 %v1749
          %1941 = vmatpush1.msra.mxu0 %v1748
          %1942 = vmatprep.subr.mxu0 %v1751
          %1943 = vmatpush1.msra.mxu0 %v1750
          %1944 = vmatprep.subr.mxu0 %v1753
          %1945 = vmatpush1.msra.mxu0 %v1752
          %1946 = vmatprep.subr.mxu0 %v1791
          %1947 = vmatpush1.msra.mxu0 %v1790
          %1948 = vmatprep.subr.mxu0 %v1793
          %1949 = vmatpush1.msra.mxu0 %v1792
          %1950 = vmatprep.subr.mxu0 %v1795
          %1951 = vmatpush1.msra.mxu0 %v1794
          %1952 = vmatprep.subr.mxu0 %v1797
          %1953 = vmatpush1.msra.mxu0 %v1796
          %1954 = vmatprep.subr.mxu0 %v1835
          %1955 = vmatpush1.msra.mxu0 %v1834
          %1956 = vmatprep.subr.mxu0 %v1837
          %1957 = vmatpush1.msra.mxu0 %v1836
          %1958 = vmatprep.subr.mxu0 %v1839
          %1959 = vmatpush1.msra.mxu0 %v1838
          %1960 = vmatprep.subr.mxu0 %v1841
          %1961 = vmatpush1.msra.mxu0 %v1840
          %1962 = vmatprep.mubr.f32.mxu0 %v1515
          %1963 = vmatmul.mubr.f32.gmra.mrb[0].mxu0 %v1514
          %v1964 = vpop.f32.mrb[0].mxu0
          %v1965 = vadd.f32 0.0, %v1964
          %v1966 = vpop.f32.mrb[0].mxu0
          %v1967 = vadd.f32 0.0, %v1966
          %1968 = vmatprep.mubr.f32.mxu0 %v1518
          %1969 = vmatmul.mubr.f32.gmra.mrb[0].mxu0 %v1517
          %v1970 = vpop.f32.mrb[0].mxu0
          %v1971 = vadd.f32 0.0, %v1970
          %v1972 = vpop.f32.mrb[0].mxu0
          %v1973 = vadd.f32 0.0, %v1972
          %1974 = vmatprep.mubr.f32.mxu0 %v1521
          %1975 = vmatmul.mubr.f32.gmra.mrb[0].mxu0 %v1520
          %v1976 = vpop.f32.mrb[0].mxu0
          %v1977 = vadd.f32 0.0, %v1976
          %v1978 = vpop.f32.mrb[0].mxu0
          %v1979 = vadd.f32 0.0, %v1978
          %1980 = vmatprep.mubr.f32.mxu0 %v1524
          %1981 = vmatmul.mubr.f32.gmra.mrb[0].mxu0 %v1523
          %v1982 = vpop.f32.mrb[0].mxu0
          %v1983 = vadd.f32 0.0, %v1982
          %v1984 = vpop.f32.mrb[0].mxu0
          %v1985 = vadd.f32 0.0, %v1984
          %1986 = vdwg.mxu0
          %1987 = vmatprep.subr.mxu0 %v1879
          %1988 = vmatpush1.msra.mxu0 %v1878
          %1989 = vmatprep.subr.mxu0 %v1881
          %1990 = vmatpush1.msra.mxu0 %v1880
          %1991 = vmatprep.subr.mxu0 %v1883
          %1992 = vmatpush1.msra.mxu0 %v1882
          %1993 = vmatprep.subr.mxu0 %v1885
          %1994 = vmatpush1.msra.mxu0 %v1884
          %1995 = vmatprep.subr.mxu0 0.0
          %1996 = vmatpush1.msra.mxu0 0.0
          %1997 = vmatprep.subr.mxu0 0.0
          %1998 = vmatpush1.msra.mxu0 0.0
          %1999 = vmatprep.subr.mxu0 0.0
          %2000 = vmatpush1.msra.mxu0 0.0
          %2001 = vmatprep.subr.mxu0 0.0
          %2002 = vmatpush1.msra.mxu0 0.0
          %2003 = vmatprep.subr.mxu0 0.0
          %2004 = vmatpush1.msra.mxu0 0.0
          %2005 = vmatprep.subr.mxu0 0.0
          %2006 = vmatpush1.msra.mxu0 0.0
          %2007 = vmatprep.subr.mxu0 0.0
          %2008 = vmatpush1.msra.mxu0 0.0
          %2009 = vmatprep.subr.mxu0 0.0
          %2010 = vmatpush1.msra.mxu0 0.0
          %2011 = vmatprep.subr.mxu0 0.0
          %2012 = vmatpush1.msra.mxu0 0.0
          %2013 = vmatprep.subr.mxu0 0.0
          %2014 = vmatpush1.msra.mxu0 0.0
          %2015 = vmatprep.subr.mxu0 0.0
          %2016 = vmatpush1.msra.mxu0 0.0
          %2017 = vmatprep.subr.mxu0 0.0
          %2018 = vmatpush1.msra.mxu0 0.0
          %2019 = vmatprep.subr.mxu0 0.0
          %2020 = vmatpush1.msra.mxu0 0.0
          %2021 = vmatprep.subr.mxu0 0.0
          %2022 = vmatpush1.msra.mxu0 0.0
          %2023 = vmatprep.subr.mxu0 0.0
          %2024 = vmatpush1.msra.mxu0 0.0
          %2025 = vmatprep.subr.mxu0 0.0
          %2026 = vmatpush1.msra.mxu0 0.0
          %2027 = vmatprep.subr.mxu0 0.0
          %2028 = vmatpush1.msra.mxu0 0.0
          %2029 = vmatprep.subr.mxu0 0.0
          %2030 = vmatpush1.msra.mxu0 0.0
          %2031 = vmatprep.subr.mxu0 0.0
          %2032 = vmatpush1.msra.mxu0 0.0
          %2033 = vmatprep.subr.mxu0 0.0
          %2034 = vmatpush1.msra.mxu0 0.0
          %2035 = vmatprep.subr.mxu0 0.0
          %2036 = vmatpush1.msra.mxu0 0.0
          %2037 = vmatprep.subr.mxu0 0.0
          %2038 = vmatpush1.msra.mxu0 0.0
          %2039 = vmatprep.subr.mxu0 0.0
          %2040 = vmatpush1.msra.mxu0 0.0
          %2041 = vmatprep.subr.mxu0 0.0
          %2042 = vmatpush1.msra.mxu0 0.0
          %2043 = vmatprep.subr.mxu0 0.0
          %2044 = vmatpush1.msra.mxu0 0.0
          %2045 = vmatprep.subr.mxu0 0.0
          %2046 = vmatpush1.msra.mxu0 0.0
          %2047 = vmatprep.subr.mxu0 0.0
          %2048 = vmatpush1.msra.mxu0 0.0
          %2049 = vmatprep.subr.mxu0 0.0
          %2050 = vmatpush1.msra.mxu0 0.0
          %2051 = vmatprep.mubr.f32.mxu0 0.0
          %2052 = vmatmul.mubr.f32.gmra.mrb[0].mxu0 %v1887
          %v2053 = vpop.f32.mrb[0].mxu0
          %v2054 = vadd.f32 %v1965, %v2053
          %v2055 = vpop.f32.mrb[0].mxu0
          %v2056 = vadd.f32 %v1967, %v2055
          %2057 = vmatprep.mubr.f32.mxu0 0.0
          %2058 = vmatmul.mubr.f32.gmra.mrb[0].mxu0 %v1890
          %v2059 = vpop.f32.mrb[0].mxu0
          %v2060 = vadd.f32 %v1971, %v2059
          %v2061 = vpop.f32.mrb[0].mxu0
          %v2062 = vadd.f32 %v1973, %v2061
          %2063 = vmatprep.mubr.f32.mxu0 0.0
          %2064 = vmatmul.mubr.f32.gmra.mrb[0].mxu0 %v1893
          %v2065 = vpop.f32.mrb[0].mxu0
          %v2066 = vadd.f32 %v1977, %v2065
          %v2067 = vpop.f32.mrb[0].mxu0
          %v2068 = vadd.f32 %v1979, %v2067
          %2069 = vmatprep.mubr.f32.mxu0 0.0
          %2070 = vmatmul.mubr.f32.gmra.mrb[0].mxu0 %v1896
          %v2071 = vpop.f32.mrb[0].mxu0
          %v2072 = vadd.f32 %v1983, %v2071
          %v2073 = vpop.f32.mrb[0].mxu0
          %v2074 = vadd.f32 %v1985, %v2073
          %2075 = vdwg.mxu0
          %v2076 = vadd.f32 %v2054, %v2056
          %2077 = vadd.xlane.f32.xlu0 %v2076
          %v2078 = vpop.xlane.xlu0 %2077
          %v2079 = vadd.f32 %v2060, %v2062
          %2080 = vadd.xlane.f32.xlu0 %v2079
          %v2081 = vpop.xlane.xlu0 %2080
          %v2082 = vadd.f32 %v2066, %v2068
          %2083 = vadd.xlane.f32.xlu0 %v2082
          %v2084 = vpop.xlane.xlu0 %2083
          %v2085 = vadd.f32 %v2072, %v2074
          %2086 = vadd.xlane.f32.xlu0 %v2085
          %v2087 = vpop.xlane.xlu0 %2086
          %v2088 = vrcp.pop 256.0
          %v2089 = vmul.f32 %v2078, %v2088
          %v2090 = vmul.f32 %v2081, %v2088
          %v2091 = vmul.f32 %v2084, %v2088
          %v2092 = vmul.f32 %v2087, %v2088
          %s2093 = smul.u32 %s798, 32
          %s2094 = scalar_lea.vmem [#allocation13], %s2093
          %v2095 = vld [vmem:[%s2094] sm:$0xff]
          %v2096 = vld [vmem:[%s2094 + $0x8] sm:$0xff]
          %v2097 = vld [vmem:[%s2094 + $0x10] sm:$0xff]
          %v2098 = vld [vmem:[%s2094 + $0x18] sm:$0xff]
          %v2099 = vmul.f32 %v2095, %v2089
          %v2100 = vmul.f32 %v2096, %v2090
          %v2101 = vmul.f32 %v2097, %v2091
          %v2102 = vmul.f32 %v2098, %v2092
          %vm2103 = vcmask 64512
          %v2104 = vsel %vm2103, %v2099, 0.0
          %v2105 = vsel %vm2103, %v2100, 0.0
          %v2106 = vadd.f32 %v2104, %v2105
          %v2107 = vsel %vm2103, %v2101, 0.0
          %v2108 = vadd.f32 %v2106, %v2107
          %v2109 = vsel %vm2103, %v2102, 0.0
          %v2110 = vadd.f32 %v2108, %v2109
          %v2111 = vrot.slane %v2110, 4
          %v2112 = vadd.f32 %v2110, %v2111
          %v2113 = vrot.slane %v2112, 2
          %v2114 = vadd.f32 %v2112, %v2113
          %v2115 = vrot.slane %v2114, 1
          %v2116 = vadd.f32 %v2114, %v2115
          %v2117 = vmax.f32 %v2116, 0.0
          %s2118 = scalar_lea.vmem [#allocation14], %s2093
          %v2119 = vld [vmem:[%s2118] sm:$0xff]
          %v2120 = vld [vmem:[%s2118 + $0x8] sm:$0xff]
          %v2121 = vld [vmem:[%s2118 + $0x10] sm:$0xff]
          %v2122 = vld [vmem:[%s2118 + $0x18] sm:$0xff]
          %v2123 = vmul.f32 %v2119, %v2117
          %v2124 = vmul.f32 %v2120, %v2117
          %v2125 = vmul.f32 %v2121, %v2117
          %v2126 = vmul.f32 %v2122, %v2117
          %v2127 = vsel %vm2103, %v2123, 0.0
          %2128 = vadd.xlane.f32.xlu0 %v2127
          %v2129 = vpop.xlane.xlu0 %2128
          %v2130 = vsel %vm2103, %v2124, 0.0
          %2131 = vadd.xlane.f32.xlu0 %v2130
          %v2132 = vpop.xlane.xlu0 %2131
          %v2133 = vsel %vm2103, %v2125, 0.0
          %2134 = vadd.xlane.f32.xlu0 %v2133
          %v2135 = vpop.xlane.xlu0 %2134
          %v2136 = vsel %vm2103, %v2126, 0.0
          %2137 = vadd.xlane.f32.xlu0 %v2136
          %v2138 = vpop.xlane.xlu0 %2137
          %v2139 = vxor.u32 %v2129, 2147483648
          %v2140 = vxor.u32 %v2132, 2147483648
          %v2141 = vxor.u32 %v2135, 2147483648
          %v2142 = vxor.u32 %v2138, 2147483648
          %v2143 = vmul.f32 %v2139, 1.442695
          %v2144 = vpow.pop %v2143
          %v2145 = vmul.f32 %v2140, 1.442695
          %v2146 = vpow.pop %v2145
          %v2147 = vmul.f32 %v2141, 1.442695
          %v2148 = vpow.pop %v2147
          %v2149 = vmul.f32 %v2142, 1.442695
          %v2150 = vpow.pop %v2149
          %v2151 = vadd.f32 %v2144, 1.0
          %v2152 = vadd.f32 %v2146, 1.0
          %v2153 = vadd.f32 %v2148, 1.0
          %v2154 = vadd.f32 %v2150, 1.0
          %v2155 = vrcp.pop %v2151
          %v2156 = vmul.f32 1.0, %v2155
          %v2157 = vrcp.pop %v2152
          %v2158 = vmul.f32 1.0, %v2157
          %v2159 = vrcp.pop %v2153
          %v2160 = vmul.f32 1.0, %v2159
          %v2161 = vrcp.pop %v2154
          %v2162 = vmul.f32 1.0, %v2161
          %v2163 = vmul.f32 %v2054, %v2156
          %v2164 = vmul.f32 %v2056, %v2156
          %v2165 = vmul.f32 %v2060, %v2158
          %v2166 = vmul.f32 %v2062, %v2158
          %v2167 = vmul.f32 %v2066, %v2160
          %v2168 = vmul.f32 %v2068, %v2160
          %v2169 = vmul.f32 %v2072, %v2162
          %v2170 = vmul.f32 %v2074, %v2162
          %v2171 = vadd.f32 %v2163, %v803
          %v2172 = vadd.f32 %v2164, %v804
          %v2173 = vadd.f32 %v2165, %v805
          %v2174 = vadd.f32 %v2166, %v806
          %v2175 = vadd.f32 %v2167, %v807
          %v2176 = vadd.f32 %v2168, %v808
          %v2177 = vadd.f32 %v2169, %v809
          %v2178 = vadd.f32 %v2170, %v810
        $region145: #{tfr_forward.1} parent=79 // loop_footer
          %s802 = sadd.s32 1, %s798
        $region146: #{tfr_forward.1} parent=79 // loop_footer_branch
          %797 = sbr.rel target = $region142
        $region147: #{tfr_forward.1} parent=79 // loop_exit
          _
        %v2179 = vld [vmem:[#allocation16] sm:$0xff]
        %v2180 = vld [vmem:[#allocation16 + $0x8] sm:$0xff]
        %v2181 = vld [vmem:[#allocation16 + $0x10] sm:$0xff]
        %v2182 = vld [vmem:[#allocation16 + $0x18] sm:$0xff]
        %v2183 = vld [vmem:[#allocation16 + $0x20] sm:$0xff]
        %v2184 = vld [vmem:[#allocation16 + $0x28] sm:$0xff]
        %v2185 = vld [vmem:[#allocation16 + $0x30] sm:$0xff]
        %v2186 = vld [vmem:[#allocation16 + $0x38] sm:$0xff]
        %v2187 = vld [vmem:[#allocation16 + $0x40] sm:$0xff]
        %v2188 = vld [vmem:[#allocation16 + $0x48] sm:$0xff]
        %v2189 = vld [vmem:[#allocation16 + $0x50] sm:$0xff]
        %v2190 = vld [vmem:[#allocation16 + $0x58] sm:$0xff]
        %2195 = vrot.lane.b32.xlu0 %v804, 17
        %v2196 = vpop.permute.xlu0 %2195
        %2197 = vrot.lane.b32.xlu0 %v806, 17
        %v2198 = vpop.permute.xlu0 %2197
        %2199 = vrot.lane.b32.xlu0 %v808, 17
        %v2200 = vpop.permute.xlu0 %2199
        %2201 = vrot.lane.b32.xlu0 %v810, 17
        %v2202 = vpop.permute.xlu0 %2201
        %2211 = vrot.lane.b32.xlu0 %v803, 17
        %v2212 = vpop.permute.xlu0 %2211
        %2213 = vrot.lane.b32.xlu0 %v805, 17
        %v2214 = vpop.permute.xlu0 %2213
        %2215 = vrot.lane.b32.xlu0 %v807, 17
        %v2216 = vpop.permute.xlu0 %2215
        %2217 = vrot.lane.b32.xlu0 %v809, 17
        %v2218 = vpop.permute.xlu0 %2217
        %vm2219 = vcmask 138240
        %v2220 = vsel %vm2219, %v2212, %v2196
        %v2221 = vsel %vm2219, %v2214, %v2198
        %v2222 = vsel %vm2219, %v2216, %v2200
        %v2223 = vsel %vm2219, %v2218, %v2202
        %v2232 = vsel %vm2219, %v2196, %v2212
        %v2233 = vsel %vm2219, %v2198, %v2214
        %v2234 = vsel %vm2219, %v2200, %v2216
        %v2235 = vsel %vm2219, %v2202, %v2218
        %v2236 = vld [vmem:[#allocation25] sm:$0x3]
        %v2238 = vlaneseq
        %v2239 = vshrl.u32 %v2238, 7
        %v2240 = vsub.s32 0, %v2239
        %v2241 = vrot.slane %v2236, %v2240
        %v2242 = vlaneseq
        %v2243 = vshrl.u32 %v2242, 7
        %v2244 = vsub.s32 1, %v2243
        %v2245 = vrot.slane %v2236, %v2244
        %v2248 = vmul.f32 %v2232, %v2241
        %v2249 = vmul.f32 %v2220, %v2245
        %v2250 = vmul.f32 %v2233, %v2241
        %v2251 = vmul.f32 %v2221, %v2245
        %v2252 = vmul.f32 %v2234, %v2241
        %v2253 = vmul.f32 %v2222, %v2245
        %v2254 = vmul.f32 %v2235, %v2241
        %v2255 = vmul.f32 %v2223, %v2245
        %2256 = vrot.lane.b32.xlu0 %v804, 16
        %v2257 = vpop.permute.xlu0 %2256
        %2258 = vrot.lane.b32.xlu0 %v806, 16
        %v2259 = vpop.permute.xlu0 %2258
        %2260 = vrot.lane.b32.xlu0 %v808, 16
        %v2261 = vpop.permute.xlu0 %2260
        %2262 = vrot.lane.b32.xlu0 %v810, 16
        %v2263 = vpop.permute.xlu0 %2262
        %2268 = vrot.lane.b32.xlu0 %v803, 16
        %v2269 = vpop.permute.xlu0 %2268
        %2270 = vrot.lane.b32.xlu0 %v805, 16
        %v2271 = vpop.permute.xlu0 %2270
        %2272 = vrot.lane.b32.xlu0 %v807, 16
        %v2273 = vpop.permute.xlu0 %2272
        %2274 = vrot.lane.b32.xlu0 %v809, 16
        %v2275 = vpop.permute.xlu0 %2274
        %vm2276 = vcmask 130048
        %v2277 = vsel %vm2276, %v2269, %v2257
        %v2278 = vsel %vm2276, %v2271, %v2259
        %v2279 = vsel %vm2276, %v2273, %v2261
        %v2280 = vsel %vm2276, %v2275, %v2263
        %v2289 = vsel %vm2276, %v2257, %v2269
        %v2290 = vsel %vm2276, %v2259, %v2271
        %v2291 = vsel %vm2276, %v2261, %v2273
        %v2292 = vsel %vm2276, %v2263, %v2275
        %s2293 = scalar_lea.vmem [#allocation25], 2
        %v2294 = vld [vmem:[%s2293] sm:$0x3]
        %v2296 = vlaneseq
        %v2297 = vshrl.u32 %v2296, 7
        %v2298 = vsub.s32 0, %v2297
        %v2299 = vrot.slane %v2294, %v2298
        %v2300 = vlaneseq
        %v2301 = vshrl.u32 %v2300, 7
        %v2302 = vsub.s32 1, %v2301
        %v2303 = vrot.slane %v2294, %v2302
        %v2306 = vmul.f32 %v2289, %v2299
        %v2307 = vmul.f32 %v2277, %v2303
        %v2308 = vmul.f32 %v2290, %v2299
        %v2309 = vmul.f32 %v2278, %v2303
        %v2310 = vmul.f32 %v2291, %v2299
        %v2311 = vmul.f32 %v2279, %v2303
        %v2312 = vmul.f32 %v2292, %v2299
        %v2313 = vmul.f32 %v2280, %v2303
        %2314 = vrot.lane.b32.xlu0 %v804, 15
        %v2315 = vpop.permute.xlu0 %2314
        %2316 = vrot.lane.b32.xlu0 %v806, 15
        %v2317 = vpop.permute.xlu0 %2316
        %2318 = vrot.lane.b32.xlu0 %v808, 15
        %v2319 = vpop.permute.xlu0 %2318
        %2320 = vrot.lane.b32.xlu0 %v810, 15
        %v2321 = vpop.permute.xlu0 %2320
        %2326 = vrot.lane.b32.xlu0 %v803, 15
        %v2327 = vpop.permute.xlu0 %2326
        %2328 = vrot.lane.b32.xlu0 %v805, 15
        %v2329 = vpop.permute.xlu0 %2328
        %2330 = vrot.lane.b32.xlu0 %v807, 15
        %v2331 = vpop.permute.xlu0 %2330
        %2332 = vrot.lane.b32.xlu0 %v809, 15
        %v2333 = vpop.permute.xlu0 %2332
        %vm2334 = vcmask 121856
        %v2335 = vsel %vm2334, %v2327, %v2315
        %v2336 = vsel %vm2334, %v2329, %v2317
        %v2337 = vsel %vm2334, %v2331, %v2319
        %v2338 = vsel %vm2334, %v2333, %v2321
        %v2347 = vsel %vm2334, %v2315, %v2327
        %v2348 = vsel %vm2334, %v2317, %v2329
        %v2349 = vsel %vm2334, %v2319, %v2331
        %v2350 = vsel %vm2334, %v2321, %v2333
        %s2351 = scalar_lea.vmem [#allocation25], 4
        %v2352 = vld [vmem:[%s2351] sm:$0x3]
        %v2354 = vlaneseq
        %v2355 = vshrl.u32 %v2354, 7
        %v2356 = vsub.s32 0, %v2355
        %v2357 = vrot.slane %v2352, %v2356
        %v2358 = vlaneseq
        %v2359 = vshrl.u32 %v2358, 7
        %v2360 = vsub.s32 1, %v2359
        %v2361 = vrot.slane %v2352, %v2360
        %v2364 = vmul.f32 %v2347, %v2357
        %v2365 = vmul.f32 %v2335, %v2361
        %v2366 = vmul.f32 %v2348, %v2357
        %v2367 = vmul.f32 %v2336, %v2361
        %v2368 = vmul.f32 %v2349, %v2357
        %v2369 = vmul.f32 %v2337, %v2361
        %v2370 = vmul.f32 %v2350, %v2357
        %v2371 = vmul.f32 %v2338, %v2361
        %2372 = vrot.lane.b32.xlu0 %v804, 1
        %v2373 = vpop.permute.xlu0 %2372
        %2374 = vrot.lane.b32.xlu0 %v806, 1
        %v2375 = vpop.permute.xlu0 %2374
        %2376 = vrot.lane.b32.xlu0 %v808, 1
        %v2377 = vpop.permute.xlu0 %2376
        %2378 = vrot.lane.b32.xlu0 %v810, 1
        %v2379 = vpop.permute.xlu0 %2378
        %2384 = vrot.lane.b32.xlu0 %v803, 1
        %v2385 = vpop.permute.xlu0 %2384
        %2386 = vrot.lane.b32.xlu0 %v805, 1
        %v2387 = vpop.permute.xlu0 %2386
        %2388 = vrot.lane.b32.xlu0 %v807, 1
        %v2389 = vpop.permute.xlu0 %2388
        %2390 = vrot.lane.b32.xlu0 %v809, 1
        %v2391 = vpop.permute.xlu0 %2390
        %vm2392 = vcmask 7168
        %v2393 = vsel %vm2392, %v2385, %v2373
        %v2394 = vsel %vm2392, %v2387, %v2375
        %v2395 = vsel %vm2392, %v2389, %v2377
        %v2396 = vsel %vm2392, %v2391, %v2379
        %v2405 = vsel %vm2392, %v2373, %v2385
        %v2406 = vsel %vm2392, %v2375, %v2387
        %v2407 = vsel %vm2392, %v2377, %v2389
        %v2408 = vsel %vm2392, %v2379, %v2391
        %s2409 = scalar_lea.vmem [#allocation25], 6
        %v2410 = vld [vmem:[%s2409] sm:$0x3]
        %v2412 = vlaneseq
        %v2413 = vshrl.u32 %v2412, 7
        %v2414 = vsub.s32 0, %v2413
        %v2415 = vrot.slane %v2410, %v2414
        %v2416 = vlaneseq
        %v2417 = vshrl.u32 %v2416, 7
        %v2418 = vsub.s32 1, %v2417
        %v2419 = vrot.slane %v2410, %v2418
        %v2422 = vmul.f32 %v2405, %v2415
        %v2423 = vmul.f32 %v2393, %v2419
        %v2424 = vmul.f32 %v2406, %v2415
        %v2425 = vmul.f32 %v2394, %v2419
        %v2426 = vmul.f32 %v2407, %v2415
        %v2427 = vmul.f32 %v2395, %v2419
        %v2428 = vmul.f32 %v2408, %v2415
        %v2429 = vmul.f32 %v2396, %v2419
        %2430 = vrot.lane.b32.xlu0 %v803, 127
        %v2431 = vpop.permute.xlu0 %2430
        %2432 = vrot.lane.b32.xlu0 %v804, 127
        %v2433 = vpop.permute.xlu0 %2432
        %2434 = vrot.lane.b32.xlu0 %v805, 127
        %v2435 = vpop.permute.xlu0 %2434
        %2436 = vrot.lane.b32.xlu0 %v806, 127
        %v2437 = vpop.permute.xlu0 %2436
        %2438 = vrot.lane.b32.xlu0 %v807, 127
        %v2439 = vpop.permute.xlu0 %2438
        %2440 = vrot.lane.b32.xlu0 %v808, 127
        %v2441 = vpop.permute.xlu0 %2440
        %2442 = vrot.lane.b32.xlu0 %v809, 127
        %v2443 = vpop.permute.xlu0 %2442
        %2444 = vrot.lane.b32.xlu0 %v810, 127
        %v2445 = vpop.permute.xlu0 %2444
        %vm2446 = vcmask 1039360
        %v2447 = vsel %vm2446, %v2431, %v2433
        %v2448 = vsel %vm2446, %v2435, %v2437
        %v2449 = vsel %vm2446, %v2439, %v2441
        %v2450 = vsel %vm2446, %v2443, %v2445
        %v2463 = vsel %vm2446, %v2433, %v2431
        %v2464 = vsel %vm2446, %v2437, %v2435
        %v2465 = vsel %vm2446, %v2441, %v2439
        %v2466 = vsel %vm2446, %v2445, %v2443
        %s2467 = scalar_lea.vmem [#allocation25], 10
        %v2468 = vld [vmem:[%s2467] sm:$0x3]
        %v2470 = vlaneseq
        %v2471 = vshrl.u32 %v2470, 7
        %v2472 = vsub.s32 0, %v2471
        %v2473 = vrot.slane %v2468, %v2472
        %v2474 = vlaneseq
        %v2475 = vshrl.u32 %v2474, 7
        %v2476 = vsub.s32 1, %v2475
        %v2477 = vrot.slane %v2468, %v2476
        %v2480 = vmul.f32 %v2447, %v2473
        %v2481 = vmul.f32 %v2463, %v2477
        %v2482 = vmul.f32 %v2448, %v2473
        %v2483 = vmul.f32 %v2464, %v2477
        %v2484 = vmul.f32 %v2449, %v2473
        %v2485 = vmul.f32 %v2465, %v2477
        %v2486 = vmul.f32 %v2450, %v2473
        %v2487 = vmul.f32 %v2466, %v2477
        %2488 = vrot.lane.b32.xlu0 %v803, 113
        %v2489 = vpop.permute.xlu0 %2488
        %2490 = vrot.lane.b32.xlu0 %v804, 113
        %v2491 = vpop.permute.xlu0 %2490
        %2492 = vrot.lane.b32.xlu0 %v805, 113
        %v2493 = vpop.permute.xlu0 %2492
        %2494 = vrot.lane.b32.xlu0 %v806, 113
        %v2495 = vpop.permute.xlu0 %2494
        %2496 = vrot.lane.b32.xlu0 %v807, 113
        %v2497 = vpop.permute.xlu0 %2496
        %2498 = vrot.lane.b32.xlu0 %v808, 113
        %v2499 = vpop.permute.xlu0 %2498
        %2500 = vrot.lane.b32.xlu0 %v809, 113
        %v2501 = vpop.permute.xlu0 %2500
        %2502 = vrot.lane.b32.xlu0 %v810, 113
        %v2503 = vpop.permute.xlu0 %2502
        %vm2504 = vcmask 924672
        %v2505 = vsel %vm2504, %v2489, %v2491
        %v2506 = vsel %vm2504, %v2493, %v2495
        %v2507 = vsel %vm2504, %v2497, %v2499
        %v2508 = vsel %vm2504, %v2501, %v2503
        %v2521 = vsel %vm2504, %v2491, %v2489
        %v2522 = vsel %vm2504, %v2495, %v2493
        %v2523 = vsel %vm2504, %v2499, %v2497
        %v2524 = vsel %vm2504, %v2503, %v2501
        %s2525 = scalar_lea.vmem [#allocation25], 12
        %v2526 = vld [vmem:[%s2525] sm:$0x3]
        %v2528 = vlaneseq
        %v2529 = vshrl.u32 %v2528, 7
        %v2530 = vsub.s32 0, %v2529
        %v2531 = vrot.slane %v2526, %v2530
        %v2532 = vlaneseq
        %v2533 = vshrl.u32 %v2532, 7
        %v2534 = vsub.s32 1, %v2533
        %v2535 = vrot.slane %v2526, %v2534
        %v2538 = vmul.f32 %v2505, %v2531
        %v2539 = vmul.f32 %v2521, %v2535
        %v2540 = vmul.f32 %v2506, %v2531
        %v2541 = vmul.f32 %v2522, %v2535
        %v2542 = vmul.f32 %v2507, %v2531
        %v2543 = vmul.f32 %v2523, %v2535
        %v2544 = vmul.f32 %v2508, %v2531
        %v2545 = vmul.f32 %v2524, %v2535
        %2546 = vrot.lane.b32.xlu0 %v803, 112
        %v2547 = vpop.permute.xlu0 %2546
        %2548 = vrot.lane.b32.xlu0 %v804, 112
        %v2549 = vpop.permute.xlu0 %2548
        %2550 = vrot.lane.b32.xlu0 %v805, 112
        %v2551 = vpop.permute.xlu0 %2550
        %2552 = vrot.lane.b32.xlu0 %v806, 112
        %v2553 = vpop.permute.xlu0 %2552
        %2554 = vrot.lane.b32.xlu0 %v807, 112
        %v2555 = vpop.permute.xlu0 %2554
        %2556 = vrot.lane.b32.xlu0 %v808, 112
        %v2557 = vpop.permute.xlu0 %2556
        %2558 = vrot.lane.b32.xlu0 %v809, 112
        %v2559 = vpop.permute.xlu0 %2558
        %2560 = vrot.lane.b32.xlu0 %v810, 112
        %v2561 = vpop.permute.xlu0 %2560
        %vm2562 = vcmask 916480
        %v2563 = vsel %vm2562, %v2547, %v2549
        %v2564 = vsel %vm2562, %v2551, %v2553
        %v2565 = vsel %vm2562, %v2555, %v2557
        %v2566 = vsel %vm2562, %v2559, %v2561
        %v2579 = vsel %vm2562, %v2549, %v2547
        %v2580 = vsel %vm2562, %v2553, %v2551
        %v2581 = vsel %vm2562, %v2557, %v2555
        %v2582 = vsel %vm2562, %v2561, %v2559
        %s2583 = scalar_lea.vmem [#allocation25], 14
        %v2584 = vld [vmem:[%s2583] sm:$0x3]
        %v2586 = vlaneseq
        %v2587 = vshrl.u32 %v2586, 7
        %v2588 = vsub.s32 0, %v2587
        %v2589 = vrot.slane %v2584, %v2588
        %v2590 = vlaneseq
        %v2591 = vshrl.u32 %v2590, 7
        %v2592 = vsub.s32 1, %v2591
        %v2593 = vrot.slane %v2584, %v2592
        %v2596 = vmul.f32 %v2563, %v2589
        %v2597 = vmul.f32 %v2579, %v2593
        %v2598 = vmul.f32 %v2564, %v2589
        %v2599 = vmul.f32 %v2580, %v2593
        %v2600 = vmul.f32 %v2565, %v2589
        %v2601 = vmul.f32 %v2581, %v2593
        %v2602 = vmul.f32 %v2566, %v2589
        %v2603 = vmul.f32 %v2582, %v2593
        %2604 = vrot.lane.b32.xlu0 %v803, 111
        %v2605 = vpop.permute.xlu0 %2604
        %2606 = vrot.lane.b32.xlu0 %v804, 111
        %v2607 = vpop.permute.xlu0 %2606
        %2608 = vrot.lane.b32.xlu0 %v805, 111
        %v2609 = vpop.permute.xlu0 %2608
        %2610 = vrot.lane.b32.xlu0 %v806, 111
        %v2611 = vpop.permute.xlu0 %2610
        %2612 = vrot.lane.b32.xlu0 %v807, 111
        %v2613 = vpop.permute.xlu0 %2612
        %2614 = vrot.lane.b32.xlu0 %v808, 111
        %v2615 = vpop.permute.xlu0 %2614
        %2616 = vrot.lane.b32.xlu0 %v809, 111
        %v2617 = vpop.permute.xlu0 %2616
        %2618 = vrot.lane.b32.xlu0 %v810, 111
        %v2619 = vpop.permute.xlu0 %2618
        %vm2620 = vcmask 908288
        %v2621 = vsel %vm2620, %v2605, %v2607
        %v2622 = vsel %vm2620, %v2609, %v2611
        %v2623 = vsel %vm2620, %v2613, %v2615
        %v2624 = vsel %vm2620, %v2617, %v2619
        %v2637 = vsel %vm2620, %v2607, %v2605
        %v2638 = vsel %vm2620, %v2611, %v2609
        %v2639 = vsel %vm2620, %v2615, %v2613
        %v2640 = vsel %vm2620, %v2619, %v2617
        %s2641 = scalar_lea.vmem [#allocation25], 16
        %v2642 = vld [vmem:[%s2641] sm:$0x3]
        %v2644 = vlaneseq
        %v2645 = vshrl.u32 %v2644, 7
        %v2646 = vsub.s32 0, %v2645
        %v2647 = vrot.slane %v2642, %v2646
        %v2648 = vlaneseq
        %v2649 = vshrl.u32 %v2648, 7
        %v2650 = vsub.s32 1, %v2649
        %v2651 = vrot.slane %v2642, %v2650
        %v2654 = vmul.f32 %v2621, %v2647
        %v2655 = vmul.f32 %v2637, %v2651
        %v2656 = vmul.f32 %v2622, %v2647
        %v2657 = vmul.f32 %v2638, %v2651
        %v2658 = vmul.f32 %v2623, %v2647
        %v2659 = vmul.f32 %v2639, %v2651
        %v2660 = vmul.f32 %v2624, %v2647
        %v2661 = vmul.f32 %v2640, %v2651
        %vm2662 = vcmask 261120
        %v2664 = vsel %vm2662, %v2181, 0
        %v2667 = vsel %vm2662, %v2184, 0
        %v2670 = vsel %vm2662, %v2187, 0
        %v2673 = vsel %vm2662, %v2190, 0
        %2675 = vmatprep.subr.mxu0 %v2249
        %2676 = vmatpush1.msra.mxu0 %v2248
        %2677 = vmatprep.subr.mxu0 %v2251
        %2678 = vmatpush1.msra.mxu0 %v2250
        %2679 = vmatprep.subr.mxu0 %v2253
        %2680 = vmatpush1.msra.mxu0 %v2252
        %2681 = vmatprep.subr.mxu0 %v2255
        %2682 = vmatpush1.msra.mxu0 %v2254
        %2683 = vmatprep.subr.mxu0 %v2307
        %2684 = vmatpush1.msra.mxu0 %v2306
        %2685 = vmatprep.subr.mxu0 %v2309
        %2686 = vmatpush1.msra.mxu0 %v2308
        %2687 = vmatprep.subr.mxu0 %v2311
        %2688 = vmatpush1.msra.mxu0 %v2310
        %2689 = vmatprep.subr.mxu0 %v2313
        %2690 = vmatpush1.msra.mxu0 %v2312
        %2691 = vmatprep.subr.mxu0 %v2365
        %2692 = vmatpush1.msra.mxu0 %v2364
        %2693 = vmatprep.subr.mxu0 %v2367
        %2694 = vmatpush1.msra.mxu0 %v2366
        %2695 = vmatprep.subr.mxu0 %v2369
        %2696 = vmatpush1.msra.mxu0 %v2368
        %2697 = vmatprep.subr.mxu0 %v2371
        %2698 = vmatpush1.msra.mxu0 %v2370
        %2699 = vmatprep.subr.mxu0 %v2423
        %2700 = vmatpush1.msra.mxu0 %v2422
        %2701 = vmatprep.subr.mxu0 %v2425
        %2702 = vmatpush1.msra.mxu0 %v2424
        %2703 = vmatprep.subr.mxu0 %v2427
        %2704 = vmatpush1.msra.mxu0 %v2426
        %2705 = vmatprep.subr.mxu0 %v2429
        %2706 = vmatpush1.msra.mxu0 %v2428
        %2707 = vmatprep.subr.mxu0 %v804
        %2708 = vmatpush1.msra.mxu0 %v803
        %2709 = vmatprep.subr.mxu0 %v806
        %2710 = vmatpush1.msra.mxu0 %v805
        %2711 = vmatprep.subr.mxu0 %v808
        %2712 = vmatpush1.msra.mxu0 %v807
        %2713 = vmatprep.subr.mxu0 %v810
        %2714 = vmatpush1.msra.mxu0 %v809
        %2715 = vmatprep.subr.mxu0 %v2481
        %2716 = vmatpush1.msra.mxu0 %v2480
        %2717 = vmatprep.subr.mxu0 %v2483
        %2718 = vmatpush1.msra.mxu0 %v2482
        %2719 = vmatprep.subr.mxu0 %v2485
        %2720 = vmatpush1.msra.mxu0 %v2484
        %2721 = vmatprep.subr.mxu0 %v2487
        %2722 = vmatpush1.msra.mxu0 %v2486
        %2723 = vmatprep.subr.mxu0 %v2539
        %2724 = vmatpush1.msra.mxu0 %v2538
        %2725 = vmatprep.subr.mxu0 %v2541
        %2726 = vmatpush1.msra.mxu0 %v2540
        %2727 = vmatprep.subr.mxu0 %v2543
        %2728 = vmatpush1.msra.mxu0 %v2542
        %2729 = vmatprep.subr.mxu0 %v2545
        %2730 = vmatpush1.msra.mxu0 %v2544
        %2731 = vmatprep.subr.mxu0 %v2597
        %2732 = vmatpush1.msra.mxu0 %v2596
        %2733 = vmatprep.subr.mxu0 %v2599
        %2734 = vmatpush1.msra.mxu0 %v2598
        %2735 = vmatprep.subr.mxu0 %v2601
        %2736 = vmatpush1.msra.mxu0 %v2600
        %2737 = vmatprep.subr.mxu0 %v2603
        %2738 = vmatpush1.msra.mxu0 %v2602
        %2739 = vmatprep.mubr.f32.mxu0 %v2180
        %2740 = vmatmul.mubr.f32.gmra.mrb[0].mxu0 %v2179
        %v2741 = vpop.f32.mrb[0].mxu0
        %v2742 = vadd.f32 %v789, %v2741
        %v2743 = vpop.f32.mrb[0].mxu0
        %v2744 = vadd.f32 %v790, %v2743
        %2745 = vmatprep.mubr.f32.mxu0 %v2183
        %2746 = vmatmul.mubr.f32.gmra.mrb[0].mxu0 %v2182
        %v2747 = vpop.f32.mrb[0].mxu0
        %v2748 = vadd.f32 %v791, %v2747
        %v2749 = vpop.f32.mrb[0].mxu0
        %v2750 = vadd.f32 %v792, %v2749
        %2751 = vmatprep.mubr.f32.mxu0 %v2186
        %2752 = vmatmul.mubr.f32.gmra.mrb[0].mxu0 %v2185
        %v2753 = vpop.f32.mrb[0].mxu0
        %v2754 = vadd.f32 %v793, %v2753
        %v2755 = vpop.f32.mrb[0].mxu0
        %v2756 = vadd.f32 %v794, %v2755
        %2757 = vmatprep.mubr.f32.mxu0 %v2189
        %2758 = vmatmul.mubr.f32.gmra.mrb[0].mxu0 %v2188
        %v2759 = vpop.f32.mrb[0].mxu0
        %v2760 = vadd.f32 %v795, %v2759
        %v2761 = vpop.f32.mrb[0].mxu0
        %v2762 = vadd.f32 %v796, %v2761
        %2763 = vdwg.mxu0
        %2764 = vmatprep.subr.mxu0 %v2655
        %2765 = vmatpush1.msra.mxu0 %v2654
        %2766 = vmatprep.subr.mxu0 %v2657
        %2767 = vmatpush1.msra.mxu0 %v2656
        %2768 = vmatprep.subr.mxu0 %v2659
        %2769 = vmatpush1.msra.mxu0 %v2658
        %2770 = vmatprep.subr.mxu0 %v2661
        %2771 = vmatpush1.msra.mxu0 %v2660
        %2772 = vmatprep.subr.mxu0 0.0
        %2773 = vmatpush1.msra.mxu0 0.0
        %2774 = vmatprep.subr.mxu0 0.0
        %2775 = vmatpush1.msra.mxu0 0.0
        %2776 = vmatprep.subr.mxu0 0.0
        %2777 = vmatpush1.msra.mxu0 0.0
        %2778 = vmatprep.subr.mxu0 0.0
        %2779 = vmatpush1.msra.mxu0 0.0
        %2780 = vmatprep.subr.mxu0 0.0
        %2781 = vmatpush1.msra.mxu0 0.0
        %2782 = vmatprep.subr.mxu0 0.0
        %2783 = vmatpush1.msra.mxu0 0.0
        %2784 = vmatprep.subr.mxu0 0.0
        %2785 = vmatpush1.msra.mxu0 0.0
        %2786 = vmatprep.subr.mxu0 0.0
        %2787 = vmatpush1.msra.mxu0 0.0
        %2788 = vmatprep.subr.mxu0 0.0
        %2789 = vmatpush1.msra.mxu0 0.0
        %2790 = vmatprep.subr.mxu0 0.0
        %2791 = vmatpush1.msra.mxu0 0.0
        %2792 = vmatprep.subr.mxu0 0.0
        %2793 = vmatpush1.msra.mxu0 0.0
        %2794 = vmatprep.subr.mxu0 0.0
        %2795 = vmatpush1.msra.mxu0 0.0
        %2796 = vmatprep.subr.mxu0 0.0
        %2797 = vmatpush1.msra.mxu0 0.0
        %2798 = vmatprep.subr.mxu0 0.0
        %2799 = vmatpush1.msra.mxu0 0.0
        %2800 = vmatprep.subr.mxu0 0.0
        %2801 = vmatpush1.msra.mxu0 0.0
        %2802 = vmatprep.subr.mxu0 0.0
        %2803 = vmatpush1.msra.mxu0 0.0
        %2804 = vmatprep.subr.mxu0 0.0
        %2805 = vmatpush1.msra.mxu0 0.0
        %2806 = vmatprep.subr.mxu0 0.0
        %2807 = vmatpush1.msra.mxu0 0.0
        %2808 = vmatprep.subr.mxu0 0.0
        %2809 = vmatpush1.msra.mxu0 0.0
        %2810 = vmatprep.subr.mxu0 0.0
        %2811 = vmatpush1.msra.mxu0 0.0
        %2812 = vmatprep.subr.mxu0 0.0
        %2813 = vmatpush1.msra.mxu0 0.0
        %2814 = vmatprep.subr.mxu0 0.0
        %2815 = vmatpush1.msra.mxu0 0.0
        %2816 = vmatprep.subr.mxu0 0.0
        %2817 = vmatpush1.msra.mxu0 0.0
        %2818 = vmatprep.subr.mxu0 0.0
        %2819 = vmatpush1.msra.mxu0 0.0
        %2820 = vmatprep.subr.mxu0 0.0
        %2821 = vmatpush1.msra.mxu0 0.0
        %2822 = vmatprep.subr.mxu0 0.0
        %2823 = vmatpush1.msra.mxu0 0.0
        %2824 = vmatprep.subr.mxu0 0.0
        %2825 = vmatpush1.msra.mxu0 0.0
        %2826 = vmatprep.subr.mxu0 0.0
        %2827 = vmatpush1.msra.mxu0 0.0
        %2828 = vmatprep.mubr.f32.mxu0 0.0
        %2829 = vmatmul.mubr.f32.gmra.mrb[0].mxu0 %v2664
        %v2830 = vpop.f32.mrb[0].mxu0
        %v2831 = vadd.f32 %v2742, %v2830
        %v2832 = vpop.f32.mrb[0].mxu0
        %v2833 = vadd.f32 %v2744, %v2832
        %2834 = vmatprep.mubr.f32.mxu0 0.0
        %2835 = vmatmul.mubr.f32.gmra.mrb[0].mxu0 %v2667
        %v2836 = vpop.f32.mrb[0].mxu0
        %v2837 = vadd.f32 %v2748, %v2836
        %v2838 = vpop.f32.mrb[0].mxu0
        %v2839 = vadd.f32 %v2750, %v2838
        %2840 = vmatprep.mubr.f32.mxu0 0.0
        %2841 = vmatmul.mubr.f32.gmra.mrb[0].mxu0 %v2670
        %v2842 = vpop.f32.mrb[0].mxu0
        %v2843 = vadd.f32 %v2754, %v2842
        %v2844 = vpop.f32.mrb[0].mxu0
        %v2845 = vadd.f32 %v2756, %v2844
        %2846 = vmatprep.mubr.f32.mxu0 0.0
        %2847 = vmatmul.mubr.f32.gmra.mrb[0].mxu0 %v2673
        %v2848 = vpop.f32.mrb[0].mxu0
        %v2849 = vadd.f32 %v2760, %v2848
        %v2850 = vpop.f32.mrb[0].mxu0
        %v2851 = vadd.f32 %v2762, %v2850
        %2852 = vdwg.mxu0
        %v2853 = vld [vmem:[#allocation17] sm:$0xff]
        %v2854 = vld [vmem:[#allocation17 + $0x8] sm:$0xff]
        %v2855 = vld [vmem:[#allocation17 + $0x10] sm:$0xff]
        %v2856 = vld [vmem:[#allocation17 + $0x18] sm:$0xff]
        %v2857 = vld [vmem:[%s665] sm:$0xff]
        %v2858 = vld [vmem:[%s665 + $0x8] sm:$0xff]
        %v2859 = vld [vmem:[%s665 + $0x10] sm:$0xff]
        %v2860 = vld [vmem:[%s665 + $0x18] sm:$0xff]
        %v2861 = vld [vmem:[%s665 + $0x20] sm:$0xff]
        %v2862 = vld [vmem:[%s665 + $0x28] sm:$0xff]
        %v2863 = vld [vmem:[%s665 + $0x30] sm:$0xff]
        %v2864 = vld [vmem:[%s665 + $0x38] sm:$0xff]
        %v2865 = vld [vmem:[%s665 + $0x40] sm:$0xff]
        %v2866 = vld [vmem:[%s665 + $0x48] sm:$0xff]
        %v2867 = vld [vmem:[%s665 + $0x50] sm:$0xff]
        %v2868 = vld [vmem:[%s665 + $0x58] sm:$0xff]
        %v2869 = vld [vmem:[%s665 + $0x60] sm:$0xff]
        %v2870 = vld [vmem:[%s665 + $0x68] sm:$0xff]
        %v2871 = vld [vmem:[%s665 + $0x70] sm:$0xff]
        %v2872 = vld [vmem:[%s665 + $0x78] sm:$0xff]
        %vm2873 = vcmask 523264
        %v2875 = vsel %vm2873, %v2853, 0
        %v2878 = vsel %vm2873, %v2854, 0
        %v2881 = vsel %vm2873, %v2855, 0
        %v2884 = vsel %vm2873, %v2856, 0
        %2886 = vmatprep.subr.mxu0 %v2858
        %2887 = vmatpush1.msra.mxu0 %v2857
        %2888 = vmatprep.subr.mxu0 %v2860
        %2889 = vmatpush1.msra.mxu0 %v2859
        %2890 = vmatprep.subr.mxu0 %v2862
        %2891 = vmatpush1.msra.mxu0 %v2861
        %2892 = vmatprep.subr.mxu0 %v2864
        %2893 = vmatpush1.msra.mxu0 %v2863
        %2894 = vmatprep.subr.mxu0 %v2866
        %2895 = vmatpush1.msra.mxu0 %v2865
        %2896 = vmatprep.subr.mxu0 %v2868
        %2897 = vmatpush1.msra.mxu0 %v2867
        %2898 = vmatprep.subr.mxu0 %v2870
        %2899 = vmatpush1.msra.mxu0 %v2869
        %2900 = vmatprep.subr.mxu0 %v2872
        %2901 = vmatpush1.msra.mxu0 %v2871
        %2902 = vmatprep.subr.mxu0 0.0
        %2903 = vmatpush1.msra.mxu0 0.0
        %2904 = vmatprep.subr.mxu0 0.0
        %2905 = vmatpush1.msra.mxu0 0.0
        %2906 = vmatprep.subr.mxu0 0.0
        %2907 = vmatpush1.msra.mxu0 0.0
        %2908 = vmatprep.subr.mxu0 0.0
        %2909 = vmatpush1.msra.mxu0 0.0
        %2910 = vmatprep.subr.mxu0 0.0
        %2911 = vmatpush1.msra.mxu0 0.0
        %2912 = vmatprep.subr.mxu0 0.0
        %2913 = vmatpush1.msra.mxu0 0.0
        %2914 = vmatprep.subr.mxu0 0.0
        %2915 = vmatpush1.msra.mxu0 0.0
        %2916 = vmatprep.subr.mxu0 0.0
        %2917 = vmatpush1.msra.mxu0 0.0
        %2918 = vmatprep.subr.mxu0 0.0
        %2919 = vmatpush1.msra.mxu0 0.0
        %2920 = vmatprep.subr.mxu0 0.0
        %2921 = vmatpush1.msra.mxu0 0.0
        %2922 = vmatprep.subr.mxu0 0.0
        %2923 = vmatpush1.msra.mxu0 0.0
        %2924 = vmatprep.subr.mxu0 0.0
        %2925 = vmatpush1.msra.mxu0 0.0
        %2926 = vmatprep.subr.mxu0 0.0
        %2927 = vmatpush1.msra.mxu0 0.0
        %2928 = vmatprep.subr.mxu0 0.0
        %2929 = vmatpush1.msra.mxu0 0.0
        %2930 = vmatprep.subr.mxu0 0.0
        %2931 = vmatpush1.msra.mxu0 0.0
        %2932 = vmatprep.subr.mxu0 0.0
        %2933 = vmatpush1.msra.mxu0 0.0
        %2934 = vmatprep.subr.mxu0 0.0
        %2935 = vmatpush1.msra.mxu0 0.0
        %2936 = vmatprep.subr.mxu0 0.0
        %2937 = vmatpush1.msra.mxu0 0.0
        %2938 = vmatprep.subr.mxu0 0.0
        %2939 = vmatpush1.msra.mxu0 0.0
        %2940 = vmatprep.subr.mxu0 0.0
        %2941 = vmatpush1.msra.mxu0 0.0
        %2942 = vmatprep.subr.mxu0 0.0
        %2943 = vmatpush1.msra.mxu0 0.0
        %2944 = vmatprep.subr.mxu0 0.0
        %2945 = vmatpush1.msra.mxu0 0.0
        %2946 = vmatprep.subr.mxu0 0.0
        %2947 = vmatpush1.msra.mxu0 0.0
        %2948 = vmatprep.subr.mxu0 0.0
        %2949 = vmatpush1.msra.mxu0 0.0
        %2950 = vmatprep.mubr.f32.mxu0 0.0
        %2951 = vmatmul.mubr.f32.gmra.mrb[0].mxu0 %v2875
        %v2952 = vpop.f32.mrb[0].mxu0
        %v2953 = vadd.f32 0.0, %v2952
        %v2954 = vpop.f32.mrb[0].mxu0
        %v2955 = vadd.f32 0.0, %v2954
        %2956 = vmatprep.mubr.f32.mxu0 0.0
        %2957 = vmatmul.mubr.f32.gmra.mrb[0].mxu0 %v2878
        %v2958 = vpop.f32.mrb[0].mxu0
        %v2959 = vadd.f32 0.0, %v2958
        %v2960 = vpop.f32.mrb[0].mxu0
        %v2961 = vadd.f32 0.0, %v2960
        %2962 = vmatprep.mubr.f32.mxu0 0.0
        %2963 = vmatmul.mubr.f32.gmra.mrb[0].mxu0 %v2881
        %v2964 = vpop.f32.mrb[0].mxu0
        %v2965 = vadd.f32 0.0, %v2964
        %v2966 = vpop.f32.mrb[0].mxu0
        %v2967 = vadd.f32 0.0, %v2966
        %2968 = vmatprep.mubr.f32.mxu0 0.0
        %2969 = vmatmul.mubr.f32.gmra.mrb[0].mxu0 %v2884
        %v2970 = vpop.f32.mrb[0].mxu0
        %v2971 = vadd.f32 0.0, %v2970
        %v2972 = vpop.f32.mrb[0].mxu0
        %v2973 = vadd.f32 0.0, %v2972
        %2974 = vdwg.mxu0
        %v2975 = vadd.f32 %v2831, %v2953
        %v2976 = vadd.f32 %v2833, %v2955
        %v2977 = vadd.f32 %v2837, %v2959
        %v2978 = vadd.f32 %v2839, %v2961
        %v2979 = vadd.f32 %v2843, %v2965
        %v2980 = vadd.f32 %v2845, %v2967
        %v2981 = vadd.f32 %v2849, %v2971
        %v2982 = vadd.f32 %v2851, %v2973
        loop: start=0, step=1, limit=2
        $region148: #{tfr_forward.1} parent=79 // loop_pre_header
          _
        $region149: #{tfr_forward.1} parent=79 // loop_header
          %s2984 = sphi 0, %s2988
          %p2985 = scmp.ge.s32.totalorder %s2984, 2
          %v2989 = vphi %v2975, %v4342
          %v2990 = vphi %v2976, %v4343
          %v2991 = vphi %v2977, %v4344
          %v2992 = vphi %v2978, %v4345
          %v2993 = vphi %v2979, %v4346
          %v2994 = vphi %v2980, %v4347
          %v2995 = vphi %v2981, %v4348
          %v2996 = vphi %v2982, %v4349
        $region150: #{tfr_forward.1} parent=79 // loop_header_branch
          %2987 = sbr.rel (%p2985) target = $region154
        $region151: #{tfr_forward.1} parent=79 // loop_body
          %s2997 = sadd.s32 %s2984, 2
          %s2998 = smul.u32 %s2997, 12
          %s2999 = smul.addr %s2998, 8
          %s3000 = scalar_lea.vmem [#allocation10], %s2999
          %v3001 = vld [vmem:[%s3000] sm:$0xff]
          %v3002 = vld [vmem:[%s3000 + $0x8] sm:$0xff]
          %v3003 = vld [vmem:[%s3000 + $0x10] sm:$0xff]
          %v3004 = vld [vmem:[%s3000 + $0x18] sm:$0xff]
          %v3005 = vld [vmem:[%s3000 + $0x20] sm:$0xff]
          %v3006 = vld [vmem:[%s3000 + $0x28] sm:$0xff]
          %v3007 = vld [vmem:[%s3000 + $0x30] sm:$0xff]
          %v3008 = vld [vmem:[%s3000 + $0x38] sm:$0xff]
          %v3009 = vld [vmem:[%s3000 + $0x40] sm:$0xff]
          %v3010 = vld [vmem:[%s3000 + $0x48] sm:$0xff]
          %v3011 = vld [vmem:[%s3000 + $0x50] sm:$0xff]
          %v3012 = vld [vmem:[%s3000 + $0x58] sm:$0xff]
          %3017 = vrot.lane.b32.xlu0 %v2990, 17
          %v3018 = vpop.permute.xlu0 %3017
          %3019 = vrot.lane.b32.xlu0 %v2992, 17
          %v3020 = vpop.permute.xlu0 %3019
          %3021 = vrot.lane.b32.xlu0 %v2994, 17
          %v3022 = vpop.permute.xlu0 %3021
          %3023 = vrot.lane.b32.xlu0 %v2996, 17
          %v3024 = vpop.permute.xlu0 %3023
          %3033 = vrot.lane.b32.xlu0 %v2989, 17
          %v3034 = vpop.permute.xlu0 %3033
          %3035 = vrot.lane.b32.xlu0 %v2991, 17
          %v3036 = vpop.permute.xlu0 %3035
          %3037 = vrot.lane.b32.xlu0 %v2993, 17
          %v3038 = vpop.permute.xlu0 %3037
          %3039 = vrot.lane.b32.xlu0 %v2995, 17
          %v3040 = vpop.permute.xlu0 %3039
          %v3041 = vsel %vm2219, %v3034, %v3018
          %v3042 = vsel %vm2219, %v3036, %v3020
          %v3043 = vsel %vm2219, %v3038, %v3022
          %v3044 = vsel %vm2219, %v3040, %v3024
          %v3053 = vsel %vm2219, %v3018, %v3034
          %v3054 = vsel %vm2219, %v3020, %v3036
          %v3055 = vsel %vm2219, %v3022, %v3038
          %v3056 = vsel %vm2219, %v3024, %v3040
          %v3057 = vld [vmem:[#allocation25] sm:$0x3]
          %v3059 = vlaneseq
          %v3060 = vshrl.u32 %v3059, 7
          %v3061 = vsub.s32 0, %v3060
          %v3062 = vrot.slane %v3057, %v3061
          %v3063 = vlaneseq
          %v3064 = vshrl.u32 %v3063, 7
          %v3065 = vsub.s32 1, %v3064
          %v3066 = vrot.slane %v3057, %v3065
          %v3069 = vmul.f32 %v3053, %v3062
          %v3070 = vmul.f32 %v3041, %v3066
          %v3071 = vmul.f32 %v3054, %v3062
          %v3072 = vmul.f32 %v3042, %v3066
          %v3073 = vmul.f32 %v3055, %v3062
          %v3074 = vmul.f32 %v3043, %v3066
          %v3075 = vmul.f32 %v3056, %v3062
          %v3076 = vmul.f32 %v3044, %v3066
          %3077 = vrot.lane.b32.xlu0 %v2990, 16
          %v3078 = vpop.permute.xlu0 %3077
          %3079 = vrot.lane.b32.xlu0 %v2992, 16
          %v3080 = vpop.permute.xlu0 %3079
          %3081 = vrot.lane.b32.xlu0 %v2994, 16
          %v3082 = vpop.permute.xlu0 %3081
          %3083 = vrot.lane.b32.xlu0 %v2996, 16
          %v3084 = vpop.permute.xlu0 %3083
          %3089 = vrot.lane.b32.xlu0 %v2989, 16
          %v3090 = vpop.permute.xlu0 %3089
          %3091 = vrot.lane.b32.xlu0 %v2991, 16
          %v3092 = vpop.permute.xlu0 %3091
          %3093 = vrot.lane.b32.xlu0 %v2993, 16
          %v3094 = vpop.permute.xlu0 %3093
          %3095 = vrot.lane.b32.xlu0 %v2995, 16
          %v3096 = vpop.permute.xlu0 %3095
          %v3097 = vsel %vm2276, %v3090, %v3078
          %v3098 = vsel %vm2276, %v3092, %v3080
          %v3099 = vsel %vm2276, %v3094, %v3082
          %v3100 = vsel %vm2276, %v3096, %v3084
          %v3109 = vsel %vm2276, %v3078, %v3090
          %v3110 = vsel %vm2276, %v3080, %v3092
          %v3111 = vsel %vm2276, %v3082, %v3094
          %v3112 = vsel %vm2276, %v3084, %v3096
          %v3113 = vld [vmem:[%s2293] sm:$0x3]
          %v3115 = vlaneseq
          %v3116 = vshrl.u32 %v3115, 7
          %v3117 = vsub.s32 0, %v3116
          %v3118 = vrot.slane %v3113, %v3117
          %v3119 = vlaneseq
          %v3120 = vshrl.u32 %v3119, 7
          %v3121 = vsub.s32 1, %v3120
          %v3122 = vrot.slane %v3113, %v3121
          %v3125 = vmul.f32 %v3109, %v3118
          %v3126 = vmul.f32 %v3097, %v3122
          %v3127 = vmul.f32 %v3110, %v3118
          %v3128 = vmul.f32 %v3098, %v3122
          %v3129 = vmul.f32 %v3111, %v3118
          %v3130 = vmul.f32 %v3099, %v3122
          %v3131 = vmul.f32 %v3112, %v3118
          %v3132 = vmul.f32 %v3100, %v3122
          %3133 = vrot.lane.b32.xlu0 %v2990, 15
          %v3134 = vpop.permute.xlu0 %3133
          %3135 = vrot.lane.b32.xlu0 %v2992, 15
          %v3136 = vpop.permute.xlu0 %3135
          %3137 = vrot.lane.b32.xlu0 %v2994, 15
          %v3138 = vpop.permute.xlu0 %3137
          %3139 = vrot.lane.b32.xlu0 %v2996, 15
          %v3140 = vpop.permute.xlu0 %3139
          %3145 = vrot.lane.b32.xlu0 %v2989, 15
          %v3146 = vpop.permute.xlu0 %3145
          %3147 = vrot.lane.b32.xlu0 %v2991, 15
          %v3148 = vpop.permute.xlu0 %3147
          %3149 = vrot.lane.b32.xlu0 %v2993, 15
          %v3150 = vpop.permute.xlu0 %3149
          %3151 = vrot.lane.b32.xlu0 %v2995, 15
          %v3152 = vpop.permute.xlu0 %3151
          %v3153 = vsel %vm2334, %v3146, %v3134
          %v3154 = vsel %vm2334, %v3148, %v3136
          %v3155 = vsel %vm2334, %v3150, %v3138
          %v3156 = vsel %vm2334, %v3152, %v3140
          %v3165 = vsel %vm2334, %v3134, %v3146
          %v3166 = vsel %vm2334, %v3136, %v3148
          %v3167 = vsel %vm2334, %v3138, %v3150
          %v3168 = vsel %vm2334, %v3140, %v3152
          %v3169 = vld [vmem:[%s2351] sm:$0x3]
          %v3171 = vlaneseq
          %v3172 = vshrl.u32 %v3171, 7
          %v3173 = vsub.s32 0, %v3172
          %v3174 = vrot.slane %v3169, %v3173
          %v3175 = vlaneseq
          %v3176 = vshrl.u32 %v3175, 7
          %v3177 = vsub.s32 1, %v3176
          %v3178 = vrot.slane %v3169, %v3177
          %v3181 = vmul.f32 %v3165, %v3174
          %v3182 = vmul.f32 %v3153, %v3178
          %v3183 = vmul.f32 %v3166, %v3174
          %v3184 = vmul.f32 %v3154, %v3178
          %v3185 = vmul.f32 %v3167, %v3174
          %v3186 = vmul.f32 %v3155, %v3178
          %v3187 = vmul.f32 %v3168, %v3174
          %v3188 = vmul.f32 %v3156, %v3178
          %3189 = vrot.lane.b32.xlu0 %v2990, 1
          %v3190 = vpop.permute.xlu0 %3189
          %3191 = vrot.lane.b32.xlu0 %v2992, 1
          %v3192 = vpop.permute.xlu0 %3191
          %3193 = vrot.lane.b32.xlu0 %v2994, 1
          %v3194 = vpop.permute.xlu0 %3193
          %3195 = vrot.lane.b32.xlu0 %v2996, 1
          %v3196 = vpop.permute.xlu0 %3195
          %3201 = vrot.lane.b32.xlu0 %v2989, 1
          %v3202 = vpop.permute.xlu0 %3201
          %3203 = vrot.lane.b32.xlu0 %v2991, 1
          %v3204 = vpop.permute.xlu0 %3203
          %3205 = vrot.lane.b32.xlu0 %v2993, 1
          %v3206 = vpop.permute.xlu0 %3205
          %3207 = vrot.lane.b32.xlu0 %v2995, 1
          %v3208 = vpop.permute.xlu0 %3207
          %v3209 = vsel %vm2392, %v3202, %v3190
          %v3210 = vsel %vm2392, %v3204, %v3192
          %v3211 = vsel %vm2392, %v3206, %v3194
          %v3212 = vsel %vm2392, %v3208, %v3196
          %v3221 = vsel %vm2392, %v3190, %v3202
          %v3222 = vsel %vm2392, %v3192, %v3204
          %v3223 = vsel %vm2392, %v3194, %v3206
          %v3224 = vsel %vm2392, %v3196, %v3208
          %v3225 = vld [vmem:[%s2409] sm:$0x3]
          %v3227 = vlaneseq
          %v3228 = vshrl.u32 %v3227, 7
          %v3229 = vsub.s32 0, %v3228
          %v3230 = vrot.slane %v3225, %v3229
          %v3231 = vlaneseq
          %v3232 = vshrl.u32 %v3231, 7
          %v3233 = vsub.s32 1, %v3232
          %v3234 = vrot.slane %v3225, %v3233
          %v3237 = vmul.f32 %v3221, %v3230
          %v3238 = vmul.f32 %v3209, %v3234
          %v3239 = vmul.f32 %v3222, %v3230
          %v3240 = vmul.f32 %v3210, %v3234
          %v3241 = vmul.f32 %v3223, %v3230
          %v3242 = vmul.f32 %v3211, %v3234
          %v3243 = vmul.f32 %v3224, %v3230
          %v3244 = vmul.f32 %v3212, %v3234
          %3245 = vrot.lane.b32.xlu0 %v2989, 127
          %v3246 = vpop.permute.xlu0 %3245
          %3247 = vrot.lane.b32.xlu0 %v2990, 127
          %v3248 = vpop.permute.xlu0 %3247
          %3249 = vrot.lane.b32.xlu0 %v2991, 127
          %v3250 = vpop.permute.xlu0 %3249
          %3251 = vrot.lane.b32.xlu0 %v2992, 127
          %v3252 = vpop.permute.xlu0 %3251
          %3253 = vrot.lane.b32.xlu0 %v2993, 127
          %v3254 = vpop.permute.xlu0 %3253
          %3255 = vrot.lane.b32.xlu0 %v2994, 127
          %v3256 = vpop.permute.xlu0 %3255
          %3257 = vrot.lane.b32.xlu0 %v2995, 127
          %v3258 = vpop.permute.xlu0 %3257
          %3259 = vrot.lane.b32.xlu0 %v2996, 127
          %v3260 = vpop.permute.xlu0 %3259
          %v3261 = vsel %vm2446, %v3246, %v3248
          %v3262 = vsel %vm2446, %v3250, %v3252
          %v3263 = vsel %vm2446, %v3254, %v3256
          %v3264 = vsel %vm2446, %v3258, %v3260
          %v3277 = vsel %vm2446, %v3248, %v3246
          %v3278 = vsel %vm2446, %v3252, %v3250
          %v3279 = vsel %vm2446, %v3256, %v3254
          %v3280 = vsel %vm2446, %v3260, %v3258
          %v3281 = vld [vmem:[%s2467] sm:$0x3]
          %v3283 = vlaneseq
          %v3284 = vshrl.u32 %v3283, 7
          %v3285 = vsub.s32 0, %v3284
          %v3286 = vrot.slane %v3281, %v3285
          %v3287 = vlaneseq
          %v3288 = vshrl.u32 %v3287, 7
          %v3289 = vsub.s32 1, %v3288
          %v3290 = vrot.slane %v3281, %v3289
          %v3293 = vmul.f32 %v3261, %v3286
          %v3294 = vmul.f32 %v3277, %v3290
          %v3295 = vmul.f32 %v3262, %v3286
          %v3296 = vmul.f32 %v3278, %v3290
          %v3297 = vmul.f32 %v3263, %v3286
          %v3298 = vmul.f32 %v3279, %v3290
          %v3299 = vmul.f32 %v3264, %v3286
          %v3300 = vmul.f32 %v3280, %v3290
          %3301 = vrot.lane.b32.xlu0 %v2989, 113
          %v3302 = vpop.permute.xlu0 %3301
          %3303 = vrot.lane.b32.xlu0 %v2990, 113
          %v3304 = vpop.permute.xlu0 %3303
          %3305 = vrot.lane.b32.xlu0 %v2991, 113
          %v3306 = vpop.permute.xlu0 %3305
          %3307 = vrot.lane.b32.xlu0 %v2992, 113
          %v3308 = vpop.permute.xlu0 %3307
          %3309 = vrot.lane.b32.xlu0 %v2993, 113
          %v3310 = vpop.permute.xlu0 %3309
          %3311 = vrot.lane.b32.xlu0 %v2994, 113
          %v3312 = vpop.permute.xlu0 %3311
          %3313 = vrot.lane.b32.xlu0 %v2995, 113
          %v3314 = vpop.permute.xlu0 %3313
          %3315 = vrot.lane.b32.xlu0 %v2996, 113
          %v3316 = vpop.permute.xlu0 %3315
          %v3317 = vsel %vm2504, %v3302, %v3304
          %v3318 = vsel %vm2504, %v3306, %v3308
          %v3319 = vsel %vm2504, %v3310, %v3312
          %v3320 = vsel %vm2504, %v3314, %v3316
          %v3333 = vsel %vm2504, %v3304, %v3302
          %v3334 = vsel %vm2504, %v3308, %v3306
          %v3335 = vsel %vm2504, %v3312, %v3310
          %v3336 = vsel %vm2504, %v3316, %v3314
          %v3337 = vld [vmem:[%s2525] sm:$0x3]
          %v3339 = vlaneseq
          %v3340 = vshrl.u32 %v3339, 7
          %v3341 = vsub.s32 0, %v3340
          %v3342 = vrot.slane %v3337, %v3341
          %v3343 = vlaneseq
          %v3344 = vshrl.u32 %v3343, 7
          %v3345 = vsub.s32 1, %v3344
          %v3346 = vrot.slane %v3337, %v3345
          %v3349 = vmul.f32 %v3317, %v3342
          %v3350 = vmul.f32 %v3333, %v3346
          %v3351 = vmul.f32 %v3318, %v3342
          %v3352 = vmul.f32 %v3334, %v3346
          %v3353 = vmul.f32 %v3319, %v3342
          %v3354 = vmul.f32 %v3335, %v3346
          %v3355 = vmul.f32 %v3320, %v3342
          %v3356 = vmul.f32 %v3336, %v3346
          %3357 = vrot.lane.b32.xlu0 %v2989, 112
          %v3358 = vpop.permute.xlu0 %3357
          %3359 = vrot.lane.b32.xlu0 %v2990, 112
          %v3360 = vpop.permute.xlu0 %3359
          %3361 = vrot.lane.b32.xlu0 %v2991, 112
          %v3362 = vpop.permute.xlu0 %3361
          %3363 = vrot.lane.b32.xlu0 %v2992, 112
          %v3364 = vpop.permute.xlu0 %3363
          %3365 = vrot.lane.b32.xlu0 %v2993, 112
          %v3366 = vpop.permute.xlu0 %3365
          %3367 = vrot.lane.b32.xlu0 %v2994, 112
          %v3368 = vpop.permute.xlu0 %3367
          %3369 = vrot.lane.b32.xlu0 %v2995, 112
          %v3370 = vpop.permute.xlu0 %3369
          %3371 = vrot.lane.b32.xlu0 %v2996, 112
          %v3372 = vpop.permute.xlu0 %3371
          %v3373 = vsel %vm2562, %v3358, %v3360
          %v3374 = vsel %vm2562, %v3362, %v3364
          %v3375 = vsel %vm2562, %v3366, %v3368
          %v3376 = vsel %vm2562, %v3370, %v3372
          %v3389 = vsel %vm2562, %v3360, %v3358
          %v3390 = vsel %vm2562, %v3364, %v3362
          %v3391 = vsel %vm2562, %v3368, %v3366
          %v3392 = vsel %vm2562, %v3372, %v3370
          %v3393 = vld [vmem:[%s2583] sm:$0x3]
          %v3395 = vlaneseq
          %v3396 = vshrl.u32 %v3395, 7
          %v3397 = vsub.s32 0, %v3396
          %v3398 = vrot.slane %v3393, %v3397
          %v3399 = vlaneseq
          %v3400 = vshrl.u32 %v3399, 7
          %v3401 = vsub.s32 1, %v3400
          %v3402 = vrot.slane %v3393, %v3401
          %v3405 = vmul.f32 %v3373, %v3398
          %v3406 = vmul.f32 %v3389, %v3402
          %v3407 = vmul.f32 %v3374, %v3398
          %v3408 = vmul.f32 %v3390, %v3402
          %v3409 = vmul.f32 %v3375, %v3398
          %v3410 = vmul.f32 %v3391, %v3402
          %v3411 = vmul.f32 %v3376, %v3398
          %v3412 = vmul.f32 %v3392, %v3402
          %3413 = vrot.lane.b32.xlu0 %v2989, 111
          %v3414 = vpop.permute.xlu0 %3413
          %3415 = vrot.lane.b32.xlu0 %v2990, 111
          %v3416 = vpop.permute.xlu0 %3415
          %3417 = vrot.lane.b32.xlu0 %v2991, 111
          %v3418 = vpop.permute.xlu0 %3417
          %3419 = vrot.lane.b32.xlu0 %v2992, 111
          %v3420 = vpop.permute.xlu0 %3419
          %3421 = vrot.lane.b32.xlu0 %v2993, 111
          %v3422 = vpop.permute.xlu0 %3421
          %3423 = vrot.lane.b32.xlu0 %v2994, 111
          %v3424 = vpop.permute.xlu0 %3423
          %3425 = vrot.lane.b32.xlu0 %v2995, 111
          %v3426 = vpop.permute.xlu0 %3425
          %3427 = vrot.lane.b32.xlu0 %v2996, 111
          %v3428 = vpop.permute.xlu0 %3427
          %v3429 = vsel %vm2620, %v3414, %v3416
          %v3430 = vsel %vm2620, %v3418, %v3420
          %v3431 = vsel %vm2620, %v3422, %v3424
          %v3432 = vsel %vm2620, %v3426, %v3428
          %v3445 = vsel %vm2620, %v3416, %v3414
          %v3446 = vsel %vm2620, %v3420, %v3418
          %v3447 = vsel %vm2620, %v3424, %v3422
          %v3448 = vsel %vm2620, %v3428, %v3426
          %v3449 = vld [vmem:[%s2641] sm:$0x3]
          %v3451 = vlaneseq
          %v3452 = vshrl.u32 %v3451, 7
          %v3453 = vsub.s32 0, %v3452
          %v3454 = vrot.slane %v3449, %v3453
          %v3455 = vlaneseq
          %v3456 = vshrl.u32 %v3455, 7
          %v3457 = vsub.s32 1, %v3456
          %v3458 = vrot.slane %v3449, %v3457
          %v3461 = vmul.f32 %v3429, %v3454
          %v3462 = vmul.f32 %v3445, %v3458
          %v3463 = vmul.f32 %v3430, %v3454
          %v3464 = vmul.f32 %v3446, %v3458
          %v3465 = vmul.f32 %v3431, %v3454
          %v3466 = vmul.f32 %v3447, %v3458
          %v3467 = vmul.f32 %v3432, %v3454
          %v3468 = vmul.f32 %v3448, %v3458
          %v3470 = vsel %vm2662, %v3003, 0
          %v3473 = vsel %vm2662, %v3006, 0
          %v3476 = vsel %vm2662, %v3009, 0
          %v3479 = vsel %vm2662, %v3012, 0
          %3481 = vmatprep.subr.mxu0 %v3070
          %3482 = vmatpush1.msra.mxu0 %v3069
          %3483 = vmatprep.subr.mxu0 %v3072
          %3484 = vmatpush1.msra.mxu0 %v3071
          %3485 = vmatprep.subr.mxu0 %v3074
          %3486 = vmatpush1.msra.mxu0 %v3073
          %3487 = vmatprep.subr.mxu0 %v3076
          %3488 = vmatpush1.msra.mxu0 %v3075
          %3489 = vmatprep.subr.mxu0 %v3126
          %3490 = vmatpush1.msra.mxu0 %v3125
          %3491 = vmatprep.subr.mxu0 %v3128
          %3492 = vmatpush1.msra.mxu0 %v3127
          %3493 = vmatprep.subr.mxu0 %v3130
          %3494 = vmatpush1.msra.mxu0 %v3129
          %3495 = vmatprep.subr.mxu0 %v3132
          %3496 = vmatpush1.msra.mxu0 %v3131
          %3497 = vmatprep.subr.mxu0 %v3182
          %3498 = vmatpush1.msra.mxu0 %v3181
          %3499 = vmatprep.subr.mxu0 %v3184
          %3500 = vmatpush1.msra.mxu0 %v3183
          %3501 = vmatprep.subr.mxu0 %v3186
          %3502 = vmatpush1.msra.mxu0 %v3185
          %3503 = vmatprep.subr.mxu0 %v3188
          %3504 = vmatpush1.msra.mxu0 %v3187
          %3505 = vmatprep.subr.mxu0 %v3238
          %3506 = vmatpush1.msra.mxu0 %v3237
          %3507 = vmatprep.subr.mxu0 %v3240
          %3508 = vmatpush1.msra.mxu0 %v3239
          %3509 = vmatprep.subr.mxu0 %v3242
          %3510 = vmatpush1.msra.mxu0 %v3241
          %3511 = vmatprep.subr.mxu0 %v3244
          %3512 = vmatpush1.msra.mxu0 %v3243
          %3513 = vmatprep.subr.mxu0 %v2990
          %3514 = vmatpush1.msra.mxu0 %v2989
          %3515 = vmatprep.subr.mxu0 %v2992
          %3516 = vmatpush1.msra.mxu0 %v2991
          %3517 = vmatprep.subr.mxu0 %v2994
          %3518 = vmatpush1.msra.mxu0 %v2993
          %3519 = vmatprep.subr.mxu0 %v2996
          %3520 = vmatpush1.msra.mxu0 %v2995
          %3521 = vmatprep.subr.mxu0 %v3294
          %3522 = vmatpush1.msra.mxu0 %v3293
          %3523 = vmatprep.subr.mxu0 %v3296
          %3524 = vmatpush1.msra.mxu0 %v3295
          %3525 = vmatprep.subr.mxu0 %v3298
          %3526 = vmatpush1.msra.mxu0 %v3297
          %3527 = vmatprep.subr.mxu0 %v3300
          %3528 = vmatpush1.msra.mxu0 %v3299
          %3529 = vmatprep.subr.mxu0 %v3350
          %3530 = vmatpush1.msra.mxu0 %v3349
          %3531 = vmatprep.subr.mxu0 %v3352
          %3532 = vmatpush1.msra.mxu0 %v3351
          %3533 = vmatprep.subr.mxu0 %v3354
          %3534 = vmatpush1.msra.mxu0 %v3353
          %3535 = vmatprep.subr.mxu0 %v3356
          %3536 = vmatpush1.msra.mxu0 %v3355
          %3537 = vmatprep.subr.mxu0 %v3406
          %3538 = vmatpush1.msra.mxu0 %v3405
          %3539 = vmatprep.subr.mxu0 %v3408
          %3540 = vmatpush1.msra.mxu0 %v3407
          %3541 = vmatprep.subr.mxu0 %v3410
          %3542 = vmatpush1.msra.mxu0 %v3409
          %3543 = vmatprep.subr.mxu0 %v3412
          %3544 = vmatpush1.msra.mxu0 %v3411
          %3545 = vmatprep.mubr.f32.mxu0 %v3002
          %3546 = vmatmul.mubr.f32.gmra.mrb[0].mxu0 %v3001
          %v3547 = vpop.f32.mrb[0].mxu0
          %v3548 = vadd.f32 0.0, %v3547
          %v3549 = vpop.f32.mrb[0].mxu0
          %v3550 = vadd.f32 0.0, %v3549
          %3551 = vmatprep.mubr.f32.mxu0 %v3005
          %3552 = vmatmul.mubr.f32.gmra.mrb[0].mxu0 %v3004
          %v3553 = vpop.f32.mrb[0].mxu0
          %v3554 = vadd.f32 0.0, %v3553
          %v3555 = vpop.f32.mrb[0].mxu0
          %v3556 = vadd.f32 0.0, %v3555
          %3557 = vmatprep.mubr.f32.mxu0 %v3008
          %3558 = vmatmul.mubr.f32.gmra.mrb[0].mxu0 %v3007
          %v3559 = vpop.f32.mrb[0].mxu0
          %v3560 = vadd.f32 0.0, %v3559
          %v3561 = vpop.f32.mrb[0].mxu0
          %v3562 = vadd.f32 0.0, %v3561
          %3563 = vmatprep.mubr.f32.mxu0 %v3011
          %3564 = vmatmul.mubr.f32.gmra.mrb[0].mxu0 %v3010
          %v3565 = vpop.f32.mrb[0].mxu0
          %v3566 = vadd.f32 0.0, %v3565
          %v3567 = vpop.f32.mrb[0].mxu0
          %v3568 = vadd.f32 0.0, %v3567
          %3569 = vdwg.mxu0
          %3570 = vmatprep.subr.mxu0 %v3462
          %3571 = vmatpush1.msra.mxu0 %v3461
          %3572 = vmatprep.subr.mxu0 %v3464
          %3573 = vmatpush1.msra.mxu0 %v3463
          %3574 = vmatprep.subr.mxu0 %v3466
          %3575 = vmatpush1.msra.mxu0 %v3465
          %3576 = vmatprep.subr.mxu0 %v3468
          %3577 = vmatpush1.msra.mxu0 %v3467
          %3578 = vmatprep.subr.mxu0 0.0
          %3579 = vmatpush1.msra.mxu0 0.0
          %3580 = vmatprep.subr.mxu0 0.0
          %3581 = vmatpush1.msra.mxu0 0.0
          %3582 = vmatprep.subr.mxu0 0.0
          %3583 = vmatpush1.msra.mxu0 0.0
          %3584 = vmatprep.subr.mxu0 0.0
          %3585 = vmatpush1.msra.mxu0 0.0
          %3586 = vmatprep.subr.mxu0 0.0
          %3587 = vmatpush1.msra.mxu0 0.0
          %3588 = vmatprep.subr.mxu0 0.0
          %3589 = vmatpush1.msra.mxu0 0.0
          %3590 = vmatprep.subr.mxu0 0.0
          %3591 = vmatpush1.msra.mxu0 0.0
          %3592 = vmatprep.subr.mxu0 0.0
          %3593 = vmatpush1.msra.mxu0 0.0
          %3594 = vmatprep.subr.mxu0 0.0
          %3595 = vmatpush1.msra.mxu0 0.0
          %3596 = vmatprep.subr.mxu0 0.0
          %3597 = vmatpush1.msra.mxu0 0.0
          %3598 = vmatprep.subr.mxu0 0.0
          %3599 = vmatpush1.msra.mxu0 0.0
          %3600 = vmatprep.subr.mxu0 0.0
          %3601 = vmatpush1.msra.mxu0 0.0
          %3602 = vmatprep.subr.mxu0 0.0
          %3603 = vmatpush1.msra.mxu0 0.0
          %3604 = vmatprep.subr.mxu0 0.0
          %3605 = vmatpush1.msra.mxu0 0.0
          %3606 = vmatprep.subr.mxu0 0.0
          %3607 = vmatpush1.msra.mxu0 0.0
          %3608 = vmatprep.subr.mxu0 0.0
          %3609 = vmatpush1.msra.mxu0 0.0
          %3610 = vmatprep.subr.mxu0 0.0
          %3611 = vmatpush1.msra.mxu0 0.0
          %3612 = vmatprep.subr.mxu0 0.0
          %3613 = vmatpush1.msra.mxu0 0.0
          %3614 = vmatprep.subr.mxu0 0.0
          %3615 = vmatpush1.msra.mxu0 0.0
          %3616 = vmatprep.subr.mxu0 0.0
          %3617 = vmatpush1.msra.mxu0 0.0
          %3618 = vmatprep.subr.mxu0 0.0
          %3619 = vmatpush1.msra.mxu0 0.0
          %3620 = vmatprep.subr.mxu0 0.0
          %3621 = vmatpush1.msra.mxu0 0.0
          %3622 = vmatprep.subr.mxu0 0.0
          %3623 = vmatpush1.msra.mxu0 0.0
          %3624 = vmatprep.subr.mxu0 0.0
          %3625 = vmatpush1.msra.mxu0 0.0
          %3626 = vmatprep.subr.mxu0 0.0
          %3627 = vmatpush1.msra.mxu0 0.0
          %3628 = vmatprep.subr.mxu0 0.0
          %3629 = vmatpush1.msra.mxu0 0.0
          %3630 = vmatprep.subr.mxu0 0.0
          %3631 = vmatpush1.msra.mxu0 0.0
          %3632 = vmatprep.subr.mxu0 0.0
          %3633 = vmatpush1.msra.mxu0 0.0
          %3634 = vmatprep.mubr.f32.mxu0 0.0
          %3635 = vmatmul.mubr.f32.gmra.mrb[0].mxu0 %v3470
          %v3636 = vpop.f32.mrb[0].mxu0
          %v3637 = vadd.f32 %v3548, %v3636
          %v3638 = vpop.f32.mrb[0].mxu0
          %v3639 = vadd.f32 %v3550, %v3638
          %3640 = vmatprep.mubr.f32.mxu0 0.0
          %3641 = vmatmul.mubr.f32.gmra.mrb[0].mxu0 %v3473
          %v3642 = vpop.f32.mrb[0].mxu0
          %v3643 = vadd.f32 %v3554, %v3642
          %v3644 = vpop.f32.mrb[0].mxu0
          %v3645 = vadd.f32 %v3556, %v3644
          %3646 = vmatprep.mubr.f32.mxu0 0.0
          %3647 = vmatmul.mubr.f32.gmra.mrb[0].mxu0 %v3476
          %v3648 = vpop.f32.mrb[0].mxu0
          %v3649 = vadd.f32 %v3560, %v3648
          %v3650 = vpop.f32.mrb[0].mxu0
          %v3651 = vadd.f32 %v3562, %v3650
          %3652 = vmatprep.mubr.f32.mxu0 0.0
          %3653 = vmatmul.mubr.f32.gmra.mrb[0].mxu0 %v3479
          %v3654 = vpop.f32.mrb[0].mxu0
          %v3655 = vadd.f32 %v3566, %v3654
          %v3656 = vpop.f32.mrb[0].mxu0
          %v3657 = vadd.f32 %v3568, %v3656
          %3658 = vdwg.mxu0
          %vm3659 = vcmp.ge.f32.partialorder %v3637, 0.0
          %vm3660 = vcmp.ge.f32.partialorder %v3639, 0.0
          %vm3661 = vcmp.ge.f32.partialorder %v3643, 0.0
          %vm3662 = vcmp.ge.f32.partialorder %v3645, 0.0
          %vm3663 = vcmp.ge.f32.partialorder %v3649, 0.0
          %vm3664 = vcmp.ge.f32.partialorder %v3651, 0.0
          %vm3665 = vcmp.ge.f32.partialorder %v3655, 0.0
          %vm3666 = vcmp.ge.f32.partialorder %v3657, 0.0
          %v3667 = vmul.f32 %v3637, 0.25
          %v3668 = vmul.f32 %v3639, 0.25
          %v3669 = vmul.f32 %v3643, 0.25
          %v3670 = vmul.f32 %v3645, 0.25
          %v3671 = vmul.f32 %v3649, 0.25
          %v3672 = vmul.f32 %v3651, 0.25
          %v3673 = vmul.f32 %v3655, 0.25
          %v3674 = vmul.f32 %v3657, 0.25
          %v3675 = vsel %vm3659, %v3637, %v3667
          %v3676 = vsel %vm3660, %v3639, %v3668
          %v3677 = vsel %vm3661, %v3643, %v3669
          %v3678 = vsel %vm3662, %v3645, %v3670
          %v3679 = vsel %vm3663, %v3649, %v3671
          %v3680 = vsel %vm3664, %v3651, %v3672
          %v3681 = vsel %vm3665, %v3655, %v3673
          %v3682 = vsel %vm3666, %v3657, %v3674
          %s3683 = smul.addr %s2998, 8
          %s3684 = scalar_lea.vmem [#allocation11], %s3683
          %v3685 = vld [vmem:[%s3684] sm:$0xff]
          %v3686 = vld [vmem:[%s3684 + $0x8] sm:$0xff]
          %v3687 = vld [vmem:[%s3684 + $0x10] sm:$0xff]
          %v3688 = vld [vmem:[%s3684 + $0x18] sm:$0xff]
          %v3689 = vld [vmem:[%s3684 + $0x20] sm:$0xff]
          %v3690 = vld [vmem:[%s3684 + $0x28] sm:$0xff]
          %v3691 = vld [vmem:[%s3684 + $0x30] sm:$0xff]
          %v3692 = vld [vmem:[%s3684 + $0x38] sm:$0xff]
          %v3693 = vld [vmem:[%s3684 + $0x40] sm:$0xff]
          %v3694 = vld [vmem:[%s3684 + $0x48] sm:$0xff]
          %v3695 = vld [vmem:[%s3684 + $0x50] sm:$0xff]
          %v3696 = vld [vmem:[%s3684 + $0x58] sm:$0xff]
          %3701 = vrot.lane.b32.xlu0 %v3676, 17
          %v3702 = vpop.permute.xlu0 %3701
          %3703 = vrot.lane.b32.xlu0 %v3678, 17
          %v3704 = vpop.permute.xlu0 %3703
          %3705 = vrot.lane.b32.xlu0 %v3680, 17
          %v3706 = vpop.permute.xlu0 %3705
          %3707 = vrot.lane.b32.xlu0 %v3682, 17
          %v3708 = vpop.permute.xlu0 %3707
          %3717 = vrot.lane.b32.xlu0 %v3675, 17
          %v3718 = vpop.permute.xlu0 %3717
          %3719 = vrot.lane.b32.xlu0 %v3677, 17
          %v3720 = vpop.permute.xlu0 %3719
          %3721 = vrot.lane.b32.xlu0 %v3679, 17
          %v3722 = vpop.permute.xlu0 %3721
          %3723 = vrot.lane.b32.xlu0 %v3681, 17
          %v3724 = vpop.permute.xlu0 %3723
          %v3725 = vsel %vm2219, %v3718, %v3702
          %v3726 = vsel %vm2219, %v3720, %v3704
          %v3727 = vsel %vm2219, %v3722, %v3706
          %v3728 = vsel %vm2219, %v3724, %v3708
          %v3737 = vsel %vm2219, %v3702, %v3718
          %v3738 = vsel %vm2219, %v3704, %v3720
          %v3739 = vsel %vm2219, %v3706, %v3722
          %v3740 = vsel %vm2219, %v3708, %v3724
          %v3741 = vmul.f32 %v3737, %v3062
          %v3742 = vmul.f32 %v3725, %v3066
          %v3743 = vmul.f32 %v3738, %v3062
          %v3744 = vmul.f32 %v3726, %v3066
          %v3745 = vmul.f32 %v3739, %v3062
          %v3746 = vmul.f32 %v3727, %v3066
          %v3747 = vmul.f32 %v3740, %v3062
          %v3748 = vmul.f32 %v3728, %v3066
          %3749 = vrot.lane.b32.xlu0 %v3676, 16
          %v3750 = vpop.permute.xlu0 %3749
          %3751 = vrot.lane.b32.xlu0 %v3678, 16
          %v3752 = vpop.permute.xlu0 %3751
          %3753 = vrot.lane.b32.xlu0 %v3680, 16
          %v3754 = vpop.permute.xlu0 %3753
          %3755 = vrot.lane.b32.xlu0 %v3682, 16
          %v3756 = vpop.permute.xlu0 %3755
          %3761 = vrot.lane.b32.xlu0 %v3675, 16
          %v3762 = vpop.permute.xlu0 %3761
          %3763 = vrot.lane.b32.xlu0 %v3677, 16
          %v3764 = vpop.permute.xlu0 %3763
          %3765 = vrot.lane.b32.xlu0 %v3679, 16
          %v3766 = vpop.permute.xlu0 %3765
          %3767 = vrot.lane.b32.xlu0 %v3681, 16
          %v3768 = vpop.permute.xlu0 %3767
          %v3769 = vsel %vm2276, %v3762, %v3750
          %v3770 = vsel %vm2276, %v3764, %v3752
          %v3771 = vsel %vm2276, %v3766, %v3754
          %v3772 = vsel %vm2276, %v3768, %v3756
          %v3781 = vsel %vm2276, %v3750, %v3762
          %v3782 = vsel %vm2276, %v3752, %v3764
          %v3783 = vsel %vm2276, %v3754, %v3766
          %v3784 = vsel %vm2276, %v3756, %v3768
          %v3785 = vmul.f32 %v3781, %v3118
          %v3786 = vmul.f32 %v3769, %v3122
          %v3787 = vmul.f32 %v3782, %v3118
          %v3788 = vmul.f32 %v3770, %v3122
          %v3789 = vmul.f32 %v3783, %v3118
          %v3790 = vmul.f32 %v3771, %v3122
          %v3791 = vmul.f32 %v3784, %v3118
          %v3792 = vmul.f32 %v3772, %v3122
          %3793 = vrot.lane.b32.xlu0 %v3676, 15
          %v3794 = vpop.permute.xlu0 %3793
          %3795 = vrot.lane.b32.xlu0 %v3678, 15
          %v3796 = vpop.permute.xlu0 %3795
          %3797 = vrot.lane.b32.xlu0 %v3680, 15
          %v3798 = vpop.permute.xlu0 %3797
          %3799 = vrot.lane.b32.xlu0 %v3682, 15
          %v3800 = vpop.permute.xlu0 %3799
          %3805 = vrot.lane.b32.xlu0 %v3675, 15
          %v3806 = vpop.permute.xlu0 %3805
          %3807 = vrot.lane.b32.xlu0 %v3677, 15
          %v3808 = vpop.permute.xlu0 %3807
          %3809 = vrot.lane.b32.xlu0 %v3679, 15
          %v3810 = vpop.permute.xlu0 %3809
          %3811 = vrot.lane.b32.xlu0 %v3681, 15
          %v3812 = vpop.permute.xlu0 %3811
          %v3813 = vsel %vm2334, %v3806, %v3794
          %v3814 = vsel %vm2334, %v3808, %v3796
          %v3815 = vsel %vm2334, %v3810, %v3798
          %v3816 = vsel %vm2334, %v3812, %v3800
          %v3825 = vsel %vm2334, %v3794, %v3806
          %v3826 = vsel %vm2334, %v3796, %v3808
          %v3827 = vsel %vm2334, %v3798, %v3810
          %v3828 = vsel %vm2334, %v3800, %v3812
          %v3829 = vmul.f32 %v3825, %v3174
          %v3830 = vmul.f32 %v3813, %v3178
          %v3831 = vmul.f32 %v3826, %v3174
          %v3832 = vmul.f32 %v3814, %v3178
          %v3833 = vmul.f32 %v3827, %v3174
          %v3834 = vmul.f32 %v3815, %v3178
          %v3835 = vmul.f32 %v3828, %v3174
          %v3836 = vmul.f32 %v3816, %v3178
          %3837 = vrot.lane.b32.xlu0 %v3676, 1
          %v3838 = vpop.permute.xlu0 %3837
          %3839 = vrot.lane.b32.xlu0 %v3678, 1
          %v3840 = vpop.permute.xlu0 %3839
          %3841 = vrot.lane.b32.xlu0 %v3680, 1
          %v3842 = vpop.permute.xlu0 %3841
          %3843 = vrot.lane.b32.xlu0 %v3682, 1
          %v3844 = vpop.permute.xlu0 %3843
          %3849 = vrot.lane.b32.xlu0 %v3675, 1
          %v3850 = vpop.permute.xlu0 %3849
          %3851 = vrot.lane.b32.xlu0 %v3677, 1
          %v3852 = vpop.permute.xlu0 %3851
          %3853 = vrot.lane.b32.xlu0 %v3679, 1
          %v3854 = vpop.permute.xlu0 %3853
          %3855 = vrot.lane.b32.xlu0 %v3681, 1
          %v3856 = vpop.permute.xlu0 %3855
          %v3857 = vsel %vm2392, %v3850, %v3838
          %v3858 = vsel %vm2392, %v3852, %v3840
          %v3859 = vsel %vm2392, %v3854, %v3842
          %v3860 = vsel %vm2392, %v3856, %v3844
          %v3869 = vsel %vm2392, %v3838, %v3850
          %v3870 = vsel %vm2392, %v3840, %v3852
          %v3871 = vsel %vm2392, %v3842, %v3854
          %v3872 = vsel %vm2392, %v3844, %v3856
          %v3873 = vmul.f32 %v3869, %v3230
          %v3874 = vmul.f32 %v3857, %v3234
          %v3875 = vmul.f32 %v3870, %v3230
          %v3876 = vmul.f32 %v3858, %v3234
          %v3877 = vmul.f32 %v3871, %v3230
          %v3878 = vmul.f32 %v3859, %v3234
          %v3879 = vmul.f32 %v3872, %v3230
          %v3880 = vmul.f32 %v3860, %v3234
          %3881 = vrot.lane.b32.xlu0 %v3675, 127
          %v3882 = vpop.permute.xlu0 %3881
          %3883 = vrot.lane.b32.xlu0 %v3676, 127
          %v3884 = vpop.permute.xlu0 %3883
          %3885 = vrot.lane.b32.xlu0 %v3677, 127
          %v3886 = vpop.permute.xlu0 %3885
          %3887 = vrot.lane.b32.xlu0 %v3678, 127
          %v3888 = vpop.permute.xlu0 %3887
          %3889 = vrot.lane.b32.xlu0 %v3679, 127
          %v3890 = vpop.permute.xlu0 %3889
          %3891 = vrot.lane.b32.xlu0 %v3680, 127
          %v3892 = vpop.permute.xlu0 %3891
          %3893 = vrot.lane.b32.xlu0 %v3681, 127
          %v3894 = vpop.permute.xlu0 %3893
          %3895 = vrot.lane.b32.xlu0 %v3682, 127
          %v3896 = vpop.permute.xlu0 %3895
          %v3897 = vsel %vm2446, %v3882, %v3884
          %v3898 = vsel %vm2446, %v3886, %v3888
          %v3899 = vsel %vm2446, %v3890, %v3892
          %v3900 = vsel %vm2446, %v3894, %v3896
          %v3913 = vsel %vm2446, %v3884, %v3882
          %v3914 = vsel %vm2446, %v3888, %v3886
          %v3915 = vsel %vm2446, %v3892, %v3890
          %v3916 = vsel %vm2446, %v3896, %v3894
          %v3917 = vmul.f32 %v3897, %v3286
          %v3918 = vmul.f32 %v3913, %v3290
          %v3919 = vmul.f32 %v3898, %v3286
          %v3920 = vmul.f32 %v3914, %v3290
          %v3921 = vmul.f32 %v3899, %v3286
          %v3922 = vmul.f32 %v3915, %v3290
          %v3923 = vmul.f32 %v3900, %v3286
          %v3924 = vmul.f32 %v3916, %v3290
          %3925 = vrot.lane.b32.xlu0 %v3675, 113
          %v3926 = vpop.permute.xlu0 %3925
          %3927 = vrot.lane.b32.xlu0 %v3676, 113
          %v3928 = vpop.permute.xlu0 %3927
          %3929 = vrot.lane.b32.xlu0 %v3677, 113
          %v3930 = vpop.permute.xlu0 %3929
          %3931 = vrot.lane.b32.xlu0 %v3678, 113
          %v3932 = vpop.permute.xlu0 %3931
          %3933 = vrot.lane.b32.xlu0 %v3679, 113
          %v3934 = vpop.permute.xlu0 %3933
          %3935 = vrot.lane.b32.xlu0 %v3680, 113
          %v3936 = vpop.permute.xlu0 %3935
          %3937 = vrot.lane.b32.xlu0 %v3681, 113
          %v3938 = vpop.permute.xlu0 %3937
          %3939 = vrot.lane.b32.xlu0 %v3682, 113
          %v3940 = vpop.permute.xlu0 %3939
          %v3941 = vsel %vm2504, %v3926, %v3928
          %v3942 = vsel %vm2504, %v3930, %v3932
          %v3943 = vsel %vm2504, %v3934, %v3936
          %v3944 = vsel %vm2504, %v3938, %v3940
          %v3957 = vsel %vm2504, %v3928, %v3926
          %v3958 = vsel %vm2504, %v3932, %v3930
          %v3959 = vsel %vm2504, %v3936, %v3934
          %v3960 = vsel %vm2504, %v3940, %v3938
          %v3961 = vmul.f32 %v3941, %v3342
          %v3962 = vmul.f32 %v3957, %v3346
          %v3963 = vmul.f32 %v3942, %v3342
          %v3964 = vmul.f32 %v3958, %v3346
          %v3965 = vmul.f32 %v3943, %v3342
          %v3966 = vmul.f32 %v3959, %v3346
          %v3967 = vmul.f32 %v3944, %v3342
          %v3968 = vmul.f32 %v3960, %v3346
          %3969 = vrot.lane.b32.xlu0 %v3675, 112
          %v3970 = vpop.permute.xlu0 %3969
          %3971 = vrot.lane.b32.xlu0 %v3676, 112
          %v3972 = vpop.permute.xlu0 %3971
          %3973 = vrot.lane.b32.xlu0 %v3677, 112
          %v3974 = vpop.permute.xlu0 %3973
          %3975 = vrot.lane.b32.xlu0 %v3678, 112
          %v3976 = vpop.permute.xlu0 %3975
          %3977 = vrot.lane.b32.xlu0 %v3679, 112
          %v3978 = vpop.permute.xlu0 %3977
          %3979 = vrot.lane.b32.xlu0 %v3680, 112
          %v3980 = vpop.permute.xlu0 %3979
          %3981 = vrot.lane.b32.xlu0 %v3681, 112
          %v3982 = vpop.permute.xlu0 %3981
          %3983 = vrot.lane.b32.xlu0 %v3682, 112
          %v3984 = vpop.permute.xlu0 %3983
          %v3985 = vsel %vm2562, %v3970, %v3972
          %v3986 = vsel %vm2562, %v3974, %v3976
          %v3987 = vsel %vm2562, %v3978, %v3980
          %v3988 = vsel %vm2562, %v3982, %v3984
          %v4001 = vsel %vm2562, %v3972, %v3970
          %v4002 = vsel %vm2562, %v3976, %v3974
          %v4003 = vsel %vm2562, %v3980, %v3978
          %v4004 = vsel %vm2562, %v3984, %v3982
          %v4005 = vmul.f32 %v3985, %v3398
          %v4006 = vmul.f32 %v4001, %v3402
          %v4007 = vmul.f32 %v3986, %v3398
          %v4008 = vmul.f32 %v4002, %v3402
          %v4009 = vmul.f32 %v3987, %v3398
          %v4010 = vmul.f32 %v4003, %v3402
          %v4011 = vmul.f32 %v3988, %v3398
          %v4012 = vmul.f32 %v4004, %v3402
          %4013 = vrot.lane.b32.xlu0 %v3675, 111
          %v4014 = vpop.permute.xlu0 %4013
          %4015 = vrot.lane.b32.xlu0 %v3676, 111
          %v4016 = vpop.permute.xlu0 %4015
          %4017 = vrot.lane.b32.xlu0 %v3677, 111
          %v4018 = vpop.permute.xlu0 %4017
          %4019 = vrot.lane.b32.xlu0 %v3678, 111
          %v4020 = vpop.permute.xlu0 %4019
          %4021 = vrot.lane.b32.xlu0 %v3679, 111
          %v4022 = vpop.permute.xlu0 %4021
          %4023 = vrot.lane.b32.xlu0 %v3680, 111
          %v4024 = vpop.permute.xlu0 %4023
          %4025 = vrot.lane.b32.xlu0 %v3681, 111
          %v4026 = vpop.permute.xlu0 %4025
          %4027 = vrot.lane.b32.xlu0 %v3682, 111
          %v4028 = vpop.permute.xlu0 %4027
          %v4029 = vsel %vm2620, %v4014, %v4016
          %v4030 = vsel %vm2620, %v4018, %v4020
          %v4031 = vsel %vm2620, %v4022, %v4024
          %v4032 = vsel %vm2620, %v4026, %v4028
          %v4045 = vsel %vm2620, %v4016, %v4014
          %v4046 = vsel %vm2620, %v4020, %v4018
          %v4047 = vsel %vm2620, %v4024, %v4022
          %v4048 = vsel %vm2620, %v4028, %v4026
          %v4049 = vmul.f32 %v4029, %v3454
          %v4050 = vmul.f32 %v4045, %v3458
          %v4051 = vmul.f32 %v4030, %v3454
          %v4052 = vmul.f32 %v4046, %v3458
          %v4053 = vmul.f32 %v4031, %v3454
          %v4054 = vmul.f32 %v4047, %v3458
          %v4055 = vmul.f32 %v4032, %v3454
          %v4056 = vmul.f32 %v4048, %v3458
          %v4058 = vsel %vm2662, %v3687, 0
          %v4061 = vsel %vm2662, %v3690, 0
          %v4064 = vsel %vm2662, %v3693, 0
          %v4067 = vsel %vm2662, %v3696, 0
          %4069 = vmatprep.subr.mxu0 %v3742
          %4070 = vmatpush1.msra.mxu0 %v3741
          %4071 = vmatprep.subr.mxu0 %v3744
          %4072 = vmatpush1.msra.mxu0 %v3743
          %4073 = vmatprep.subr.mxu0 %v3746
          %4074 = vmatpush1.msra.mxu0 %v3745
          %4075 = vmatprep.subr.mxu0 %v3748
          %4076 = vmatpush1.msra.mxu0 %v3747
          %4077 = vmatprep.subr.mxu0 %v3786
          %4078 = vmatpush1.msra.mxu0 %v3785
          %4079 = vmatprep.subr.mxu0 %v3788
          %4080 = vmatpush1.msra.mxu0 %v3787
          %4081 = vmatprep.subr.mxu0 %v3790
          %4082 = vmatpush1.msra.mxu0 %v3789
          %4083 = vmatprep.subr.mxu0 %v3792
          %4084 = vmatpush1.msra.mxu0 %v3791
          %4085 = vmatprep.subr.mxu0 %v3830
          %4086 = vmatpush1.msra.mxu0 %v3829
          %4087 = vmatprep.subr.mxu0 %v3832
          %4088 = vmatpush1.msra.mxu0 %v3831
          %4089 = vmatprep.subr.mxu0 %v3834
          %4090 = vmatpush1.msra.mxu0 %v3833
          %4091 = vmatprep.subr.mxu0 %v3836
          %4092 = vmatpush1.msra.mxu0 %v3835
          %4093 = vmatprep.subr.mxu0 %v3874
          %4094 = vmatpush1.msra.mxu0 %v3873
          %4095 = vmatprep.subr.mxu0 %v3876
          %4096 = vmatpush1.msra.mxu0 %v3875
          %4097 = vmatprep.subr.mxu0 %v3878
          %4098 = vmatpush1.msra.mxu0 %v3877
          %4099 = vmatprep.subr.mxu0 %v3880
          %4100 = vmatpush1.msra.mxu0 %v3879
          %4101 = vmatprep.subr.mxu0 %v3676
          %4102 = vmatpush1.msra.mxu0 %v3675
          %4103 = vmatprep.subr.mxu0 %v3678
          %4104 = vmatpush1.msra.mxu0 %v3677
          %4105 = vmatprep.subr.mxu0 %v3680
          %4106 = vmatpush1.msra.mxu0 %v3679
          %4107 = vmatprep.subr.mxu0 %v3682
          %4108 = vmatpush1.msra.mxu0 %v3681
          %4109 = vmatprep.subr.mxu0 %v3918
          %4110 = vmatpush1.msra.mxu0 %v3917
          %4111 = vmatprep.subr.mxu0 %v3920
          %4112 = vmatpush1.msra.mxu0 %v3919
          %4113 = vmatprep.subr.mxu0 %v3922
          %4114 = vmatpush1.msra.mxu0 %v3921
          %4115 = vmatprep.subr.mxu0 %v3924
          %4116 = vmatpush1.msra.mxu0 %v3923
          %4117 = vmatprep.subr.mxu0 %v3962
          %4118 = vmatpush1.msra.mxu0 %v3961
          %4119 = vmatprep.subr.mxu0 %v3964
          %4120 = vmatpush1.msra.mxu0 %v3963
          %4121 = vmatprep.subr.mxu0 %v3966
          %4122 = vmatpush1.msra.mxu0 %v3965
          %4123 = vmatprep.subr.mxu0 %v3968
          %4124 = vmatpush1.msra.mxu0 %v3967
          %4125 = vmatprep.subr.mxu0 %v4006
          %4126 = vmatpush1.msra.mxu0 %v4005
          %4127 = vmatprep.subr.mxu0 %v4008
          %4128 = vmatpush1.msra.mxu0 %v4007
          %4129 = vmatprep.subr.mxu0 %v4010
          %4130 = vmatpush1.msra.mxu0 %v4009
          %4131 = vmatprep.subr.mxu0 %v4012
          %4132 = vmatpush1.msra.mxu0 %v4011
          %4133 = vmatprep.mubr.f32.mxu0 %v3686
          %4134 = vmatmul.mubr.f32.gmra.mrb[0].mxu0 %v3685
          %v4135 = vpop.f32.mrb[0].mxu0
          %v4136 = vadd.f32 0.0, %v4135
          %v4137 = vpop.f32.mrb[0].mxu0
          %v4138 = vadd.f32 0.0, %v4137
          %4139 = vmatprep.mubr.f32.mxu0 %v3689
          %4140 = vmatmul.mubr.f32.gmra.mrb[0].mxu0 %v3688
          %v4141 = vpop.f32.mrb[0].mxu0
          %v4142 = vadd.f32 0.0, %v4141
          %v4143 = vpop.f32.mrb[0].mxu0
          %v4144 = vadd.f32 0.0, %v4143
          %4145 = vmatprep.mubr.f32.mxu0 %v3692
          %4146 = vmatmul.mubr.f32.gmra.mrb[0].mxu0 %v3691
          %v4147 = vpop.f32.mrb[0].mxu0
          %v4148 = vadd.f32 0.0, %v4147
          %v4149 = vpop.f32.mrb[0].mxu0
          %v4150 = vadd.f32 0.0, %v4149
          %4151 = vmatprep.mubr.f32.mxu0 %v3695
          %4152 = vmatmul.mubr.f32.gmra.mrb[0].mxu0 %v3694
          %v4153 = vpop.f32.mrb[0].mxu0
          %v4154 = vadd.f32 0.0, %v4153
          %v4155 = vpop.f32.mrb[0].mxu0
          %v4156 = vadd.f32 0.0, %v4155
          %4157 = vdwg.mxu0
          %4158 = vmatprep.subr.mxu0 %v4050
          %4159 = vmatpush1.msra.mxu0 %v4049
          %4160 = vmatprep.subr.mxu0 %v4052
          %4161 = vmatpush1.msra.mxu0 %v4051
          %4162 = vmatprep.subr.mxu0 %v4054
          %4163 = vmatpush1.msra.mxu0 %v4053
          %4164 = vmatprep.subr.mxu0 %v4056
          %4165 = vmatpush1.msra.mxu0 %v4055
          %4166 = vmatprep.subr.mxu0 0.0
          %4167 = vmatpush1.msra.mxu0 0.0
          %4168 = vmatprep.subr.mxu0 0.0
          %4169 = vmatpush1.msra.mxu0 0.0
          %4170 = vmatprep.subr.mxu0 0.0
          %4171 = vmatpush1.msra.mxu0 0.0
          %4172 = vmatprep.subr.mxu0 0.0
          %4173 = vmatpush1.msra.mxu0 0.0
          %4174 = vmatprep.subr.mxu0 0.0
          %4175 = vmatpush1.msra.mxu0 0.0
          %4176 = vmatprep.subr.mxu0 0.0
          %4177 = vmatpush1.msra.mxu0 0.0
          %4178 = vmatprep.subr.mxu0 0.0
          %4179 = vmatpush1.msra.mxu0 0.0
          %4180 = vmatprep.subr.mxu0 0.0
          %4181 = vmatpush1.msra.mxu0 0.0
          %4182 = vmatprep.subr.mxu0 0.0
          %4183 = vmatpush1.msra.mxu0 0.0
          %4184 = vmatprep.subr.mxu0 0.0
          %4185 = vmatpush1.msra.mxu0 0.0
          %4186 = vmatprep.subr.mxu0 0.0
          %4187 = vmatpush1.msra.mxu0 0.0
          %4188 = vmatprep.subr.mxu0 0.0
          %4189 = vmatpush1.msra.mxu0 0.0
          %4190 = vmatprep.subr.mxu0 0.0
          %4191 = vmatpush1.msra.mxu0 0.0
          %4192 = vmatprep.subr.mxu0 0.0
          %4193 = vmatpush1.msra.mxu0 0.0
          %4194 = vmatprep.subr.mxu0 0.0
          %4195 = vmatpush1.msra.mxu0 0.0
          %4196 = vmatprep.subr.mxu0 0.0
          %4197 = vmatpush1.msra.mxu0 0.0
          %4198 = vmatprep.subr.mxu0 0.0
          %4199 = vmatpush1.msra.mxu0 0.0
          %4200 = vmatprep.subr.mxu0 0.0
          %4201 = vmatpush1.msra.mxu0 0.0
          %4202 = vmatprep.subr.mxu0 0.0
          %4203 = vmatpush1.msra.mxu0 0.0
          %4204 = vmatprep.subr.mxu0 0.0
          %4205 = vmatpush1.msra.mxu0 0.0
          %4206 = vmatprep.subr.mxu0 0.0
          %4207 = vmatpush1.msra.mxu0 0.0
          %4208 = vmatprep.subr.mxu0 0.0
          %4209 = vmatpush1.msra.mxu0 0.0
          %4210 = vmatprep.subr.mxu0 0.0
          %4211 = vmatpush1.msra.mxu0 0.0
          %4212 = vmatprep.subr.mxu0 0.0
          %4213 = vmatpush1.msra.mxu0 0.0
          %4214 = vmatprep.subr.mxu0 0.0
          %4215 = vmatpush1.msra.mxu0 0.0
          %4216 = vmatprep.subr.mxu0 0.0
          %4217 = vmatpush1.msra.mxu0 0.0
          %4218 = vmatprep.subr.mxu0 0.0
          %4219 = vmatpush1.msra.mxu0 0.0
          %4220 = vmatprep.subr.mxu0 0.0
          %4221 = vmatpush1.msra.mxu0 0.0
          %4222 = vmatprep.mubr.f32.mxu0 0.0
          %4223 = vmatmul.mubr.f32.gmra.mrb[0].mxu0 %v4058
          %v4224 = vpop.f32.mrb[0].mxu0
          %v4225 = vadd.f32 %v4136, %v4224
          %v4226 = vpop.f32.mrb[0].mxu0
          %v4227 = vadd.f32 %v4138, %v4226
          %4228 = vmatprep.mubr.f32.mxu0 0.0
          %4229 = vmatmul.mubr.f32.gmra.mrb[0].mxu0 %v4061
          %v4230 = vpop.f32.mrb[0].mxu0
          %v4231 = vadd.f32 %v4142, %v4230
          %v4232 = vpop.f32.mrb[0].mxu0
          %v4233 = vadd.f32 %v4144, %v4232
          %4234 = vmatprep.mubr.f32.mxu0 0.0
          %4235 = vmatmul.mubr.f32.gmra.mrb[0].mxu0 %v4064
          %v4236 = vpop.f32.mrb[0].mxu0
          %v4237 = vadd.f32 %v4148, %v4236
          %v4238 = vpop.f32.mrb[0].mxu0
          %v4239 = vadd.f32 %v4150, %v4238
          %4240 = vmatprep.mubr.f32.mxu0 0.0
          %4241 = vmatmul.mubr.f32.gmra.mrb[0].mxu0 %v4067
          %v4242 = vpop.f32.mrb[0].mxu0
          %v4243 = vadd.f32 %v4154, %v4242
          %v4244 = vpop.f32.mrb[0].mxu0
          %v4245 = vadd.f32 %v4156, %v4244
          %4246 = vdwg.mxu0
          %v4247 = vadd.f32 %v4225, %v4227
          %4248 = vadd.xlane.f32.xlu0 %v4247
          %v4249 = vpop.xlane.xlu0 %4248
          %v4250 = vadd.f32 %v4231, %v4233
          %4251 = vadd.xlane.f32.xlu0 %v4250
          %v4252 = vpop.xlane.xlu0 %4251
          %v4253 = vadd.f32 %v4237, %v4239
          %4254 = vadd.xlane.f32.xlu0 %v4253
          %v4255 = vpop.xlane.xlu0 %4254
          %v4256 = vadd.f32 %v4243, %v4245
          %4257 = vadd.xlane.f32.xlu0 %v4256
          %v4258 = vpop.xlane.xlu0 %4257
          %v4259 = vrcp.pop 256.0
          %v4260 = vmul.f32 %v4249, %v4259
          %v4261 = vmul.f32 %v4252, %v4259
          %v4262 = vmul.f32 %v4255, %v4259
          %v4263 = vmul.f32 %v4258, %v4259
          %s4264 = smul.u32 %s2997, 32
          %s4265 = scalar_lea.vmem [#allocation13], %s4264
          %v4266 = vld [vmem:[%s4265] sm:$0xff]
          %v4267 = vld [vmem:[%s4265 + $0x8] sm:$0xff]
          %v4268 = vld [vmem:[%s4265 + $0x10] sm:$0xff]
          %v4269 = vld [vmem:[%s4265 + $0x18] sm:$0xff]
          %v4270 = vmul.f32 %v4266, %v4260
          %v4271 = vmul.f32 %v4267, %v4261
          %v4272 = vmul.f32 %v4268, %v4262
          %v4273 = vmul.f32 %v4269, %v4263
          %vm4274 = vcmask 64512
          %v4275 = vsel %vm4274, %v4270, 0.0
          %v4276 = vsel %vm4274, %v4271, 0.0
          %v4277 = vadd.f32 %v4275, %v4276
          %v4278 = vsel %vm4274, %v4272, 0.0
          %v4279 = vadd.f32 %v4277, %v4278
          %v4280 = vsel %vm4274, %v4273, 0.0
          %v4281 = vadd.f32 %v4279, %v4280
          %v4282 = vrot.slane %v4281, 4
          %v4283 = vadd.f32 %v4281, %v4282
          %v4284 = vrot.slane %v4283, 2
          %v4285 = vadd.f32 %v4283, %v4284
          %v4286 = vrot.slane %v4285, 1
          %v4287 = vadd.f32 %v4285, %v4286
          %v4288 = vmax.f32 %v4287, 0.0
          %s4289 = scalar_lea.vmem [#allocation14], %s4264
          %v4290 = vld [vmem:[%s4289] sm:$0xff]
          %v4291 = vld [vmem:[%s4289 + $0x8] sm:$0xff]
          %v4292 = vld [vmem:[%s4289 + $0x10] sm:$0xff]
          %v4293 = vld [vmem:[%s4289 + $0x18] sm:$0xff]
          %v4294 = vmul.f32 %v4290, %v4288
          %v4295 = vmul.f32 %v4291, %v4288
          %v4296 = vmul.f32 %v4292, %v4288
          %v4297 = vmul.f32 %v4293, %v4288
          %v4298 = vsel %vm4274, %v4294, 0.0
          %4299 = vadd.xlane.f32.xlu0 %v4298
          %v4300 = vpop.xlane.xlu0 %4299
          %v4301 = vsel %vm4274, %v4295, 0.0
          %4302 = vadd.xlane.f32.xlu0 %v4301
          %v4303 = vpop.xlane.xlu0 %4302
          %v4304 = vsel %vm4274, %v4296, 0.0
          %4305 = vadd.xlane.f32.xlu0 %v4304
          %v4306 = vpop.xlane.xlu0 %4305
          %v4307 = vsel %vm4274, %v4297, 0.0
          %4308 = vadd.xlane.f32.xlu0 %v4307
          %v4309 = vpop.xlane.xlu0 %4308
          %v4310 = vxor.u32 %v4300, 2147483648
          %v4311 = vxor.u32 %v4303, 2147483648
          %v4312 = vxor.u32 %v4306, 2147483648
          %v4313 = vxor.u32 %v4309, 2147483648
          %v4314 = vmul.f32 %v4310, 1.442695
          %v4315 = vpow.pop %v4314
          %v4316 = vmul.f32 %v4311, 1.442695
          %v4317 = vpow.pop %v4316
          %v4318 = vmul.f32 %v4312, 1.442695
          %v4319 = vpow.pop %v4318
          %v4320 = vmul.f32 %v4313, 1.442695
          %v4321 = vpow.pop %v4320
          %v4322 = vadd.f32 %v4315, 1.0
          %v4323 = vadd.f32 %v4317, 1.0
          %v4324 = vadd.f32 %v4319, 1.0
          %v4325 = vadd.f32 %v4321, 1.0
          %v4326 = vrcp.pop %v4322
          %v4327 = vmul.f32 1.0, %v4326
          %v4328 = vrcp.pop %v4323
          %v4329 = vmul.f32 1.0, %v4328
          %v4330 = vrcp.pop %v4324
          %v4331 = vmul.f32 1.0, %v4330
          %v4332 = vrcp.pop %v4325
          %v4333 = vmul.f32 1.0, %v4332
          %v4334 = vmul.f32 %v4225, %v4327
          %v4335 = vmul.f32 %v4227, %v4327
          %v4336 = vmul.f32 %v4231, %v4329
          %v4337 = vmul.f32 %v4233, %v4329
          %v4338 = vmul.f32 %v4237, %v4331
          %v4339 = vmul.f32 %v4239, %v4331
          %v4340 = vmul.f32 %v4243, %v4333
          %v4341 = vmul.f32 %v4245, %v4333
          %v4342 = vadd.f32 %v4334, %v2989
          %v4343 = vadd.f32 %v4335, %v2990
          %v4344 = vadd.f32 %v4336, %v2991
          %v4345 = vadd.f32 %v4337, %v2992
          %v4346 = vadd.f32 %v4338, %v2993
          %v4347 = vadd.f32 %v4339, %v2994
          %v4348 = vadd.f32 %v4340, %v2995
          %v4349 = vadd.f32 %v4341, %v2996
        $region152: #{tfr_forward.1} parent=79 // loop_footer
          %s2988 = sadd.s32 1, %s2984
        $region153: #{tfr_forward.1} parent=79 // loop_footer_branch
          %2983 = sbr.rel target = $region149
        $region154: #{tfr_forward.1} parent=79 // loop_exit
          _
        %s4350 = scalar_lea.vmem [#allocation16], 96
        %v4351 = vld [vmem:[%s4350] sm:$0xff]
        %v4352 = vld [vmem:[%s4350 + $0x8] sm:$0xff]
        %v4353 = vld [vmem:[%s4350 + $0x10] sm:$0xff]
        %v4354 = vld [vmem:[%s4350 + $0x18] sm:$0xff]
        %v4355 = vld [vmem:[%s4350 + $0x20] sm:$0xff]
        %v4356 = vld [vmem:[%s4350 + $0x28] sm:$0xff]
        %v4357 = vld [vmem:[%s4350 + $0x30] sm:$0xff]
        %v4358 = vld [vmem:[%s4350 + $0x38] sm:$0xff]
        %v4359 = vld [vmem:[%s4350 + $0x40] sm:$0xff]
        %v4360 = vld [vmem:[%s4350 + $0x48] sm:$0xff]
        %v4361 = vld [vmem:[%s4350 + $0x50] sm:$0xff]
        %v4362 = vld [vmem:[%s4350 + $0x58] sm:$0xff]
        %4367 = vrot.lane.b32.xlu0 %v2990, 17
        %v4368 = vpop.permute.xlu0 %4367
        %4369 = vrot.lane.b32.xlu0 %v2992, 17
        %v4370 = vpop.permute.xlu0 %4369
        %4371 = vrot.lane.b32.xlu0 %v2994, 17
        %v4372 = vpop.permute.xlu0 %4371
        %4373 = vrot.lane.b32.xlu0 %v2996, 17
        %v4374 = vpop.permute.xlu0 %4373
        %4383 = vrot.lane.b32.xlu0 %v2989, 17
        %v4384 = vpop.permute.xlu0 %4383
        %4385 = vrot.lane.b32.xlu0 %v2991, 17
        %v4386 = vpop.permute.xlu0 %4385
        %4387 = vrot.lane.b32.xlu0 %v2993, 17
        %v4388 = vpop.permute.xlu0 %4387
        %4389 = vrot.lane.b32.xlu0 %v2995, 17
        %v4390 = vpop.permute.xlu0 %4389
        %v4391 = vsel %vm2219, %v4384, %v4368
        %v4392 = vsel %vm2219, %v4386, %v4370
        %v4393 = vsel %vm2219, %v4388, %v4372
        %v4394 = vsel %vm2219, %v4390, %v4374
        %v4403 = vsel %vm2219, %v4368, %v4384
        %v4404 = vsel %vm2219, %v4370, %v4386
        %v4405 = vsel %vm2219, %v4372, %v4388
        %v4406 = vsel %vm2219, %v4374, %v4390
        %v4407 = vmul.f32 %v4403, %v2241
        %v4408 = vmul.f32 %v4391, %v2245
        %v4409 = vmul.f32 %v4404, %v2241
        %v4410 = vmul.f32 %v4392, %v2245
        %v4411 = vmul.f32 %v4405, %v2241
        %v4412 = vmul.f32 %v4393, %v2245
        %v4413 = vmul.f32 %v4406, %v2241
        %v4414 = vmul.f32 %v4394, %v2245
        %4415 = vrot.lane.b32.xlu0 %v2990, 16
        %v4416 = vpop.permute.xlu0 %4415
        %4417 = vrot.lane.b32.xlu0 %v2992, 16
        %v4418 = vpop.permute.xlu0 %4417
        %4419 = vrot.lane.b32.xlu0 %v2994, 16
        %v4420 = vpop.permute.xlu0 %4419
        %4421 = vrot.lane.b32.xlu0 %v2996, 16
        %v4422 = vpop.permute.xlu0 %4421
        %4427 = vrot.lane.b32.xlu0 %v2989, 16
        %v4428 = vpop.permute.xlu0 %4427
        %4429 = vrot.lane.b32.xlu0 %v2991, 16
        %v4430 = vpop.permute.xlu0 %4429
        %4431 = vrot.lane.b32.xlu0 %v2993, 16
        %v4432 = vpop.permute.xlu0 %4431
        %4433 = vrot.lane.b32.xlu0 %v2995, 16
        %v4434 = vpop.permute.xlu0 %4433
        %v4435 = vsel %vm2276, %v4428, %v4416
        %v4436 = vsel %vm2276, %v4430, %v4418
        %v4437 = vsel %vm2276, %v4432, %v4420
        %v4438 = vsel %vm2276, %v4434, %v4422
        %v4447 = vsel %vm2276, %v4416, %v4428
        %v4448 = vsel %vm2276, %v4418, %v4430
        %v4449 = vsel %vm2276, %v4420, %v4432
        %v4450 = vsel %vm2276, %v4422, %v4434
        %v4451 = vmul.f32 %v4447, %v2299
        %v4452 = vmul.f32 %v4435, %v2303
        %v4453 = vmul.f32 %v4448, %v2299
        %v4454 = vmul.f32 %v4436, %v2303
        %v4455 = vmul.f32 %v4449, %v2299
        %v4456 = vmul.f32 %v4437, %v2303
        %v4457 = vmul.f32 %v4450, %v2299
        %v4458 = vmul.f32 %v4438, %v2303
        %4459 = vrot.lane.b32.xlu0 %v2990, 15
        %v4460 = vpop.permute.xlu0 %4459
        %4461 = vrot.lane.b32.xlu0 %v2992, 15
        %v4462 = vpop.permute.xlu0 %4461
        %4463 = vrot.lane.b32.xlu0 %v2994, 15
        %v4464 = vpop.permute.xlu0 %4463
        %4465 = vrot.lane.b32.xlu0 %v2996, 15
        %v4466 = vpop.permute.xlu0 %4465
        %4471 = vrot.lane.b32.xlu0 %v2989, 15
        %v4472 = vpop.permute.xlu0 %4471
        %4473 = vrot.lane.b32.xlu0 %v2991, 15
        %v4474 = vpop.permute.xlu0 %4473
        %4475 = vrot.lane.b32.xlu0 %v2993, 15
        %v4476 = vpop.permute.xlu0 %4475
        %4477 = vrot.lane.b32.xlu0 %v2995, 15
        %v4478 = vpop.permute.xlu0 %4477
        %v4479 = vsel %vm2334, %v4472, %v4460
        %v4480 = vsel %vm2334, %v4474, %v4462
        %v4481 = vsel %vm2334, %v4476, %v4464
        %v4482 = vsel %vm2334, %v4478, %v4466
        %v4491 = vsel %vm2334, %v4460, %v4472
        %v4492 = vsel %vm2334, %v4462, %v4474
        %v4493 = vsel %vm2334, %v4464, %v4476
        %v4494 = vsel %vm2334, %v4466, %v4478
        %v4495 = vmul.f32 %v4491, %v2357
        %v4496 = vmul.f32 %v4479, %v2361
        %v4497 = vmul.f32 %v4492, %v2357
        %v4498 = vmul.f32 %v4480, %v2361
        %v4499 = vmul.f32 %v4493, %v2357
        %v4500 = vmul.f32 %v4481, %v2361
        %v4501 = vmul.f32 %v4494, %v2357
        %v4502 = vmul.f32 %v4482, %v2361
        %4503 = vrot.lane.b32.xlu0 %v2990, 1
        %v4504 = vpop.permute.xlu0 %4503
        %4505 = vrot.lane.b32.xlu0 %v2992, 1
        %v4506 = vpop.permute.xlu0 %4505
        %4507 = vrot.lane.b32.xlu0 %v2994, 1
        %v4508 = vpop.permute.xlu0 %4507
        %4509 = vrot.lane.b32.xlu0 %v2996, 1
        %v4510 = vpop.permute.xlu0 %4509
        %4515 = vrot.lane.b32.xlu0 %v2989, 1
        %v4516 = vpop.permute.xlu0 %4515
        %4517 = vrot.lane.b32.xlu0 %v2991, 1
        %v4518 = vpop.permute.xlu0 %4517
        %4519 = vrot.lane.b32.xlu0 %v2993, 1
        %v4520 = vpop.permute.xlu0 %4519
        %4521 = vrot.lane.b32.xlu0 %v2995, 1
        %v4522 = vpop.permute.xlu0 %4521
        %v4523 = vsel %vm2392, %v4516, %v4504
        %v4524 = vsel %vm2392, %v4518, %v4506
        %v4525 = vsel %vm2392, %v4520, %v4508
        %v4526 = vsel %vm2392, %v4522, %v4510
        %v4535 = vsel %vm2392, %v4504, %v4516
        %v4536 = vsel %vm2392, %v4506, %v4518
        %v4537 = vsel %vm2392, %v4508, %v4520
        %v4538 = vsel %vm2392, %v4510, %v4522
        %v4539 = vmul.f32 %v4535, %v2415
        %v4540 = vmul.f32 %v4523, %v2419
        %v4541 = vmul.f32 %v4536, %v2415
        %v4542 = vmul.f32 %v4524, %v2419
        %v4543 = vmul.f32 %v4537, %v2415
        %v4544 = vmul.f32 %v4525, %v2419
        %v4545 = vmul.f32 %v4538, %v2415
        %v4546 = vmul.f32 %v4526, %v2419
        %4547 = vrot.lane.b32.xlu0 %v2989, 127
        %v4548 = vpop.permute.xlu0 %4547
        %4549 = vrot.lane.b32.xlu0 %v2990, 127
        %v4550 = vpop.permute.xlu0 %4549
        %4551 = vrot.lane.b32.xlu0 %v2991, 127
        %v4552 = vpop.permute.xlu0 %4551
        %4553 = vrot.lane.b32.xlu0 %v2992, 127
        %v4554 = vpop.permute.xlu0 %4553
        %4555 = vrot.lane.b32.xlu0 %v2993, 127
        %v4556 = vpop.permute.xlu0 %4555
        %4557 = vrot.lane.b32.xlu0 %v2994, 127
        %v4558 = vpop.permute.xlu0 %4557
        %4559 = vrot.lane.b32.xlu0 %v2995, 127
        %v4560 = vpop.permute.xlu0 %4559
        %4561 = vrot.lane.b32.xlu0 %v2996, 127
        %v4562 = vpop.permute.xlu0 %4561
        %v4563 = vsel %vm2446, %v4548, %v4550
        %v4564 = vsel %vm2446, %v4552, %v4554
        %v4565 = vsel %vm2446, %v4556, %v4558
        %v4566 = vsel %vm2446, %v4560, %v4562
        %v4579 = vsel %vm2446, %v4550, %v4548
        %v4580 = vsel %vm2446, %v4554, %v4552
        %v4581 = vsel %vm2446, %v4558, %v4556
        %v4582 = vsel %vm2446, %v4562, %v4560
        %v4583 = vmul.f32 %v4563, %v2473
        %v4584 = vmul.f32 %v4579, %v2477
        %v4585 = vmul.f32 %v4564, %v2473
        %v4586 = vmul.f32 %v4580, %v2477
        %v4587 = vmul.f32 %v4565, %v2473
        %v4588 = vmul.f32 %v4581, %v2477
        %v4589 = vmul.f32 %v4566, %v2473
        %v4590 = vmul.f32 %v4582, %v2477
        %4591 = vrot.lane.b32.xlu0 %v2989, 113
        %v4592 = vpop.permute.xlu0 %4591
        %4593 = vrot.lane.b32.xlu0 %v2990, 113
        %v4594 = vpop.permute.xlu0 %4593
        %4595 = vrot.lane.b32.xlu0 %v2991, 113
        %v4596 = vpop.permute.xlu0 %4595
        %4597 = vrot.lane.b32.xlu0 %v2992, 113
        %v4598 = vpop.permute.xlu0 %4597
        %4599 = vrot.lane.b32.xlu0 %v2993, 113
        %v4600 = vpop.permute.xlu0 %4599
        %4601 = vrot.lane.b32.xlu0 %v2994, 113
        %v4602 = vpop.permute.xlu0 %4601
        %4603 = vrot.lane.b32.xlu0 %v2995, 113
        %v4604 = vpop.permute.xlu0 %4603
        %4605 = vrot.lane.b32.xlu0 %v2996, 113
        %v4606 = vpop.permute.xlu0 %4605
        %v4607 = vsel %vm2504, %v4592, %v4594
        %v4608 = vsel %vm2504, %v4596, %v4598
        %v4609 = vsel %vm2504, %v4600, %v4602
        %v4610 = vsel %vm2504, %v4604, %v4606
        %v4623 = vsel %vm2504, %v4594, %v4592
        %v4624 = vsel %vm2504, %v4598, %v4596
        %v4625 = vsel %vm2504, %v4602, %v4600
        %v4626 = vsel %vm2504, %v4606, %v4604
        %v4627 = vmul.f32 %v4607, %v2531
        %v4628 = vmul.f32 %v4623, %v2535
        %v4629 = vmul.f32 %v4608, %v2531
        %v4630 = vmul.f32 %v4624, %v2535
        %v4631 = vmul.f32 %v4609, %v2531
        %v4632 = vmul.f32 %v4625, %v2535
        %v4633 = vmul.f32 %v4610, %v2531
        %v4634 = vmul.f32 %v4626, %v2535
        %4635 = vrot.lane.b32.xlu0 %v2989, 112
        %v4636 = vpop.permute.xlu0 %4635
        %4637 = vrot.lane.b32.xlu0 %v2990, 112
        %v4638 = vpop.permute.xlu0 %4637
        %4639 = vrot.lane.b32.xlu0 %v2991, 112
        %v4640 = vpop.permute.xlu0 %4639
        %4641 = vrot.lane.b32.xlu0 %v2992, 112
        %v4642 = vpop.permute.xlu0 %4641
        %4643 = vrot.lane.b32.xlu0 %v2993, 112
        %v4644 = vpop.permute.xlu0 %4643
        %4645 = vrot.lane.b32.xlu0 %v2994, 112
        %v4646 = vpop.permute.xlu0 %4645
        %4647 = vrot.lane.b32.xlu0 %v2995, 112
        %v4648 = vpop.permute.xlu0 %4647
        %4649 = vrot.lane.b32.xlu0 %v2996, 112
        %v4650 = vpop.permute.xlu0 %4649
        %v4651 = vsel %vm2562, %v4636, %v4638
        %v4652 = vsel %vm2562, %v4640, %v4642
        %v4653 = vsel %vm2562, %v4644, %v4646
        %v4654 = vsel %vm2562, %v4648, %v4650
        %v4667 = vsel %vm2562, %v4638, %v4636
        %v4668 = vsel %vm2562, %v4642, %v4640
        %v4669 = vsel %vm2562, %v4646, %v4644
        %v4670 = vsel %vm2562, %v4650, %v4648
        %v4671 = vmul.f32 %v4651, %v2589
        %v4672 = vmul.f32 %v4667, %v2593
        %v4673 = vmul.f32 %v4652, %v2589
        %v4674 = vmul.f32 %v4668, %v2593
        %v4675 = vmul.f32 %v4653, %v2589
        %v4676 = vmul.f32 %v4669, %v2593
        %v4677 = vmul.f32 %v4654, %v2589
        %v4678 = vmul.f32 %v4670, %v2593
        %4679 = vrot.lane.b32.xlu0 %v2989, 111
        %v4680 = vpop.permute.xlu0 %4679
        %4681 = vrot.lane.b32.xlu0 %v2990, 111
        %v4682 = vpop.permute.xlu0 %4681
        %4683 = vrot.lane.b32.xlu0 %v2991, 111
        %v4684 = vpop.permute.xlu0 %4683
        %4685 = vrot.lane.b32.xlu0 %v2992, 111
        %v4686 = vpop.permute.xlu0 %4685
        %4687 = vrot.lane.b32.xlu0 %v2993, 111
        %v4688 = vpop.permute.xlu0 %4687
        %4689 = vrot.lane.b32.xlu0 %v2994, 111
        %v4690 = vpop.permute.xlu0 %4689
        %4691 = vrot.lane.b32.xlu0 %v2995, 111
        %v4692 = vpop.permute.xlu0 %4691
        %4693 = vrot.lane.b32.xlu0 %v2996, 111
        %v4694 = vpop.permute.xlu0 %4693
        %v4695 = vsel %vm2620, %v4680, %v4682
        %v4696 = vsel %vm2620, %v4684, %v4686
        %v4697 = vsel %vm2620, %v4688, %v4690
        %v4698 = vsel %vm2620, %v4692, %v4694
        %v4711 = vsel %vm2620, %v4682, %v4680
        %v4712 = vsel %vm2620, %v4686, %v4684
        %v4713 = vsel %vm2620, %v4690, %v4688
        %v4714 = vsel %vm2620, %v4694, %v4692
        %v4715 = vmul.f32 %v4695, %v2647
        %v4716 = vmul.f32 %v4711, %v2651
        %v4717 = vmul.f32 %v4696, %v2647
        %v4718 = vmul.f32 %v4712, %v2651
        %v4719 = vmul.f32 %v4697, %v2647
        %v4720 = vmul.f32 %v4713, %v2651
        %v4721 = vmul.f32 %v4698, %v2647
        %v4722 = vmul.f32 %v4714, %v2651
        %v4724 = vsel %vm2662, %v4353, 0
        %v4727 = vsel %vm2662, %v4356, 0
        %v4730 = vsel %vm2662, %v4359, 0
        %v4733 = vsel %vm2662, %v4362, 0
        %4735 = vmatprep.subr.mxu0 %v4408
        %4736 = vmatpush1.msra.mxu0 %v4407
        %4737 = vmatprep.subr.mxu0 %v4410
        %4738 = vmatpush1.msra.mxu0 %v4409
        %4739 = vmatprep.subr.mxu0 %v4412
        %4740 = vmatpush1.msra.mxu0 %v4411
        %4741 = vmatprep.subr.mxu0 %v4414
        %4742 = vmatpush1.msra.mxu0 %v4413
        %4743 = vmatprep.subr.mxu0 %v4452
        %4744 = vmatpush1.msra.mxu0 %v4451
        %4745 = vmatprep.subr.mxu0 %v4454
        %4746 = vmatpush1.msra.mxu0 %v4453
        %4747 = vmatprep.subr.mxu0 %v4456
        %4748 = vmatpush1.msra.mxu0 %v4455
        %4749 = vmatprep.subr.mxu0 %v4458
        %4750 = vmatpush1.msra.mxu0 %v4457
        %4751 = vmatprep.subr.mxu0 %v4496
        %4752 = vmatpush1.msra.mxu0 %v4495
        %4753 = vmatprep.subr.mxu0 %v4498
        %4754 = vmatpush1.msra.mxu0 %v4497
        %4755 = vmatprep.subr.mxu0 %v4500
        %4756 = vmatpush1.msra.mxu0 %v4499
        %4757 = vmatprep.subr.mxu0 %v4502
        %4758 = vmatpush1.msra.mxu0 %v4501
        %4759 = vmatprep.subr.mxu0 %v4540
        %4760 = vmatpush1.msra.mxu0 %v4539
        %4761 = vmatprep.subr.mxu0 %v4542
        %4762 = vmatpush1.msra.mxu0 %v4541
        %4763 = vmatprep.subr.mxu0 %v4544
        %4764 = vmatpush1.msra.mxu0 %v4543
        %4765 = vmatprep.subr.mxu0 %v4546
        %4766 = vmatpush1.msra.mxu0 %v4545
        %4767 = vmatprep.subr.mxu0 %v2990
        %4768 = vmatpush1.msra.mxu0 %v2989
        %4769 = vmatprep.subr.mxu0 %v2992
        %4770 = vmatpush1.msra.mxu0 %v2991
        %4771 = vmatprep.subr.mxu0 %v2994
        %4772 = vmatpush1.msra.mxu0 %v2993
        %4773 = vmatprep.subr.mxu0 %v2996
        %4774 = vmatpush1.msra.mxu0 %v2995
        %4775 = vmatprep.subr.mxu0 %v4584
        %4776 = vmatpush1.msra.mxu0 %v4583
        %4777 = vmatprep.subr.mxu0 %v4586
        %4778 = vmatpush1.msra.mxu0 %v4585
        %4779 = vmatprep.subr.mxu0 %v4588
        %4780 = vmatpush1.msra.mxu0 %v4587
        %4781 = vmatprep.subr.mxu0 %v4590
        %4782 = vmatpush1.msra.mxu0 %v4589
        %4783 = vmatprep.subr.mxu0 %v4628
        %4784 = vmatpush1.msra.mxu0 %v4627
        %4785 = vmatprep.subr.mxu0 %v4630
        %4786 = vmatpush1.msra.mxu0 %v4629
        %4787 = vmatprep.subr.mxu0 %v4632
        %4788 = vmatpush1.msra.mxu0 %v4631
        %4789 = vmatprep.subr.mxu0 %v4634
        %4790 = vmatpush1.msra.mxu0 %v4633
        %4791 = vmatprep.subr.mxu0 %v4672
        %4792 = vmatpush1.msra.mxu0 %v4671
        %4793 = vmatprep.subr.mxu0 %v4674
        %4794 = vmatpush1.msra.mxu0 %v4673
        %4795 = vmatprep.subr.mxu0 %v4676
        %4796 = vmatpush1.msra.mxu0 %v4675
        %4797 = vmatprep.subr.mxu0 %v4678
        %4798 = vmatpush1.msra.mxu0 %v4677
        %4799 = vmatprep.mubr.f32.mxu0 %v4352
        %4800 = vmatmul.mubr.f32.gmra.mrb[0].mxu0 %v4351
        %v4801 = vpop.f32.mrb[0].mxu0
        %v4802 = vadd.f32 %v2975, %v4801
        %v4803 = vpop.f32.mrb[0].mxu0
        %v4804 = vadd.f32 %v2976, %v4803
        %4805 = vmatprep.mubr.f32.mxu0 %v4355
        %4806 = vmatmul.mubr.f32.gmra.mrb[0].mxu0 %v4354
        %v4807 = vpop.f32.mrb[0].mxu0
        %v4808 = vadd.f32 %v2977, %v4807
        %v4809 = vpop.f32.mrb[0].mxu0
        %v4810 = vadd.f32 %v2978, %v4809
        %4811 = vmatprep.mubr.f32.mxu0 %v4358
        %4812 = vmatmul.mubr.f32.gmra.mrb[0].mxu0 %v4357
        %v4813 = vpop.f32.mrb[0].mxu0
        %v4814 = vadd.f32 %v2979, %v4813
        %v4815 = vpop.f32.mrb[0].mxu0
        %v4816 = vadd.f32 %v2980, %v4815
        %4817 = vmatprep.mubr.f32.mxu0 %v4361
        %4818 = vmatmul.mubr.f32.gmra.mrb[0].mxu0 %v4360
        %v4819 = vpop.f32.mrb[0].mxu0
        %v4820 = vadd.f32 %v2981, %v4819
        %v4821 = vpop.f32.mrb[0].mxu0
        %v4822 = vadd.f32 %v2982, %v4821
        %4823 = vdwg.mxu0
        %4824 = vmatprep.subr.mxu0 %v4716
        %4825 = vmatpush1.msra.mxu0 %v4715
        %4826 = vmatprep.subr.mxu0 %v4718
        %4827 = vmatpush1.msra.mxu0 %v4717
        %4828 = vmatprep.subr.mxu0 %v4720
        %4829 = vmatpush1.msra.mxu0 %v4719
        %4830 = vmatprep.subr.mxu0 %v4722
        %4831 = vmatpush1.msra.mxu0 %v4721
        %4832 = vmatprep.subr.mxu0 0.0
        %4833 = vmatpush1.msra.mxu0 0.0
        %4834 = vmatprep.subr.mxu0 0.0
        %4835 = vmatpush1.msra.mxu0 0.0
        %4836 = vmatprep.subr.mxu0 0.0
        %4837 = vmatpush1.msra.mxu0 0.0
        %4838 = vmatprep.subr.mxu0 0.0
        %4839 = vmatpush1.msra.mxu0 0.0
        %4840 = vmatprep.subr.mxu0 0.0
        %4841 = vmatpush1.msra.mxu0 0.0
        %4842 = vmatprep.subr.mxu0 0.0
        %4843 = vmatpush1.msra.mxu0 0.0
        %4844 = vmatprep.subr.mxu0 0.0
        %4845 = vmatpush1.msra.mxu0 0.0
        %4846 = vmatprep.subr.mxu0 0.0
        %4847 = vmatpush1.msra.mxu0 0.0
        %4848 = vmatprep.subr.mxu0 0.0
        %4849 = vmatpush1.msra.mxu0 0.0
        %4850 = vmatprep.subr.mxu0 0.0
        %4851 = vmatpush1.msra.mxu0 0.0
        %4852 = vmatprep.subr.mxu0 0.0
        %4853 = vmatpush1.msra.mxu0 0.0
        %4854 = vmatprep.subr.mxu0 0.0
        %4855 = vmatpush1.msra.mxu0 0.0
        %4856 = vmatprep.subr.mxu0 0.0
        %4857 = vmatpush1.msra.mxu0 0.0
        %4858 = vmatprep.subr.mxu0 0.0
        %4859 = vmatpush1.msra.mxu0 0.0
        %4860 = vmatprep.subr.mxu0 0.0
        %4861 = vmatpush1.msra.mxu0 0.0
        %4862 = vmatprep.subr.mxu0 0.0
        %4863 = vmatpush1.msra.mxu0 0.0
        %4864 = vmatprep.subr.mxu0 0.0
        %4865 = vmatpush1.msra.mxu0 0.0
        %4866 = vmatprep.subr.mxu0 0.0
        %4867 = vmatpush1.msra.mxu0 0.0
        %4868 = vmatprep.subr.mxu0 0.0
        %4869 = vmatpush1.msra.mxu0 0.0
        %4870 = vmatprep.subr.mxu0 0.0
        %4871 = vmatpush1.msra.mxu0 0.0
        %4872 = vmatprep.subr.mxu0 0.0
        %4873 = vmatpush1.msra.mxu0 0.0
        %4874 = vmatprep.subr.mxu0 0.0
        %4875 = vmatpush1.msra.mxu0 0.0
        %4876 = vmatprep.subr.mxu0 0.0
        %4877 = vmatpush1.msra.mxu0 0.0
        %4878 = vmatprep.subr.mxu0 0.0
        %4879 = vmatpush1.msra.mxu0 0.0
        %4880 = vmatprep.subr.mxu0 0.0
        %4881 = vmatpush1.msra.mxu0 0.0
        %4882 = vmatprep.subr.mxu0 0.0
        %4883 = vmatpush1.msra.mxu0 0.0
        %4884 = vmatprep.subr.mxu0 0.0
        %4885 = vmatpush1.msra.mxu0 0.0
        %4886 = vmatprep.subr.mxu0 0.0
        %4887 = vmatpush1.msra.mxu0 0.0
        %4888 = vmatprep.mubr.f32.mxu0 0.0
        %4889 = vmatmul.mubr.f32.gmra.mrb[0].mxu0 %v4724
        %v4890 = vpop.f32.mrb[0].mxu0
        %v4891 = vadd.f32 %v4802, %v4890
        %v4892 = vpop.f32.mrb[0].mxu0
        %v4893 = vadd.f32 %v4804, %v4892
        %4894 = vmatprep.mubr.f32.mxu0 0.0
        %4895 = vmatmul.mubr.f32.gmra.mrb[0].mxu0 %v4727
        %v4896 = vpop.f32.mrb[0].mxu0
        %v4897 = vadd.f32 %v4808, %v4896
        %v4898 = vpop.f32.mrb[0].mxu0
        %v4899 = vadd.f32 %v4810, %v4898
        %4900 = vmatprep.mubr.f32.mxu0 0.0
        %4901 = vmatmul.mubr.f32.gmra.mrb[0].mxu0 %v4730
        %v4902 = vpop.f32.mrb[0].mxu0
        %v4903 = vadd.f32 %v4814, %v4902
        %v4904 = vpop.f32.mrb[0].mxu0
        %v4905 = vadd.f32 %v4816, %v4904
        %4906 = vmatprep.mubr.f32.mxu0 0.0
        %4907 = vmatmul.mubr.f32.gmra.mrb[0].mxu0 %v4733
        %v4908 = vpop.f32.mrb[0].mxu0
        %v4909 = vadd.f32 %v4820, %v4908
        %v4910 = vpop.f32.mrb[0].mxu0
        %v4911 = vadd.f32 %v4822, %v4910
        %4912 = vdwg.mxu0
        %v4913 = vld [vmem:[#allocation19] sm:$0xff]
        %v4914 = vld [vmem:[#allocation19 + $0x8] sm:$0xff]
        %v4915 = vld [vmem:[#allocation19 + $0x10] sm:$0xff]
        %v4916 = vld [vmem:[#allocation19 + $0x18] sm:$0xff]
        %v4917 = vld [vmem:[%s674] sm:$0xff]
        %v4918 = vld [vmem:[%s674 + $0x8] sm:$0xff]
        %v4919 = vld [vmem:[%s674 + $0x10] sm:$0xff]
        %v4920 = vld [vmem:[%s674 + $0x18] sm:$0xff]
        %v4921 = vld [vmem:[%s674 + $0x20] sm:$0xff]
        %v4922 = vld [vmem:[%s674 + $0x28] sm:$0xff]
        %v4923 = vld [vmem:[%s674 + $0x30] sm:$0xff]
        %v4924 = vld [vmem:[%s674 + $0x38] sm:$0xff]
        %v4925 = vld [vmem:[%s674 + $0x40] sm:$0xff]
        %v4926 = vld [vmem:[%s674 + $0x48] sm:$0xff]
        %v4927 = vld [vmem:[%s674 + $0x50] sm:$0xff]
        %v4928 = vld [vmem:[%s674 + $0x58] sm:$0xff]
        %vm4929 = vcmask 785408
        %v4931 = vsel %vm4929, %v4913, 0
        %v4934 = vsel %vm4929, %v4914, 0
        %v4937 = vsel %vm4929, %v4915, 0
        %v4940 = vsel %vm4929, %v4916, 0
        %4942 = vmatprep.subr.mxu0 0.0
        %4943 = vmatpush1.msra.mxu0 %v4917
        %4944 = vmatprep.subr.mxu0 0.0
        %4945 = vmatpush1.msra.mxu0 %v4918
        %4946 = vmatprep.subr.mxu0 0.0
        %4947 = vmatpush1.msra.mxu0 %v4919
        %4948 = vmatprep.subr.mxu0 0.0
        %4949 = vmatpush1.msra.mxu0 %v4920
        %4950 = vmatprep.subr.mxu0 0.0
        %4951 = vmatpush1.msra.mxu0 %v4921
        %4952 = vmatprep.subr.mxu0 0.0
        %4953 = vmatpush1.msra.mxu0 %v4922
        %4954 = vmatprep.subr.mxu0 0.0
        %4955 = vmatpush1.msra.mxu0 %v4923
        %4956 = vmatprep.subr.mxu0 0.0
        %4957 = vmatpush1.msra.mxu0 %v4924
        %4958 = vmatprep.subr.mxu0 0.0
        %4959 = vmatpush1.msra.mxu0 %v4925
        %4960 = vmatprep.subr.mxu0 0.0
        %4961 = vmatpush1.msra.mxu0 %v4926
        %4962 = vmatprep.subr.mxu0 0.0
        %4963 = vmatpush1.msra.mxu0 %v4927
        %4964 = vmatprep.subr.mxu0 0.0
        %4965 = vmatpush1.msra.mxu0 %v4928
        %4966 = vmatprep.subr.mxu0 0.0
        %4967 = vmatpush1.msra.mxu0 0.0
        %4968 = vmatprep.subr.mxu0 0.0
        %4969 = vmatpush1.msra.mxu0 0.0
        %4970 = vmatprep.subr.mxu0 0.0
        %4971 = vmatpush1.msra.mxu0 0.0
        %4972 = vmatprep.subr.mxu0 0.0
        %4973 = vmatpush1.msra.mxu0 0.0
        %4974 = vmatprep.subr.mxu0 0.0
        %4975 = vmatpush1.msra.mxu0 0.0
        %4976 = vmatprep.subr.mxu0 0.0
        %4977 = vmatpush1.msra.mxu0 0.0
        %4978 = vmatprep.subr.mxu0 0.0
        %4979 = vmatpush1.msra.mxu0 0.0
        %4980 = vmatprep.subr.mxu0 0.0
        %4981 = vmatpush1.msra.mxu0 0.0
        %4982 = vmatprep.subr.mxu0 0.0
        %4983 = vmatpush1.msra.mxu0 0.0
        %4984 = vmatprep.subr.mxu0 0.0
        %4985 = vmatpush1.msra.mxu0 0.0
        %4986 = vmatprep.subr.mxu0 0.0
        %4987 = vmatpush1.msra.mxu0 0.0
        %4988 = vmatprep.subr.mxu0 0.0
        %4989 = vmatpush1.msra.mxu0 0.0
        %4990 = vmatprep.subr.mxu0 0.0
        %4991 = vmatpush1.msra.mxu0 0.0
        %4992 = vmatprep.subr.mxu0 0.0
        %4993 = vmatpush1.msra.mxu0 0.0
        %4994 = vmatprep.subr.mxu0 0.0
        %4995 = vmatpush1.msra.mxu0 0.0
        %4996 = vmatprep.subr.mxu0 0.0
        %4997 = vmatpush1.msra.mxu0 0.0
        %4998 = vmatprep.subr.mxu0 0.0
        %4999 = vmatpush1.msra.mxu0 0.0
        %5000 = vmatprep.subr.mxu0 0.0
        %5001 = vmatpush1.msra.mxu0 0.0
        %5002 = vmatprep.subr.mxu0 0.0
        %5003 = vmatpush1.msra.mxu0 0.0
        %5004 = vmatprep.subr.mxu0 0.0
        %5005 = vmatpush1.msra.mxu0 0.0
        %5006 = vmatprep.mubr.f32.mxu0 0.0
        %5007 = vmatmul.mubr.f32.gmra.mrb[0].mxu0 %v4931
        %v5008 = vpop.f32.mrb[0].mxu0
        %v5009 = vadd.f32 0.0, %v5008
        %v5010 = vpop.f32.mrb[0].mxu0
        %5011 = vmatprep.mubr.f32.mxu0 0.0
        %5012 = vmatmul.mubr.f32.gmra.mrb[0].mxu0 %v4934
        %v5013 = vpop.f32.mrb[0].mxu0
        %v5014 = vadd.f32 0.0, %v5013
        %v5015 = vpop.f32.mrb[0].mxu0
        %5016 = vmatprep.mubr.f32.mxu0 0.0
        %5017 = vmatmul.mubr.f32.gmra.mrb[0].mxu0 %v4937
        %v5018 = vpop.f32.mrb[0].mxu0
        %v5019 = vadd.f32 0.0, %v5018
        %v5020 = vpop.f32.mrb[0].mxu0
        %5021 = vmatprep.mubr.f32.mxu0 0.0
        %5022 = vmatmul.mubr.f32.gmra.mrb[0].mxu0 %v4940
        %v5023 = vpop.f32.mrb[0].mxu0
        %v5024 = vadd.f32 0.0, %v5023
        %v5025 = vpop.f32.mrb[0].mxu0
        %5026 = vdwg.mxu0
        %v5027 = vld [vmem:[#allocation22] sm:$0xff]
        %v5028 = vld [vmem:[#allocation22 + $0x8] sm:$0xff]
        %v5029 = vld [vmem:[#allocation22 + $0x10] sm:$0xff]
        %v5030 = vld [vmem:[#allocation22 + $0x18] sm:$0xff]
        %v5031 = vld [vmem:[#allocation22 + $0x20] sm:$0xff]
        %v5032 = vld [vmem:[#allocation22 + $0x28] sm:$0xff]
        %v5033 = vld [vmem:[#allocation22 + $0x30] sm:$0xff]
        %v5034 = vld [vmem:[#allocation22 + $0x38] sm:$0xff]
        %v5035 = vld [vmem:[#allocation22 + $0x40] sm:$0xff]
        %v5036 = vld [vmem:[#allocation22 + $0x48] sm:$0xff]
        %v5037 = vld [vmem:[#allocation22 + $0x50] sm:$0xff]
        %v5038 = vld [vmem:[#allocation22 + $0x58] sm:$0xff]
        %v5039 = vld [vmem:[#allocation22 + $0x60] sm:$0xff]
        %v5040 = vld [vmem:[#allocation22 + $0x68] sm:$0xff]
        %v5041 = vld [vmem:[#allocation22 + $0x70] sm:$0xff]
        %v5042 = vld [vmem:[#allocation22 + $0x78] sm:$0xff]
        %v5044 = vsel %vm2873, %v5009, 0
        %v5047 = vsel %vm2873, %v5014, 0
        %v5050 = vsel %vm2873, %v5019, 0
        %v5053 = vsel %vm2873, %v5024, 0
        %5055 = vmatprep.subr.mxu0 %v5028
        %5056 = vmatpush1.msra.mxu0 %v5027
        %5057 = vmatprep.subr.mxu0 %v5030
        %5058 = vmatpush1.msra.mxu0 %v5029
        %5059 = vmatprep.subr.mxu0 %v5032
        %5060 = vmatpush1.msra.mxu0 %v5031
        %5061 = vmatprep.subr.mxu0 %v5034
        %5062 = vmatpush1.msra.mxu0 %v5033
        %5063 = vmatprep.subr.mxu0 %v5036
        %5064 = vmatpush1.msra.mxu0 %v5035
        %5065 = vmatprep.subr.mxu0 %v5038
        %5066 = vmatpush1.msra.mxu0 %v5037
        %5067 = vmatprep.subr.mxu0 %v5040
        %5068 = vmatpush1.msra.mxu0 %v5039
        %5069 = vmatprep.subr.mxu0 %v5042
        %5070 = vmatpush1.msra.mxu0 %v5041
        %5071 = vmatprep.subr.mxu0 0.0
        %5072 = vmatpush1.msra.mxu0 0.0
        %5073 = vmatprep.subr.mxu0 0.0
        %5074 = vmatpush1.msra.mxu0 0.0
        %5075 = vmatprep.subr.mxu0 0.0
        %5076 = vmatpush1.msra.mxu0 0.0
        %5077 = vmatprep.subr.mxu0 0.0
        %5078 = vmatpush1.msra.mxu0 0.0
        %5079 = vmatprep.subr.mxu0 0.0
        %5080 = vmatpush1.msra.mxu0 0.0
        %5081 = vmatprep.subr.mxu0 0.0
        %5082 = vmatpush1.msra.mxu0 0.0
        %5083 = vmatprep.subr.mxu0 0.0
        %5084 = vmatpush1.msra.mxu0 0.0
        %5085 = vmatprep.subr.mxu0 0.0
        %5086 = vmatpush1.msra.mxu0 0.0
        %5087 = vmatprep.subr.mxu0 0.0
        %5088 = vmatpush1.msra.mxu0 0.0
        %5089 = vmatprep.subr.mxu0 0.0
        %5090 = vmatpush1.msra.mxu0 0.0
        %5091 = vmatprep.subr.mxu0 0.0
        %5092 = vmatpush1.msra.mxu0 0.0
        %5093 = vmatprep.subr.mxu0 0.0
        %5094 = vmatpush1.msra.mxu0 0.0
        %5095 = vmatprep.subr.mxu0 0.0
        %5096 = vmatpush1.msra.mxu0 0.0
        %5097 = vmatprep.subr.mxu0 0.0
        %5098 = vmatpush1.msra.mxu0 0.0
        %5099 = vmatprep.subr.mxu0 0.0
        %5100 = vmatpush1.msra.mxu0 0.0
        %5101 = vmatprep.subr.mxu0 0.0
        %5102 = vmatpush1.msra.mxu0 0.0
        %5103 = vmatprep.subr.mxu0 0.0
        %5104 = vmatpush1.msra.mxu0 0.0
        %5105 = vmatprep.subr.mxu0 0.0
        %5106 = vmatpush1.msra.mxu0 0.0
        %5107 = vmatprep.subr.mxu0 0.0
        %5108 = vmatpush1.msra.mxu0 0.0
        %5109 = vmatprep.subr.mxu0 0.0
        %5110 = vmatpush1.msra.mxu0 0.0
        %5111 = vmatprep.subr.mxu0 0.0
        %5112 = vmatpush1.msra.mxu0 0.0
        %5113 = vmatprep.subr.mxu0 0.0
        %5114 = vmatpush1.msra.mxu0 0.0
        %5115 = vmatprep.subr.mxu0 0.0
        %5116 = vmatpush1.msra.mxu0 0.0
        %5117 = vmatprep.subr.mxu0 0.0
        %5118 = vmatpush1.msra.mxu0 0.0
        %5119 = vmatprep.mubr.f32.mxu0 0.0
        %5120 = vmatmul.mubr.f32.gmra.mrb[0].mxu0 %v5044
        %v5121 = vpop.f32.mrb[0].mxu0
        %v5122 = vadd.f32 0.0, %v5121
        %v5123 = vpop.f32.mrb[0].mxu0
        %v5124 = vadd.f32 0.0, %v5123
        %5125 = vmatprep.mubr.f32.mxu0 0.0
        %5126 = vmatmul.mubr.f32.gmra.mrb[0].mxu0 %v5047
        %v5127 = vpop.f32.mrb[0].mxu0
        %v5128 = vadd.f32 0.0, %v5127
        %v5129 = vpop.f32.mrb[0].mxu0
        %v5130 = vadd.f32 0.0, %v5129
        %5131 = vmatprep.mubr.f32.mxu0 0.0
        %5132 = vmatmul.mubr.f32.gmra.mrb[0].mxu0 %v5050
        %v5133 = vpop.f32.mrb[0].mxu0
        %v5134 = vadd.f32 0.0, %v5133
        %v5135 = vpop.f32.mrb[0].mxu0
        %v5136 = vadd.f32 0.0, %v5135
        %5137 = vmatprep.mubr.f32.mxu0 0.0
        %5138 = vmatmul.mubr.f32.gmra.mrb[0].mxu0 %v5053
        %v5139 = vpop.f32.mrb[0].mxu0
        %v5140 = vadd.f32 0.0, %v5139
        %v5141 = vpop.f32.mrb[0].mxu0
        %v5142 = vadd.f32 0.0, %v5141
        %5143 = vdwg.mxu0
        %v5144 = vadd.f32 %v4891, %v5122
        %v5145 = vadd.f32 %v4893, %v5124
        %v5146 = vadd.f32 %v4897, %v5128
        %v5147 = vadd.f32 %v4899, %v5130
        %v5148 = vadd.f32 %v4903, %v5134
        %v5149 = vadd.f32 %v4905, %v5136
        %v5150 = vadd.f32 %v4909, %v5140
        %v5151 = vadd.f32 %v4911, %v5142
        loop: start=0, step=1, limit=2
        $region155: #{tfr_forward.1} parent=79 // loop_pre_header
          _
        $region156: #{tfr_forward.1} parent=79 // loop_header
          %s5153 = sphi 0, %s5157
          %p5154 = scmp.ge.s32.totalorder %s5153, 2
          %v5158 = vphi %v5144, %v6511
          %v5159 = vphi %v5145, %v6512
          %v5160 = vphi %v5146, %v6513
          %v5161 = vphi %v5147, %v6514
          %v5162 = vphi %v5148, %v6515
          %v5163 = vphi %v5149, %v6516
          %v5164 = vphi %v5150, %v6517
          %v5165 = vphi %v5151, %v6518
        $region157: #{tfr_forward.1} parent=79 // loop_header_branch
          %5156 = sbr.rel (%p5154) target = $region161
        $region158: #{tfr_forward.1} parent=79 // loop_body
          %s5166 = sadd.s32 %s5153, 4
          %s5167 = smul.u32 %s5166, 12
          %s5168 = smul.addr %s5167, 8
          %s5169 = scalar_lea.vmem [#allocation10], %s5168
          %v5170 = vld [vmem:[%s5169] sm:$0xff]
          %v5171 = vld [vmem:[%s5169 + $0x8] sm:$0xff]
          %v5172 = vld [vmem:[%s5169 + $0x10] sm:$0xff]
          %v5173 = vld [vmem:[%s5169 + $0x18] sm:$0xff]
          %v5174 = vld [vmem:[%s5169 + $0x20] sm:$0xff]
          %v5175 = vld [vmem:[%s5169 + $0x28] sm:$0xff]
          %v5176 = vld [vmem:[%s5169 + $0x30] sm:$0xff]
          %v5177 = vld [vmem:[%s5169 + $0x38] sm:$0xff]
          %v5178 = vld [vmem:[%s5169 + $0x40] sm:$0xff]
          %v5179 = vld [vmem:[%s5169 + $0x48] sm:$0xff]
          %v5180 = vld [vmem:[%s5169 + $0x50] sm:$0xff]
          %v5181 = vld [vmem:[%s5169 + $0x58] sm:$0xff]
          %5186 = vrot.lane.b32.xlu0 %v5159, 17
          %v5187 = vpop.permute.xlu0 %5186
          %5188 = vrot.lane.b32.xlu0 %v5161, 17
          %v5189 = vpop.permute.xlu0 %5188
          %5190 = vrot.lane.b32.xlu0 %v5163, 17
          %v5191 = vpop.permute.xlu0 %5190
          %5192 = vrot.lane.b32.xlu0 %v5165, 17
          %v5193 = vpop.permute.xlu0 %5192
          %5202 = vrot.lane.b32.xlu0 %v5158, 17
          %v5203 = vpop.permute.xlu0 %5202
          %5204 = vrot.lane.b32.xlu0 %v5160, 17
          %v5205 = vpop.permute.xlu0 %5204
          %5206 = vrot.lane.b32.xlu0 %v5162, 17
          %v5207 = vpop.permute.xlu0 %5206
          %5208 = vrot.lane.b32.xlu0 %v5164, 17
          %v5209 = vpop.permute.xlu0 %5208
          %v5210 = vsel %vm2219, %v5203, %v5187
          %v5211 = vsel %vm2219, %v5205, %v5189
          %v5212 = vsel %vm2219, %v5207, %v5191
          %v5213 = vsel %vm2219, %v5209, %v5193
          %v5222 = vsel %vm2219, %v5187, %v5203
          %v5223 = vsel %vm2219, %v5189, %v5205
          %v5224 = vsel %vm2219, %v5191, %v5207
          %v5225 = vsel %vm2219, %v5193, %v5209
          %v5226 = vld [vmem:[#allocation25] sm:$0x3]
          %v5228 = vlaneseq
          %v5229 = vshrl.u32 %v5228, 7
          %v5230 = vsub.s32 0, %v5229
          %v5231 = vrot.slane %v5226, %v5230
          %v5232 = vlaneseq
          %v5233 = vshrl.u32 %v5232, 7
          %v5234 = vsub.s32 1, %v5233
          %v5235 = vrot.slane %v5226, %v5234
          %v5238 = vmul.f32 %v5222, %v5231
          %v5239 = vmul.f32 %v5210, %v5235
          %v5240 = vmul.f32 %v5223, %v5231
          %v5241 = vmul.f32 %v5211, %v5235
          %v5242 = vmul.f32 %v5224, %v5231
          %v5243 = vmul.f32 %v5212, %v5235
          %v5244 = vmul.f32 %v5225, %v5231
          %v5245 = vmul.f32 %v5213, %v5235
          %5246 = vrot.lane.b32.xlu0 %v5159, 16
          %v5247 = vpop.permute.xlu0 %5246
          %5248 = vrot.lane.b32.xlu0 %v5161, 16
          %v5249 = vpop.permute.xlu0 %5248
          %5250 = vrot.lane.b32.xlu0 %v5163, 16
          %v5251 = vpop.permute.xlu0 %5250
          %5252 = vrot.lane.b32.xlu0 %v5165, 16
          %v5253 = vpop.permute.xlu0 %5252
          %5258 = vrot.lane.b32.xlu0 %v5158, 16
          %v5259 = vpop.permute.xlu0 %5258
          %5260 = vrot.lane.b32.xlu0 %v5160, 16
          %v5261 = vpop.permute.xlu0 %5260
          %5262 = vrot.lane.b32.xlu0 %v5162, 16
          %v5263 = vpop.permute.xlu0 %5262
          %5264 = vrot.lane.b32.xlu0 %v5164, 16
          %v5265 = vpop.permute.xlu0 %5264
          %v5266 = vsel %vm2276, %v5259, %v5247
          %v5267 = vsel %vm2276, %v5261, %v5249
          %v5268 = vsel %vm2276, %v5263, %v5251
          %v5269 = vsel %vm2276, %v5265, %v5253
          %v5278 = vsel %vm2276, %v5247, %v5259
          %v5279 = vsel %vm2276, %v5249, %v5261
          %v5280 = vsel %vm2276, %v5251, %v5263
          %v5281 = vsel %vm2276, %v5253, %v5265
          %v5282 = vld [vmem:[%s2293] sm:$0x3]
          %v5284 = vlaneseq
          %v5285 = vshrl.u32 %v5284, 7
          %v5286 = vsub.s32 0, %v5285
          %v5287 = vrot.slane %v5282, %v5286
          %v5288 = vlaneseq
          %v5289 = vshrl.u32 %v5288, 7
          %v5290 = vsub.s32 1, %v5289
          %v5291 = vrot.slane %v5282, %v5290
          %v5294 = vmul.f32 %v5278, %v5287
          %v5295 = vmul.f32 %v5266, %v5291
          %v5296 = vmul.f32 %v5279, %v5287
          %v5297 = vmul.f32 %v5267, %v5291
          %v5298 = vmul.f32 %v5280, %v5287
          %v5299 = vmul.f32 %v5268, %v5291
          %v5300 = vmul.f32 %v5281, %v5287
          %v5301 = vmul.f32 %v5269, %v5291
          %5302 = vrot.lane.b32.xlu0 %v5159, 15
          %v5303 = vpop.permute.xlu0 %5302
          %5304 = vrot.lane.b32.xlu0 %v5161, 15
          %v5305 = vpop.permute.xlu0 %5304
          %5306 = vrot.lane.b32.xlu0 %v5163, 15
          %v5307 = vpop.permute.xlu0 %5306
          %5308 = vrot.lane.b32.xlu0 %v5165, 15
          %v5309 = vpop.permute.xlu0 %5308
          %5314 = vrot.lane.b32.xlu0 %v5158, 15
          %v5315 = vpop.permute.xlu0 %5314
          %5316 = vrot.lane.b32.xlu0 %v5160, 15
          %v5317 = vpop.permute.xlu0 %5316
          %5318 = vrot.lane.b32.xlu0 %v5162, 15
          %v5319 = vpop.permute.xlu0 %5318
          %5320 = vrot.lane.b32.xlu0 %v5164, 15
          %v5321 = vpop.permute.xlu0 %5320
          %v5322 = vsel %vm2334, %v5315, %v5303
          %v5323 = vsel %vm2334, %v5317, %v5305
          %v5324 = vsel %vm2334, %v5319, %v5307
          %v5325 = vsel %vm2334, %v5321, %v5309
          %v5334 = vsel %vm2334, %v5303, %v5315
          %v5335 = vsel %vm2334, %v5305, %v5317
          %v5336 = vsel %vm2334, %v5307, %v5319
          %v5337 = vsel %vm2334, %v5309, %v5321
          %v5338 = vld [vmem:[%s2351] sm:$0x3]
          %v5340 = vlaneseq
          %v5341 = vshrl.u32 %v5340, 7
          %v5342 = vsub.s32 0, %v5341
          %v5343 = vrot.slane %v5338, %v5342
          %v5344 = vlaneseq
          %v5345 = vshrl.u32 %v5344, 7
          %v5346 = vsub.s32 1, %v5345
          %v5347 = vrot.slane %v5338, %v5346
          %v5350 = vmul.f32 %v5334, %v5343
          %v5351 = vmul.f32 %v5322, %v5347
          %v5352 = vmul.f32 %v5335, %v5343
          %v5353 = vmul.f32 %v5323, %v5347
          %v5354 = vmul.f32 %v5336, %v5343
          %v5355 = vmul.f32 %v5324, %v5347
          %v5356 = vmul.f32 %v5337, %v5343
          %v5357 = vmul.f32 %v5325, %v5347
          %5358 = vrot.lane.b32.xlu0 %v5159, 1
          %v5359 = vpop.permute.xlu0 %5358
          %5360 = vrot.lane.b32.xlu0 %v5161, 1
          %v5361 = vpop.permute.xlu0 %5360
          %5362 = vrot.lane.b32.xlu0 %v5163, 1
          %v5363 = vpop.permute.xlu0 %5362
          %5364 = vrot.lane.b32.xlu0 %v5165, 1
          %v5365 = vpop.permute.xlu0 %5364
          %5370 = vrot.lane.b32.xlu0 %v5158, 1
          %v5371 = vpop.permute.xlu0 %5370
          %5372 = vrot.lane.b32.xlu0 %v5160, 1
          %v5373 = vpop.permute.xlu0 %5372
          %5374 = vrot.lane.b32.xlu0 %v5162, 1
          %v5375 = vpop.permute.xlu0 %5374
          %5376 = vrot.lane.b32.xlu0 %v5164, 1
          %v5377 = vpop.permute.xlu0 %5376
          %v5378 = vsel %vm2392, %v5371, %v5359
          %v5379 = vsel %vm2392, %v5373, %v5361
          %v5380 = vsel %vm2392, %v5375, %v5363
          %v5381 = vsel %vm2392, %v5377, %v5365
          %v5390 = vsel %vm2392, %v5359, %v5371
          %v5391 = vsel %vm2392, %v5361, %v5373
          %v5392 = vsel %vm2392, %v5363, %v5375
          %v5393 = vsel %vm2392, %v5365, %v5377
          %v5394 = vld [vmem:[%s2409] sm:$0x3]
          %v5396 = vlaneseq
          %v5397 = vshrl.u32 %v5396, 7
          %v5398 = vsub.s32 0, %v5397
          %v5399 = vrot.slane %v5394, %v5398
          %v5400 = vlaneseq
          %v5401 = vshrl.u32 %v5400, 7
          %v5402 = vsub.s32 1, %v5401
          %v5403 = vrot.slane %v5394, %v5402
          %v5406 = vmul.f32 %v5390, %v5399
          %v5407 = vmul.f32 %v5378, %v5403
          %v5408 = vmul.f32 %v5391, %v5399
          %v5409 = vmul.f32 %v5379, %v5403
          %v5410 = vmul.f32 %v5392, %v5399
          %v5411 = vmul.f32 %v5380, %v5403
          %v5412 = vmul.f32 %v5393, %v5399
          %v5413 = vmul.f32 %v5381, %v5403
          %5414 = vrot.lane.b32.xlu0 %v5158, 127
          %v5415 = vpop.permute.xlu0 %5414
          %5416 = vrot.lane.b32.xlu0 %v5159, 127
          %v5417 = vpop.permute.xlu0 %5416
          %5418 = vrot.lane.b32.xlu0 %v5160, 127
          %v5419 = vpop.permute.xlu0 %5418
          %5420 = vrot.lane.b32.xlu0 %v5161, 127
          %v5421 = vpop.permute.xlu0 %5420
          %5422 = vrot.lane.b32.xlu0 %v5162, 127
          %v5423 = vpop.permute.xlu0 %5422
          %5424 = vrot.lane.b32.xlu0 %v5163, 127
          %v5425 = vpop.permute.xlu0 %5424
          %5426 = vrot.lane.b32.xlu0 %v5164, 127
          %v5427 = vpop.permute.xlu0 %5426
          %5428 = vrot.lane.b32.xlu0 %v5165, 127
          %v5429 = vpop.permute.xlu0 %5428
          %v5430 = vsel %vm2446, %v5415, %v5417
          %v5431 = vsel %vm2446, %v5419, %v5421
          %v5432 = vsel %vm2446, %v5423, %v5425
          %v5433 = vsel %vm2446, %v5427, %v5429
          %v5446 = vsel %vm2446, %v5417, %v5415
          %v5447 = vsel %vm2446, %v5421, %v5419
          %v5448 = vsel %vm2446, %v5425, %v5423
          %v5449 = vsel %vm2446, %v5429, %v5427
          %v5450 = vld [vmem:[%s2467] sm:$0x3]
          %v5452 = vlaneseq
          %v5453 = vshrl.u32 %v5452, 7
          %v5454 = vsub.s32 0, %v5453
          %v5455 = vrot.slane %v5450, %v5454
          %v5456 = vlaneseq
          %v5457 = vshrl.u32 %v5456, 7
          %v5458 = vsub.s32 1, %v5457
          %v5459 = vrot.slane %v5450, %v5458
          %v5462 = vmul.f32 %v5430, %v5455
          %v5463 = vmul.f32 %v5446, %v5459
          %v5464 = vmul.f32 %v5431, %v5455
          %v5465 = vmul.f32 %v5447, %v5459
          %v5466 = vmul.f32 %v5432, %v5455
          %v5467 = vmul.f32 %v5448, %v5459
          %v5468 = vmul.f32 %v5433, %v5455
          %v5469 = vmul.f32 %v5449, %v5459
          %5470 = vrot.lane.b32.xlu0 %v5158, 113
          %v5471 = vpop.permute.xlu0 %5470
          %5472 = vrot.lane.b32.xlu0 %v5159, 113
          %v5473 = vpop.permute.xlu0 %5472
          %5474 = vrot.lane.b32.xlu0 %v5160, 113
          %v5475 = vpop.permute.xlu0 %5474
          %5476 = vrot.lane.b32.xlu0 %v5161, 113
          %v5477 = vpop.permute.xlu0 %5476
          %5478 = vrot.lane.b32.xlu0 %v5162, 113
          %v5479 = vpop.permute.xlu0 %5478
          %5480 = vrot.lane.b32.xlu0 %v5163, 113
          %v5481 = vpop.permute.xlu0 %5480
          %5482 = vrot.lane.b32.xlu0 %v5164, 113
          %v5483 = vpop.permute.xlu0 %5482
          %5484 = vrot.lane.b32.xlu0 %v5165, 113
          %v5485 = vpop.permute.xlu0 %5484
          %v5486 = vsel %vm2504, %v5471, %v5473
          %v5487 = vsel %vm2504, %v5475, %v5477
          %v5488 = vsel %vm2504, %v5479, %v5481
          %v5489 = vsel %vm2504, %v5483, %v5485
          %v5502 = vsel %vm2504, %v5473, %v5471
          %v5503 = vsel %vm2504, %v5477, %v5475
          %v5504 = vsel %vm2504, %v5481, %v5479
          %v5505 = vsel %vm2504, %v5485, %v5483
          %v5506 = vld [vmem:[%s2525] sm:$0x3]
          %v5508 = vlaneseq
          %v5509 = vshrl.u32 %v5508, 7
          %v5510 = vsub.s32 0, %v5509
          %v5511 = vrot.slane %v5506, %v5510
          %v5512 = vlaneseq
          %v5513 = vshrl.u32 %v5512, 7
          %v5514 = vsub.s32 1, %v5513
          %v5515 = vrot.slane %v5506, %v5514
          %v5518 = vmul.f32 %v5486, %v5511
          %v5519 = vmul.f32 %v5502, %v5515
          %v5520 = vmul.f32 %v5487, %v5511
          %v5521 = vmul.f32 %v5503, %v5515
          %v5522 = vmul.f32 %v5488, %v5511
          %v5523 = vmul.f32 %v5504, %v5515
          %v5524 = vmul.f32 %v5489, %v5511
          %v5525 = vmul.f32 %v5505, %v5515
          %5526 = vrot.lane.b32.xlu0 %v5158, 112
          %v5527 = vpop.permute.xlu0 %5526
          %5528 = vrot.lane.b32.xlu0 %v5159, 112
          %v5529 = vpop.permute.xlu0 %5528
          %5530 = vrot.lane.b32.xlu0 %v5160, 112
          %v5531 = vpop.permute.xlu0 %5530
          %5532 = vrot.lane.b32.xlu0 %v5161, 112
          %v5533 = vpop.permute.xlu0 %5532
          %5534 = vrot.lane.b32.xlu0 %v5162, 112
          %v5535 = vpop.permute.xlu0 %5534
          %5536 = vrot.lane.b32.xlu0 %v5163, 112
          %v5537 = vpop.permute.xlu0 %5536
          %5538 = vrot.lane.b32.xlu0 %v5164, 112
          %v5539 = vpop.permute.xlu0 %5538
          %5540 = vrot.lane.b32.xlu0 %v5165, 112
          %v5541 = vpop.permute.xlu0 %5540
          %v5542 = vsel %vm2562, %v5527, %v5529
          %v5543 = vsel %vm2562, %v5531, %v5533
          %v5544 = vsel %vm2562, %v5535, %v5537
          %v5545 = vsel %vm2562, %v5539, %v5541
          %v5558 = vsel %vm2562, %v5529, %v5527
          %v5559 = vsel %vm2562, %v5533, %v5531
          %v5560 = vsel %vm2562, %v5537, %v5535
          %v5561 = vsel %vm2562, %v5541, %v5539
          %v5562 = vld [vmem:[%s2583] sm:$0x3]
          %v5564 = vlaneseq
          %v5565 = vshrl.u32 %v5564, 7
          %v5566 = vsub.s32 0, %v5565
          %v5567 = vrot.slane %v5562, %v5566
          %v5568 = vlaneseq
          %v5569 = vshrl.u32 %v5568, 7
          %v5570 = vsub.s32 1, %v5569
          %v5571 = vrot.slane %v5562, %v5570
          %v5574 = vmul.f32 %v5542, %v5567
          %v5575 = vmul.f32 %v5558, %v5571
          %v5576 = vmul.f32 %v5543, %v5567
          %v5577 = vmul.f32 %v5559, %v5571
          %v5578 = vmul.f32 %v5544, %v5567
          %v5579 = vmul.f32 %v5560, %v5571
          %v5580 = vmul.f32 %v5545, %v5567
          %v5581 = vmul.f32 %v5561, %v5571
          %5582 = vrot.lane.b32.xlu0 %v5158, 111
          %v5583 = vpop.permute.xlu0 %5582
          %5584 = vrot.lane.b32.xlu0 %v5159, 111
          %v5585 = vpop.permute.xlu0 %5584
          %5586 = vrot.lane.b32.xlu0 %v5160, 111
          %v5587 = vpop.permute.xlu0 %5586
          %5588 = vrot.lane.b32.xlu0 %v5161, 111
          %v5589 = vpop.permute.xlu0 %5588
          %5590 = vrot.lane.b32.xlu0 %v5162, 111
          %v5591 = vpop.permute.xlu0 %5590
          %5592 = vrot.lane.b32.xlu0 %v5163, 111
          %v5593 = vpop.permute.xlu0 %5592
          %5594 = vrot.lane.b32.xlu0 %v5164, 111
          %v5595 = vpop.permute.xlu0 %5594
          %5596 = vrot.lane.b32.xlu0 %v5165, 111
          %v5597 = vpop.permute.xlu0 %5596
          %v5598 = vsel %vm2620, %v5583, %v5585
          %v5599 = vsel %vm2620, %v5587, %v5589
          %v5600 = vsel %vm2620, %v5591, %v5593
          %v5601 = vsel %vm2620, %v5595, %v5597
          %v5614 = vsel %vm2620, %v5585, %v5583
          %v5615 = vsel %vm2620, %v5589, %v5587
          %v5616 = vsel %vm2620, %v5593, %v5591
          %v5617 = vsel %vm2620, %v5597, %v5595
          %v5618 = vld [vmem:[%s2641] sm:$0x3]
          %v5620 = vlaneseq
          %v5621 = vshrl.u32 %v5620, 7
          %v5622 = vsub.s32 0, %v5621
          %v5623 = vrot.slane %v5618, %v5622
          %v5624 = vlaneseq
          %v5625 = vshrl.u32 %v5624, 7
          %v5626 = vsub.s32 1, %v5625
          %v5627 = vrot.slane %v5618, %v5626
          %v5630 = vmul.f32 %v5598, %v5623
          %v5631 = vmul.f32 %v5614, %v5627
          %v5632 = vmul.f32 %v5599, %v5623
          %v5633 = vmul.f32 %v5615, %v5627
          %v5634 = vmul.f32 %v5600, %v5623
          %v5635 = vmul.f32 %v5616, %v5627
          %v5636 = vmul.f32 %v5601, %v5623
          %v5637 = vmul.f32 %v5617, %v5627
          %v5639 = vsel %vm2662, %v5172, 0
          %v5642 = vsel %vm2662, %v5175, 0
          %v5645 = vsel %vm2662, %v5178, 0
          %v5648 = vsel %vm2662, %v5181, 0
          %5650 = vmatprep.subr.mxu0 %v5239
          %5651 = vmatpush1.msra.mxu0 %v5238
          %5652 = vmatprep.subr.mxu0 %v5241
          %5653 = vmatpush1.msra.mxu0 %v5240
          %5654 = vmatprep.subr.mxu0 %v5243
          %5655 = vmatpush1.msra.mxu0 %v5242
          %5656 = vmatprep.subr.mxu0 %v5245
          %5657 = vmatpush1.msra.mxu0 %v5244
          %5658 = vmatprep.subr.mxu0 %v5295
          %5659 = vmatpush1.msra.mxu0 %v5294
          %5660 = vmatprep.subr.mxu0 %v5297
          %5661 = vmatpush1.msra.mxu0 %v5296
          %5662 = vmatprep.subr.mxu0 %v5299
          %5663 = vmatpush1.msra.mxu0 %v5298
          %5664 = vmatprep.subr.mxu0 %v5301
          %5665 = vmatpush1.msra.mxu0 %v5300
          %5666 = vmatprep.subr.mxu0 %v5351
          %5667 = vmatpush1.msra.mxu0 %v5350
          %5668 = vmatprep.subr.mxu0 %v5353
          %5669 = vmatpush1.msra.mxu0 %v5352
          %5670 = vmatprep.subr.mxu0 %v5355
          %5671 = vmatpush1.msra.mxu0 %v5354
          %5672 = vmatprep.subr.mxu0 %v5357
          %5673 = vmatpush1.msra.mxu0 %v5356
          %5674 = vmatprep.subr.mxu0 %v5407
          %5675 = vmatpush1.msra.mxu0 %v5406
          %5676 = vmatprep.subr.mxu0 %v5409
          %5677 = vmatpush1.msra.mxu0 %v5408
          %5678 = vmatprep.subr.mxu0 %v5411
          %5679 = vmatpush1.msra.mxu0 %v5410
          %5680 = vmatprep.subr.mxu0 %v5413
          %5681 = vmatpush1.msra.mxu0 %v5412
          %5682 = vmatprep.subr.mxu0 %v5159
          %5683 = vmatpush1.msra.mxu0 %v5158
          %5684 = vmatprep.subr.mxu0 %v5161
          %5685 = vmatpush1.msra.mxu0 %v5160
          %5686 = vmatprep.subr.mxu0 %v5163
          %5687 = vmatpush1.msra.mxu0 %v5162
          %5688 = vmatprep.subr.mxu0 %v5165
          %5689 = vmatpush1.msra.mxu0 %v5164
          %5690 = vmatprep.subr.mxu0 %v5463
          %5691 = vmatpush1.msra.mxu0 %v5462
          %5692 = vmatprep.subr.mxu0 %v5465
          %5693 = vmatpush1.msra.mxu0 %v5464
          %5694 = vmatprep.subr.mxu0 %v5467
          %5695 = vmatpush1.msra.mxu0 %v5466
          %5696 = vmatprep.subr.mxu0 %v5469
          %5697 = vmatpush1.msra.mxu0 %v5468
          %5698 = vmatprep.subr.mxu0 %v5519
          %5699 = vmatpush1.msra.mxu0 %v5518
          %5700 = vmatprep.subr.mxu0 %v5521
          %5701 = vmatpush1.msra.mxu0 %v5520
          %5702 = vmatprep.subr.mxu0 %v5523
          %5703 = vmatpush1.msra.mxu0 %v5522
          %5704 = vmatprep.subr.mxu0 %v5525
          %5705 = vmatpush1.msra.mxu0 %v5524
          %5706 = vmatprep.subr.mxu0 %v5575
          %5707 = vmatpush1.msra.mxu0 %v5574
          %5708 = vmatprep.subr.mxu0 %v5577
          %5709 = vmatpush1.msra.mxu0 %v5576
          %5710 = vmatprep.subr.mxu0 %v5579
          %5711 = vmatpush1.msra.mxu0 %v5578
          %5712 = vmatprep.subr.mxu0 %v5581
          %5713 = vmatpush1.msra.mxu0 %v5580
          %5714 = vmatprep.mubr.f32.mxu0 %v5171
          %5715 = vmatmul.mubr.f32.gmra.mrb[0].mxu0 %v5170
          %v5716 = vpop.f32.mrb[0].mxu0
          %v5717 = vadd.f32 0.0, %v5716
          %v5718 = vpop.f32.mrb[0].mxu0
          %v5719 = vadd.f32 0.0, %v5718
          %5720 = vmatprep.mubr.f32.mxu0 %v5174
          %5721 = vmatmul.mubr.f32.gmra.mrb[0].mxu0 %v5173
          %v5722 = vpop.f32.mrb[0].mxu0
          %v5723 = vadd.f32 0.0, %v5722
          %v5724 = vpop.f32.mrb[0].mxu0
          %v5725 = vadd.f32 0.0, %v5724
          %5726 = vmatprep.mubr.f32.mxu0 %v5177
          %5727 = vmatmul.mubr.f32.gmra.mrb[0].mxu0 %v5176
          %v5728 = vpop.f32.mrb[0].mxu0
          %v5729 = vadd.f32 0.0, %v5728
          %v5730 = vpop.f32.mrb[0].mxu0
          %v5731 = vadd.f32 0.0, %v5730
          %5732 = vmatprep.mubr.f32.mxu0 %v5180
          %5733 = vmatmul.mubr.f32.gmra.mrb[0].mxu0 %v5179
          %v5734 = vpop.f32.mrb[0].mxu0
          %v5735 = vadd.f32 0.0, %v5734
          %v5736 = vpop.f32.mrb[0].mxu0
          %v5737 = vadd.f32 0.0, %v5736
          %5738 = vdwg.mxu0
          %5739 = vmatprep.subr.mxu0 %v5631
          %5740 = vmatpush1.msra.mxu0 %v5630
          %5741 = vmatprep.subr.mxu0 %v5633
          %5742 = vmatpush1.msra.mxu0 %v5632
          %5743 = vmatprep.subr.mxu0 %v5635
          %5744 = vmatpush1.msra.mxu0 %v5634
          %5745 = vmatprep.subr.mxu0 %v5637
          %5746 = vmatpush1.msra.mxu0 %v5636
          %5747 = vmatprep.subr.mxu0 0.0
          %5748 = vmatpush1.msra.mxu0 0.0
          %5749 = vmatprep.subr.mxu0 0.0
          %5750 = vmatpush1.msra.mxu0 0.0
          %5751 = vmatprep.subr.mxu0 0.0
          %5752 = vmatpush1.msra.mxu0 0.0
          %5753 = vmatprep.subr.mxu0 0.0
          %5754 = vmatpush1.msra.mxu0 0.0
          %5755 = vmatprep.subr.mxu0 0.0
          %5756 = vmatpush1.msra.mxu0 0.0
          %5757 = vmatprep.subr.mxu0 0.0
          %5758 = vmatpush1.msra.mxu0 0.0
          %5759 = vmatprep.subr.mxu0 0.0
          %5760 = vmatpush1.msra.mxu0 0.0
          %5761 = vmatprep.subr.mxu0 0.0
          %5762 = vmatpush1.msra.mxu0 0.0
          %5763 = vmatprep.subr.mxu0 0.0
          %5764 = vmatpush1.msra.mxu0 0.0
          %5765 = vmatprep.subr.mxu0 0.0
          %5766 = vmatpush1.msra.mxu0 0.0
          %5767 = vmatprep.subr.mxu0 0.0
          %5768 = vmatpush1.msra.mxu0 0.0
          %5769 = vmatprep.subr.mxu0 0.0
          %5770 = vmatpush1.msra.mxu0 0.0
          %5771 = vmatprep.subr.mxu0 0.0
          %5772 = vmatpush1.msra.mxu0 0.0
          %5773 = vmatprep.subr.mxu0 0.0
          %5774 = vmatpush1.msra.mxu0 0.0
          %5775 = vmatprep.subr.mxu0 0.0
          %5776 = vmatpush1.msra.mxu0 0.0
          %5777 = vmatprep.subr.mxu0 0.0
          %5778 = vmatpush1.msra.mxu0 0.0
          %5779 = vmatprep.subr.mxu0 0.0
          %5780 = vmatpush1.msra.mxu0 0.0
          %5781 = vmatprep.subr.mxu0 0.0
          %5782 = vmatpush1.msra.mxu0 0.0
          %5783 = vmatprep.subr.mxu0 0.0
          %5784 = vmatpush1.msra.mxu0 0.0
          %5785 = vmatprep.subr.mxu0 0.0
          %5786 = vmatpush1.msra.mxu0 0.0
          %5787 = vmatprep.subr.mxu0 0.0
          %5788 = vmatpush1.msra.mxu0 0.0
          %5789 = vmatprep.subr.mxu0 0.0
          %5790 = vmatpush1.msra.mxu0 0.0
          %5791 = vmatprep.subr.mxu0 0.0
          %5792 = vmatpush1.msra.mxu0 0.0
          %5793 = vmatprep.subr.mxu0 0.0
          %5794 = vmatpush1.msra.mxu0 0.0
          %5795 = vmatprep.subr.mxu0 0.0
          %5796 = vmatpush1.msra.mxu0 0.0
          %5797 = vmatprep.subr.mxu0 0.0
          %5798 = vmatpush1.msra.mxu0 0.0
          %5799 = vmatprep.subr.mxu0 0.0
          %5800 = vmatpush1.msra.mxu0 0.0
          %5801 = vmatprep.subr.mxu0 0.0
          %5802 = vmatpush1.msra.mxu0 0.0
          %5803 = vmatprep.mubr.f32.mxu0 0.0
          %5804 = vmatmul.mubr.f32.gmra.mrb[0].mxu0 %v5639
          %v5805 = vpop.f32.mrb[0].mxu0
          %v5806 = vadd.f32 %v5717, %v5805
          %v5807 = vpop.f32.mrb[0].mxu0
          %v5808 = vadd.f32 %v5719, %v5807
          %5809 = vmatprep.mubr.f32.mxu0 0.0
          %5810 = vmatmul.mubr.f32.gmra.mrb[0].mxu0 %v5642
          %v5811 = vpop.f32.mrb[0].mxu0
          %v5812 = vadd.f32 %v5723, %v5811
          %v5813 = vpop.f32.mrb[0].mxu0
          %v5814 = vadd.f32 %v5725, %v5813
          %5815 = vmatprep.mubr.f32.mxu0 0.0
          %5816 = vmatmul.mubr.f32.gmra.mrb[0].mxu0 %v5645
          %v5817 = vpop.f32.mrb[0].mxu0
          %v5818 = vadd.f32 %v5729, %v5817
          %v5819 = vpop.f32.mrb[0].mxu0
          %v5820 = vadd.f32 %v5731, %v5819
          %5821 = vmatprep.mubr.f32.mxu0 0.0
          %5822 = vmatmul.mubr.f32.gmra.mrb[0].mxu0 %v5648
          %v5823 = vpop.f32.mrb[0].mxu0
          %v5824 = vadd.f32 %v5735, %v5823
          %v5825 = vpop.f32.mrb[0].mxu0
          %v5826 = vadd.f32 %v5737, %v5825
          %5827 = vdwg.mxu0
          %vm5828 = vcmp.ge.f32.partialorder %v5806, 0.0
          %vm5829 = vcmp.ge.f32.partialorder %v5808, 0.0
          %vm5830 = vcmp.ge.f32.partialorder %v5812, 0.0
          %vm5831 = vcmp.ge.f32.partialorder %v5814, 0.0
          %vm5832 = vcmp.ge.f32.partialorder %v5818, 0.0
          %vm5833 = vcmp.ge.f32.partialorder %v5820, 0.0
          %vm5834 = vcmp.ge.f32.partialorder %v5824, 0.0
          %vm5835 = vcmp.ge.f32.partialorder %v5826, 0.0
          %v5836 = vmul.f32 %v5806, 0.25
          %v5837 = vmul.f32 %v5808, 0.25
          %v5838 = vmul.f32 %v5812, 0.25
          %v5839 = vmul.f32 %v5814, 0.25
          %v5840 = vmul.f32 %v5818, 0.25
          %v5841 = vmul.f32 %v5820, 0.25
          %v5842 = vmul.f32 %v5824, 0.25
          %v5843 = vmul.f32 %v5826, 0.25
          %v5844 = vsel %vm5828, %v5806, %v5836
          %v5845 = vsel %vm5829, %v5808, %v5837
          %v5846 = vsel %vm5830, %v5812, %v5838
          %v5847 = vsel %vm5831, %v5814, %v5839
          %v5848 = vsel %vm5832, %v5818, %v5840
          %v5849 = vsel %vm5833, %v5820, %v5841
          %v5850 = vsel %vm5834, %v5824, %v5842
          %v5851 = vsel %vm5835, %v5826, %v5843
          %s5852 = smul.addr %s5167, 8
          %s5853 = scalar_lea.vmem [#allocation11], %s5852
          %v5854 = vld [vmem:[%s5853] sm:$0xff]
          %v5855 = vld [vmem:[%s5853 + $0x8] sm:$0xff]
          %v5856 = vld [vmem:[%s5853 + $0x10] sm:$0xff]
          %v5857 = vld [vmem:[%s5853 + $0x18] sm:$0xff]
          %v5858 = vld [vmem:[%s5853 + $0x20] sm:$0xff]
          %v5859 = vld [vmem:[%s5853 + $0x28] sm:$0xff]
          %v5860 = vld [vmem:[%s5853 + $0x30] sm:$0xff]
          %v5861 = vld [vmem:[%s5853 + $0x38] sm:$0xff]
          %v5862 = vld [vmem:[%s5853 + $0x40] sm:$0xff]
          %v5863 = vld [vmem:[%s5853 + $0x48] sm:$0xff]
          %v5864 = vld [vmem:[%s5853 + $0x50] sm:$0xff]
          %v5865 = vld [vmem:[%s5853 + $0x58] sm:$0xff]
          %5870 = vrot.lane.b32.xlu0 %v5845, 17
          %v5871 = vpop.permute.xlu0 %5870
          %5872 = vrot.lane.b32.xlu0 %v5847, 17
          %v5873 = vpop.permute.xlu0 %5872
          %5874 = vrot.lane.b32.xlu0 %v5849, 17
          %v5875 = vpop.permute.xlu0 %5874
          %5876 = vrot.lane.b32.xlu0 %v5851, 17
          %v5877 = vpop.permute.xlu0 %5876
          %5886 = vrot.lane.b32.xlu0 %v5844, 17
          %v5887 = vpop.permute.xlu0 %5886
          %5888 = vrot.lane.b32.xlu0 %v5846, 17
          %v5889 = vpop.permute.xlu0 %5888
          %5890 = vrot.lane.b32.xlu0 %v5848, 17
          %v5891 = vpop.permute.xlu0 %5890
          %5892 = vrot.lane.b32.xlu0 %v5850, 17
          %v5893 = vpop.permute.xlu0 %5892
          %v5894 = vsel %vm2219, %v5887, %v5871
          %v5895 = vsel %vm2219, %v5889, %v5873
          %v5896 = vsel %vm2219, %v5891, %v5875
          %v5897 = vsel %vm2219, %v5893, %v5877
          %v5906 = vsel %vm2219, %v5871, %v5887
          %v5907 = vsel %vm2219, %v5873, %v5889
          %v5908 = vsel %vm2219, %v5875, %v5891
          %v5909 = vsel %vm2219, %v5877, %v5893
          %v5910 = vmul.f32 %v5906, %v5231
          %v5911 = vmul.f32 %v5894, %v5235
          %v5912 = vmul.f32 %v5907, %v5231
          %v5913 = vmul.f32 %v5895, %v5235
          %v5914 = vmul.f32 %v5908, %v5231
          %v5915 = vmul.f32 %v5896, %v5235
          %v5916 = vmul.f32 %v5909, %v5231
          %v5917 = vmul.f32 %v5897, %v5235
          %5918 = vrot.lane.b32.xlu0 %v5845, 16
          %v5919 = vpop.permute.xlu0 %5918
          %5920 = vrot.lane.b32.xlu0 %v5847, 16
          %v5921 = vpop.permute.xlu0 %5920
          %5922 = vrot.lane.b32.xlu0 %v5849, 16
          %v5923 = vpop.permute.xlu0 %5922
          %5924 = vrot.lane.b32.xlu0 %v5851, 16
          %v5925 = vpop.permute.xlu0 %5924
          %5930 = vrot.lane.b32.xlu0 %v5844, 16
          %v5931 = vpop.permute.xlu0 %5930
          %5932 = vrot.lane.b32.xlu0 %v5846, 16
          %v5933 = vpop.permute.xlu0 %5932
          %5934 = vrot.lane.b32.xlu0 %v5848, 16
          %v5935 = vpop.permute.xlu0 %5934
          %5936 = vrot.lane.b32.xlu0 %v5850, 16
          %v5937 = vpop.permute.xlu0 %5936
          %v5938 = vsel %vm2276, %v5931, %v5919
          %v5939 = vsel %vm2276, %v5933, %v5921
          %v5940 = vsel %vm2276, %v5935, %v5923
          %v5941 = vsel %vm2276, %v5937, %v5925
          %v5950 = vsel %vm2276, %v5919, %v5931
          %v5951 = vsel %vm2276, %v5921, %v5933
          %v5952 = vsel %vm2276, %v5923, %v5935
          %v5953 = vsel %vm2276, %v5925, %v5937
          %v5954 = vmul.f32 %v5950, %v5287
          %v5955 = vmul.f32 %v5938, %v5291
          %v5956 = vmul.f32 %v5951, %v5287
          %v5957 = vmul.f32 %v5939, %v5291
          %v5958 = vmul.f32 %v5952, %v5287
          %v5959 = vmul.f32 %v5940, %v5291
          %v5960 = vmul.f32 %v5953, %v5287
          %v5961 = vmul.f32 %v5941, %v5291
          %5962 = vrot.lane.b32.xlu0 %v5845, 15
          %v5963 = vpop.permute.xlu0 %5962
          %5964 = vrot.lane.b32.xlu0 %v5847, 15
          %v5965 = vpop.permute.xlu0 %5964
          %5966 = vrot.lane.b32.xlu0 %v5849, 15
          %v5967 = vpop.permute.xlu0 %5966
          %5968 = vrot.lane.b32.xlu0 %v5851, 15
          %v5969 = vpop.permute.xlu0 %5968
          %5974 = vrot.lane.b32.xlu0 %v5844, 15
          %v5975 = vpop.permute.xlu0 %5974
          %5976 = vrot.lane.b32.xlu0 %v5846, 15
          %v5977 = vpop.permute.xlu0 %5976
          %5978 = vrot.lane.b32.xlu0 %v5848, 15
          %v5979 = vpop.permute.xlu0 %5978
          %5980 = vrot.lane.b32.xlu0 %v5850, 15
          %v5981 = vpop.permute.xlu0 %5980
          %v5982 = vsel %vm2334, %v5975, %v5963
          %v5983 = vsel %vm2334, %v5977, %v5965
          %v5984 = vsel %vm2334, %v5979, %v5967
          %v5985 = vsel %vm2334, %v5981, %v5969
          %v5994 = vsel %vm2334, %v5963, %v5975
          %v5995 = vsel %vm2334, %v5965, %v5977
          %v5996 = vsel %vm2334, %v5967, %v5979
          %v5997 = vsel %vm2334, %v5969, %v5981
          %v5998 = vmul.f32 %v5994, %v5343
          %v5999 = vmul.f32 %v5982, %v5347
          %v6000 = vmul.f32 %v5995, %v5343
          %v6001 = vmul.f32 %v5983, %v5347
          %v6002 = vmul.f32 %v5996, %v5343
          %v6003 = vmul.f32 %v5984, %v5347
          %v6004 = vmul.f32 %v5997, %v5343
          %v6005 = vmul.f32 %v5985, %v5347
          %6006 = vrot.lane.b32.xlu0 %v5845, 1
          %v6007 = vpop.permute.xlu0 %6006
          %6008 = vrot.lane.b32.xlu0 %v5847, 1
          %v6009 = vpop.permute.xlu0 %6008
          %6010 = vrot.lane.b32.xlu0 %v5849, 1
          %v6011 = vpop.permute.xlu0 %6010
          %6012 = vrot.lane.b32.xlu0 %v5851, 1
          %v6013 = vpop.permute.xlu0 %6012
          %6018 = vrot.lane.b32.xlu0 %v5844, 1
          %v6019 = vpop.permute.xlu0 %6018
          %6020 = vrot.lane.b32.xlu0 %v5846, 1
          %v6021 = vpop.permute.xlu0 %6020
          %6022 = vrot.lane.b32.xlu0 %v5848, 1
          %v6023 = vpop.permute.xlu0 %6022
          %6024 = vrot.lane.b32.xlu0 %v5850, 1
          %v6025 = vpop.permute.xlu0 %6024
          %v6026 = vsel %vm2392, %v6019, %v6007
          %v6027 = vsel %vm2392, %v6021, %v6009
          %v6028 = vsel %vm2392, %v6023, %v6011
          %v6029 = vsel %vm2392, %v6025, %v6013
          %v6038 = vsel %vm2392, %v6007, %v6019
          %v6039 = vsel %vm2392, %v6009, %v6021
          %v6040 = vsel %vm2392, %v6011, %v6023
          %v6041 = vsel %vm2392, %v6013, %v6025
          %v6042 = vmul.f32 %v6038, %v5399
          %v6043 = vmul.f32 %v6026, %v5403
          %v6044 = vmul.f32 %v6039, %v5399
          %v6045 = vmul.f32 %v6027, %v5403
          %v6046 = vmul.f32 %v6040, %v5399
          %v6047 = vmul.f32 %v6028, %v5403
          %v6048 = vmul.f32 %v6041, %v5399
          %v6049 = vmul.f32 %v6029, %v5403
          %6050 = vrot.lane.b32.xlu0 %v5844, 127
          %v6051 = vpop.permute.xlu0 %6050
          %6052 = vrot.lane.b32.xlu0 %v5845, 127
          %v6053 = vpop.permute.xlu0 %6052
          %6054 = vrot.lane.b32.xlu0 %v5846, 127
          %v6055 = vpop.permute.xlu0 %6054
          %6056 = vrot.lane.b32.xlu0 %v5847, 127
          %v6057 = vpop.permute.xlu0 %6056
          %6058 = vrot.lane.b32.xlu0 %v5848, 127
          %v6059 = vpop.permute.xlu0 %6058
          %6060 = vrot.lane.b32.xlu0 %v5849, 127
          %v6061 = vpop.permute.xlu0 %6060
          %6062 = vrot.lane.b32.xlu0 %v5850, 127
          %v6063 = vpop.permute.xlu0 %6062
          %6064 = vrot.lane.b32.xlu0 %v5851, 127
          %v6065 = vpop.permute.xlu0 %6064
          %v6066 = vsel %vm2446, %v6051, %v6053
          %v6067 = vsel %vm2446, %v6055, %v6057
          %v6068 = vsel %vm2446, %v6059, %v6061
          %v6069 = vsel %vm2446, %v6063, %v6065
          %v6082 = vsel %vm2446, %v6053, %v6051
          %v6083 = vsel %vm2446, %v6057, %v6055
          %v6084 = vsel %vm2446, %v6061, %v6059
          %v6085 = vsel %vm2446, %v6065, %v6063
          %v6086 = vmul.f32 %v6066, %v5455
          %v6087 = vmul.f32 %v6082, %v5459
          %v6088 = vmul.f32 %v6067, %v5455
          %v6089 = vmul.f32 %v6083, %v5459
          %v6090 = vmul.f32 %v6068, %v5455
          %v6091 = vmul.f32 %v6084, %v5459
          %v6092 = vmul.f32 %v6069, %v5455
          %v6093 = vmul.f32 %v6085, %v5459
          %6094 = vrot.lane.b32.xlu0 %v5844, 113
          %v6095 = vpop.permute.xlu0 %6094
          %6096 = vrot.lane.b32.xlu0 %v5845, 113
          %v6097 = vpop.permute.xlu0 %6096
          %6098 = vrot.lane.b32.xlu0 %v5846, 113
          %v6099 = vpop.permute.xlu0 %6098
          %6100 = vrot.lane.b32.xlu0 %v5847, 113
          %v6101 = vpop.permute.xlu0 %6100
          %6102 = vrot.lane.b32.xlu0 %v5848, 113
          %v6103 = vpop.permute.xlu0 %6102
          %6104 = vrot.lane.b32.xlu0 %v5849, 113
          %v6105 = vpop.permute.xlu0 %6104
          %6106 = vrot.lane.b32.xlu0 %v5850, 113
          %v6107 = vpop.permute.xlu0 %6106
          %6108 = vrot.lane.b32.xlu0 %v5851, 113
          %v6109 = vpop.permute.xlu0 %6108
          %v6110 = vsel %vm2504, %v6095, %v6097
          %v6111 = vsel %vm2504, %v6099, %v6101
          %v6112 = vsel %vm2504, %v6103, %v6105
          %v6113 = vsel %vm2504, %v6107, %v6109
          %v6126 = vsel %vm2504, %v6097, %v6095
          %v6127 = vsel %vm2504, %v6101, %v6099
          %v6128 = vsel %vm2504, %v6105, %v6103
          %v6129 = vsel %vm2504, %v6109, %v6107
          %v6130 = vmul.f32 %v6110, %v5511
          %v6131 = vmul.f32 %v6126, %v5515
          %v6132 = vmul.f32 %v6111, %v5511
          %v6133 = vmul.f32 %v6127, %v5515
          %v6134 = vmul.f32 %v6112, %v5511
          %v6135 = vmul.f32 %v6128, %v5515
          %v6136 = vmul.f32 %v6113, %v5511
          %v6137 = vmul.f32 %v6129, %v5515
          %6138 = vrot.lane.b32.xlu0 %v5844, 112
          %v6139 = vpop.permute.xlu0 %6138
          %6140 = vrot.lane.b32.xlu0 %v5845, 112
          %v6141 = vpop.permute.xlu0 %6140
          %6142 = vrot.lane.b32.xlu0 %v5846, 112
          %v6143 = vpop.permute.xlu0 %6142
          %6144 = vrot.lane.b32.xlu0 %v5847, 112
          %v6145 = vpop.permute.xlu0 %6144
          %6146 = vrot.lane.b32.xlu0 %v5848, 112
          %v6147 = vpop.permute.xlu0 %6146
          %6148 = vrot.lane.b32.xlu0 %v5849, 112
          %v6149 = vpop.permute.xlu0 %6148
          %6150 = vrot.lane.b32.xlu0 %v5850, 112
          %v6151 = vpop.permute.xlu0 %6150
          %6152 = vrot.lane.b32.xlu0 %v5851, 112
          %v6153 = vpop.permute.xlu0 %6152
          %v6154 = vsel %vm2562, %v6139, %v6141
          %v6155 = vsel %vm2562, %v6143, %v6145
          %v6156 = vsel %vm2562, %v6147, %v6149
          %v6157 = vsel %vm2562, %v6151, %v6153
          %v6170 = vsel %vm2562, %v6141, %v6139
          %v6171 = vsel %vm2562, %v6145, %v6143
          %v6172 = vsel %vm2562, %v6149, %v6147
          %v6173 = vsel %vm2562, %v6153, %v6151
          %v6174 = vmul.f32 %v6154, %v5567
          %v6175 = vmul.f32 %v6170, %v5571
          %v6176 = vmul.f32 %v6155, %v5567
          %v6177 = vmul.f32 %v6171, %v5571
          %v6178 = vmul.f32 %v6156, %v5567
          %v6179 = vmul.f32 %v6172, %v5571
          %v6180 = vmul.f32 %v6157, %v5567
          %v6181 = vmul.f32 %v6173, %v5571
          %6182 = vrot.lane.b32.xlu0 %v5844, 111
          %v6183 = vpop.permute.xlu0 %6182
          %6184 = vrot.lane.b32.xlu0 %v5845, 111
          %v6185 = vpop.permute.xlu0 %6184
          %6186 = vrot.lane.b32.xlu0 %v5846, 111
          %v6187 = vpop.permute.xlu0 %6186
          %6188 = vrot.lane.b32.xlu0 %v5847, 111
          %v6189 = vpop.permute.xlu0 %6188
          %6190 = vrot.lane.b32.xlu0 %v5848, 111
          %v6191 = vpop.permute.xlu0 %6190
          %6192 = vrot.lane.b32.xlu0 %v5849, 111
          %v6193 = vpop.permute.xlu0 %6192
          %6194 = vrot.lane.b32.xlu0 %v5850, 111
          %v6195 = vpop.permute.xlu0 %6194
          %6196 = vrot.lane.b32.xlu0 %v5851, 111
          %v6197 = vpop.permute.xlu0 %6196
          %v6198 = vsel %vm2620, %v6183, %v6185
          %v6199 = vsel %vm2620, %v6187, %v6189
          %v6200 = vsel %vm2620, %v6191, %v6193
          %v6201 = vsel %vm2620, %v6195, %v6197
          %v6214 = vsel %vm2620, %v6185, %v6183
          %v6215 = vsel %vm2620, %v6189, %v6187
          %v6216 = vsel %vm2620, %v6193, %v6191
          %v6217 = vsel %vm2620, %v6197, %v6195
          %v6218 = vmul.f32 %v6198, %v5623
          %v6219 = vmul.f32 %v6214, %v5627
          %v6220 = vmul.f32 %v6199, %v5623
          %v6221 = vmul.f32 %v6215, %v5627
          %v6222 = vmul.f32 %v6200, %v5623
          %v6223 = vmul.f32 %v6216, %v5627
          %v6224 = vmul.f32 %v6201, %v5623
          %v6225 = vmul.f32 %v6217, %v5627
          %v6227 = vsel %vm2662, %v5856, 0
          %v6230 = vsel %vm2662, %v5859, 0
          %v6233 = vsel %vm2662, %v5862, 0
          %v6236 = vsel %vm2662, %v5865, 0
          %6238 = vmatprep.subr.mxu0 %v5911
          %6239 = vmatpush1.msra.mxu0 %v5910
          %6240 = vmatprep.subr.mxu0 %v5913
          %6241 = vmatpush1.msra.mxu0 %v5912
          %6242 = vmatprep.subr.mxu0 %v5915
          %6243 = vmatpush1.msra.mxu0 %v5914
          %6244 = vmatprep.subr.mxu0 %v5917
          %6245 = vmatpush1.msra.mxu0 %v5916
          %6246 = vmatprep.subr.mxu0 %v5955
          %6247 = vmatpush1.msra.mxu0 %v5954
          %6248 = vmatprep.subr.mxu0 %v5957
          %6249 = vmatpush1.msra.mxu0 %v5956
          %6250 = vmatprep.subr.mxu0 %v5959
          %6251 = vmatpush1.msra.mxu0 %v5958
          %6252 = vmatprep.subr.mxu0 %v5961
          %6253 = vmatpush1.msra.mxu0 %v5960
          %6254 = vmatprep.subr.mxu0 %v5999
          %6255 = vmatpush1.msra.mxu0 %v5998
          %6256 = vmatprep.subr.mxu0 %v6001
          %6257 = vmatpush1.msra.mxu0 %v6000
          %6258 = vmatprep.subr.mxu0 %v6003
          %6259 = vmatpush1.msra.mxu0 %v6002
          %6260 = vmatprep.subr.mxu0 %v6005
          %6261 = vmatpush1.msra.mxu0 %v6004
          %6262 = vmatprep.subr.mxu0 %v6043
          %6263 = vmatpush1.msra.mxu0 %v6042
          %6264 = vmatprep.subr.mxu0 %v6045
          %6265 = vmatpush1.msra.mxu0 %v6044
          %6266 = vmatprep.subr.mxu0 %v6047
          %6267 = vmatpush1.msra.mxu0 %v6046
          %6268 = vmatprep.subr.mxu0 %v6049
          %6269 = vmatpush1.msra.mxu0 %v6048
          %6270 = vmatprep.subr.mxu0 %v5845
          %6271 = vmatpush1.msra.mxu0 %v5844
          %6272 = vmatprep.subr.mxu0 %v5847
          %6273 = vmatpush1.msra.mxu0 %v5846
          %6274 = vmatprep.subr.mxu0 %v5849
          %6275 = vmatpush1.msra.mxu0 %v5848
          %6276 = vmatprep.subr.mxu0 %v5851
          %6277 = vmatpush1.msra.mxu0 %v5850
          %6278 = vmatprep.subr.mxu0 %v6087
          %6279 = vmatpush1.msra.mxu0 %v6086
          %6280 = vmatprep.subr.mxu0 %v6089
          %6281 = vmatpush1.msra.mxu0 %v6088
          %6282 = vmatprep.subr.mxu0 %v6091
          %6283 = vmatpush1.msra.mxu0 %v6090
          %6284 = vmatprep.subr.mxu0 %v6093
          %6285 = vmatpush1.msra.mxu0 %v6092
          %6286 = vmatprep.subr.mxu0 %v6131
          %6287 = vmatpush1.msra.mxu0 %v6130
          %6288 = vmatprep.subr.mxu0 %v6133
          %6289 = vmatpush1.msra.mxu0 %v6132
          %6290 = vmatprep.subr.mxu0 %v6135
          %6291 = vmatpush1.msra.mxu0 %v6134
          %6292 = vmatprep.subr.mxu0 %v6137
          %6293 = vmatpush1.msra.mxu0 %v6136
          %6294 = vmatprep.subr.mxu0 %v6175
          %6295 = vmatpush1.msra.mxu0 %v6174
          %6296 = vmatprep.subr.mxu0 %v6177
          %6297 = vmatpush1.msra.mxu0 %v6176
          %6298 = vmatprep.subr.mxu0 %v6179
          %6299 = vmatpush1.msra.mxu0 %v6178
          %6300 = vmatprep.subr.mxu0 %v6181
          %6301 = vmatpush1.msra.mxu0 %v6180
          %6302 = vmatprep.mubr.f32.mxu0 %v5855
          %6303 = vmatmul.mubr.f32.gmra.mrb[0].mxu0 %v5854
          %v6304 = vpop.f32.mrb[0].mxu0
          %v6305 = vadd.f32 0.0, %v6304
          %v6306 = vpop.f32.mrb[0].mxu0
          %v6307 = vadd.f32 0.0, %v6306
          %6308 = vmatprep.mubr.f32.mxu0 %v5858
          %6309 = vmatmul.mubr.f32.gmra.mrb[0].mxu0 %v5857
          %v6310 = vpop.f32.mrb[0].mxu0
          %v6311 = vadd.f32 0.0, %v6310
          %v6312 = vpop.f32.mrb[0].mxu0
          %v6313 = vadd.f32 0.0, %v6312
          %6314 = vmatprep.mubr.f32.mxu0 %v5861
          %6315 = vmatmul.mubr.f32.gmra.mrb[0].mxu0 %v5860
          %v6316 = vpop.f32.mrb[0].mxu0
          %v6317 = vadd.f32 0.0, %v6316
          %v6318 = vpop.f32.mrb[0].mxu0
          %v6319 = vadd.f32 0.0, %v6318
          %6320 = vmatprep.mubr.f32.mxu0 %v5864
          %6321 = vmatmul.mubr.f32.gmra.mrb[0].mxu0 %v5863
          %v6322 = vpop.f32.mrb[0].mxu0
          %v6323 = vadd.f32 0.0, %v6322
          %v6324 = vpop.f32.mrb[0].mxu0
          %v6325 = vadd.f32 0.0, %v6324
          %6326 = vdwg.mxu0
          %6327 = vmatprep.subr.mxu0 %v6219
          %6328 = vmatpush1.msra.mxu0 %v6218
          %6329 = vmatprep.subr.mxu0 %v6221
          %6330 = vmatpush1.msra.mxu0 %v6220
          %6331 = vmatprep.subr.mxu0 %v6223
          %6332 = vmatpush1.msra.mxu0 %v6222
          %6333 = vmatprep.subr.mxu0 %v6225
          %6334 = vmatpush1.msra.mxu0 %v6224
          %6335 = vmatprep.subr.mxu0 0.0
          %6336 = vmatpush1.msra.mxu0 0.0
          %6337 = vmatprep.subr.mxu0 0.0
          %6338 = vmatpush1.msra.mxu0 0.0
          %6339 = vmatprep.subr.mxu0 0.0
          %6340 = vmatpush1.msra.mxu0 0.0
          %6341 = vmatprep.subr.mxu0 0.0
          %6342 = vmatpush1.msra.mxu0 0.0
          %6343 = vmatprep.subr.mxu0 0.0
          %6344 = vmatpush1.msra.mxu0 0.0
          %6345 = vmatprep.subr.mxu0 0.0
          %6346 = vmatpush1.msra.mxu0 0.0
          %6347 = vmatprep.subr.mxu0 0.0
          %6348 = vmatpush1.msra.mxu0 0.0
          %6349 = vmatprep.subr.mxu0 0.0
          %6350 = vmatpush1.msra.mxu0 0.0
          %6351 = vmatprep.subr.mxu0 0.0
          %6352 = vmatpush1.msra.mxu0 0.0
          %6353 = vmatprep.subr.mxu0 0.0
          %6354 = vmatpush1.msra.mxu0 0.0
          %6355 = vmatprep.subr.mxu0 0.0
          %6356 = vmatpush1.msra.mxu0 0.0
          %6357 = vmatprep.subr.mxu0 0.0
          %6358 = vmatpush1.msra.mxu0 0.0
          %6359 = vmatprep.subr.mxu0 0.0
          %6360 = vmatpush1.msra.mxu0 0.0
          %6361 = vmatprep.subr.mxu0 0.0
          %6362 = vmatpush1.msra.mxu0 0.0
          %6363 = vmatprep.subr.mxu0 0.0
          %6364 = vmatpush1.msra.mxu0 0.0
          %6365 = vmatprep.subr.mxu0 0.0
          %6366 = vmatpush1.msra.mxu0 0.0
          %6367 = vmatprep.subr.mxu0 0.0
          %6368 = vmatpush1.msra.mxu0 0.0
          %6369 = vmatprep.subr.mxu0 0.0
          %6370 = vmatpush1.msra.mxu0 0.0
          %6371 = vmatprep.subr.mxu0 0.0
          %6372 = vmatpush1.msra.mxu0 0.0
          %6373 = vmatprep.subr.mxu0 0.0
          %6374 = vmatpush1.msra.mxu0 0.0
          %6375 = vmatprep.subr.mxu0 0.0
          %6376 = vmatpush1.msra.mxu0 0.0
          %6377 = vmatprep.subr.mxu0 0.0
          %6378 = vmatpush1.msra.mxu0 0.0
          %6379 = vmatprep.subr.mxu0 0.0
          %6380 = vmatpush1.msra.mxu0 0.0
          %6381 = vmatprep.subr.mxu0 0.0
          %6382 = vmatpush1.msra.mxu0 0.0
          %6383 = vmatprep.subr.mxu0 0.0
          %6384 = vmatpush1.msra.mxu0 0.0
          %6385 = vmatprep.subr.mxu0 0.0
          %6386 = vmatpush1.msra.mxu0 0.0
          %6387 = vmatprep.subr.mxu0 0.0
          %6388 = vmatpush1.msra.mxu0 0.0
          %6389 = vmatprep.subr.mxu0 0.0
          %6390 = vmatpush1.msra.mxu0 0.0
          %6391 = vmatprep.mubr.f32.mxu0 0.0
          %6392 = vmatmul.mubr.f32.gmra.mrb[0].mxu0 %v6227
          %v6393 = vpop.f32.mrb[0].mxu0
          %v6394 = vadd.f32 %v6305, %v6393
          %v6395 = vpop.f32.mrb[0].mxu0
          %v6396 = vadd.f32 %v6307, %v6395
          %6397 = vmatprep.mubr.f32.mxu0 0.0
          %6398 = vmatmul.mubr.f32.gmra.mrb[0].mxu0 %v6230
          %v6399 = vpop.f32.mrb[0].mxu0
          %v6400 = vadd.f32 %v6311, %v6399
          %v6401 = vpop.f32.mrb[0].mxu0
          %v6402 = vadd.f32 %v6313, %v6401
          %6403 = vmatprep.mubr.f32.mxu0 0.0
          %6404 = vmatmul.mubr.f32.gmra.mrb[0].mxu0 %v6233
          %v6405 = vpop.f32.mrb[0].mxu0
          %v6406 = vadd.f32 %v6317, %v6405
          %v6407 = vpop.f32.mrb[0].mxu0
          %v6408 = vadd.f32 %v6319, %v6407
          %6409 = vmatprep.mubr.f32.mxu0 0.0
          %6410 = vmatmul.mubr.f32.gmra.mrb[0].mxu0 %v6236
          %v6411 = vpop.f32.mrb[0].mxu0
          %v6412 = vadd.f32 %v6323, %v6411
          %v6413 = vpop.f32.mrb[0].mxu0
          %v6414 = vadd.f32 %v6325, %v6413
          %6415 = vdwg.mxu0
          %v6416 = vadd.f32 %v6394, %v6396
          %6417 = vadd.xlane.f32.xlu0 %v6416
          %v6418 = vpop.xlane.xlu0 %6417
          %v6419 = vadd.f32 %v6400, %v6402
          %6420 = vadd.xlane.f32.xlu0 %v6419
          %v6421 = vpop.xlane.xlu0 %6420
          %v6422 = vadd.f32 %v6406, %v6408
          %6423 = vadd.xlane.f32.xlu0 %v6422
          %v6424 = vpop.xlane.xlu0 %6423
          %v6425 = vadd.f32 %v6412, %v6414
          %6426 = vadd.xlane.f32.xlu0 %v6425
          %v6427 = vpop.xlane.xlu0 %6426
          %v6428 = vrcp.pop 256.0
          %v6429 = vmul.f32 %v6418, %v6428
          %v6430 = vmul.f32 %v6421, %v6428
          %v6431 = vmul.f32 %v6424, %v6428
          %v6432 = vmul.f32 %v6427, %v6428
          %s6433 = smul.u32 %s5166, 32
          %s6434 = scalar_lea.vmem [#allocation13], %s6433
          %v6435 = vld [vmem:[%s6434] sm:$0xff]
          %v6436 = vld [vmem:[%s6434 + $0x8] sm:$0xff]
          %v6437 = vld [vmem:[%s6434 + $0x10] sm:$0xff]
          %v6438 = vld [vmem:[%s6434 + $0x18] sm:$0xff]
          %v6439 = vmul.f32 %v6435, %v6429
          %v6440 = vmul.f32 %v6436, %v6430
          %v6441 = vmul.f32 %v6437, %v6431
          %v6442 = vmul.f32 %v6438, %v6432
          %vm6443 = vcmask 64512
          %v6444 = vsel %vm6443, %v6439, 0.0
          %v6445 = vsel %vm6443, %v6440, 0.0
          %v6446 = vadd.f32 %v6444, %v6445
          %v6447 = vsel %vm6443, %v6441, 0.0
          %v6448 = vadd.f32 %v6446, %v6447
          %v6449 = vsel %vm6443, %v6442, 0.0
          %v6450 = vadd.f32 %v6448, %v6449
          %v6451 = vrot.slane %v6450, 4
          %v6452 = vadd.f32 %v6450, %v6451
          %v6453 = vrot.slane %v6452, 2
          %v6454 = vadd.f32 %v6452, %v6453
          %v6455 = vrot.slane %v6454, 1
          %v6456 = vadd.f32 %v6454, %v6455
          %v6457 = vmax.f32 %v6456, 0.0
          %s6458 = scalar_lea.vmem [#allocation14], %s6433
          %v6459 = vld [vmem:[%s6458] sm:$0xff]
          %v6460 = vld [vmem:[%s6458 + $0x8] sm:$0xff]
          %v6461 = vld [vmem:[%s6458 + $0x10] sm:$0xff]
          %v6462 = vld [vmem:[%s6458 + $0x18] sm:$0xff]
          %v6463 = vmul.f32 %v6459, %v6457
          %v6464 = vmul.f32 %v6460, %v6457
          %v6465 = vmul.f32 %v6461, %v6457
          %v6466 = vmul.f32 %v6462, %v6457
          %v6467 = vsel %vm6443, %v6463, 0.0
          %6468 = vadd.xlane.f32.xlu0 %v6467
          %v6469 = vpop.xlane.xlu0 %6468
          %v6470 = vsel %vm6443, %v6464, 0.0
          %6471 = vadd.xlane.f32.xlu0 %v6470
          %v6472 = vpop.xlane.xlu0 %6471
          %v6473 = vsel %vm6443, %v6465, 0.0
          %6474 = vadd.xlane.f32.xlu0 %v6473
          %v6475 = vpop.xlane.xlu0 %6474
          %v6476 = vsel %vm6443, %v6466, 0.0
          %6477 = vadd.xlane.f32.xlu0 %v6476
          %v6478 = vpop.xlane.xlu0 %6477
          %v6479 = vxor.u32 %v6469, 2147483648
          %v6480 = vxor.u32 %v6472, 2147483648
          %v6481 = vxor.u32 %v6475, 2147483648
          %v6482 = vxor.u32 %v6478, 2147483648
          %v6483 = vmul.f32 %v6479, 1.442695
          %v6484 = vpow.pop %v6483
          %v6485 = vmul.f32 %v6480, 1.442695
          %v6486 = vpow.pop %v6485
          %v6487 = vmul.f32 %v6481, 1.442695
          %v6488 = vpow.pop %v6487
          %v6489 = vmul.f32 %v6482, 1.442695
          %v6490 = vpow.pop %v6489
          %v6491 = vadd.f32 %v6484, 1.0
          %v6492 = vadd.f32 %v6486, 1.0
          %v6493 = vadd.f32 %v6488, 1.0
          %v6494 = vadd.f32 %v6490, 1.0
          %v6495 = vrcp.pop %v6491
          %v6496 = vmul.f32 1.0, %v6495
          %v6497 = vrcp.pop %v6492
          %v6498 = vmul.f32 1.0, %v6497
          %v6499 = vrcp.pop %v6493
          %v6500 = vmul.f32 1.0, %v6499
          %v6501 = vrcp.pop %v6494
          %v6502 = vmul.f32 1.0, %v6501
          %v6503 = vmul.f32 %v6394, %v6496
          %v6504 = vmul.f32 %v6396, %v6496
          %v6505 = vmul.f32 %v6400, %v6498
          %v6506 = vmul.f32 %v6402, %v6498
          %v6507 = vmul.f32 %v6406, %v6500
          %v6508 = vmul.f32 %v6408, %v6500
          %v6509 = vmul.f32 %v6412, %v6502
          %v6510 = vmul.f32 %v6414, %v6502
          %v6511 = vadd.f32 %v6503, %v5158
          %v6512 = vadd.f32 %v6504, %v5159
          %v6513 = vadd.f32 %v6505, %v5160
          %v6514 = vadd.f32 %v6506, %v5161
          %v6515 = vadd.f32 %v6507, %v5162
          %v6516 = vadd.f32 %v6508, %v5163
          %v6517 = vadd.f32 %v6509, %v5164
          %v6518 = vadd.f32 %v6510, %v5165
        $region159: #{tfr_forward.1} parent=79 // loop_footer
          %s5157 = sadd.s32 1, %s5153
        $region160: #{tfr_forward.1} parent=79 // loop_footer_branch
          %5152 = sbr.rel target = $region156
        $region161: #{tfr_forward.1} parent=79 // loop_exit
          _
        %s6519 = scalar_lea.vmem [#allocation16], 192
        %v6520 = vld [vmem:[%s6519] sm:$0xff]
        %v6521 = vld [vmem:[%s6519 + $0x8] sm:$0xff]
        %v6522 = vld [vmem:[%s6519 + $0x10] sm:$0xff]
        %v6523 = vld [vmem:[%s6519 + $0x18] sm:$0xff]
        %v6524 = vld [vmem:[%s6519 + $0x20] sm:$0xff]
        %v6525 = vld [vmem:[%s6519 + $0x28] sm:$0xff]
        %v6526 = vld [vmem:[%s6519 + $0x30] sm:$0xff]
        %v6527 = vld [vmem:[%s6519 + $0x38] sm:$0xff]
        %v6528 = vld [vmem:[%s6519 + $0x40] sm:$0xff]
        %v6529 = vld [vmem:[%s6519 + $0x48] sm:$0xff]
        %v6530 = vld [vmem:[%s6519 + $0x50] sm:$0xff]
        %v6531 = vld [vmem:[%s6519 + $0x58] sm:$0xff]
        %6536 = vrot.lane.b32.xlu0 %v5159, 17
        %v6537 = vpop.permute.xlu0 %6536
        %6538 = vrot.lane.b32.xlu0 %v5161, 17
        %v6539 = vpop.permute.xlu0 %6538
        %6540 = vrot.lane.b32.xlu0 %v5163, 17
        %v6541 = vpop.permute.xlu0 %6540
        %6542 = vrot.lane.b32.xlu0 %v5165, 17
        %v6543 = vpop.permute.xlu0 %6542
        %6552 = vrot.lane.b32.xlu0 %v5158, 17
        %v6553 = vpop.permute.xlu0 %6552
        %6554 = vrot.lane.b32.xlu0 %v5160, 17
        %v6555 = vpop.permute.xlu0 %6554
        %6556 = vrot.lane.b32.xlu0 %v5162, 17
        %v6557 = vpop.permute.xlu0 %6556
        %6558 = vrot.lane.b32.xlu0 %v5164, 17
        %v6559 = vpop.permute.xlu0 %6558
        %v6560 = vsel %vm2219, %v6553, %v6537
        %v6561 = vsel %vm2219, %v6555, %v6539
        %v6562 = vsel %vm2219, %v6557, %v6541
        %v6563 = vsel %vm2219, %v6559, %v6543
        %v6572 = vsel %vm2219, %v6537, %v6553
        %v6573 = vsel %vm2219, %v6539, %v6555
        %v6574 = vsel %vm2219, %v6541, %v6557
        %v6575 = vsel %vm2219, %v6543, %v6559
        %v6576 = vmul.f32 %v6572, %v2241
        %v6577 = vmul.f32 %v6560, %v2245
        %v6578 = vmul.f32 %v6573, %v2241
        %v6579 = vmul.f32 %v6561, %v2245
        %v6580 = vmul.f32 %v6574, %v2241
        %v6581 = vmul.f32 %v6562, %v2245
        %v6582 = vmul.f32 %v6575, %v2241
        %v6583 = vmul.f32 %v6563, %v2245
        %6584 = vrot.lane.b32.xlu0 %v5159, 16
        %v6585 = vpop.permute.xlu0 %6584
        %6586 = vrot.lane.b32.xlu0 %v5161, 16
        %v6587 = vpop.permute.xlu0 %6586
        %6588 = vrot.lane.b32.xlu0 %v5163, 16
        %v6589 = vpop.permute.xlu0 %6588
        %6590 = vrot.lane.b32.xlu0 %v5165, 16
        %v6591 = vpop.permute.xlu0 %6590
        %6596 = vrot.lane.b32.xlu0 %v5158, 16
        %v6597 = vpop.permute.xlu0 %6596
        %6598 = vrot.lane.b32.xlu0 %v5160, 16
        %v6599 = vpop.permute.xlu0 %6598
        %6600 = vrot.lane.b32.xlu0 %v5162, 16
        %v6601 = vpop.permute.xlu0 %6600
        %6602 = vrot.lane.b32.xlu0 %v5164, 16
        %v6603 = vpop.permute.xlu0 %6602
        %v6604 = vsel %vm2276, %v6597, %v6585
        %v6605 = vsel %vm2276, %v6599, %v6587
        %v6606 = vsel %vm2276, %v6601, %v6589
        %v6607 = vsel %vm2276, %v6603, %v6591
        %v6616 = vsel %vm2276, %v6585, %v6597
        %v6617 = vsel %vm2276, %v6587, %v6599
        %v6618 = vsel %vm2276, %v6589, %v6601
        %v6619 = vsel %vm2276, %v6591, %v6603
        %v6620 = vmul.f32 %v6616, %v2299
        %v6621 = vmul.f32 %v6604, %v2303
        %v6622 = vmul.f32 %v6617, %v2299
        %v6623 = vmul.f32 %v6605, %v2303
        %v6624 = vmul.f32 %v6618, %v2299
        %v6625 = vmul.f32 %v6606, %v2303
        %v6626 = vmul.f32 %v6619, %v2299
        %v6627 = vmul.f32 %v6607, %v2303
        %6628 = vrot.lane.b32.xlu0 %v5159, 15
        %v6629 = vpop.permute.xlu0 %6628
        %6630 = vrot.lane.b32.xlu0 %v5161, 15
        %v6631 = vpop.permute.xlu0 %6630
        %6632 = vrot.lane.b32.xlu0 %v5163, 15
        %v6633 = vpop.permute.xlu0 %6632
        %6634 = vrot.lane.b32.xlu0 %v5165, 15
        %v6635 = vpop.permute.xlu0 %6634
        %6640 = vrot.lane.b32.xlu0 %v5158, 15
        %v6641 = vpop.permute.xlu0 %6640
        %6642 = vrot.lane.b32.xlu0 %v5160, 15
        %v6643 = vpop.permute.xlu0 %6642
        %6644 = vrot.lane.b32.xlu0 %v5162, 15
        %v6645 = vpop.permute.xlu0 %6644
        %6646 = vrot.lane.b32.xlu0 %v5164, 15
        %v6647 = vpop.permute.xlu0 %6646
        %v6648 = vsel %vm2334, %v6641, %v6629
        %v6649 = vsel %vm2334, %v6643, %v6631
        %v6650 = vsel %vm2334, %v6645, %v6633
        %v6651 = vsel %vm2334, %v6647, %v6635
        %v6660 = vsel %vm2334, %v6629, %v6641
        %v6661 = vsel %vm2334, %v6631, %v6643
        %v6662 = vsel %vm2334, %v6633, %v6645
        %v6663 = vsel %vm2334, %v6635, %v6647
        %v6664 = vmul.f32 %v6660, %v2357
        %v6665 = vmul.f32 %v6648, %v2361
        %v6666 = vmul.f32 %v6661, %v2357
        %v6667 = vmul.f32 %v6649, %v2361
        %v6668 = vmul.f32 %v6662, %v2357
        %v6669 = vmul.f32 %v6650, %v2361
        %v6670 = vmul.f32 %v6663, %v2357
        %v6671 = vmul.f32 %v6651, %v2361
        %6672 = vrot.lane.b32.xlu0 %v5159, 1
        %v6673 = vpop.permute.xlu0 %6672
        %6674 = vrot.lane.b32.xlu0 %v5161, 1
        %v6675 = vpop.permute.xlu0 %6674
        %6676 = vrot.lane.b32.xlu0 %v5163, 1
        %v6677 = vpop.permute.xlu0 %6676
        %6678 = vrot.lane.b32.xlu0 %v5165, 1
        %v6679 = vpop.permute.xlu0 %6678
        %6684 = vrot.lane.b32.xlu0 %v5158, 1
        %v6685 = vpop.permute.xlu0 %6684
        %6686 = vrot.lane.b32.xlu0 %v5160, 1
        %v6687 = vpop.permute.xlu0 %6686
        %6688 = vrot.lane.b32.xlu0 %v5162, 1
        %v6689 = vpop.permute.xlu0 %6688
        %6690 = vrot.lane.b32.xlu0 %v5164, 1
        %v6691 = vpop.permute.xlu0 %6690
        %v6692 = vsel %vm2392, %v6685, %v6673
        %v6693 = vsel %vm2392, %v6687, %v6675
        %v6694 = vsel %vm2392, %v6689, %v6677
        %v6695 = vsel %vm2392, %v6691, %v6679
        %v6704 = vsel %vm2392, %v6673, %v6685
        %v6705 = vsel %vm2392, %v6675, %v6687
        %v6706 = vsel %vm2392, %v6677, %v6689
        %v6707 = vsel %vm2392, %v6679, %v6691
        %v6708 = vmul.f32 %v6704, %v2415
        %v6709 = vmul.f32 %v6692, %v2419
        %v6710 = vmul.f32 %v6705, %v2415
        %v6711 = vmul.f32 %v6693, %v2419
        %v6712 = vmul.f32 %v6706, %v2415
        %v6713 = vmul.f32 %v6694, %v2419
        %v6714 = vmul.f32 %v6707, %v2415
        %v6715 = vmul.f32 %v6695, %v2419
        %6716 = vrot.lane.b32.xlu0 %v5158, 127
        %v6717 = vpop.permute.xlu0 %6716
        %6718 = vrot.lane.b32.xlu0 %v5159, 127
        %v6719 = vpop.permute.xlu0 %6718
        %6720 = vrot.lane.b32.xlu0 %v5160, 127
        %v6721 = vpop.permute.xlu0 %6720
        %6722 = vrot.lane.b32.xlu0 %v5161, 127
        %v6723 = vpop.permute.xlu0 %6722
        %6724 = vrot.lane.b32.xlu0 %v5162, 127
        %v6725 = vpop.permute.xlu0 %6724
        %6726 = vrot.lane.b32.xlu0 %v5163, 127
        %v6727 = vpop.permute.xlu0 %6726
        %6728 = vrot.lane.b32.xlu0 %v5164, 127
        %v6729 = vpop.permute.xlu0 %6728
        %6730 = vrot.lane.b32.xlu0 %v5165, 127
        %v6731 = vpop.permute.xlu0 %6730
        %v6732 = vsel %vm2446, %v6717, %v6719
        %v6733 = vsel %vm2446, %v6721, %v6723
        %v6734 = vsel %vm2446, %v6725, %v6727
        %v6735 = vsel %vm2446, %v6729, %v6731
        %v6748 = vsel %vm2446, %v6719, %v6717
        %v6749 = vsel %vm2446, %v6723, %v6721
        %v6750 = vsel %vm2446, %v6727, %v6725
        %v6751 = vsel %vm2446, %v6731, %v6729
        %v6752 = vmul.f32 %v6732, %v2473
        %v6753 = vmul.f32 %v6748, %v2477
        %v6754 = vmul.f32 %v6733, %v2473
        %v6755 = vmul.f32 %v6749, %v2477
        %v6756 = vmul.f32 %v6734, %v2473
        %v6757 = vmul.f32 %v6750, %v2477
        %v6758 = vmul.f32 %v6735, %v2473
        %v6759 = vmul.f32 %v6751, %v2477
        %6760 = vrot.lane.b32.xlu0 %v5158, 113
        %v6761 = vpop.permute.xlu0 %6760
        %6762 = vrot.lane.b32.xlu0 %v5159, 113
        %v6763 = vpop.permute.xlu0 %6762
        %6764 = vrot.lane.b32.xlu0 %v5160, 113
        %v6765 = vpop.permute.xlu0 %6764
        %6766 = vrot.lane.b32.xlu0 %v5161, 113
        %v6767 = vpop.permute.xlu0 %6766
        %6768 = vrot.lane.b32.xlu0 %v5162, 113
        %v6769 = vpop.permute.xlu0 %6768
        %6770 = vrot.lane.b32.xlu0 %v5163, 113
        %v6771 = vpop.permute.xlu0 %6770
        %6772 = vrot.lane.b32.xlu0 %v5164, 113
        %v6773 = vpop.permute.xlu0 %6772
        %6774 = vrot.lane.b32.xlu0 %v5165, 113
        %v6775 = vpop.permute.xlu0 %6774
        %v6776 = vsel %vm2504, %v6761, %v6763
        %v6777 = vsel %vm2504, %v6765, %v6767
        %v6778 = vsel %vm2504, %v6769, %v6771
        %v6779 = vsel %vm2504, %v6773, %v6775
        %v6792 = vsel %vm2504, %v6763, %v6761
        %v6793 = vsel %vm2504, %v6767, %v6765
        %v6794 = vsel %vm2504, %v6771, %v6769
        %v6795 = vsel %vm2504, %v6775, %v6773
        %v6796 = vmul.f32 %v6776, %v2531
        %v6797 = vmul.f32 %v6792, %v2535
        %v6798 = vmul.f32 %v6777, %v2531
        %v6799 = vmul.f32 %v6793, %v2535
        %v6800 = vmul.f32 %v6778, %v2531
        %v6801 = vmul.f32 %v6794, %v2535
        %v6802 = vmul.f32 %v6779, %v2531
        %v6803 = vmul.f32 %v6795, %v2535
        %6804 = vrot.lane.b32.xlu0 %v5158, 112
        %v6805 = vpop.permute.xlu0 %6804
        %6806 = vrot.lane.b32.xlu0 %v5159, 112
        %v6807 = vpop.permute.xlu0 %6806
        %6808 = vrot.lane.b32.xlu0 %v5160, 112
        %v6809 = vpop.permute.xlu0 %6808
        %6810 = vrot.lane.b32.xlu0 %v5161, 112
        %v6811 = vpop.permute.xlu0 %6810
        %6812 = vrot.lane.b32.xlu0 %v5162, 112
        %v6813 = vpop.permute.xlu0 %6812
        %6814 = vrot.lane.b32.xlu0 %v5163, 112
        %v6815 = vpop.permute.xlu0 %6814
        %6816 = vrot.lane.b32.xlu0 %v5164, 112
        %v6817 = vpop.permute.xlu0 %6816
        %6818 = vrot.lane.b32.xlu0 %v5165, 112
        %v6819 = vpop.permute.xlu0 %6818
        %v6820 = vsel %vm2562, %v6805, %v6807
        %v6821 = vsel %vm2562, %v6809, %v6811
        %v6822 = vsel %vm2562, %v6813, %v6815
        %v6823 = vsel %vm2562, %v6817, %v6819
        %v6836 = vsel %vm2562, %v6807, %v6805
        %v6837 = vsel %vm2562, %v6811, %v6809
        %v6838 = vsel %vm2562, %v6815, %v6813
        %v6839 = vsel %vm2562, %v6819, %v6817
        %v6840 = vmul.f32 %v6820, %v2589
        %v6841 = vmul.f32 %v6836, %v2593
        %v6842 = vmul.f32 %v6821, %v2589
        %v6843 = vmul.f32 %v6837, %v2593
        %v6844 = vmul.f32 %v6822, %v2589
        %v6845 = vmul.f32 %v6838, %v2593
        %v6846 = vmul.f32 %v6823, %v2589
        %v6847 = vmul.f32 %v6839, %v2593
        %6848 = vrot.lane.b32.xlu0 %v5158, 111
        %v6849 = vpop.permute.xlu0 %6848
        %6850 = vrot.lane.b32.xlu0 %v5159, 111
        %v6851 = vpop.permute.xlu0 %6850
        %6852 = vrot.lane.b32.xlu0 %v5160, 111
        %v6853 = vpop.permute.xlu0 %6852
        %6854 = vrot.lane.b32.xlu0 %v5161, 111
        %v6855 = vpop.permute.xlu0 %6854
        %6856 = vrot.lane.b32.xlu0 %v5162, 111
        %v6857 = vpop.permute.xlu0 %6856
        %6858 = vrot.lane.b32.xlu0 %v5163, 111
        %v6859 = vpop.permute.xlu0 %6858
        %6860 = vrot.lane.b32.xlu0 %v5164, 111
        %v6861 = vpop.permute.xlu0 %6860
        %6862 = vrot.lane.b32.xlu0 %v5165, 111
        %v6863 = vpop.permute.xlu0 %6862
        %v6864 = vsel %vm2620, %v6849, %v6851
        %v6865 = vsel %vm2620, %v6853, %v6855
        %v6866 = vsel %vm2620, %v6857, %v6859
        %v6867 = vsel %vm2620, %v6861, %v6863
        %v6880 = vsel %vm2620, %v6851, %v6849
        %v6881 = vsel %vm2620, %v6855, %v6853
        %v6882 = vsel %vm2620, %v6859, %v6857
        %v6883 = vsel %vm2620, %v6863, %v6861
        %v6884 = vmul.f32 %v6864, %v2647
        %v6885 = vmul.f32 %v6880, %v2651
        %v6886 = vmul.f32 %v6865, %v2647
        %v6887 = vmul.f32 %v6881, %v2651
        %v6888 = vmul.f32 %v6866, %v2647
        %v6889 = vmul.f32 %v6882, %v2651
        %v6890 = vmul.f32 %v6867, %v2647
        %v6891 = vmul.f32 %v6883, %v2651
        %v6893 = vsel %vm2662, %v6522, 0
        %v6896 = vsel %vm2662, %v6525, 0
        %v6899 = vsel %vm2662, %v6528, 0
        %v6902 = vsel %vm2662, %v6531, 0
        %6904 = vmatprep.subr.mxu0 %v6577
        %6905 = vmatpush1.msra.mxu0 %v6576
        %6906 = vmatprep.subr.mxu0 %v6579
        %6907 = vmatpush1.msra.mxu0 %v6578
        %6908 = vmatprep.subr.mxu0 %v6581
        %6909 = vmatpush1.msra.mxu0 %v6580
        %6910 = vmatprep.subr.mxu0 %v6583
        %6911 = vmatpush1.msra.mxu0 %v6582
        %6912 = vmatprep.subr.mxu0 %v6621
        %6913 = vmatpush1.msra.mxu0 %v6620
        %6914 = vmatprep.subr.mxu0 %v6623
        %6915 = vmatpush1.msra.mxu0 %v6622
        %6916 = vmatprep.subr.mxu0 %v6625
        %6917 = vmatpush1.msra.mxu0 %v6624
        %6918 = vmatprep.subr.mxu0 %v6627
        %6919 = vmatpush1.msra.mxu0 %v6626
        %6920 = vmatprep.subr.mxu0 %v6665
        %6921 = vmatpush1.msra.mxu0 %v6664
        %6922 = vmatprep.subr.mxu0 %v6667
        %6923 = vmatpush1.msra.mxu0 %v6666
        %6924 = vmatprep.subr.mxu0 %v6669
        %6925 = vmatpush1.msra.mxu0 %v6668
        %6926 = vmatprep.subr.mxu0 %v6671
        %6927 = vmatpush1.msra.mxu0 %v6670
        %6928 = vmatprep.subr.mxu0 %v6709
        %6929 = vmatpush1.msra.mxu0 %v6708
        %6930 = vmatprep.subr.mxu0 %v6711
        %6931 = vmatpush1.msra.mxu0 %v6710
        %6932 = vmatprep.subr.mxu0 %v6713
        %6933 = vmatpush1.msra.mxu0 %v6712
        %6934 = vmatprep.subr.mxu0 %v6715
        %6935 = vmatpush1.msra.mxu0 %v6714
        %6936 = vmatprep.subr.mxu0 %v5159
        %6937 = vmatpush1.msra.mxu0 %v5158
        %6938 = vmatprep.subr.mxu0 %v5161
        %6939 = vmatpush1.msra.mxu0 %v5160
        %6940 = vmatprep.subr.mxu0 %v5163
        %6941 = vmatpush1.msra.mxu0 %v5162
        %6942 = vmatprep.subr.mxu0 %v5165
        %6943 = vmatpush1.msra.mxu0 %v5164
        %6944 = vmatprep.subr.mxu0 %v6753
        %6945 = vmatpush1.msra.mxu0 %v6752
        %6946 = vmatprep.subr.mxu0 %v6755
        %6947 = vmatpush1.msra.mxu0 %v6754
        %6948 = vmatprep.subr.mxu0 %v6757
        %6949 = vmatpush1.msra.mxu0 %v6756
        %6950 = vmatprep.subr.mxu0 %v6759
        %6951 = vmatpush1.msra.mxu0 %v6758
        %6952 = vmatprep.subr.mxu0 %v6797
        %6953 = vmatpush1.msra.mxu0 %v6796
        %6954 = vmatprep.subr.mxu0 %v6799
        %6955 = vmatpush1.msra.mxu0 %v6798
        %6956 = vmatprep.subr.mxu0 %v6801
        %6957 = vmatpush1.msra.mxu0 %v6800
        %6958 = vmatprep.subr.mxu0 %v6803
        %6959 = vmatpush1.msra.mxu0 %v6802
        %6960 = vmatprep.subr.mxu0 %v6841
        %6961 = vmatpush1.msra.mxu0 %v6840
        %6962 = vmatprep.subr.mxu0 %v6843
        %6963 = vmatpush1.msra.mxu0 %v6842
        %6964 = vmatprep.subr.mxu0 %v6845
        %6965 = vmatpush1.msra.mxu0 %v6844
        %6966 = vmatprep.subr.mxu0 %v6847
        %6967 = vmatpush1.msra.mxu0 %v6846
        %6968 = vmatprep.mubr.f32.mxu0 %v6521
        %6969 = vmatmul.mubr.f32.gmra.mrb[0].mxu0 %v6520
        %v6970 = vpop.f32.mrb[0].mxu0
        %v6971 = vadd.f32 %v5144, %v6970
        %v6972 = vpop.f32.mrb[0].mxu0
        %v6973 = vadd.f32 %v5145, %v6972
        %6974 = vmatprep.mubr.f32.mxu0 %v6524
        %6975 = vmatmul.mubr.f32.gmra.mrb[0].mxu0 %v6523
        %v6976 = vpop.f32.mrb[0].mxu0
        %v6977 = vadd.f32 %v5146, %v6976
        %v6978 = vpop.f32.mrb[0].mxu0
        %v6979 = vadd.f32 %v5147, %v6978
        %6980 = vmatprep.mubr.f32.mxu0 %v6527
        %6981 = vmatmul.mubr.f32.gmra.mrb[0].mxu0 %v6526
        %v6982 = vpop.f32.mrb[0].mxu0
        %v6983 = vadd.f32 %v5148, %v6982
        %v6984 = vpop.f32.mrb[0].mxu0
        %v6985 = vadd.f32 %v5149, %v6984
        %6986 = vmatprep.mubr.f32.mxu0 %v6530
        %6987 = vmatmul.mubr.f32.gmra.mrb[0].mxu0 %v6529
        %v6988 = vpop.f32.mrb[0].mxu0
        %v6989 = vadd.f32 %v5150, %v6988
        %v6990 = vpop.f32.mrb[0].mxu0
        %v6991 = vadd.f32 %v5151, %v6990
        %6992 = vdwg.mxu0
        %6993 = vmatprep.subr.mxu0 %v6885
        %6994 = vmatpush1.msra.mxu0 %v6884
        %6995 = vmatprep.subr.mxu0 %v6887
        %6996 = vmatpush1.msra.mxu0 %v6886
        %6997 = vmatprep.subr.mxu0 %v6889
        %6998 = vmatpush1.msra.mxu0 %v6888
        %6999 = vmatprep.subr.mxu0 %v6891
        %7000 = vmatpush1.msra.mxu0 %v6890
        %7001 = vmatprep.subr.mxu0 0.0
        %7002 = vmatpush1.msra.mxu0 0.0
        %7003 = vmatprep.subr.mxu0 0.0
        %7004 = vmatpush1.msra.mxu0 0.0
        %7005 = vmatprep.subr.mxu0 0.0
        %7006 = vmatpush1.msra.mxu0 0.0
        %7007 = vmatprep.subr.mxu0 0.0
        %7008 = vmatpush1.msra.mxu0 0.0
        %7009 = vmatprep.subr.mxu0 0.0
        %7010 = vmatpush1.msra.mxu0 0.0
        %7011 = vmatprep.subr.mxu0 0.0
        %7012 = vmatpush1.msra.mxu0 0.0
        %7013 = vmatprep.subr.mxu0 0.0
        %7014 = vmatpush1.msra.mxu0 0.0
        %7015 = vmatprep.subr.mxu0 0.0
        %7016 = vmatpush1.msra.mxu0 0.0
        %7017 = vmatprep.subr.mxu0 0.0
        %7018 = vmatpush1.msra.mxu0 0.0
        %7019 = vmatprep.subr.mxu0 0.0
        %7020 = vmatpush1.msra.mxu0 0.0
        %7021 = vmatprep.subr.mxu0 0.0
        %7022 = vmatpush1.msra.mxu0 0.0
        %7023 = vmatprep.subr.mxu0 0.0
        %7024 = vmatpush1.msra.mxu0 0.0
        %7025 = vmatprep.subr.mxu0 0.0
        %7026 = vmatpush1.msra.mxu0 0.0
        %7027 = vmatprep.subr.mxu0 0.0
        %7028 = vmatpush1.msra.mxu0 0.0
        %7029 = vmatprep.subr.mxu0 0.0
        %7030 = vmatpush1.msra.mxu0 0.0
        %7031 = vmatprep.subr.mxu0 0.0
        %7032 = vmatpush1.msra.mxu0 0.0
        %7033 = vmatprep.subr.mxu0 0.0
        %7034 = vmatpush1.msra.mxu0 0.0
        %7035 = vmatprep.subr.mxu0 0.0
        %7036 = vmatpush1.msra.mxu0 0.0
        %7037 = vmatprep.subr.mxu0 0.0
        %7038 = vmatpush1.msra.mxu0 0.0
        %7039 = vmatprep.subr.mxu0 0.0
        %7040 = vmatpush1.msra.mxu0 0.0
        %7041 = vmatprep.subr.mxu0 0.0
        %7042 = vmatpush1.msra.mxu0 0.0
        %7043 = vmatprep.subr.mxu0 0.0
        %7044 = vmatpush1.msra.mxu0 0.0
        %7045 = vmatprep.subr.mxu0 0.0
        %7046 = vmatpush1.msra.mxu0 0.0
        %7047 = vmatprep.subr.mxu0 0.0
        %7048 = vmatpush1.msra.mxu0 0.0
        %7049 = vmatprep.subr.mxu0 0.0
        %7050 = vmatpush1.msra.mxu0 0.0
        %7051 = vmatprep.subr.mxu0 0.0
        %7052 = vmatpush1.msra.mxu0 0.0
        %7053 = vmatprep.subr.mxu0 0.0
        %7054 = vmatpush1.msra.mxu0 0.0
        %7055 = vmatprep.subr.mxu0 0.0
        %7056 = vmatpush1.msra.mxu0 0.0
        %7057 = vmatprep.mubr.f32.mxu0 0.0
        %7058 = vmatmul.mubr.f32.gmra.mrb[0].mxu0 %v6893
        %v7059 = vpop.f32.mrb[0].mxu0
        %v7060 = vadd.f32 %v6971, %v7059
        %v7061 = vpop.f32.mrb[0].mxu0
        %v7062 = vadd.f32 %v6973, %v7061
        %7063 = vmatprep.mubr.f32.mxu0 0.0
        %7064 = vmatmul.mubr.f32.gmra.mrb[0].mxu0 %v6896
        %v7065 = vpop.f32.mrb[0].mxu0
        %v7066 = vadd.f32 %v6977, %v7065
        %v7067 = vpop.f32.mrb[0].mxu0
        %v7068 = vadd.f32 %v6979, %v7067
        %7069 = vmatprep.mubr.f32.mxu0 0.0
        %7070 = vmatmul.mubr.f32.gmra.mrb[0].mxu0 %v6899
        %v7071 = vpop.f32.mrb[0].mxu0
        %v7072 = vadd.f32 %v6983, %v7071
        %v7073 = vpop.f32.mrb[0].mxu0
        %v7074 = vadd.f32 %v6985, %v7073
        %7075 = vmatprep.mubr.f32.mxu0 0.0
        %7076 = vmatmul.mubr.f32.gmra.mrb[0].mxu0 %v6902
        %v7077 = vpop.f32.mrb[0].mxu0
        %v7078 = vadd.f32 %v6989, %v7077
        %v7079 = vpop.f32.mrb[0].mxu0
        %v7080 = vadd.f32 %v6991, %v7079
        %7081 = vdwg.mxu0
        %v7082 = vld [vmem:[#allocation20] sm:$0xff]
        %v7083 = vld [vmem:[#allocation20 + $0x8] sm:$0xff]
        %v7084 = vld [vmem:[#allocation20 + $0x10] sm:$0xff]
        %v7085 = vld [vmem:[#allocation20 + $0x18] sm:$0xff]
        %v7086 = vld [vmem:[%s683] sm:$0xff]
        %v7087 = vld [vmem:[%s683 + $0x8] sm:$0xff]
        %v7088 = vld [vmem:[%s683 + $0x10] sm:$0xff]
        %v7089 = vld [vmem:[%s683 + $0x18] sm:$0xff]
        %v7090 = vld [vmem:[%s683 + $0x20] sm:$0xff]
        %v7091 = vld [vmem:[%s683 + $0x28] sm:$0xff]
        %v7092 = vld [vmem:[%s683 + $0x30] sm:$0xff]
        %v7093 = vld [vmem:[%s683 + $0x38] sm:$0xff]
        %v7094 = vld [vmem:[%s683 + $0x40] sm:$0xff]
        %v7095 = vld [vmem:[%s683 + $0x48] sm:$0xff]
        %v7096 = vld [vmem:[%s683 + $0x50] sm:$0xff]
        %v7097 = vld [vmem:[%s683 + $0x58] sm:$0xff]
        %v7098 = vld [vmem:[%s683 + $0x60] sm:$0xff]
        %v7099 = vld [vmem:[%s683 + $0x68] sm:$0xff]
        %v7100 = vld [vmem:[%s683 + $0x70] sm:$0xff]
        %v7101 = vld [vmem:[%s683 + $0x78] sm:$0xff]
        %7102 = vmatprep.subr.mxu0 0.0
        %7103 = vmatpush1.msra.mxu0 %v7086
        %7104 = vmatprep.subr.mxu0 0.0
        %7105 = vmatpush1.msra.mxu0 %v7087
        %7106 = vmatprep.subr.mxu0 0.0
        %7107 = vmatpush1.msra.mxu0 %v7088
        %7108 = vmatprep.subr.mxu0 0.0
        %7109 = vmatpush1.msra.mxu0 %v7089
        %7110 = vmatprep.subr.mxu0 0.0
        %7111 = vmatpush1.msra.mxu0 %v7090
        %7112 = vmatprep.subr.mxu0 0.0
        %7113 = vmatpush1.msra.mxu0 %v7091
        %7114 = vmatprep.subr.mxu0 0.0
        %7115 = vmatpush1.msra.mxu0 %v7092
        %7116 = vmatprep.subr.mxu0 0.0
        %7117 = vmatpush1.msra.mxu0 %v7093
        %7118 = vmatprep.subr.mxu0 0.0
        %7119 = vmatpush1.msra.mxu0 %v7094
        %7120 = vmatprep.subr.mxu0 0.0
        %7121 = vmatpush1.msra.mxu0 %v7095
        %7122 = vmatprep.subr.mxu0 0.0
        %7123 = vmatpush1.msra.mxu0 %v7096
        %7124 = vmatprep.subr.mxu0 0.0
        %7125 = vmatpush1.msra.mxu0 %v7097
        %7126 = vmatprep.subr.mxu0 0.0
        %7127 = vmatpush1.msra.mxu0 %v7098
        %7128 = vmatprep.subr.mxu0 0.0
        %7129 = vmatpush1.msra.mxu0 %v7099
        %7130 = vmatprep.subr.mxu0 0.0
        %7131 = vmatpush1.msra.mxu0 %v7100
        %7132 = vmatprep.subr.mxu0 0.0
        %7133 = vmatpush1.msra.mxu0 %v7101
        %7134 = vmatprep.subr.mxu0 0.0
        %7135 = vmatpush1.msra.mxu0 0.0
        %7136 = vmatprep.subr.mxu0 0.0
        %7137 = vmatpush1.msra.mxu0 0.0
        %7138 = vmatprep.subr.mxu0 0.0
        %7139 = vmatpush1.msra.mxu0 0.0
        %7140 = vmatprep.subr.mxu0 0.0
        %7141 = vmatpush1.msra.mxu0 0.0
        %7142 = vmatprep.subr.mxu0 0.0
        %7143 = vmatpush1.msra.mxu0 0.0
        %7144 = vmatprep.subr.mxu0 0.0
        %7145 = vmatpush1.msra.mxu0 0.0
        %7146 = vmatprep.subr.mxu0 0.0
        %7147 = vmatpush1.msra.mxu0 0.0
        %7148 = vmatprep.subr.mxu0 0.0
        %7149 = vmatpush1.msra.mxu0 0.0
        %7150 = vmatprep.subr.mxu0 0.0
        %7151 = vmatpush1.msra.mxu0 0.0
        %7152 = vmatprep.subr.mxu0 0.0
        %7153 = vmatpush1.msra.mxu0 0.0
        %7154 = vmatprep.subr.mxu0 0.0
        %7155 = vmatpush1.msra.mxu0 0.0
        %7156 = vmatprep.subr.mxu0 0.0
        %7157 = vmatpush1.msra.mxu0 0.0
        %7158 = vmatprep.subr.mxu0 0.0
        %7159 = vmatpush1.msra.mxu0 0.0
        %7160 = vmatprep.subr.mxu0 0.0
        %7161 = vmatpush1.msra.mxu0 0.0
        %7162 = vmatprep.subr.mxu0 0.0
        %7163 = vmatpush1.msra.mxu0 0.0
        %7164 = vmatprep.subr.mxu0 0.0
        %7165 = vmatpush1.msra.mxu0 0.0
        %7166 = vmatprep.mubr.f32.mxu0 0.0
        %7167 = vmatmul.mubr.f32.gmra.mrb[0].mxu0 %v7082
        %v7168 = vpop.f32.mrb[0].mxu0
        %v7169 = vadd.f32 0.0, %v7168
        %v7170 = vpop.f32.mrb[0].mxu0
        %7171 = vmatprep.mubr.f32.mxu0 0.0
        %7172 = vmatmul.mubr.f32.gmra.mrb[0].mxu0 %v7083
        %v7173 = vpop.f32.mrb[0].mxu0
        %v7174 = vadd.f32 0.0, %v7173
        %v7175 = vpop.f32.mrb[0].mxu0
        %7176 = vmatprep.mubr.f32.mxu0 0.0
        %7177 = vmatmul.mubr.f32.gmra.mrb[0].mxu0 %v7084
        %v7178 = vpop.f32.mrb[0].mxu0
        %v7179 = vadd.f32 0.0, %v7178
        %v7180 = vpop.f32.mrb[0].mxu0
        %7181 = vmatprep.mubr.f32.mxu0 0.0
        %7182 = vmatmul.mubr.f32.gmra.mrb[0].mxu0 %v7085
        %v7183 = vpop.f32.mrb[0].mxu0
        %v7184 = vadd.f32 0.0, %v7183
        %v7185 = vpop.f32.mrb[0].mxu0
        %7186 = vdwg.mxu0
        %v7187 = vld [vmem:[#allocation23] sm:$0xff]
        %v7188 = vld [vmem:[#allocation23 + $0x8] sm:$0xff]
        %v7189 = vld [vmem:[#allocation23 + $0x10] sm:$0xff]
        %v7190 = vld [vmem:[#allocation23 + $0x18] sm:$0xff]
        %v7192 = vsel %vm2276, %v7169, 0
        %v7195 = vsel %vm2276, %v7174, 0
        %v7198 = vsel %vm2276, %v7179, 0
        %v7201 = vsel %vm2276, %v7184, 0
        %7203 = vmatprep.subr.mxu0 %v7188
        %7204 = vmatpush1.msra.mxu0 %v7187
        %7205 = vmatprep.subr.mxu0 %v7190
        %7206 = vmatpush1.msra.mxu0 %v7189
        %7207 = vmatprep.subr.mxu0 0.0
        %7208 = vmatpush1.msra.mxu0 0.0
        %7209 = vmatprep.subr.mxu0 0.0
        %7210 = vmatpush1.msra.mxu0 0.0
        %7211 = vmatprep.subr.mxu0 0.0
        %7212 = vmatpush1.msra.mxu0 0.0
        %7213 = vmatprep.subr.mxu0 0.0
        %7214 = vmatpush1.msra.mxu0 0.0
        %7215 = vmatprep.subr.mxu0 0.0
        %7216 = vmatpush1.msra.mxu0 0.0
        %7217 = vmatprep.subr.mxu0 0.0
        %7218 = vmatpush1.msra.mxu0 0.0
        %7219 = vmatprep.subr.mxu0 0.0
        %7220 = vmatpush1.msra.mxu0 0.0
        %7221 = vmatprep.subr.mxu0 0.0
        %7222 = vmatpush1.msra.mxu0 0.0
        %7223 = vmatprep.subr.mxu0 0.0
        %7224 = vmatpush1.msra.mxu0 0.0
        %7225 = vmatprep.subr.mxu0 0.0
        %7226 = vmatpush1.msra.mxu0 0.0
        %7227 = vmatprep.subr.mxu0 0.0
        %7228 = vmatpush1.msra.mxu0 0.0
        %7229 = vmatprep.subr.mxu0 0.0
        %7230 = vmatpush1.msra.mxu0 0.0
        %7231 = vmatprep.subr.mxu0 0.0
        %7232 = vmatpush1.msra.mxu0 0.0
        %7233 = vmatprep.subr.mxu0 0.0
        %7234 = vmatpush1.msra.mxu0 0.0
        %7235 = vmatprep.subr.mxu0 0.0
        %7236 = vmatpush1.msra.mxu0 0.0
        %7237 = vmatprep.subr.mxu0 0.0
        %7238 = vmatpush1.msra.mxu0 0.0
        %7239 = vmatprep.subr.mxu0 0.0
        %7240 = vmatpush1.msra.mxu0 0.0
        %7241 = vmatprep.subr.mxu0 0.0
        %7242 = vmatpush1.msra.mxu0 0.0
        %7243 = vmatprep.subr.mxu0 0.0
        %7244 = vmatpush1.msra.mxu0 0.0
        %7245 = vmatprep.subr.mxu0 0.0
        %7246 = vmatpush1.msra.mxu0 0.0
        %7247 = vmatprep.subr.mxu0 0.0
        %7248 = vmatpush1.msra.mxu0 0.0
        %7249 = vmatprep.subr.mxu0 0.0
        %7250 = vmatpush1.msra.mxu0 0.0
        %7251 = vmatprep.subr.mxu0 0.0
        %7252 = vmatpush1.msra.mxu0 0.0
        %7253 = vmatprep.subr.mxu0 0.0
        %7254 = vmatpush1.msra.mxu0 0.0
        %7255 = vmatprep.subr.mxu0 0.0
        %7256 = vmatpush1.msra.mxu0 0.0
        %7257 = vmatprep.subr.mxu0 0.0
        %7258 = vmatpush1.msra.mxu0 0.0
        %7259 = vmatprep.subr.mxu0 0.0
        %7260 = vmatpush1.msra.mxu0 0.0
        %7261 = vmatprep.subr.mxu0 0.0
        %7262 = vmatpush1.msra.mxu0 0.0
        %7263 = vmatprep.subr.mxu0 0.0
        %7264 = vmatpush1.msra.mxu0 0.0
        %7265 = vmatprep.subr.mxu0 0.0
        %7266 = vmatpush1.msra.mxu0 0.0
        %7267 = vmatprep.mubr.f32.mxu0 0.0
        %7268 = vmatmul.mubr.f32.gmra.mrb[0].mxu0 %v7192
        %v7269 = vpop.f32.mrb[0].mxu0
        %v7270 = vadd.f32 0.0, %v7269
        %v7271 = vpop.f32.mrb[0].mxu0
        %v7272 = vadd.f32 0.0, %v7271
        %7273 = vmatprep.mubr.f32.mxu0 0.0
        %7274 = vmatmul.mubr.f32.gmra.mrb[0].mxu0 %v7195
        %v7275 = vpop.f32.mrb[0].mxu0
        %v7276 = vadd.f32 0.0, %v7275
        %v7277 = vpop.f32.mrb[0].mxu0
        %v7278 = vadd.f32 0.0, %v7277
        %7279 = vmatprep.mubr.f32.mxu0 0.0
        %7280 = vmatmul.mubr.f32.gmra.mrb[0].mxu0 %v7198
        %v7281 = vpop.f32.mrb[0].mxu0
        %v7282 = vadd.f32 0.0, %v7281
        %v7283 = vpop.f32.mrb[0].mxu0
        %v7284 = vadd.f32 0.0, %v7283
        %7285 = vmatprep.mubr.f32.mxu0 0.0
        %7286 = vmatmul.mubr.f32.gmra.mrb[0].mxu0 %v7201
        %v7287 = vpop.f32.mrb[0].mxu0
        %v7288 = vadd.f32 0.0, %v7287
        %v7289 = vpop.f32.mrb[0].mxu0
        %v7290 = vadd.f32 0.0, %v7289
        %7291 = vdwg.mxu0
        %v7292 = vadd.f32 %v7060, %v7270
        %v7293 = vadd.f32 %v7062, %v7272
        %v7294 = vadd.f32 %v7066, %v7276
        %v7295 = vadd.f32 %v7068, %v7278
        %v7296 = vadd.f32 %v7072, %v7282
        %v7297 = vadd.f32 %v7074, %v7284
        %v7298 = vadd.f32 %v7078, %v7288
        %v7299 = vadd.f32 %v7080, %v7290
        %7300 = vst [vmem:[%s788] sm:$0xff] %v7292
        %7301 = vst [vmem:[%s788 + $0x8] sm:$0xff] %v7293
        %7302 = vst [vmem:[%s788 + $0x10] sm:$0xff] %v7294
        %7303 = vst [vmem:[%s788 + $0x18] sm:$0xff] %v7295
        %7304 = vst [vmem:[%s788 + $0x20] sm:$0xff] %v7296
        %7305 = vst [vmem:[%s788 + $0x28] sm:$0xff] %v7297
        %7306 = vst [vmem:[%s788 + $0x30] sm:$0xff] %v7298
        %7307 = vst [vmem:[%s788 + $0x38] sm:$0xff] %v7299
        %s7308 = sand.u32 %s386, 1
        %s7309 = scalar_lea.sflag [#allocation4], %s7308
        %s7310 = sand.u32 %s386, 1
        %s7311 = smul.addr %s7310, 64
        %s7312 = scalar_lea.vmem [#allocation26], %s7311
        // Predicated region
        $region162: #{tfr_forward.1} parent=79 // pred_check
          %p7313 = pneg %p396
        $region163: #{tfr_forward.1} parent=79 // pred_check_branch
          %7315 = sbr.rel (%p7313) target = $region165
        $region164: #{tfr_forward.1} parent=79 // pred_region
          %s7317 = ssub.s32 1024, 1024
          %7318 = vsyncadd %s7309, %s7317
          %s7319 = smul.addr %s43, 8
          %s7320 = smul.addr %s7319, 128
          %s7321 = scalar_lea.hbm %s15, %s7320
          %s7322 = sshll.u32 %s7312, 4
          %s7323 = int_to_ptr.vmem [resolvable:$true] %s7322
          %7328 = dma.vmem_to_hbm [thread:$0]  %s7323, 1024, %s7321, %s7309, 256, 256, 16
        $region165: #{tfr_forward.1} parent=79 // pred_fallthru
          _
      $region80: #{tfr_forward.1} parent=5 // pred_fallthru
        _
      %p7329 = scmp.le.s32.totalorder 2, %s38
      // Predicated region
      $region166: #{tfr_forward.1} parent=5 // pred_check
        %p7330 = pneg %p7329
      $region167: #{tfr_forward.1} parent=5 // pred_check_branch
        %7332 = sbr.rel (%p7330) target = $region169
      $region168: #{tfr_forward.1} parent=5 // pred_region
        %s7333 = ssub.s32 %s38, 2
        // Predicated region
        $region170: #{tfr_forward.1} parent=168 // pred_check
          %p7334 = pneg %p402
        $region171: #{tfr_forward.1} parent=168 // pred_check_branch
          %7336 = sbr.rel (%p7334) target = $region173
        $region172: #{tfr_forward.1} parent=168 // pred_region
          %s7337 = sand.u32 %s387, 1
          %s7338 = scalar_lea.sflag [#allocation4], %s7337
          %s7339 = sand.u32 %s387, 1
          %s7340 = smul.addr %s7339, 64
          %s7341 = scalar_lea.vmem [#allocation26], %s7340
          %7342 = dma.done %s7338, 1024
        $region173: #{tfr_forward.1} parent=168 // pred_fallthru
          _
      $region169: #{tfr_forward.1} parent=5 // pred_fallthru
        _
    $region6: #{tfr_forward.1} parent=1 // loop_footer
      %s42 = sadd.s32 1, %s38
    $region7: #{tfr_forward.1} parent=1 // loop_footer_branch
      %37 = sbr.rel target = $region3
    $region8: #{tfr_forward.1} parent=1 // loop_exit
      _
    %7343 = vsyncpa [#allocation3], 1
    %s7344 = scalar_lea.sflag [#allocation3], 1
    %7345 = vsyncpa %s7344, 1
    %7346 = vsyncpa [#allocation6], 1
    %s7347 = scalar_lea.sflag [#allocation6], 1
    %7348 = vsyncpa %s7347, 1
    %7349 = vsyncpa [#allocation9], 1
    %s7350 = scalar_lea.sflag [#allocation9], 1
    %7351 = vsyncpa %s7350, 1
    %7352 = vsyncpa [#allocation12], 1
    %7353 = vsyncpa [#allocation15], 1
    %7354 = vsyncpa [#allocation18], 1
    %7355 = vsyncpa [#allocation21], 1
    %7356 = vsyncpa [#allocation24], 1
    %7357 = vsyncpa [#allocation4], 1
    %s7358 = scalar_lea.sflag [#allocation4], 1
    %7359 = vsyncpa %s7358, 1

</llo_original>
